<compile_context>
chip_gen: v7x
topology: tpu7x:2x2x1
jax: 0.10.0
libtpu: 0.0.40
codegen_flags: <defaults>
</compile_context>

<pallas_src>
import functools

import jax
import jax.numpy as jnp
from jax.experimental import pallas as pl
from jax.experimental.pallas import tpu as pltpu

# ----------------------------- configuration -------------------------------
B = 2                      # batch
L = 8                      # max program length
T = 16                     # num_program_tokens (token T-1 is <pad>/<eop>)
E = T                      # token-embedding dim
H = 32                     # GRU hidden size (logical)
HP = 128                   # lane-padded hidden size (one 128-lane gate block)
G3 = 3 * HP                # padded 3-gate slab width
Z = 16                     # latent dim
NUM_DEMO = 2               # config.num_demo_per_program
MAX_DEMO_LEN = 6           # config.max_demo_length
S_STEPS = MAX_DEMO_LEN - 1
NUM_ACTIONS = 6            # last action = "end"
AE = 8                     # action-embedding dim
C_S, H_S, W_S = 8, 8, 8    # per-demo state grid
SF = 32                    # state-feature dim
BD = B * NUM_DEMO
TEACHER_ENFORCING = True   # config.use_teacher_enforcing
HEAD_PAD = 128             # lane-dense merged-head width


# ----------------------------- in-kernel helpers ----------------------------
def _gru_gates(gi, gh, h):
    """PyTorch nn.GRUCell gating on lane-aligned (rows, 3*HP) gate slabs."""
    r = jax.nn.sigmoid(gi[:, 0 * HP:1 * HP] + gh[:, 0 * HP:1 * HP])
    zg = jax.nn.sigmoid(gi[:, 1 * HP:2 * HP] + gh[:, 1 * HP:2 * HP])
    n = jnp.tanh(gi[:, 2 * HP:3 * HP] + r * gh[:, 2 * HP:3 * HP])
    return (1.0 - zg) * n + zg * h


# ----------------------------- fused kernel ---------------------------------
def _program_vae_kernel(
        # data
        oh_prog_ref, mask_ref, eps_ref, rep_ref, states_ref, oh_act_ref,
        # encoder weights
        e_wih_ref, e_whh_ref, e_bih_ref, e_bhh_ref,
        mu_w_ref, mu_b_ref, ls_w_ref, ls_b_ref,
        # decoder weights
        d_wih_tok_ref, d_wih_z_ref, d_whh_ref, d_bih_ref, d_bhh_ref,
        d_z2h_w_ref, d_z2h_b_ref, d_head_w_ref, d_head_b_ref,
        # condition-policy weights
        senc_w_ref, senc_b_ref, c_wih_act_ref, c_wih_s_ref, c_wih_z_ref,
        c_whh_ref, c_bih_ref, c_bhh_ref, c_z2h_w_ref, c_z2h_b_ref,
        a_head_w_ref, a_head_b_ref,
        # outputs
        dec_out_ref, act_out_ref, z_out_ref):
    f32 = jnp.float32

    # -------- VAE encoder rollout (teacher forced, packed-sequence mask) ------
    e_wih = e_wih_ref[...]
    e_whh = e_whh_ref[...]
    e_bih = jnp.broadcast_to(e_bih_ref[...], (B, G3))     # hoisted broadcasts
    e_bhh = jnp.broadcast_to(e_bhh_ref[...], (B, G3))
    h = jnp.zeros((B, HP), f32)
    for t in range(L):
        gi = jnp.dot(oh_prog_ref[t], e_wih, preferred_element_type=f32) + e_bih
        gh = jnp.dot(h, e_whh, preferred_element_type=f32) + e_bhh
        h_new = _gru_gates(gi, gh, h)
        m = mask_ref[t]                                    # (B, 1), 1 inside prog
        h = m * h_new + (1.0 - m) * h                      # freeze h past EOP

    # -------- reparameterisation in-kernel ------------------------------------
    mu = jnp.dot(h, mu_w_ref[...], preferred_element_type=f32) + mu_b_ref[...]
    log_sigma = jnp.dot(h, ls_w_ref[...], preferred_element_type=f32) + ls_b_ref[...]
    z = mu + jnp.exp(log_sigma) * eps_ref[...]             # (B, Z)
    z_out_ref[...] = z

    # -------- VAE decoder rollout (teacher forced) -----------------------------
    d_wih = d_wih_tok_ref[...]
    d_whh = d_whh_ref[...]
    d_bhh = jnp.broadcast_to(d_bhh_ref[...], (B, G3))
    gic = (jnp.dot(z, d_wih_z_ref[...], preferred_element_type=f32)
           + jnp.broadcast_to(d_bih_ref[...], (B, G3)))    # time-constant gi part
    d_head_w = d_head_w_ref[...]
    d_head_b = jnp.broadcast_to(d_head_b_ref[...], (B, HEAD_PAD))
    h = jnp.tanh(jnp.dot(z, d_z2h_w_ref[...], preferred_element_type=f32)
                 + d_z2h_b_ref[...])
    for t in range(L):
        gi = jnp.dot(oh_prog_ref[t], d_wih, preferred_element_type=f32) + gic
        gh = jnp.dot(h, d_whh, preferred_element_type=f32) + d_bhh
        h = _gru_gates(gi, gh, h)
        dec_out_ref[:, t, :] = (jnp.dot(h, d_head_w, preferred_element_type=f32)
                                + d_head_b)                # final (B, L, 128) layout

    # -------- condition-policy rollout (teacher forced) ------------------------
    z_rep = jnp.dot(rep_ref[...], z, preferred_element_type=f32)         # (BD, Z)
    sfeat = jnp.tanh(jnp.dot(states_ref[...], senc_w_ref[...],
                             preferred_element_type=f32) + senc_b_ref[...])
    c_wih_act = c_wih_act_ref[...]
    c_whh = c_whh_ref[...]
    c_bhh = jnp.broadcast_to(c_bhh_ref[...], (BD, G3))
    gic = (jnp.dot(sfeat, c_wih_s_ref[...], preferred_element_type=f32)
           + jnp.dot(z_rep, c_wih_z_ref[...], preferred_element_type=f32)
           + jnp.broadcast_to(c_bih_ref[...], (BD, G3)))
    a_head_w = a_head_w_ref[...]
    a_head_b = jnp.broadcast_to(a_head_b_ref[...], (BD, HEAD_PAD))
    h = jnp.tanh(jnp.dot(z_rep, c_z2h_w_ref[...], preferred_element_type=f32)
                 + c_z2h_b_ref[...])
    for t in range(S_STEPS):
        gi = jnp.dot(oh_act_ref[t], c_wih_act, preferred_element_type=f32) + gic
        gh = jnp.dot(h, c_whh, preferred_element_type=f32) + c_bhh
        h = _gru_gates(gi, gh, h)
        act_out_ref[:, t, :] = (jnp.dot(h, a_head_w, preferred_element_type=f32)
                                + a_head_b)                # final (BD, S, 128) layout


def fused_forward(*args):
    vmem_specs = [pl.BlockSpec(memory_space=pltpu.MemorySpace.VMEM)
                  for _ in range(len(args))]
    return pl.pallas_call(
        _program_vae_kernel,
        out_shape=(jax.ShapeDtypeStruct((B, L, HEAD_PAD), jnp.float32),
                   jax.ShapeDtypeStruct((BD, S_STEPS, HEAD_PAD), jnp.float32),
                   jax.ShapeDtypeStruct((B, Z), jnp.float32)),
        in_specs=vmem_specs,
        out_specs=(pl.BlockSpec(memory_space=pltpu.MemorySpace.VMEM),
                   pl.BlockSpec(memory_space=pltpu.MemorySpace.VMEM),
                   pl.BlockSpec(memory_space=pltpu.MemorySpace.VMEM)),
    )(*args)


# ----------------------------- weight padding helpers (glue) -----------------
def _pad_gate_cols(w):
    """(in, 3H) -> (in, 3*HP): each r/z/n gate starts on a 128-lane boundary."""
    out = jnp.zeros((w.shape[0], G3), jnp.float32)
    for g in range(3):
        out = out.at[:, g * HP:g * HP + H].set(w[:, g * H:(g + 1) * H])
    return out


def _pad_rows(w, rows=HP):
    return jnp.pad(w, ((0, rows - w.shape[0]), (0, 0)))


def _pad_cols(w, cols):
    return jnp.pad(w, ((0, 0), (0, cols - w.shape[1])))


# ----------------------------- parameters ----------------------------------
def init_params(key):
    def nrm(k, shape, scale=0.1):
        return (scale * jax.random.normal(k, shape)).astype(jnp.float32)

    keys = jax.random.split(key, 32)
    p = {}
    # VAE encoder
    p["tok_embed"] = nrm(keys[0], (T, E))
    p["enc_wih"] = nrm(keys[1], (E, 3 * H))
    p["enc_whh"] = nrm(keys[2], (H, 3 * H))
    p["enc_bih"] = jnp.zeros((1, 3 * H), jnp.float32)
    p["enc_bhh"] = jnp.zeros((1, 3 * H), jnp.float32)
    # latent heads
    p["mu_w"] = nrm(keys[3], (H, Z))
    p["mu_b"] = jnp.zeros((1, Z), jnp.float32)
    p["logsig_w"] = nrm(keys[4], (H, Z))
    p["logsig_b"] = jnp.zeros((1, Z), jnp.float32)
    # VAE decoder
    p["dec_tok_embed"] = nrm(keys[5], (T, E))
    p["z2h_w"] = nrm(keys[6], (Z, H))
    p["z2h_b"] = jnp.zeros((1, H), jnp.float32)
    p["dec_wih"] = nrm(keys[7], (E + Z, 3 * H))
    p["dec_whh"] = nrm(keys[8], (H, 3 * H))
    p["dec_bih"] = jnp.zeros((1, 3 * H), jnp.float32)
    p["dec_bhh"] = jnp.zeros((1, 3 * H), jnp.float32)
    p["tok_out_w"] = nrm(keys[9], (H, T))
    p["tok_out_b"] = jnp.zeros((1, T), jnp.float32)
    p["eop_out_w"] = nrm(keys[10], (H, 2))
    p["eop_out_b"] = jnp.zeros((1, 2), jnp.float32)
    # condition policy
    p["state_enc_w"] = nrm(keys[11], (C_S * H_S * W_S, SF), scale=0.02)
    p["state_enc_b"] = jnp.zeros((1, SF), jnp.float32)
    p["act_embed"] = nrm(keys[12], (NUM_ACTIONS, AE))
    p["cp_z2h_w"] = nrm(keys[13], (Z, H))
    p["cp_z2h_b"] = jnp.zeros((1, H), jnp.float32)
    p["cp_wih"] = nrm(keys[14], (SF + Z + AE, 3 * H))
    p["cp_whh"] = nrm(keys[15], (H, 3 * H))
    p["cp_bih"] = jnp.zeros((1, 3 * H), jnp.float32)
    p["cp_bhh"] = jnp.zeros((1, 3 * H), jnp.float32)
    p["act_out_w"] = nrm(keys[16], (H, NUM_ACTIONS))
    p["act_out_b"] = jnp.zeros((1, NUM_ACTIONS), jnp.float32)
    return p


# ----------------------------- forward pass --------------------------------
def program_vae_forward(params, programs, program_masks, init_states, a_h, eps):
    """Non-reinforce-step ProgramVAE.forward (teacher enforcing)."""
    # ---- weight folding + lane-aligned gate padding (tiny glue preprocessing) --
    enc_wih_tok = _pad_gate_cols(jnp.dot(params["tok_embed"], params["enc_wih"]))
    enc_whh = _pad_rows(_pad_gate_cols(params["enc_whh"]))
    enc_bih = _pad_gate_cols(params["enc_bih"])
    enc_bhh = _pad_gate_cols(params["enc_bhh"])
    mu_w = _pad_rows(params["mu_w"])
    ls_w = _pad_rows(params["logsig_w"])

    dec_wih_tok = _pad_gate_cols(jnp.dot(params["dec_tok_embed"], params["dec_wih"][:E]))
    dec_wih_z = _pad_gate_cols(params["dec_wih"][E:])
    dec_whh = _pad_rows(_pad_gate_cols(params["dec_whh"]))
    dec_bih = _pad_gate_cols(params["dec_bih"])
    dec_bhh = _pad_gate_cols(params["dec_bhh"])
    dec_z2h_w = _pad_cols(params["z2h_w"], HP)
    dec_z2h_b = _pad_cols(params["z2h_b"], HP)
    dec_head_w = _pad_rows(jnp.concatenate(
        [params["tok_out_w"], params["eop_out_w"],
         jnp.zeros((H, HEAD_PAD - T - 2), jnp.float32)], axis=1))
    dec_head_b = jnp.concatenate(
        [params["tok_out_b"], params["eop_out_b"],
         jnp.zeros((1, HEAD_PAD - T - 2), jnp.float32)], axis=1)

    cp_wih_s = _pad_gate_cols(params["cp_wih"][:SF])
    cp_wih_z = _pad_gate_cols(params["cp_wih"][SF:SF + Z])
    cp_wih_act = _pad_gate_cols(jnp.dot(params["act_embed"], params["cp_wih"][SF + Z:]))
    cp_whh = _pad_rows(_pad_gate_cols(params["cp_whh"]))
    cp_bih = _pad_gate_cols(params["cp_bih"])
    cp_bhh = _pad_gate_cols(params["cp_bhh"])
    cp_z2h_w = _pad_cols(params["cp_z2h_w"], HP)
    cp_z2h_b = _pad_cols(params["cp_z2h_b"], HP)
    act_head_w = _pad_rows(jnp.concatenate(
        [params["act_out_w"], jnp.zeros((H, HEAD_PAD - NUM_ACTIONS), jnp.float32)], axis=1))
    act_head_b = jnp.concatenate(
        [params["act_out_b"], jnp.zeros((1, HEAD_PAD - NUM_ACTIONS), jnp.float32)], axis=1)

    # ---- teacher-forced inputs (time-major one-hot slabs) ----
    oh_prog = jax.nn.one_hot(programs.T, T, dtype=jnp.float32)               # (L, B, T)
    mask_seq = program_masks.astype(jnp.float32).T[..., None]                # (L, B, 1)
    states_flat = init_states.reshape(BD, C_S * H_S * W_S).astype(jnp.float32)
    rep_mat = jnp.repeat(jnp.eye(B, dtype=jnp.float32), NUM_DEMO, axis=0)    # (BD, B)
    a_h_flat = a_h.reshape(BD, S_STEPS)
    prev_act = jnp.concatenate(
        [jnp.zeros((BD, 1), jnp.int32), a_h_flat[:, :S_STEPS - 1]], axis=1)  # (BD, S)
    oh_act = jax.nn.one_hot(prev_act.T, NUM_ACTIONS, dtype=jnp.float32)      # (S, BD, A)

    # ---- single fused pallas_call: encoder -> z -> decoder -> policy ----
    dec_head, act_head, z = fused_forward(
        oh_prog, mask_seq, eps, rep_mat, states_flat, oh_act,
        enc_wih_tok, enc_whh, enc_bih, enc_bhh, mu_w, params["mu_b"], ls_w, params["logsig_b"],
        dec_wih_tok, dec_wih_z, dec_whh, dec_bih, dec_bhh,
        dec_z2h_w, dec_z2h_b, dec_head_w, dec_head_b,
        params["state_enc_w"], params["state_enc_b"], cp_wih_act, cp_wih_s, cp_wih_z,
        cp_whh, cp_bih, cp_bhh, cp_z2h_w, cp_z2h_b, act_head_w, act_head_b)

    # ---- argmax / mask bookkeeping (outputs already in final layout) ----
    output_logits = dec_head[..., :T]                                        # (B, L, T)
    eop_output_logits = dec_head[..., T:T + 2]                               # (B, L, 2)
    pred_programs = jnp.argmax(output_logits, axis=-1).astype(jnp.int32)
    eop_pred_programs = jnp.argmax(eop_output_logits, axis=-1).astype(jnp.int32)
    cont = (eop_pred_programs == 0).astype(jnp.int32)
    pred_program_masks = jnp.concatenate(
        [jnp.ones((B, 1), jnp.int32), jnp.cumprod(cont, axis=1)[:, :L - 1]],
        axis=1).astype(bool)
    pred_programs_len = jnp.sum(pred_program_masks, axis=-1).astype(jnp.int32)

    action_logits_flat = act_head[..., :NUM_ACTIONS]                         # (BD, S, A)
    pred_actions = jnp.argmax(action_logits_flat, axis=-1).astype(jnp.int32)
    acont = (pred_actions != NUM_ACTIONS - 1).astype(jnp.int32)
    action_masks_flat = jnp.concatenate(
        [jnp.ones((BD, 1), jnp.int32), jnp.cumprod(acont, axis=1)[:, :S_STEPS - 1]],
        axis=1).astype(bool)
    action_logits = action_logits_flat.reshape(B, NUM_DEMO, S_STEPS, NUM_ACTIONS)
    action_masks = action_masks_flat.reshape(B, NUM_DEMO, S_STEPS)

    return (pred_programs, pred_programs_len, output_logits, eop_pred_programs,
            eop_output_logits, pred_program_masks, action_logits, action_masks, z)


# ----------------------------- driver ---------------------------------------
if __name__ == "__main__":
    key = jax.random.PRNGKey(0)
    k_prog, k_state, k_ah, k_eps = jax.random.split(key, 4)

    programs = jax.random.randint(k_prog, (B, L), 0, T - 1, dtype=jnp.int32)
    programs = programs.at[0, 5:].set(T - 1)          # pad tail of first program
    program_masks = programs != (T - 1)               # act()-style mask
    init_states = jax.random.normal(k_state, (B, NUM_DEMO, C_S, H_S, W_S), jnp.float32)
    a_h = jax.random.randint(k_ah, (B, NUM_DEMO, S_STEPS), 0, NUM_ACTIONS, dtype=jnp.int32)
    eps = jax.random.normal(k_eps, (B, Z), jnp.float32)

    params = init_params(jax.random.PRNGKey(1))

    fwd = jax.jit(functools.partial(program_vae_forward, params))
    out = fwd(programs, program_masks, init_states, a_h, eps)
    out = jax.block_until_ready(out)

    (pred_programs, pred_programs_len, output_logits, eop_pred_programs,
     eop_output_logits, pred_program_masks, action_logits, action_masks, z) = out

    assert pred_programs.shape == (B, L)
    assert pred_programs_len.shape == (B,)
    assert output_logits.shape == (B, L, T)
    assert eop_pred_programs.shape == (B, L)
    assert eop_output_logits.shape == (B, L, 2)
    assert pred_program_masks.shape == (B, L)
    assert action_logits.shape == (B, NUM_DEMO, S_STEPS, NUM_ACTIONS)
    assert action_masks.shape == (B, NUM_DEMO, S_STEPS)
    assert z.shape == (B, Z)
    assert bool(jnp.all(jnp.isfinite(output_logits)))
    assert bool(jnp.all(jnp.isfinite(action_logits)))

    print("KERNEL_OK")
</pallas_src>

<mosaic_0001>
module attributes {stable_mosaic.version = 11 : i64} {
  func.func @_program_vae_kernel(%arg0: memref<8x2x16xf32, #tpu.memory_space<vmem>>, %arg1: memref<8x2x1xf32, #tpu.memory_space<vmem>>, %arg2: memref<2x16xf32, #tpu.memory_space<vmem>>, %arg3: memref<4x2xf32, #tpu.memory_space<vmem>>, %arg4: memref<4x512xf32, #tpu.memory_space<vmem>>, %arg5: memref<5x4x6xf32, #tpu.memory_space<vmem>>, %arg6: memref<16x384xf32, #tpu.memory_space<vmem>>, %arg7: memref<128x384xf32, #tpu.memory_space<vmem>>, %arg8: memref<1x384xf32, #tpu.memory_space<vmem>>, %arg9: memref<1x384xf32, #tpu.memory_space<vmem>>, %arg10: memref<128x16xf32, #tpu.memory_space<vmem>>, %arg11: memref<1x16xf32, #tpu.memory_space<vmem>>, %arg12: memref<128x16xf32, #tpu.memory_space<vmem>>, %arg13: memref<1x16xf32, #tpu.memory_space<vmem>>, %arg14: memref<16x384xf32, #tpu.memory_space<vmem>>, %arg15: memref<16x384xf32, #tpu.memory_space<vmem>>, %arg16: memref<128x384xf32, #tpu.memory_space<vmem>>, %arg17: memref<1x384xf32, #tpu.memory_space<vmem>>, %arg18: memref<1x384xf32, #tpu.memory_space<vmem>>, %arg19: memref<16x128xf32, #tpu.memory_space<vmem>>, %arg20: memref<1x128xf32, #tpu.memory_space<vmem>>, %arg21: memref<128x128xf32, #tpu.memory_space<vmem>>, %arg22: memref<1x128xf32, #tpu.memory_space<vmem>>, %arg23: memref<512x32xf32, #tpu.memory_space<vmem>>, %arg24: memref<1x32xf32, #tpu.memory_space<vmem>>, %arg25: memref<6x384xf32, #tpu.memory_space<vmem>>, %arg26: memref<32x384xf32, #tpu.memory_space<vmem>>, %arg27: memref<16x384xf32, #tpu.memory_space<vmem>>, %arg28: memref<128x384xf32, #tpu.memory_space<vmem>>, %arg29: memref<1x384xf32, #tpu.memory_space<vmem>>, %arg30: memref<1x384xf32, #tpu.memory_space<vmem>>, %arg31: memref<16x128xf32, #tpu.memory_space<vmem>>, %arg32: memref<1x128xf32, #tpu.memory_space<vmem>>, %arg33: memref<128x128xf32, #tpu.memory_space<vmem>>, %arg34: memref<1x128xf32, #tpu.memory_space<vmem>>, %arg35: memref<2x8x128xf32, #tpu.memory_space<vmem>>, %arg36: memref<4x5x128xf32, #tpu.memory_space<vmem>>, %arg37: memref<2x16xf32, #tpu.memory_space<vmem>>) attributes {dimension_semantics = [], scalar_prefetch = 0 : i64, scratch_operands = 0 : i64, tpu.core_type = #tpu.core_type<tc>} {
    %c0 = arith.constant 0 : index
    %c0_0 = arith.constant 0 : index
    %0 = vector.load %arg6[%c0, %c0_0] : memref<16x384xf32, #tpu.memory_space<vmem>>, vector<16x384xf32>
    %c0_1 = arith.constant 0 : index
    %c0_2 = arith.constant 0 : index
    %1 = vector.load %arg7[%c0_1, %c0_2] : memref<128x384xf32, #tpu.memory_space<vmem>>, vector<128x384xf32>
    %c0_3 = arith.constant 0 : index
    %c0_4 = arith.constant 0 : index
    %2 = vector.load %arg8[%c0_3, %c0_4] : memref<1x384xf32, #tpu.memory_space<vmem>>, vector<1x384xf32>
    %3 = vector.shape_cast %2 : vector<1x384xf32> to vector<1x384xf32>
    %4 = vector.broadcast %3 : vector<1x384xf32> to vector<2x384xf32>
    %c0_5 = arith.constant 0 : index
    %c0_6 = arith.constant 0 : index
    %5 = vector.load %arg9[%c0_5, %c0_6] : memref<1x384xf32, #tpu.memory_space<vmem>>, vector<1x384xf32>
    %6 = vector.shape_cast %5 : vector<1x384xf32> to vector<1x384xf32>
    %7 = vector.broadcast %6 : vector<1x384xf32> to vector<2x384xf32>
    %cst = arith.constant 0.000000e+00 : f32
    %8 = vector.broadcast %cst : f32 to vector<2x128xf32>
    %c0_7 = arith.constant 0 : index
    %c0_8 = arith.constant 0 : index
    %c0_9 = arith.constant 0 : index
    %9 = vector.load %arg0[%c0_7, %c0_8, %c0_9] : memref<8x2x16xf32, #tpu.memory_space<vmem>>, vector<1x2x16xf32>
    %10 = vector.shape_cast %9 : vector<1x2x16xf32> to vector<2x16xf32>
    %cst_10 = arith.constant dense<0.000000e+00> : vector<2x384xf32>
    %11 = tpu.matmul %10, %0, %cst_10 {dimension_numbers = #tpu.dot_dimension_numbers<[1], [0], [0], [1], [0, 0, 1, 1], [], []>} : vector<2x16xf32>, vector<16x384xf32>, vector<2x384xf32> -> vector<2x384xf32>
    %12 = arith.addf %11, %4 : vector<2x384xf32>
    %cst_11 = arith.constant dense<0.000000e+00> : vector<2x384xf32>
    %13 = tpu.matmul %8, %1, %cst_11 {dimension_numbers = #tpu.dot_dimension_numbers<[1], [0], [0], [1], [0, 0, 1, 1], [], []>} : vector<2x128xf32>, vector<128x384xf32>, vector<2x384xf32> -> vector<2x384xf32>
    %14 = arith.addf %13, %7 : vector<2x384xf32>
    %15 = vector.extract_strided_slice %12 {offsets = [0, 0], sizes = [2, 128], strides = [1, 1]} : vector<2x384xf32> to vector<2x128xf32>
    %16 = vector.extract_strided_slice %14 {offsets = [0, 0], sizes = [2, 128], strides = [1, 1]} : vector<2x384xf32> to vector<2x128xf32>
    %17 = arith.addf %15, %16 : vector<2x128xf32>
    %18 = arith.negf %17 : vector<2x128xf32>
    %19 = math.exp %18 : vector<2x128xf32>
    %cst_12 = arith.constant 1.000000e+00 : f32
    %20 = vector.broadcast %cst_12 : f32 to vector<2x128xf32>
    %21 = arith.addf %20, %19 : vector<2x128xf32>
    %22 = arith.divf %20, %21 : vector<2x128xf32>
    %23 = vector.extract_strided_slice %12 {offsets = [0, 128], sizes = [2, 128], strides = [1, 1]} : vector<2x384xf32> to vector<2x128xf32>
    %24 = vector.extract_strided_slice %14 {offsets = [0, 128], sizes = [2, 128], strides = [1, 1]} : vector<2x384xf32> to vector<2x128xf32>
    %25 = arith.addf %23, %24 : vector<2x128xf32>
    %26 = arith.negf %25 : vector<2x128xf32>
    %27 = math.exp %26 : vector<2x128xf32>
    %cst_13 = arith.constant 1.000000e+00 : f32
    %28 = vector.broadcast %cst_13 : f32 to vector<2x128xf32>
    %29 = arith.addf %28, %27 : vector<2x128xf32>
    %30 = arith.divf %28, %29 : vector<2x128xf32>
    %31 = vector.extract_strided_slice %12 {offsets = [0, 256], sizes = [2, 128], strides = [1, 1]} : vector<2x384xf32> to vector<2x128xf32>
    %32 = vector.extract_strided_slice %14 {offsets = [0, 256], sizes = [2, 128], strides = [1, 1]} : vector<2x384xf32> to vector<2x128xf32>
    %33 = arith.mulf %22, %32 : vector<2x128xf32>
    %34 = arith.addf %31, %33 : vector<2x128xf32>
    %35 = math.tanh %34 : vector<2x128xf32>
    %cst_14 = arith.constant 1.000000e+00 : f32
    %36 = vector.broadcast %cst_14 : f32 to vector<2x128xf32>
    %37 = arith.subf %36, %30 : vector<2x128xf32>
    %38 = arith.mulf %37, %35 : vector<2x128xf32>
    %39 = arith.mulf %30, %8 : vector<2x128xf32>
    %40 = arith.addf %38, %39 : vector<2x128xf32>
    %c0_15 = arith.constant 0 : index
    %c0_16 = arith.constant 0 : index
    %c0_17 = arith.constant 0 : index
    %41 = vector.load %arg1[%c0_15, %c0_16, %c0_17] : memref<8x2x1xf32, #tpu.memory_space<vmem>>, vector<1x2x1xf32>
    %42 = vector.shape_cast %41 : vector<1x2x1xf32> to vector<2x1xf32>
    %43 = vector.broadcast %42 : vector<2x1xf32> to vector<2x128xf32>
    %44 = arith.mulf %43, %40 : vector<2x128xf32>
    %cst_18 = arith.constant 1.000000e+00 : f32
    %45 = vector.broadcast %cst_18 : f32 to vector<2x1xf32>
    %46 = arith.subf %45, %42 : vector<2x1xf32>
    %47 = vector.broadcast %46 : vector<2x1xf32> to vector<2x128xf32>
    %48 = arith.mulf %47, %8 : vector<2x128xf32>
    %49 = arith.addf %44, %48 : vector<2x128xf32>
    %c1 = arith.constant 1 : index
    %c0_19 = arith.constant 0 : index
    %c0_20 = arith.constant 0 : index
    %50 = vector.load %arg0[%c1, %c0_19, %c0_20] : memref<8x2x16xf32, #tpu.memory_space<vmem>>, vector<1x2x16xf32>
    %51 = vector.shape_cast %50 : vector<1x2x16xf32> to vector<2x16xf32>
    %cst_21 = arith.constant dense<0.000000e+00> : vector<2x384xf32>
    %52 = tpu.matmul %51, %0, %cst_21 {dimension_numbers = #tpu.dot_dimension_numbers<[1], [0], [0], [1], [0, 0, 1, 1], [], []>} : vector<2x16xf32>, vector<16x384xf32>, vector<2x384xf32> -> vector<2x384xf32>
    %53 = arith.addf %52, %4 : vector<2x384xf32>
    %cst_22 = arith.constant dense<0.000000e+00> : vector<2x384xf32>
    %54 = tpu.matmul %49, %1, %cst_22 {dimension_numbers = #tpu.dot_dimension_numbers<[1], [0], [0], [1], [0, 0, 1, 1], [], []>} : vector<2x128xf32>, vector<128x384xf32>, vector<2x384xf32> -> vector<2x384xf32>
    %55 = arith.addf %54, %7 : vector<2x384xf32>
    %56 = vector.extract_strided_slice %53 {offsets = [0, 0], sizes = [2, 128], strides = [1, 1]} : vector<2x384xf32> to vector<2x128xf32>
    %57 = vector.extract_strided_slice %55 {offsets = [0, 0], sizes = [2, 128], strides = [1, 1]} : vector<2x384xf32> to vector<2x128xf32>
    %58 = arith.addf %56, %57 : vector<2x128xf32>
    %59 = arith.negf %58 : vector<2x128xf32>
    %60 = math.exp %59 : vector<2x128xf32>
    %cst_23 = arith.constant 1.000000e+00 : f32
    %61 = vector.broadcast %cst_23 : f32 to vector<2x128xf32>
    %62 = arith.addf %61, %60 : vector<2x128xf32>
    %63 = arith.divf %61, %62 : vector<2x128xf32>
    %64 = vector.extract_strided_slice %53 {offsets = [0, 128], sizes = [2, 128], strides = [1, 1]} : vector<2x384xf32> to vector<2x128xf32>
    %65 = vector.extract_strided_slice %55 {offsets = [0, 128], sizes = [2, 128], strides = [1, 1]} : vector<2x384xf32> to vector<2x128xf32>
    %66 = arith.addf %64, %65 : vector<2x128xf32>
    %67 = arith.negf %66 : vector<2x128xf32>
    %68 = math.exp %67 : vector<2x128xf32>
    %cst_24 = arith.constant 1.000000e+00 : f32
    %69 = vector.broadcast %cst_24 : f32 to vector<2x128xf32>
    %70 = arith.addf %69, %68 : vector<2x128xf32>
    %71 = arith.divf %69, %70 : vector<2x128xf32>
    %72 = vector.extract_strided_slice %53 {offsets = [0, 256], sizes = [2, 128], strides = [1, 1]} : vector<2x384xf32> to vector<2x128xf32>
    %73 = vector.extract_strided_slice %55 {offsets = [0, 256], sizes = [2, 128], strides = [1, 1]} : vector<2x384xf32> to vector<2x128xf32>
    %74 = arith.mulf %63, %73 : vector<2x128xf32>
    %75 = arith.addf %72, %74 : vector<2x128xf32>
    %76 = math.tanh %75 : vector<2x128xf32>
    %cst_25 = arith.constant 1.000000e+00 : f32
    %77 = vector.broadcast %cst_25 : f32 to vector<2x128xf32>
    %78 = arith.subf %77, %71 : vector<2x128xf32>
    %79 = arith.mulf %78, %76 : vector<2x128xf32>
    %80 = arith.mulf %71, %49 : vector<2x128xf32>
    %81 = arith.addf %79, %80 : vector<2x128xf32>
    %c1_26 = arith.constant 1 : index
    %c0_27 = arith.constant 0 : index
    %c0_28 = arith.constant 0 : index
    %82 = vector.load %arg1[%c1_26, %c0_27, %c0_28] : memref<8x2x1xf32, #tpu.memory_space<vmem>>, vector<1x2x1xf32>
    %83 = vector.shape_cast %82 : vector<1x2x1xf32> to vector<2x1xf32>
    %84 = vector.broadcast %83 : vector<2x1xf32> to vector<2x128xf32>
    %85 = arith.mulf %84, %81 : vector<2x128xf32>
    %cst_29 = arith.constant 1.000000e+00 : f32
    %86 = vector.broadcast %cst_29 : f32 to vector<2x1xf32>
    %87 = arith.subf %86, %83 : vector<2x1xf32>
    %88 = vector.broadcast %87 : vector<2x1xf32> to vector<2x128xf32>
    %89 = arith.mulf %88, %49 : vector<2x128xf32>
    %90 = arith.addf %85, %89 : vector<2x128xf32>
    %c2 = arith.constant 2 : index
    %c0_30 = arith.constant 0 : index
    %c0_31 = arith.constant 0 : index
    %91 = vector.load %arg0[%c2, %c0_30, %c0_31] : memref<8x2x16xf32, #tpu.memory_space<vmem>>, vector<1x2x16xf32>
    %92 = vector.shape_cast %91 : vector<1x2x16xf32> to vector<2x16xf32>
    %cst_32 = arith.constant dense<0.000000e+00> : vector<2x384xf32>
    %93 = tpu.matmul %92, %0, %cst_32 {dimension_numbers = #tpu.dot_dimension_numbers<[1], [0], [0], [1], [0, 0, 1, 1], [], []>} : vector<2x16xf32>, vector<16x384xf32>, vector<2x384xf32> -> vector<2x384xf32>
    %94 = arith.addf %93, %4 : vector<2x384xf32>
    %cst_33 = arith.constant dense<0.000000e+00> : vector<2x384xf32>
    %95 = tpu.matmul %90, %1, %cst_33 {dimension_numbers = #tpu.dot_dimension_numbers<[1], [0], [0], [1], [0, 0, 1, 1], [], []>} : vector<2x128xf32>, vector<128x384xf32>, vector<2x384xf32> -> vector<2x384xf32>
    %96 = arith.addf %95, %7 : vector<2x384xf32>
    %97 = vector.extract_strided_slice %94 {offsets = [0, 0], sizes = [2, 128], strides = [1, 1]} : vector<2x384xf32> to vector<2x128xf32>
    %98 = vector.extract_strided_slice %96 {offsets = [0, 0], sizes = [2, 128], strides = [1, 1]} : vector<2x384xf32> to vector<2x128xf32>
    %99 = arith.addf %97, %98 : vector<2x128xf32>
    %100 = arith.negf %99 : vector<2x128xf32>
    %101 = math.exp %100 : vector<2x128xf32>
    %cst_34 = arith.constant 1.000000e+00 : f32
    %102 = vector.broadcast %cst_34 : f32 to vector<2x128xf32>
    %103 = arith.addf %102, %101 : vector<2x128xf32>
    %104 = arith.divf %102, %103 : vector<2x128xf32>
    %105 = vector.extract_strided_slice %94 {offsets = [0, 128], sizes = [2, 128], strides = [1, 1]} : vector<2x384xf32> to vector<2x128xf32>
    %106 = vector.extract_strided_slice %96 {offsets = [0, 128], sizes = [2, 128], strides = [1, 1]} : vector<2x384xf32> to vector<2x128xf32>
    %107 = arith.addf %105, %106 : vector<2x128xf32>
    %108 = arith.negf %107 : vector<2x128xf32>
    %109 = math.exp %108 : vector<2x128xf32>
    %cst_35 = arith.constant 1.000000e+00 : f32
    %110 = vector.broadcast %cst_35 : f32 to vector<2x128xf32>
    %111 = arith.addf %110, %109 : vector<2x128xf32>
    %112 = arith.divf %110, %111 : vector<2x128xf32>
    %113 = vector.extract_strided_slice %94 {offsets = [0, 256], sizes = [2, 128], strides = [1, 1]} : vector<2x384xf32> to vector<2x128xf32>
    %114 = vector.extract_strided_slice %96 {offsets = [0, 256], sizes = [2, 128], strides = [1, 1]} : vector<2x384xf32> to vector<2x128xf32>
    %115 = arith.mulf %104, %114 : vector<2x128xf32>
    %116 = arith.addf %113, %115 : vector<2x128xf32>
    %117 = math.tanh %116 : vector<2x128xf32>
    %cst_36 = arith.constant 1.000000e+00 : f32
    %118 = vector.broadcast %cst_36 : f32 to vector<2x128xf32>
    %119 = arith.subf %118, %112 : vector<2x128xf32>
    %120 = arith.mulf %119, %117 : vector<2x128xf32>
    %121 = arith.mulf %112, %90 : vector<2x128xf32>
    %122 = arith.addf %120, %121 : vector<2x128xf32>
    %c2_37 = arith.constant 2 : index
    %c0_38 = arith.constant 0 : index
    %c0_39 = arith.constant 0 : index
    %123 = vector.load %arg1[%c2_37, %c0_38, %c0_39] : memref<8x2x1xf32, #tpu.memory_space<vmem>>, vector<1x2x1xf32>
    %124 = vector.shape_cast %123 : vector<1x2x1xf32> to vector<2x1xf32>
    %125 = vector.broadcast %124 : vector<2x1xf32> to vector<2x128xf32>
    %126 = arith.mulf %125, %122 : vector<2x128xf32>
    %cst_40 = arith.constant 1.000000e+00 : f32
    %127 = vector.broadcast %cst_40 : f32 to vector<2x1xf32>
    %128 = arith.subf %127, %124 : vector<2x1xf32>
    %129 = vector.broadcast %128 : vector<2x1xf32> to vector<2x128xf32>
    %130 = arith.mulf %129, %90 : vector<2x128xf32>
    %131 = arith.addf %126, %130 : vector<2x128xf32>
    %c3 = arith.constant 3 : index
    %c0_41 = arith.constant 0 : index
    %c0_42 = arith.constant 0 : index
    %132 = vector.load %arg0[%c3, %c0_41, %c0_42] : memref<8x2x16xf32, #tpu.memory_space<vmem>>, vector<1x2x16xf32>
    %133 = vector.shape_cast %132 : vector<1x2x16xf32> to vector<2x16xf32>
    %cst_43 = arith.constant dense<0.000000e+00> : vector<2x384xf32>
    %134 = tpu.matmul %133, %0, %cst_43 {dimension_numbers = #tpu.dot_dimension_numbers<[1], [0], [0], [1], [0, 0, 1, 1], [], []>} : vector<2x16xf32>, vector<16x384xf32>, vector<2x384xf32> -> vector<2x384xf32>
    %135 = arith.addf %134, %4 : vector<2x384xf32>
    %cst_44 = arith.constant dense<0.000000e+00> : vector<2x384xf32>
    %136 = tpu.matmul %131, %1, %cst_44 {dimension_numbers = #tpu.dot_dimension_numbers<[1], [0], [0], [1], [0, 0, 1, 1], [], []>} : vector<2x128xf32>, vector<128x384xf32>, vector<2x384xf32> -> vector<2x384xf32>
    %137 = arith.addf %136, %7 : vector<2x384xf32>
    %138 = vector.extract_strided_slice %135 {offsets = [0, 0], sizes = [2, 128], strides = [1, 1]} : vector<2x384xf32> to vector<2x128xf32>
    %139 = vector.extract_strided_slice %137 {offsets = [0, 0], sizes = [2, 128], strides = [1, 1]} : vector<2x384xf32> to vector<2x128xf32>
    %140 = arith.addf %138, %139 : vector<2x128xf32>
    %141 = arith.negf %140 : vector<2x128xf32>
    %142 = math.exp %141 : vector<2x128xf32>
    %cst_45 = arith.constant 1.000000e+00 : f32
    %143 = vector.broadcast %cst_45 : f32 to vector<2x128xf32>
    %144 = arith.addf %143, %142 : vector<2x128xf32>
    %145 = arith.divf %143, %144 : vector<2x128xf32>
    %146 = vector.extract_strided_slice %135 {offsets = [0, 128], sizes = [2, 128], strides = [1, 1]} : vector<2x384xf32> to vector<2x128xf32>
    %147 = vector.extract_strided_slice %137 {offsets = [0, 128], sizes = [2, 128], strides = [1, 1]} : vector<2x384xf32> to vector<2x128xf32>
    %148 = arith.addf %146, %147 : vector<2x128xf32>
    %149 = arith.negf %148 : vector<2x128xf32>
    %150 = math.exp %149 : vector<2x128xf32>
    %cst_46 = arith.constant 1.000000e+00 : f32
    %151 = vector.broadcast %cst_46 : f32 to vector<2x128xf32>
    %152 = arith.addf %151, %150 : vector<2x128xf32>
    %153 = arith.divf %151, %152 : vector<2x128xf32>
    %154 = vector.extract_strided_slice %135 {offsets = [0, 256], sizes = [2, 128], strides = [1, 1]} : vector<2x384xf32> to vector<2x128xf32>
    %155 = vector.extract_strided_slice %137 {offsets = [0, 256], sizes = [2, 128], strides = [1, 1]} : vector<2x384xf32> to vector<2x128xf32>
    %156 = arith.mulf %145, %155 : vector<2x128xf32>
    %157 = arith.addf %154, %156 : vector<2x128xf32>
    %158 = math.tanh %157 : vector<2x128xf32>
    %cst_47 = arith.constant 1.000000e+00 : f32
    %159 = vector.broadcast %cst_47 : f32 to vector<2x128xf32>
    %160 = arith.subf %159, %153 : vector<2x128xf32>
    %161 = arith.mulf %160, %158 : vector<2x128xf32>
    %162 = arith.mulf %153, %131 : vector<2x128xf32>
    %163 = arith.addf %161, %162 : vector<2x128xf32>
    %c3_48 = arith.constant 3 : index
    %c0_49 = arith.constant 0 : index
    %c0_50 = arith.constant 0 : index
    %164 = vector.load %arg1[%c3_48, %c0_49, %c0_50] : memref<8x2x1xf32, #tpu.memory_space<vmem>>, vector<1x2x1xf32>
    %165 = vector.shape_cast %164 : vector<1x2x1xf32> to vector<2x1xf32>
    %166 = vector.broadcast %165 : vector<2x1xf32> to vector<2x128xf32>
    %167 = arith.mulf %166, %163 : vector<2x128xf32>
    %cst_51 = arith.constant 1.000000e+00 : f32
    %168 = vector.broadcast %cst_51 : f32 to vector<2x1xf32>
    %169 = arith.subf %168, %165 : vector<2x1xf32>
    %170 = vector.broadcast %169 : vector<2x1xf32> to vector<2x128xf32>
    %171 = arith.mulf %170, %131 : vector<2x128xf32>
    %172 = arith.addf %167, %171 : vector<2x128xf32>
    %c4 = arith.constant 4 : index
    %c0_52 = arith.constant 0 : index
    %c0_53 = arith.constant 0 : index
    %173 = vector.load %arg0[%c4, %c0_52, %c0_53] : memref<8x2x16xf32, #tpu.memory_space<vmem>>, vector<1x2x16xf32>
    %174 = vector.shape_cast %173 : vector<1x2x16xf32> to vector<2x16xf32>
    %cst_54 = arith.constant dense<0.000000e+00> : vector<2x384xf32>
    %175 = tpu.matmul %174, %0, %cst_54 {dimension_numbers = #tpu.dot_dimension_numbers<[1], [0], [0], [1], [0, 0, 1, 1], [], []>} : vector<2x16xf32>, vector<16x384xf32>, vector<2x384xf32> -> vector<2x384xf32>
    %176 = arith.addf %175, %4 : vector<2x384xf32>
    %cst_55 = arith.constant dense<0.000000e+00> : vector<2x384xf32>
    %177 = tpu.matmul %172, %1, %cst_55 {dimension_numbers = #tpu.dot_dimension_numbers<[1], [0], [0], [1], [0, 0, 1, 1], [], []>} : vector<2x128xf32>, vector<128x384xf32>, vector<2x384xf32> -> vector<2x384xf32>
    %178 = arith.addf %177, %7 : vector<2x384xf32>
    %179 = vector.extract_strided_slice %176 {offsets = [0, 0], sizes = [2, 128], strides = [1, 1]} : vector<2x384xf32> to vector<2x128xf32>
    %180 = vector.extract_strided_slice %178 {offsets = [0, 0], sizes = [2, 128], strides = [1, 1]} : vector<2x384xf32> to vector<2x128xf32>
    %181 = arith.addf %179, %180 : vector<2x128xf32>
    %182 = arith.negf %181 : vector<2x128xf32>
    %183 = math.exp %182 : vector<2x128xf32>
    %cst_56 = arith.constant 1.000000e+00 : f32
    %184 = vector.broadcast %cst_56 : f32 to vector<2x128xf32>
    %185 = arith.addf %184, %183 : vector<2x128xf32>
    %186 = arith.divf %184, %185 : vector<2x128xf32>
    %187 = vector.extract_strided_slice %176 {offsets = [0, 128], sizes = [2, 128], strides = [1, 1]} : vector<2x384xf32> to vector<2x128xf32>
    %188 = vector.extract_strided_slice %178 {offsets = [0, 128], sizes = [2, 128], strides = [1, 1]} : vector<2x384xf32> to vector<2x128xf32>
    %189 = arith.addf %187, %188 : vector<2x128xf32>
    %190 = arith.negf %189 : vector<2x128xf32>
    %191 = math.exp %190 : vector<2x128xf32>
    %cst_57 = arith.constant 1.000000e+00 : f32
    %192 = vector.broadcast %cst_57 : f32 to vector<2x128xf32>
    %193 = arith.addf %192, %191 : vector<2x128xf32>
    %194 = arith.divf %192, %193 : vector<2x128xf32>
    %195 = vector.extract_strided_slice %176 {offsets = [0, 256], sizes = [2, 128], strides = [1, 1]} : vector<2x384xf32> to vector<2x128xf32>
    %196 = vector.extract_strided_slice %178 {offsets = [0, 256], sizes = [2, 128], strides = [1, 1]} : vector<2x384xf32> to vector<2x128xf32>
    %197 = arith.mulf %186, %196 : vector<2x128xf32>
    %198 = arith.addf %195, %197 : vector<2x128xf32>
    %199 = math.tanh %198 : vector<2x128xf32>
    %cst_58 = arith.constant 1.000000e+00 : f32
    %200 = vector.broadcast %cst_58 : f32 to vector<2x128xf32>
    %201 = arith.subf %200, %194 : vector<2x128xf32>
    %202 = arith.mulf %201, %199 : vector<2x128xf32>
    %203 = arith.mulf %194, %172 : vector<2x128xf32>
    %204 = arith.addf %202, %203 : vector<2x128xf32>
    %c4_59 = arith.constant 4 : index
    %c0_60 = arith.constant 0 : index
    %c0_61 = arith.constant 0 : index
    %205 = vector.load %arg1[%c4_59, %c0_60, %c0_61] : memref<8x2x1xf32, #tpu.memory_space<vmem>>, vector<1x2x1xf32>
    %206 = vector.shape_cast %205 : vector<1x2x1xf32> to vector<2x1xf32>
    %207 = vector.broadcast %206 : vector<2x1xf32> to vector<2x128xf32>
    %208 = arith.mulf %207, %204 : vector<2x128xf32>
    %cst_62 = arith.constant 1.000000e+00 : f32
    %209 = vector.broadcast %cst_62 : f32 to vector<2x1xf32>
    %210 = arith.subf %209, %206 : vector<2x1xf32>
    %211 = vector.broadcast %210 : vector<2x1xf32> to vector<2x128xf32>
    %212 = arith.mulf %211, %172 : vector<2x128xf32>
    %213 = arith.addf %208, %212 : vector<2x128xf32>
    %c5 = arith.constant 5 : index
    %c0_63 = arith.constant 0 : index
    %c0_64 = arith.constant 0 : index
    %214 = vector.load %arg0[%c5, %c0_63, %c0_64] : memref<8x2x16xf32, #tpu.memory_space<vmem>>, vector<1x2x16xf32>
    %215 = vector.shape_cast %214 : vector<1x2x16xf32> to vector<2x16xf32>
    %cst_65 = arith.constant dense<0.000000e+00> : vector<2x384xf32>
    %216 = tpu.matmul %215, %0, %cst_65 {dimension_numbers = #tpu.dot_dimension_numbers<[1], [0], [0], [1], [0, 0, 1, 1], [], []>} : vector<2x16xf32>, vector<16x384xf32>, vector<2x384xf32> -> vector<2x384xf32>
    %217 = arith.addf %216, %4 : vector<2x384xf32>
    %cst_66 = arith.constant dense<0.000000e+00> : vector<2x384xf32>
    %218 = tpu.matmul %213, %1, %cst_66 {dimension_numbers = #tpu.dot_dimension_numbers<[1], [0], [0], [1], [0, 0, 1, 1], [], []>} : vector<2x128xf32>, vector<128x384xf32>, vector<2x384xf32> -> vector<2x384xf32>
    %219 = arith.addf %218, %7 : vector<2x384xf32>
    %220 = vector.extract_strided_slice %217 {offsets = [0, 0], sizes = [2, 128], strides = [1, 1]} : vector<2x384xf32> to vector<2x128xf32>
    %221 = vector.extract_strided_slice %219 {offsets = [0, 0], sizes = [2, 128], strides = [1, 1]} : vector<2x384xf32> to vector<2x128xf32>
    %222 = arith.addf %220, %221 : vector<2x128xf32>
    %223 = arith.negf %222 : vector<2x128xf32>
    %224 = math.exp %223 : vector<2x128xf32>
    %cst_67 = arith.constant 1.000000e+00 : f32
    %225 = vector.broadcast %cst_67 : f32 to vector<2x128xf32>
    %226 = arith.addf %225, %224 : vector<2x128xf32>
    %227 = arith.divf %225, %226 : vector<2x128xf32>
    %228 = vector.extract_strided_slice %217 {offsets = [0, 128], sizes = [2, 128], strides = [1, 1]} : vector<2x384xf32> to vector<2x128xf32>
    %229 = vector.extract_strided_slice %219 {offsets = [0, 128], sizes = [2, 128], strides = [1, 1]} : vector<2x384xf32> to vector<2x128xf32>
    %230 = arith.addf %228, %229 : vector<2x128xf32>
    %231 = arith.negf %230 : vector<2x128xf32>
    %232 = math.exp %231 : vector<2x128xf32>
    %cst_68 = arith.constant 1.000000e+00 : f32
    %233 = vector.broadcast %cst_68 : f32 to vector<2x128xf32>
    %234 = arith.addf %233, %232 : vector<2x128xf32>
    %235 = arith.divf %233, %234 : vector<2x128xf32>
    %236 = vector.extract_strided_slice %217 {offsets = [0, 256], sizes = [2, 128], strides = [1, 1]} : vector<2x384xf32> to vector<2x128xf32>
    %237 = vector.extract_strided_slice %219 {offsets = [0, 256], sizes = [2, 128], strides = [1, 1]} : vector<2x384xf32> to vector<2x128xf32>
    %238 = arith.mulf %227, %237 : vector<2x128xf32>
    %239 = arith.addf %236, %238 : vector<2x128xf32>
    %240 = math.tanh %239 : vector<2x128xf32>
    %cst_69 = arith.constant 1.000000e+00 : f32
    %241 = vector.broadcast %cst_69 : f32 to vector<2x128xf32>
    %242 = arith.subf %241, %235 : vector<2x128xf32>
    %243 = arith.mulf %242, %240 : vector<2x128xf32>
    %244 = arith.mulf %235, %213 : vector<2x128xf32>
    %245 = arith.addf %243, %244 : vector<2x128xf32>
    %c5_70 = arith.constant 5 : index
    %c0_71 = arith.constant 0 : index
    %c0_72 = arith.constant 0 : index
    %246 = vector.load %arg1[%c5_70, %c0_71, %c0_72] : memref<8x2x1xf32, #tpu.memory_space<vmem>>, vector<1x2x1xf32>
    %247 = vector.shape_cast %246 : vector<1x2x1xf32> to vector<2x1xf32>
    %248 = vector.broadcast %247 : vector<2x1xf32> to vector<2x128xf32>
    %249 = arith.mulf %248, %245 : vector<2x128xf32>
    %cst_73 = arith.constant 1.000000e+00 : f32
    %250 = vector.broadcast %cst_73 : f32 to vector<2x1xf32>
    %251 = arith.subf %250, %247 : vector<2x1xf32>
    %252 = vector.broadcast %251 : vector<2x1xf32> to vector<2x128xf32>
    %253 = arith.mulf %252, %213 : vector<2x128xf32>
    %254 = arith.addf %249, %253 : vector<2x128xf32>
    %c6 = arith.constant 6 : index
    %c0_74 = arith.constant 0 : index
    %c0_75 = arith.constant 0 : index
    %255 = vector.load %arg0[%c6, %c0_74, %c0_75] : memref<8x2x16xf32, #tpu.memory_space<vmem>>, vector<1x2x16xf32>
    %256 = vector.shape_cast %255 : vector<1x2x16xf32> to vector<2x16xf32>
    %cst_76 = arith.constant dense<0.000000e+00> : vector<2x384xf32>
    %257 = tpu.matmul %256, %0, %cst_76 {dimension_numbers = #tpu.dot_dimension_numbers<[1], [0], [0], [1], [0, 0, 1, 1], [], []>} : vector<2x16xf32>, vector<16x384xf32>, vector<2x384xf32> -> vector<2x384xf32>
    %258 = arith.addf %257, %4 : vector<2x384xf32>
    %cst_77 = arith.constant dense<0.000000e+00> : vector<2x384xf32>
    %259 = tpu.matmul %254, %1, %cst_77 {dimension_numbers = #tpu.dot_dimension_numbers<[1], [0], [0], [1], [0, 0, 1, 1], [], []>} : vector<2x128xf32>, vector<128x384xf32>, vector<2x384xf32> -> vector<2x384xf32>
    %260 = arith.addf %259, %7 : vector<2x384xf32>
    %261 = vector.extract_strided_slice %258 {offsets = [0, 0], sizes = [2, 128], strides = [1, 1]} : vector<2x384xf32> to vector<2x128xf32>
    %262 = vector.extract_strided_slice %260 {offsets = [0, 0], sizes = [2, 128], strides = [1, 1]} : vector<2x384xf32> to vector<2x128xf32>
    %263 = arith.addf %261, %262 : vector<2x128xf32>
    %264 = arith.negf %263 : vector<2x128xf32>
    %265 = math.exp %264 : vector<2x128xf32>
    %cst_78 = arith.constant 1.000000e+00 : f32
    %266 = vector.broadcast %cst_78 : f32 to vector<2x128xf32>
    %267 = arith.addf %266, %265 : vector<2x128xf32>
    %268 = arith.divf %266, %267 : vector<2x128xf32>
    %269 = vector.extract_strided_slice %258 {offsets = [0, 128], sizes = [2, 128], strides = [1, 1]} : vector<2x384xf32> to vector<2x128xf32>
    %270 = vector.extract_strided_slice %260 {offsets = [0, 128], sizes = [2, 128], strides = [1, 1]} : vector<2x384xf32> to vector<2x128xf32>
    %271 = arith.addf %269, %270 : vector<2x128xf32>
    %272 = arith.negf %271 : vector<2x128xf32>
    %273 = math.exp %272 : vector<2x128xf32>
    %cst_79 = arith.constant 1.000000e+00 : f32
    %274 = vector.broadcast %cst_79 : f32 to vector<2x128xf32>
    %275 = arith.addf %274, %273 : vector<2x128xf32>
    %276 = arith.divf %274, %275 : vector<2x128xf32>
    %277 = vector.extract_strided_slice %258 {offsets = [0, 256], sizes = [2, 128], strides = [1, 1]} : vector<2x384xf32> to vector<2x128xf32>
    %278 = vector.extract_strided_slice %260 {offsets = [0, 256], sizes = [2, 128], strides = [1, 1]} : vector<2x384xf32> to vector<2x128xf32>
    %279 = arith.mulf %268, %278 : vector<2x128xf32>
    %280 = arith.addf %277, %279 : vector<2x128xf32>
    %281 = math.tanh %280 : vector<2x128xf32>
    %cst_80 = arith.constant 1.000000e+00 : f32
    %282 = vector.broadcast %cst_80 : f32 to vector<2x128xf32>
    %283 = arith.subf %282, %276 : vector<2x128xf32>
    %284 = arith.mulf %283, %281 : vector<2x128xf32>
    %285 = arith.mulf %276, %254 : vector<2x128xf32>
    %286 = arith.addf %284, %285 : vector<2x128xf32>
    %c6_81 = arith.constant 6 : index
    %c0_82 = arith.constant 0 : index
    %c0_83 = arith.constant 0 : index
    %287 = vector.load %arg1[%c6_81, %c0_82, %c0_83] : memref<8x2x1xf32, #tpu.memory_space<vmem>>, vector<1x2x1xf32>
    %288 = vector.shape_cast %287 : vector<1x2x1xf32> to vector<2x1xf32>
    %289 = vector.broadcast %288 : vector<2x1xf32> to vector<2x128xf32>
    %290 = arith.mulf %289, %286 : vector<2x128xf32>
    %cst_84 = arith.constant 1.000000e+00 : f32
    %291 = vector.broadcast %cst_84 : f32 to vector<2x1xf32>
    %292 = arith.subf %291, %288 : vector<2x1xf32>
    %293 = vector.broadcast %292 : vector<2x1xf32> to vector<2x128xf32>
    %294 = arith.mulf %293, %254 : vector<2x128xf32>
    %295 = arith.addf %290, %294 : vector<2x128xf32>
    %c7 = arith.constant 7 : index
    %c0_85 = arith.constant 0 : index
    %c0_86 = arith.constant 0 : index
    %296 = vector.load %arg0[%c7, %c0_85, %c0_86] : memref<8x2x16xf32, #tpu.memory_space<vmem>>, vector<1x2x16xf32>
    %297 = vector.shape_cast %296 : vector<1x2x16xf32> to vector<2x16xf32>
    %cst_87 = arith.constant dense<0.000000e+00> : vector<2x384xf32>
    %298 = tpu.matmul %297, %0, %cst_87 {dimension_numbers = #tpu.dot_dimension_numbers<[1], [0], [0], [1], [0, 0, 1, 1], [], []>} : vector<2x16xf32>, vector<16x384xf32>, vector<2x384xf32> -> vector<2x384xf32>
    %299 = arith.addf %298, %4 : vector<2x384xf32>
    %cst_88 = arith.constant dense<0.000000e+00> : vector<2x384xf32>
    %300 = tpu.matmul %295, %1, %cst_88 {dimension_numbers = #tpu.dot_dimension_numbers<[1], [0], [0], [1], [0, 0, 1, 1], [], []>} : vector<2x128xf32>, vector<128x384xf32>, vector<2x384xf32> -> vector<2x384xf32>
    %301 = arith.addf %300, %7 : vector<2x384xf32>
    %302 = vector.extract_strided_slice %299 {offsets = [0, 0], sizes = [2, 128], strides = [1, 1]} : vector<2x384xf32> to vector<2x128xf32>
    %303 = vector.extract_strided_slice %301 {offsets = [0, 0], sizes = [2, 128], strides = [1, 1]} : vector<2x384xf32> to vector<2x128xf32>
    %304 = arith.addf %302, %303 : vector<2x128xf32>
    %305 = arith.negf %304 : vector<2x128xf32>
    %306 = math.exp %305 : vector<2x128xf32>
    %cst_89 = arith.constant 1.000000e+00 : f32
    %307 = vector.broadcast %cst_89 : f32 to vector<2x128xf32>
    %308 = arith.addf %307, %306 : vector<2x128xf32>
    %309 = arith.divf %307, %308 : vector<2x128xf32>
    %310 = vector.extract_strided_slice %299 {offsets = [0, 128], sizes = [2, 128], strides = [1, 1]} : vector<2x384xf32> to vector<2x128xf32>
    %311 = vector.extract_strided_slice %301 {offsets = [0, 128], sizes = [2, 128], strides = [1, 1]} : vector<2x384xf32> to vector<2x128xf32>
    %312 = arith.addf %310, %311 : vector<2x128xf32>
    %313 = arith.negf %312 : vector<2x128xf32>
    %314 = math.exp %313 : vector<2x128xf32>
    %cst_90 = arith.constant 1.000000e+00 : f32
    %315 = vector.broadcast %cst_90 : f32 to vector<2x128xf32>
    %316 = arith.addf %315, %314 : vector<2x128xf32>
    %317 = arith.divf %315, %316 : vector<2x128xf32>
    %318 = vector.extract_strided_slice %299 {offsets = [0, 256], sizes = [2, 128], strides = [1, 1]} : vector<2x384xf32> to vector<2x128xf32>
    %319 = vector.extract_strided_slice %301 {offsets = [0, 256], sizes = [2, 128], strides = [1, 1]} : vector<2x384xf32> to vector<2x128xf32>
    %320 = arith.mulf %309, %319 : vector<2x128xf32>
    %321 = arith.addf %318, %320 : vector<2x128xf32>
    %322 = math.tanh %321 : vector<2x128xf32>
    %cst_91 = arith.constant 1.000000e+00 : f32
    %323 = vector.broadcast %cst_91 : f32 to vector<2x128xf32>
    %324 = arith.subf %323, %317 : vector<2x128xf32>
    %325 = arith.mulf %324, %322 : vector<2x128xf32>
    %326 = arith.mulf %317, %295 : vector<2x128xf32>
    %327 = arith.addf %325, %326 : vector<2x128xf32>
    %c7_92 = arith.constant 7 : index
    %c0_93 = arith.constant 0 : index
    %c0_94 = arith.constant 0 : index
    %328 = vector.load %arg1[%c7_92, %c0_93, %c0_94] : memref<8x2x1xf32, #tpu.memory_space<vmem>>, vector<1x2x1xf32>
    %329 = vector.shape_cast %328 : vector<1x2x1xf32> to vector<2x1xf32>
    %330 = vector.broadcast %329 : vector<2x1xf32> to vector<2x128xf32>
    %331 = arith.mulf %330, %327 : vector<2x128xf32>
    %cst_95 = arith.constant 1.000000e+00 : f32
    %332 = vector.broadcast %cst_95 : f32 to vector<2x1xf32>
    %333 = arith.subf %332, %329 : vector<2x1xf32>
    %334 = vector.broadcast %333 : vector<2x1xf32> to vector<2x128xf32>
    %335 = arith.mulf %334, %295 : vector<2x128xf32>
    %336 = arith.addf %331, %335 : vector<2x128xf32>
    %c0_96 = arith.constant 0 : index
    %c0_97 = arith.constant 0 : index
    %337 = vector.load %arg10[%c0_96, %c0_97] : memref<128x16xf32, #tpu.memory_space<vmem>>, vector<128x16xf32>
    %cst_98 = arith.constant dense<0.000000e+00> : vector<2x16xf32>
    %338 = tpu.matmul %336, %337, %cst_98 {dimension_numbers = #tpu.dot_dimension_numbers<[1], [0], [0], [1], [0, 0, 1, 1], [], []>} : vector<2x128xf32>, vector<128x16xf32>, vector<2x16xf32> -> vector<2x16xf32>
    %c0_99 = arith.constant 0 : index
    %c0_100 = arith.constant 0 : index
    %339 = vector.load %arg11[%c0_99, %c0_100] : memref<1x16xf32, #tpu.memory_space<vmem>>, vector<1x16xf32>
    %340 = vector.broadcast %339 : vector<1x16xf32> to vector<2x16xf32>
    %341 = arith.addf %338, %340 : vector<2x16xf32>
    %c0_101 = arith.constant 0 : index
    %c0_102 = arith.constant 0 : index
    %342 = vector.load %arg12[%c0_101, %c0_102] : memref<128x16xf32, #tpu.memory_space<vmem>>, vector<128x16xf32>
    %cst_103 = arith.constant dense<0.000000e+00> : vector<2x16xf32>
    %343 = tpu.matmul %336, %342, %cst_103 {dimension_numbers = #tpu.dot_dimension_numbers<[1], [0], [0], [1], [0, 0, 1, 1], [], []>} : vector<2x128xf32>, vector<128x16xf32>, vector<2x16xf32> -> vector<2x16xf32>
    %c0_104 = arith.constant 0 : index
    %c0_105 = arith.constant 0 : index
    %344 = vector.load %arg13[%c0_104, %c0_105] : memref<1x16xf32, #tpu.memory_space<vmem>>, vector<1x16xf32>
    %345 = vector.broadcast %344 : vector<1x16xf32> to vector<2x16xf32>
    %346 = arith.addf %343, %345 : vector<2x16xf32>
    %347 = math.exp %346 : vector<2x16xf32>
    %c0_106 = arith.constant 0 : index
    %c0_107 = arith.constant 0 : index
    %348 = vector.load %arg2[%c0_106, %c0_107] : memref<2x16xf32, #tpu.memory_space<vmem>>, vector<2x16xf32>
    %349 = arith.mulf %347, %348 : vector<2x16xf32>
    %350 = arith.addf %341, %349 : vector<2x16xf32>
    %c0_108 = arith.constant 0 : index
    %c0_109 = arith.constant 0 : index
    %351 = vector.load %arg37[%c0_108, %c0_109] : memref<2x16xf32, #tpu.memory_space<vmem>>, vector<2x16xf32>
    tpu.vector_store %arg37[%c0_108, %c0_109], %350 {strides = array<i32>} : memref<2x16xf32, #tpu.memory_space<vmem>>, vector<2x16xf32>,
    %c0_110 = arith.constant 0 : index
    %c0_111 = arith.constant 0 : index
    %352 = vector.load %arg14[%c0_110, %c0_111] : memref<16x384xf32, #tpu.memory_space<vmem>>, vector<16x384xf32>
    %c0_112 = arith.constant 0 : index
    %c0_113 = arith.constant 0 : index
    %353 = vector.load %arg16[%c0_112, %c0_113] : memref<128x384xf32, #tpu.memory_space<vmem>>, vector<128x384xf32>
    %c0_114 = arith.constant 0 : index
    %c0_115 = arith.constant 0 : index
    %354 = vector.load %arg18[%c0_114, %c0_115] : memref<1x384xf32, #tpu.memory_space<vmem>>, vector<1x384xf32>
    %355 = vector.shape_cast %354 : vector<1x384xf32> to vector<1x384xf32>
    %356 = vector.broadcast %355 : vector<1x384xf32> to vector<2x384xf32>
    %c0_116 = arith.constant 0 : index
    %c0_117 = arith.constant 0 : index
    %357 = vector.load %arg15[%c0_116, %c0_117] : memref<16x384xf32, #tpu.memory_space<vmem>>, vector<16x384xf32>
    %cst_118 = arith.constant dense<0.000000e+00> : vector<2x384xf32>
    %358 = tpu.matmul %350, %357, %cst_118 {dimension_numbers = #tpu.dot_dimension_numbers<[1], [0], [0], [1], [0, 0, 1, 1], [], []>} : vector<2x16xf32>, vector<16x384xf32>, vector<2x384xf32> -> vector<2x384xf32>
    %c0_119 = arith.constant 0 : index
    %c0_120 = arith.constant 0 : index
    %359 = vector.load %arg17[%c0_119, %c0_120] : memref<1x384xf32, #tpu.memory_space<vmem>>, vector<1x384xf32>
    %360 = vector.shape_cast %359 : vector<1x384xf32> to vector<1x384xf32>
    %361 = vector.broadcast %360 : vector<1x384xf32> to vector<2x384xf32>
    %362 = arith.addf %358, %361 : vector<2x384xf32>
    %c0_121 = arith.constant 0 : index
    %c0_122 = arith.constant 0 : index
    %363 = vector.load %arg21[%c0_121, %c0_122] : memref<128x128xf32, #tpu.memory_space<vmem>>, vector<128x128xf32>
    %c0_123 = arith.constant 0 : index
    %c0_124 = arith.constant 0 : index
    %364 = vector.load %arg22[%c0_123, %c0_124] : memref<1x128xf32, #tpu.memory_space<vmem>>, vector<1x128xf32>
    %365 = vector.shape_cast %364 : vector<1x128xf32> to vector<1x128xf32>
    %366 = vector.broadcast %365 : vector<1x128xf32> to vector<2x128xf32>
    %c0_125 = arith.constant 0 : index
    %c0_126 = arith.constant 0 : index
    %367 = vector.load %arg19[%c0_125, %c0_126] : memref<16x128xf32, #tpu.memory_space<vmem>>, vector<16x128xf32>
    %cst_127 = arith.constant dense<0.000000e+00> : vector<2x128xf32>
    %368 = tpu.matmul %350, %367, %cst_127 {dimension_numbers = #tpu.dot_dimension_numbers<[1], [0], [0], [1], [0, 0, 1, 1], [], []>} : vector<2x16xf32>, vector<16x128xf32>, vector<2x128xf32> -> vector<2x128xf32>
    %c0_128 = arith.constant 0 : index
    %c0_129 = arith.constant 0 : index
    %369 = vector.load %arg20[%c0_128, %c0_129] : memref<1x128xf32, #tpu.memory_space<vmem>>, vector<1x128xf32>
    %370 = vector.broadcast %369 : vector<1x128xf32> to vector<2x128xf32>
    %371 = arith.addf %368, %370 : vector<2x128xf32>
    %372 = math.tanh %371 : vector<2x128xf32>
    %c0_130 = arith.constant 0 : index
    %c0_131 = arith.constant 0 : index
    %c0_132 = arith.constant 0 : index
    %373 = vector.load %arg0[%c0_130, %c0_131, %c0_132] : memref<8x2x16xf32, #tpu.memory_space<vmem>>, vector<1x2x16xf32>
    %374 = vector.shape_cast %373 : vector<1x2x16xf32> to vector<2x16xf32>
    %cst_133 = arith.constant dense<0.000000e+00> : vector<2x384xf32>
    %375 = tpu.matmul %374, %352, %cst_133 {dimension_numbers = #tpu.dot_dimension_numbers<[1], [0], [0], [1], [0, 0, 1, 1], [], []>} : vector<2x16xf32>, vector<16x384xf32>, vector<2x384xf32> -> vector<2x384xf32>
    %376 = arith.addf %375, %362 : vector<2x384xf32>
    %cst_134 = arith.constant dense<0.000000e+00> : vector<2x384xf32>
    %377 = tpu.matmul %372, %353, %cst_134 {dimension_numbers = #tpu.dot_dimension_numbers<[1], [0], [0], [1], [0, 0, 1, 1], [], []>} : vector<2x128xf32>, vector<128x384xf32>, vector<2x384xf32> -> vector<2x384xf32>
    %378 = arith.addf %377, %356 : vector<2x384xf32>
    %379 = vector.extract_strided_slice %376 {offsets = [0, 0], sizes = [2, 128], strides = [1, 1]} : vector<2x384xf32> to vector<2x128xf32>
    %380 = vector.extract_strided_slice %378 {offsets = [0, 0], sizes = [2, 128], strides = [1, 1]} : vector<2x384xf32> to vector<2x128xf32>
    %381 = arith.addf %379, %380 : vector<2x128xf32>
    %382 = arith.negf %381 : vector<2x128xf32>
    %383 = math.exp %382 : vector<2x128xf32>
    %cst_135 = arith.constant 1.000000e+00 : f32
    %384 = vector.broadcast %cst_135 : f32 to vector<2x128xf32>
    %385 = arith.addf %384, %383 : vector<2x128xf32>
    %386 = arith.divf %384, %385 : vector<2x128xf32>
    %387 = vector.extract_strided_slice %376 {offsets = [0, 128], sizes = [2, 128], strides = [1, 1]} : vector<2x384xf32> to vector<2x128xf32>
    %388 = vector.extract_strided_slice %378 {offsets = [0, 128], sizes = [2, 128], strides = [1, 1]} : vector<2x384xf32> to vector<2x128xf32>
    %389 = arith.addf %387, %388 : vector<2x128xf32>
    %390 = arith.negf %389 : vector<2x128xf32>
    %391 = math.exp %390 : vector<2x128xf32>
    %cst_136 = arith.constant 1.000000e+00 : f32
    %392 = vector.broadcast %cst_136 : f32 to vector<2x128xf32>
    %393 = arith.addf %392, %391 : vector<2x128xf32>
    %394 = arith.divf %392, %393 : vector<2x128xf32>
    %395 = vector.extract_strided_slice %376 {offsets = [0, 256], sizes = [2, 128], strides = [1, 1]} : vector<2x384xf32> to vector<2x128xf32>
    %396 = vector.extract_strided_slice %378 {offsets = [0, 256], sizes = [2, 128], strides = [1, 1]} : vector<2x384xf32> to vector<2x128xf32>
    %397 = arith.mulf %386, %396 : vector<2x128xf32>
    %398 = arith.addf %395, %397 : vector<2x128xf32>
    %399 = math.tanh %398 : vector<2x128xf32>
    %cst_137 = arith.constant 1.000000e+00 : f32
    %400 = vector.broadcast %cst_137 : f32 to vector<2x128xf32>
    %401 = arith.subf %400, %394 : vector<2x128xf32>
    %402 = arith.mulf %401, %399 : vector<2x128xf32>
    %403 = arith.mulf %394, %372 : vector<2x128xf32>
    %404 = arith.addf %402, %403 : vector<2x128xf32>
    %cst_138 = arith.constant dense<0.000000e+00> : vector<2x128xf32>
    %405 = tpu.matmul %404, %363, %cst_138 {dimension_numbers = #tpu.dot_dimension_numbers<[1], [0], [0], [1], [0, 0, 1, 1], [], []>} : vector<2x128xf32>, vector<128x128xf32>, vector<2x128xf32> -> vector<2x128xf32>
    %406 = arith.addf %405, %366 : vector<2x128xf32>
    %c0_139 = arith.constant 0 : index
    %c0_140 = arith.constant 0 : index
    %c0_141 = arith.constant 0 : index
    %407 = vector.load %arg35[%c0_139, %c0_140, %c0_141] : memref<2x8x128xf32, #tpu.memory_space<vmem>>, vector<2x1x128xf32>
    %408 = vector.shape_cast %407 : vector<2x1x128xf32> to vector<2x128xf32>
    %409 = vector.shape_cast %406 : vector<2x128xf32> to vector<2x1x128xf32>
    tpu.vector_store %arg35[%c0_139, %c0_140, %c0_141], %409 {strides = array<i32>} : memref<2x8x128xf32, #tpu.memory_space<vmem>>, vector<2x1x128xf32>,
    %c1_142 = arith.constant 1 : index
    %c0_143 = arith.constant 0 : index
    %c0_144 = arith.constant 0 : index
    %410 = vector.load %arg0[%c1_142, %c0_143, %c0_144] : memref<8x2x16xf32, #tpu.memory_space<vmem>>, vector<1x2x16xf32>
    %411 = vector.shape_cast %410 : vector<1x2x16xf32> to vector<2x16xf32>
    %cst_145 = arith.constant dense<0.000000e+00> : vector<2x384xf32>
    %412 = tpu.matmul %411, %352, %cst_145 {dimension_numbers = #tpu.dot_dimension_numbers<[1], [0], [0], [1], [0, 0, 1, 1], [], []>} : vector<2x16xf32>, vector<16x384xf32>, vector<2x384xf32> -> vector<2x384xf32>
    %413 = arith.addf %412, %362 : vector<2x384xf32>
    %cst_146 = arith.constant dense<0.000000e+00> : vector<2x384xf32>
    %414 = tpu.matmul %404, %353, %cst_146 {dimension_numbers = #tpu.dot_dimension_numbers<[1], [0], [0], [1], [0, 0, 1, 1], [], []>} : vector<2x128xf32>, vector<128x384xf32>, vector<2x384xf32> -> vector<2x384xf32>
    %415 = arith.addf %414, %356 : vector<2x384xf32>
    %416 = vector.extract_strided_slice %413 {offsets = [0, 0], sizes = [2, 128], strides = [1, 1]} : vector<2x384xf32> to vector<2x128xf32>
    %417 = vector.extract_strided_slice %415 {offsets = [0, 0], sizes = [2, 128], strides = [1, 1]} : vector<2x384xf32> to vector<2x128xf32>
    %418 = arith.addf %416, %417 : vector<2x128xf32>
    %419 = arith.negf %418 : vector<2x128xf32>
    %420 = math.exp %419 : vector<2x128xf32>
    %cst_147 = arith.constant 1.000000e+00 : f32
    %421 = vector.broadcast %cst_147 : f32 to vector<2x128xf32>
    %422 = arith.addf %421, %420 : vector<2x128xf32>
    %423 = arith.divf %421, %422 : vector<2x128xf32>
    %424 = vector.extract_strided_slice %413 {offsets = [0, 128], sizes = [2, 128], strides = [1, 1]} : vector<2x384xf32> to vector<2x128xf32>
    %425 = vector.extract_strided_slice %415 {offsets = [0, 128], sizes = [2, 128], strides = [1, 1]} : vector<2x384xf32> to vector<2x128xf32>
    %426 = arith.addf %424, %425 : vector<2x128xf32>
    %427 = arith.negf %426 : vector<2x128xf32>
    %428 = math.exp %427 : vector<2x128xf32>
    %cst_148 = arith.constant 1.000000e+00 : f32
    %429 = vector.broadcast %cst_148 : f32 to vector<2x128xf32>
    %430 = arith.addf %429, %428 : vector<2x128xf32>
    %431 = arith.divf %429, %430 : vector<2x128xf32>
    %432 = vector.extract_strided_slice %413 {offsets = [0, 256], sizes = [2, 128], strides = [1, 1]} : vector<2x384xf32> to vector<2x128xf32>
    %433 = vector.extract_strided_slice %415 {offsets = [0, 256], sizes = [2, 128], strides = [1, 1]} : vector<2x384xf32> to vector<2x128xf32>
    %434 = arith.mulf %423, %433 : vector<2x128xf32>
    %435 = arith.addf %432, %434 : vector<2x128xf32>
    %436 = math.tanh %435 : vector<2x128xf32>
    %cst_149 = arith.constant 1.000000e+00 : f32
    %437 = vector.broadcast %cst_149 : f32 to vector<2x128xf32>
    %438 = arith.subf %437, %431 : vector<2x128xf32>
    %439 = arith.mulf %438, %436 : vector<2x128xf32>
    %440 = arith.mulf %431, %404 : vector<2x128xf32>
    %441 = arith.addf %439, %440 : vector<2x128xf32>
    %cst_150 = arith.constant dense<0.000000e+00> : vector<2x128xf32>
    %442 = tpu.matmul %441, %363, %cst_150 {dimension_numbers = #tpu.dot_dimension_numbers<[1], [0], [0], [1], [0, 0, 1, 1], [], []>} : vector<2x128xf32>, vector<128x128xf32>, vector<2x128xf32> -> vector<2x128xf32>
    %443 = arith.addf %442, %366 : vector<2x128xf32>
    %c0_151 = arith.constant 0 : index
    %c1_152 = arith.constant 1 : index
    %c0_153 = arith.constant 0 : index
    %444 = vector.load %arg35[%c0_151, %c1_152, %c0_153] : memref<2x8x128xf32, #tpu.memory_space<vmem>>, vector<2x1x128xf32>
    %445 = vector.shape_cast %444 : vector<2x1x128xf32> to vector<2x128xf32>
    %446 = vector.shape_cast %443 : vector<2x128xf32> to vector<2x1x128xf32>
    tpu.vector_store %arg35[%c0_151, %c1_152, %c0_153], %446 {strides = array<i32>} : memref<2x8x128xf32, #tpu.memory_space<vmem>>, vector<2x1x128xf32>,
    %c2_154 = arith.constant 2 : index
    %c0_155 = arith.constant 0 : index
    %c0_156 = arith.constant 0 : index
    %447 = vector.load %arg0[%c2_154, %c0_155, %c0_156] : memref<8x2x16xf32, #tpu.memory_space<vmem>>, vector<1x2x16xf32>
    %448 = vector.shape_cast %447 : vector<1x2x16xf32> to vector<2x16xf32>
    %cst_157 = arith.constant dense<0.000000e+00> : vector<2x384xf32>
    %449 = tpu.matmul %448, %352, %cst_157 {dimension_numbers = #tpu.dot_dimension_numbers<[1], [0], [0], [1], [0, 0, 1, 1], [], []>} : vector<2x16xf32>, vector<16x384xf32>, vector<2x384xf32> -> vector<2x384xf32>
    %450 = arith.addf %449, %362 : vector<2x384xf32>
    %cst_158 = arith.constant dense<0.000000e+00> : vector<2x384xf32>
    %451 = tpu.matmul %441, %353, %cst_158 {dimension_numbers = #tpu.dot_dimension_numbers<[1], [0], [0], [1], [0, 0, 1, 1], [], []>} : vector<2x128xf32>, vector<128x384xf32>, vector<2x384xf32> -> vector<2x384xf32>
    %452 = arith.addf %451, %356 : vector<2x384xf32>
    %453 = vector.extract_strided_slice %450 {offsets = [0, 0], sizes = [2, 128], strides = [1, 1]} : vector<2x384xf32> to vector<2x128xf32>
    %454 = vector.extract_strided_slice %452 {offsets = [0, 0], sizes = [2, 128], strides = [1, 1]} : vector<2x384xf32> to vector<2x128xf32>
    %455 = arith.addf %453, %454 : vector<2x128xf32>
    %456 = arith.negf %455 : vector<2x128xf32>
    %457 = math.exp %456 : vector<2x128xf32>
    %cst_159 = arith.constant 1.000000e+00 : f32
    %458 = vector.broadcast %cst_159 : f32 to vector<2x128xf32>
    %459 = arith.addf %458, %457 : vector<2x128xf32>
    %460 = arith.divf %458, %459 : vector<2x128xf32>
    %461 = vector.extract_strided_slice %450 {offsets = [0, 128], sizes = [2, 128], strides = [1, 1]} : vector<2x384xf32> to vector<2x128xf32>
    %462 = vector.extract_strided_slice %452 {offsets = [0, 128], sizes = [2, 128], strides = [1, 1]} : vector<2x384xf32> to vector<2x128xf32>
    %463 = arith.addf %461, %462 : vector<2x128xf32>
    %464 = arith.negf %463 : vector<2x128xf32>
    %465 = math.exp %464 : vector<2x128xf32>
    %cst_160 = arith.constant 1.000000e+00 : f32
    %466 = vector.broadcast %cst_160 : f32 to vector<2x128xf32>
    %467 = arith.addf %466, %465 : vector<2x128xf32>
    %468 = arith.divf %466, %467 : vector<2x128xf32>
    %469 = vector.extract_strided_slice %450 {offsets = [0, 256], sizes = [2, 128], strides = [1, 1]} : vector<2x384xf32> to vector<2x128xf32>
    %470 = vector.extract_strided_slice %452 {offsets = [0, 256], sizes = [2, 128], strides = [1, 1]} : vector<2x384xf32> to vector<2x128xf32>
    %471 = arith.mulf %460, %470 : vector<2x128xf32>
    %472 = arith.addf %469, %471 : vector<2x128xf32>
    %473 = math.tanh %472 : vector<2x128xf32>
    %cst_161 = arith.constant 1.000000e+00 : f32
    %474 = vector.broadcast %cst_161 : f32 to vector<2x128xf32>
    %475 = arith.subf %474, %468 : vector<2x128xf32>
    %476 = arith.mulf %475, %473 : vector<2x128xf32>
    %477 = arith.mulf %468, %441 : vector<2x128xf32>
    %478 = arith.addf %476, %477 : vector<2x128xf32>
    %cst_162 = arith.constant dense<0.000000e+00> : vector<2x128xf32>
    %479 = tpu.matmul %478, %363, %cst_162 {dimension_numbers = #tpu.dot_dimension_numbers<[1], [0], [0], [1], [0, 0, 1, 1], [], []>} : vector<2x128xf32>, vector<128x128xf32>, vector<2x128xf32> -> vector<2x128xf32>
    %480 = arith.addf %479, %366 : vector<2x128xf32>
    %c0_163 = arith.constant 0 : index
    %c2_164 = arith.constant 2 : index
    %c0_165 = arith.constant 0 : index
    %481 = vector.load %arg35[%c0_163, %c2_164, %c0_165] : memref<2x8x128xf32, #tpu.memory_space<vmem>>, vector<2x1x128xf32>
    %482 = vector.shape_cast %481 : vector<2x1x128xf32> to vector<2x128xf32>
    %483 = vector.shape_cast %480 : vector<2x128xf32> to vector<2x1x128xf32>
    tpu.vector_store %arg35[%c0_163, %c2_164, %c0_165], %483 {strides = array<i32>} : memref<2x8x128xf32, #tpu.memory_space<vmem>>, vector<2x1x128xf32>,
    %c3_166 = arith.constant 3 : index
    %c0_167 = arith.constant 0 : index
    %c0_168 = arith.constant 0 : index
    %484 = vector.load %arg0[%c3_166, %c0_167, %c0_168] : memref<8x2x16xf32, #tpu.memory_space<vmem>>, vector<1x2x16xf32>
    %485 = vector.shape_cast %484 : vector<1x2x16xf32> to vector<2x16xf32>
    %cst_169 = arith.constant dense<0.000000e+00> : vector<2x384xf32>
    %486 = tpu.matmul %485, %352, %cst_169 {dimension_numbers = #tpu.dot_dimension_numbers<[1], [0], [0], [1], [0, 0, 1, 1], [], []>} : vector<2x16xf32>, vector<16x384xf32>, vector<2x384xf32> -> vector<2x384xf32>
    %487 = arith.addf %486, %362 : vector<2x384xf32>
    %cst_170 = arith.constant dense<0.000000e+00> : vector<2x384xf32>
    %488 = tpu.matmul %478, %353, %cst_170 {dimension_numbers = #tpu.dot_dimension_numbers<[1], [0], [0], [1], [0, 0, 1, 1], [], []>} : vector<2x128xf32>, vector<128x384xf32>, vector<2x384xf32> -> vector<2x384xf32>
    %489 = arith.addf %488, %356 : vector<2x384xf32>
    %490 = vector.extract_strided_slice %487 {offsets = [0, 0], sizes = [2, 128], strides = [1, 1]} : vector<2x384xf32> to vector<2x128xf32>
    %491 = vector.extract_strided_slice %489 {offsets = [0, 0], sizes = [2, 128], strides = [1, 1]} : vector<2x384xf32> to vector<2x128xf32>
    %492 = arith.addf %490, %491 : vector<2x128xf32>
    %493 = arith.negf %492 : vector<2x128xf32>
    %494 = math.exp %493 : vector<2x128xf32>
    %cst_171 = arith.constant 1.000000e+00 : f32
    %495 = vector.broadcast %cst_171 : f32 to vector<2x128xf32>
    %496 = arith.addf %495, %494 : vector<2x128xf32>
    %497 = arith.divf %495, %496 : vector<2x128xf32>
    %498 = vector.extract_strided_slice %487 {offsets = [0, 128], sizes = [2, 128], strides = [1, 1]} : vector<2x384xf32> to vector<2x128xf32>
    %499 = vector.extract_strided_slice %489 {offsets = [0, 128], sizes = [2, 128], strides = [1, 1]} : vector<2x384xf32> to vector<2x128xf32>
    %500 = arith.addf %498, %499 : vector<2x128xf32>
    %501 = arith.negf %500 : vector<2x128xf32>
    %502 = math.exp %501 : vector<2x128xf32>
    %cst_172 = arith.constant 1.000000e+00 : f32
    %503 = vector.broadcast %cst_172 : f32 to vector<2x128xf32>
    %504 = arith.addf %503, %502 : vector<2x128xf32>
    %505 = arith.divf %503, %504 : vector<2x128xf32>
    %506 = vector.extract_strided_slice %487 {offsets = [0, 256], sizes = [2, 128], strides = [1, 1]} : vector<2x384xf32> to vector<2x128xf32>
    %507 = vector.extract_strided_slice %489 {offsets = [0, 256], sizes = [2, 128], strides = [1, 1]} : vector<2x384xf32> to vector<2x128xf32>
    %508 = arith.mulf %497, %507 : vector<2x128xf32>
    %509 = arith.addf %506, %508 : vector<2x128xf32>
    %510 = math.tanh %509 : vector<2x128xf32>
    %cst_173 = arith.constant 1.000000e+00 : f32
    %511 = vector.broadcast %cst_173 : f32 to vector<2x128xf32>
    %512 = arith.subf %511, %505 : vector<2x128xf32>
    %513 = arith.mulf %512, %510 : vector<2x128xf32>
    %514 = arith.mulf %505, %478 : vector<2x128xf32>
    %515 = arith.addf %513, %514 : vector<2x128xf32>
    %cst_174 = arith.constant dense<0.000000e+00> : vector<2x128xf32>
    %516 = tpu.matmul %515, %363, %cst_174 {dimension_numbers = #tpu.dot_dimension_numbers<[1], [0], [0], [1], [0, 0, 1, 1], [], []>} : vector<2x128xf32>, vector<128x128xf32>, vector<2x128xf32> -> vector<2x128xf32>
    %517 = arith.addf %516, %366 : vector<2x128xf32>
    %c0_175 = arith.constant 0 : index
    %c3_176 = arith.constant 3 : index
    %c0_177 = arith.constant 0 : index
    %518 = vector.load %arg35[%c0_175, %c3_176, %c0_177] : memref<2x8x128xf32, #tpu.memory_space<vmem>>, vector<2x1x128xf32>
    %519 = vector.shape_cast %518 : vector<2x1x128xf32> to vector<2x128xf32>
    %520 = vector.shape_cast %517 : vector<2x128xf32> to vector<2x1x128xf32>
    tpu.vector_store %arg35[%c0_175, %c3_176, %c0_177], %520 {strides = array<i32>} : memref<2x8x128xf32, #tpu.memory_space<vmem>>, vector<2x1x128xf32>,
    %c4_178 = arith.constant 4 : index
    %c0_179 = arith.constant 0 : index
    %c0_180 = arith.constant 0 : index
    %521 = vector.load %arg0[%c4_178, %c0_179, %c0_180] : memref<8x2x16xf32, #tpu.memory_space<vmem>>, vector<1x2x16xf32>
    %522 = vector.shape_cast %521 : vector<1x2x16xf32> to vector<2x16xf32>
    %cst_181 = arith.constant dense<0.000000e+00> : vector<2x384xf32>
    %523 = tpu.matmul %522, %352, %cst_181 {dimension_numbers = #tpu.dot_dimension_numbers<[1], [0], [0], [1], [0, 0, 1, 1], [], []>} : vector<2x16xf32>, vector<16x384xf32>, vector<2x384xf32> -> vector<2x384xf32>
    %524 = arith.addf %523, %362 : vector<2x384xf32>
    %cst_182 = arith.constant dense<0.000000e+00> : vector<2x384xf32>
    %525 = tpu.matmul %515, %353, %cst_182 {dimension_numbers = #tpu.dot_dimension_numbers<[1], [0], [0], [1], [0, 0, 1, 1], [], []>} : vector<2x128xf32>, vector<128x384xf32>, vector<2x384xf32> -> vector<2x384xf32>
    %526 = arith.addf %525, %356 : vector<2x384xf32>
    %527 = vector.extract_strided_slice %524 {offsets = [0, 0], sizes = [2, 128], strides = [1, 1]} : vector<2x384xf32> to vector<2x128xf32>
    %528 = vector.extract_strided_slice %526 {offsets = [0, 0], sizes = [2, 128], strides = [1, 1]} : vector<2x384xf32> to vector<2x128xf32>
    %529 = arith.addf %527, %528 : vector<2x128xf32>
    %530 = arith.negf %529 : vector<2x128xf32>
    %531 = math.exp %530 : vector<2x128xf32>
    %cst_183 = arith.constant 1.000000e+00 : f32
    %532 = vector.broadcast %cst_183 : f32 to vector<2x128xf32>
    %533 = arith.addf %532, %531 : vector<2x128xf32>
    %534 = arith.divf %532, %533 : vector<2x128xf32>
    %535 = vector.extract_strided_slice %524 {offsets = [0, 128], sizes = [2, 128], strides = [1, 1]} : vector<2x384xf32> to vector<2x128xf32>
    %536 = vector.extract_strided_slice %526 {offsets = [0, 128], sizes = [2, 128], strides = [1, 1]} : vector<2x384xf32> to vector<2x128xf32>
    %537 = arith.addf %535, %536 : vector<2x128xf32>
    %538 = arith.negf %537 : vector<2x128xf32>
    %539 = math.exp %538 : vector<2x128xf32>
    %cst_184 = arith.constant 1.000000e+00 : f32
    %540 = vector.broadcast %cst_184 : f32 to vector<2x128xf32>
    %541 = arith.addf %540, %539 : vector<2x128xf32>
    %542 = arith.divf %540, %541 : vector<2x128xf32>
    %543 = vector.extract_strided_slice %524 {offsets = [0, 256], sizes = [2, 128], strides = [1, 1]} : vector<2x384xf32> to vector<2x128xf32>
    %544 = vector.extract_strided_slice %526 {offsets = [0, 256], sizes = [2, 128], strides = [1, 1]} : vector<2x384xf32> to vector<2x128xf32>
    %545 = arith.mulf %534, %544 : vector<2x128xf32>
    %546 = arith.addf %543, %545 : vector<2x128xf32>
    %547 = math.tanh %546 : vector<2x128xf32>
    %cst_185 = arith.constant 1.000000e+00 : f32
    %548 = vector.broadcast %cst_185 : f32 to vector<2x128xf32>
    %549 = arith.subf %548, %542 : vector<2x128xf32>
    %550 = arith.mulf %549, %547 : vector<2x128xf32>
    %551 = arith.mulf %542, %515 : vector<2x128xf32>
    %552 = arith.addf %550, %551 : vector<2x128xf32>
    %cst_186 = arith.constant dense<0.000000e+00> : vector<2x128xf32>
    %553 = tpu.matmul %552, %363, %cst_186 {dimension_numbers = #tpu.dot_dimension_numbers<[1], [0], [0], [1], [0, 0, 1, 1], [], []>} : vector<2x128xf32>, vector<128x128xf32>, vector<2x128xf32> -> vector<2x128xf32>
    %554 = arith.addf %553, %366 : vector<2x128xf32>
    %c0_187 = arith.constant 0 : index
    %c4_188 = arith.constant 4 : index
    %c0_189 = arith.constant 0 : index
    %555 = vector.load %arg35[%c0_187, %c4_188, %c0_189] : memref<2x8x128xf32, #tpu.memory_space<vmem>>, vector<2x1x128xf32>
    %556 = vector.shape_cast %555 : vector<2x1x128xf32> to vector<2x128xf32>
    %557 = vector.shape_cast %554 : vector<2x128xf32> to vector<2x1x128xf32>
    tpu.vector_store %arg35[%c0_187, %c4_188, %c0_189], %557 {strides = array<i32>} : memref<2x8x128xf32, #tpu.memory_space<vmem>>, vector<2x1x128xf32>,
    %c5_190 = arith.constant 5 : index
    %c0_191 = arith.constant 0 : index
    %c0_192 = arith.constant 0 : index
    %558 = vector.load %arg0[%c5_190, %c0_191, %c0_192] : memref<8x2x16xf32, #tpu.memory_space<vmem>>, vector<1x2x16xf32>
    %559 = vector.shape_cast %558 : vector<1x2x16xf32> to vector<2x16xf32>
    %cst_193 = arith.constant dense<0.000000e+00> : vector<2x384xf32>
    %560 = tpu.matmul %559, %352, %cst_193 {dimension_numbers = #tpu.dot_dimension_numbers<[1], [0], [0], [1], [0, 0, 1, 1], [], []>} : vector<2x16xf32>, vector<16x384xf32>, vector<2x384xf32> -> vector<2x384xf32>
    %561 = arith.addf %560, %362 : vector<2x384xf32>
    %cst_194 = arith.constant dense<0.000000e+00> : vector<2x384xf32>
    %562 = tpu.matmul %552, %353, %cst_194 {dimension_numbers = #tpu.dot_dimension_numbers<[1], [0], [0], [1], [0, 0, 1, 1], [], []>} : vector<2x128xf32>, vector<128x384xf32>, vector<2x384xf32> -> vector<2x384xf32>
    %563 = arith.addf %562, %356 : vector<2x384xf32>
    %564 = vector.extract_strided_slice %561 {offsets = [0, 0], sizes = [2, 128], strides = [1, 1]} : vector<2x384xf32> to vector<2x128xf32>
    %565 = vector.extract_strided_slice %563 {offsets = [0, 0], sizes = [2, 128], strides = [1, 1]} : vector<2x384xf32> to vector<2x128xf32>
    %566 = arith.addf %564, %565 : vector<2x128xf32>
    %567 = arith.negf %566 : vector<2x128xf32>
    %568 = math.exp %567 : vector<2x128xf32>
    %cst_195 = arith.constant 1.000000e+00 : f32
    %569 = vector.broadcast %cst_195 : f32 to vector<2x128xf32>
    %570 = arith.addf %569, %568 : vector<2x128xf32>
    %571 = arith.divf %569, %570 : vector<2x128xf32>
    %572 = vector.extract_strided_slice %561 {offsets = [0, 128], sizes = [2, 128], strides = [1, 1]} : vector<2x384xf32> to vector<2x128xf32>
    %573 = vector.extract_strided_slice %563 {offsets = [0, 128], sizes = [2, 128], strides = [1, 1]} : vector<2x384xf32> to vector<2x128xf32>
    %574 = arith.addf %572, %573 : vector<2x128xf32>
    %575 = arith.negf %574 : vector<2x128xf32>
    %576 = math.exp %575 : vector<2x128xf32>
    %cst_196 = arith.constant 1.000000e+00 : f32
    %577 = vector.broadcast %cst_196 : f32 to vector<2x128xf32>
    %578 = arith.addf %577, %576 : vector<2x128xf32>
    %579 = arith.divf %577, %578 : vector<2x128xf32>
    %580 = vector.extract_strided_slice %561 {offsets = [0, 256], sizes = [2, 128], strides = [1, 1]} : vector<2x384xf32> to vector<2x128xf32>
    %581 = vector.extract_strided_slice %563 {offsets = [0, 256], sizes = [2, 128], strides = [1, 1]} : vector<2x384xf32> to vector<2x128xf32>
    %582 = arith.mulf %571, %581 : vector<2x128xf32>
    %583 = arith.addf %580, %582 : vector<2x128xf32>
    %584 = math.tanh %583 : vector<2x128xf32>
    %cst_197 = arith.constant 1.000000e+00 : f32
    %585 = vector.broadcast %cst_197 : f32 to vector<2x128xf32>
    %586 = arith.subf %585, %579 : vector<2x128xf32>
    %587 = arith.mulf %586, %584 : vector<2x128xf32>
    %588 = arith.mulf %579, %552 : vector<2x128xf32>
    %589 = arith.addf %587, %588 : vector<2x128xf32>
    %cst_198 = arith.constant dense<0.000000e+00> : vector<2x128xf32>
    %590 = tpu.matmul %589, %363, %cst_198 {dimension_numbers = #tpu.dot_dimension_numbers<[1], [0], [0], [1], [0, 0, 1, 1], [], []>} : vector<2x128xf32>, vector<128x128xf32>, vector<2x128xf32> -> vector<2x128xf32>
    %591 = arith.addf %590, %366 : vector<2x128xf32>
    %c0_199 = arith.constant 0 : index
    %c5_200 = arith.constant 5 : index
    %c0_201 = arith.constant 0 : index
    %592 = vector.load %arg35[%c0_199, %c5_200, %c0_201] : memref<2x8x128xf32, #tpu.memory_space<vmem>>, vector<2x1x128xf32>
    %593 = vector.shape_cast %592 : vector<2x1x128xf32> to vector<2x128xf32>
    %594 = vector.shape_cast %591 : vector<2x128xf32> to vector<2x1x128xf32>
    tpu.vector_store %arg35[%c0_199, %c5_200, %c0_201], %594 {strides = array<i32>} : memref<2x8x128xf32, #tpu.memory_space<vmem>>, vector<2x1x128xf32>,
    %c6_202 = arith.constant 6 : index
    %c0_203 = arith.constant 0 : index
    %c0_204 = arith.constant 0 : index
    %595 = vector.load %arg0[%c6_202, %c0_203, %c0_204] : memref<8x2x16xf32, #tpu.memory_space<vmem>>, vector<1x2x16xf32>
    %596 = vector.shape_cast %595 : vector<1x2x16xf32> to vector<2x16xf32>
    %cst_205 = arith.constant dense<0.000000e+00> : vector<2x384xf32>
    %597 = tpu.matmul %596, %352, %cst_205 {dimension_numbers = #tpu.dot_dimension_numbers<[1], [0], [0], [1], [0, 0, 1, 1], [], []>} : vector<2x16xf32>, vector<16x384xf32>, vector<2x384xf32> -> vector<2x384xf32>
    %598 = arith.addf %597, %362 : vector<2x384xf32>
    %cst_206 = arith.constant dense<0.000000e+00> : vector<2x384xf32>
    %599 = tpu.matmul %589, %353, %cst_206 {dimension_numbers = #tpu.dot_dimension_numbers<[1], [0], [0], [1], [0, 0, 1, 1], [], []>} : vector<2x128xf32>, vector<128x384xf32>, vector<2x384xf32> -> vector<2x384xf32>
    %600 = arith.addf %599, %356 : vector<2x384xf32>
    %601 = vector.extract_strided_slice %598 {offsets = [0, 0], sizes = [2, 128], strides = [1, 1]} : vector<2x384xf32> to vector<2x128xf32>
    %602 = vector.extract_strided_slice %600 {offsets = [0, 0], sizes = [2, 128], strides = [1, 1]} : vector<2x384xf32> to vector<2x128xf32>
    %603 = arith.addf %601, %602 : vector<2x128xf32>
    %604 = arith.negf %603 : vector<2x128xf32>
    %605 = math.exp %604 : vector<2x128xf32>
    %cst_207 = arith.constant 1.000000e+00 : f32
    %606 = vector.broadcast %cst_207 : f32 to vector<2x128xf32>
    %607 = arith.addf %606, %605 : vector<2x128xf32>
    %608 = arith.divf %606, %607 : vector<2x128xf32>
    %609 = vector.extract_strided_slice %598 {offsets = [0, 128], sizes = [2, 128], strides = [1, 1]} : vector<2x384xf32> to vector<2x128xf32>
    %610 = vector.extract_strided_slice %600 {offsets = [0, 128], sizes = [2, 128], strides = [1, 1]} : vector<2x384xf32> to vector<2x128xf32>
    %611 = arith.addf %609, %610 : vector<2x128xf32>
    %612 = arith.negf %611 : vector<2x128xf32>
    %613 = math.exp %612 : vector<2x128xf32>
    %cst_208 = arith.constant 1.000000e+00 : f32
    %614 = vector.broadcast %cst_208 : f32 to vector<2x128xf32>
    %615 = arith.addf %614, %613 : vector<2x128xf32>
    %616 = arith.divf %614, %615 : vector<2x128xf32>
    %617 = vector.extract_strided_slice %598 {offsets = [0, 256], sizes = [2, 128], strides = [1, 1]} : vector<2x384xf32> to vector<2x128xf32>
    %618 = vector.extract_strided_slice %600 {offsets = [0, 256], sizes = [2, 128], strides = [1, 1]} : vector<2x384xf32> to vector<2x128xf32>
    %619 = arith.mulf %608, %618 : vector<2x128xf32>
    %620 = arith.addf %617, %619 : vector<2x128xf32>
    %621 = math.tanh %620 : vector<2x128xf32>
    %cst_209 = arith.constant 1.000000e+00 : f32
    %622 = vector.broadcast %cst_209 : f32 to vector<2x128xf32>
    %623 = arith.subf %622, %616 : vector<2x128xf32>
    %624 = arith.mulf %623, %621 : vector<2x128xf32>
    %625 = arith.mulf %616, %589 : vector<2x128xf32>
    %626 = arith.addf %624, %625 : vector<2x128xf32>
    %cst_210 = arith.constant dense<0.000000e+00> : vector<2x128xf32>
    %627 = tpu.matmul %626, %363, %cst_210 {dimension_numbers = #tpu.dot_dimension_numbers<[1], [0], [0], [1], [0, 0, 1, 1], [], []>} : vector<2x128xf32>, vector<128x128xf32>, vector<2x128xf32> -> vector<2x128xf32>
    %628 = arith.addf %627, %366 : vector<2x128xf32>
    %c0_211 = arith.constant 0 : index
    %c6_212 = arith.constant 6 : index
    %c0_213 = arith.constant 0 : index
    %629 = vector.load %arg35[%c0_211, %c6_212, %c0_213] : memref<2x8x128xf32, #tpu.memory_space<vmem>>, vector<2x1x128xf32>
    %630 = vector.shape_cast %629 : vector<2x1x128xf32> to vector<2x128xf32>
    %631 = vector.shape_cast %628 : vector<2x128xf32> to vector<2x1x128xf32>
    tpu.vector_store %arg35[%c0_211, %c6_212, %c0_213], %631 {strides = array<i32>} : memref<2x8x128xf32, #tpu.memory_space<vmem>>, vector<2x1x128xf32>,
    %c7_214 = arith.constant 7 : index
    %c0_215 = arith.constant 0 : index
    %c0_216 = arith.constant 0 : index
    %632 = vector.load %arg0[%c7_214, %c0_215, %c0_216] : memref<8x2x16xf32, #tpu.memory_space<vmem>>, vector<1x2x16xf32>
    %633 = vector.shape_cast %632 : vector<1x2x16xf32> to vector<2x16xf32>
    %cst_217 = arith.constant dense<0.000000e+00> : vector<2x384xf32>
    %634 = tpu.matmul %633, %352, %cst_217 {dimension_numbers = #tpu.dot_dimension_numbers<[1], [0], [0], [1], [0, 0, 1, 1], [], []>} : vector<2x16xf32>, vector<16x384xf32>, vector<2x384xf32> -> vector<2x384xf32>
    %635 = arith.addf %634, %362 : vector<2x384xf32>
    %cst_218 = arith.constant dense<0.000000e+00> : vector<2x384xf32>
    %636 = tpu.matmul %626, %353, %cst_218 {dimension_numbers = #tpu.dot_dimension_numbers<[1], [0], [0], [1], [0, 0, 1, 1], [], []>} : vector<2x128xf32>, vector<128x384xf32>, vector<2x384xf32> -> vector<2x384xf32>
    %637 = arith.addf %636, %356 : vector<2x384xf32>
    %638 = vector.extract_strided_slice %635 {offsets = [0, 0], sizes = [2, 128], strides = [1, 1]} : vector<2x384xf32> to vector<2x128xf32>
    %639 = vector.extract_strided_slice %637 {offsets = [0, 0], sizes = [2, 128], strides = [1, 1]} : vector<2x384xf32> to vector<2x128xf32>
    %640 = arith.addf %638, %639 : vector<2x128xf32>
    %641 = arith.negf %640 : vector<2x128xf32>
    %642 = math.exp %641 : vector<2x128xf32>
    %cst_219 = arith.constant 1.000000e+00 : f32
    %643 = vector.broadcast %cst_219 : f32 to vector<2x128xf32>
    %644 = arith.addf %643, %642 : vector<2x128xf32>
    %645 = arith.divf %643, %644 : vector<2x128xf32>
    %646 = vector.extract_strided_slice %635 {offsets = [0, 128], sizes = [2, 128], strides = [1, 1]} : vector<2x384xf32> to vector<2x128xf32>
    %647 = vector.extract_strided_slice %637 {offsets = [0, 128], sizes = [2, 128], strides = [1, 1]} : vector<2x384xf32> to vector<2x128xf32>
    %648 = arith.addf %646, %647 : vector<2x128xf32>
    %649 = arith.negf %648 : vector<2x128xf32>
    %650 = math.exp %649 : vector<2x128xf32>
    %cst_220 = arith.constant 1.000000e+00 : f32
    %651 = vector.broadcast %cst_220 : f32 to vector<2x128xf32>
    %652 = arith.addf %651, %650 : vector<2x128xf32>
    %653 = arith.divf %651, %652 : vector<2x128xf32>
    %654 = vector.extract_strided_slice %635 {offsets = [0, 256], sizes = [2, 128], strides = [1, 1]} : vector<2x384xf32> to vector<2x128xf32>
    %655 = vector.extract_strided_slice %637 {offsets = [0, 256], sizes = [2, 128], strides = [1, 1]} : vector<2x384xf32> to vector<2x128xf32>
    %656 = arith.mulf %645, %655 : vector<2x128xf32>
    %657 = arith.addf %654, %656 : vector<2x128xf32>
    %658 = math.tanh %657 : vector<2x128xf32>
    %cst_221 = arith.constant 1.000000e+00 : f32
    %659 = vector.broadcast %cst_221 : f32 to vector<2x128xf32>
    %660 = arith.subf %659, %653 : vector<2x128xf32>
    %661 = arith.mulf %660, %658 : vector<2x128xf32>
    %662 = arith.mulf %653, %626 : vector<2x128xf32>
    %663 = arith.addf %661, %662 : vector<2x128xf32>
    %cst_222 = arith.constant dense<0.000000e+00> : vector<2x128xf32>
    %664 = tpu.matmul %663, %363, %cst_222 {dimension_numbers = #tpu.dot_dimension_numbers<[1], [0], [0], [1], [0, 0, 1, 1], [], []>} : vector<2x128xf32>, vector<128x128xf32>, vector<2x128xf32> -> vector<2x128xf32>
    %665 = arith.addf %664, %366 : vector<2x128xf32>
    %c0_223 = arith.constant 0 : index
    %c7_224 = arith.constant 7 : index
    %c0_225 = arith.constant 0 : index
    %666 = vector.load %arg35[%c0_223, %c7_224, %c0_225] : memref<2x8x128xf32, #tpu.memory_space<vmem>>, vector<2x1x128xf32>
    %667 = vector.shape_cast %666 : vector<2x1x128xf32> to vector<2x128xf32>
    %668 = vector.shape_cast %665 : vector<2x128xf32> to vector<2x1x128xf32>
    tpu.vector_store %arg35[%c0_223, %c7_224, %c0_225], %668 {strides = array<i32>} : memref<2x8x128xf32, #tpu.memory_space<vmem>>, vector<2x1x128xf32>,
    %c0_226 = arith.constant 0 : index
    %c0_227 = arith.constant 0 : index
    %669 = vector.load %arg3[%c0_226, %c0_227] : memref<4x2xf32, #tpu.memory_space<vmem>>, vector<4x2xf32>
    %cst_228 = arith.constant dense<0.000000e+00> : vector<4x16xf32>
    %670 = tpu.matmul %669, %350, %cst_228 {dimension_numbers = #tpu.dot_dimension_numbers<[1], [0], [0], [1], [0, 0, 1, 1], [], []>} : vector<4x2xf32>, vector<2x16xf32>, vector<4x16xf32> -> vector<4x16xf32>
    %c0_229 = arith.constant 0 : index
    %c0_230 = arith.constant 0 : index
    %671 = vector.load %arg4[%c0_229, %c0_230] : memref<4x512xf32, #tpu.memory_space<vmem>>, vector<4x512xf32>
    %c0_231 = arith.constant 0 : index
    %c0_232 = arith.constant 0 : index
    %672 = vector.load %arg23[%c0_231, %c0_232] : memref<512x32xf32, #tpu.memory_space<vmem>>, vector<512x32xf32>
    %cst_233 = arith.constant dense<0.000000e+00> : vector<4x32xf32>
    %673 = tpu.matmul %671, %672, %cst_233 {dimension_numbers = #tpu.dot_dimension_numbers<[1], [0], [0], [1], [0, 0, 1, 1], [], []>} : vector<4x512xf32>, vector<512x32xf32>, vector<4x32xf32> -> vector<4x32xf32>
    %c0_234 = arith.constant 0 : index
    %c0_235 = arith.constant 0 : index
    %674 = vector.load %arg24[%c0_234, %c0_235] : memref<1x32xf32, #tpu.memory_space<vmem>>, vector<1x32xf32>
    %675 = vector.broadcast %674 : vector<1x32xf32> to vector<4x32xf32>
    %676 = arith.addf %673, %675 : vector<4x32xf32>
    %677 = math.tanh %676 : vector<4x32xf32>
    %c0_236 = arith.constant 0 : index
    %c0_237 = arith.constant 0 : index
    %678 = vector.load %arg25[%c0_236, %c0_237] : memref<6x384xf32, #tpu.memory_space<vmem>>, vector<6x384xf32>
    %c0_238 = arith.constant 0 : index
    %c0_239 = arith.constant 0 : index
    %679 = vector.load %arg28[%c0_238, %c0_239] : memref<128x384xf32, #tpu.memory_space<vmem>>, vector<128x384xf32>
    %c0_240 = arith.constant 0 : index
    %c0_241 = arith.constant 0 : index
    %680 = vector.load %arg30[%c0_240, %c0_241] : memref<1x384xf32, #tpu.memory_space<vmem>>, vector<1x384xf32>
    %681 = vector.shape_cast %680 : vector<1x384xf32> to vector<1x384xf32>
    %682 = vector.broadcast %681 : vector<1x384xf32> to vector<4x384xf32>
    %c0_242 = arith.constant 0 : index
    %c0_243 = arith.constant 0 : index
    %683 = vector.load %arg26[%c0_242, %c0_243] : memref<32x384xf32, #tpu.memory_space<vmem>>, vector<32x384xf32>
    %cst_244 = arith.constant dense<0.000000e+00> : vector<4x384xf32>
    %684 = tpu.matmul %677, %683, %cst_244 {dimension_numbers = #tpu.dot_dimension_numbers<[1], [0], [0], [1], [0, 0, 1, 1], [], []>} : vector<4x32xf32>, vector<32x384xf32>, vector<4x384xf32> -> vector<4x384xf32>
    %c0_245 = arith.constant 0 : index
    %c0_246 = arith.constant 0 : index
    %685 = vector.load %arg27[%c0_245, %c0_246] : memref<16x384xf32, #tpu.memory_space<vmem>>, vector<16x384xf32>
    %cst_247 = arith.constant dense<0.000000e+00> : vector<4x384xf32>
    %686 = tpu.matmul %670, %685, %cst_247 {dimension_numbers = #tpu.dot_dimension_numbers<[1], [0], [0], [1], [0, 0, 1, 1], [], []>} : vector<4x16xf32>, vector<16x384xf32>, vector<4x384xf32> -> vector<4x384xf32>
    %687 = arith.addf %684, %686 : vector<4x384xf32>
    %c0_248 = arith.constant 0 : index
    %c0_249 = arith.constant 0 : index
    %688 = vector.load %arg29[%c0_248, %c0_249] : memref<1x384xf32, #tpu.memory_space<vmem>>, vector<1x384xf32>
    %689 = vector.shape_cast %688 : vector<1x384xf32> to vector<1x384xf32>
    %690 = vector.broadcast %689 : vector<1x384xf32> to vector<4x384xf32>
    %691 = arith.addf %687, %690 : vector<4x384xf32>
    %c0_250 = arith.constant 0 : index
    %c0_251 = arith.constant 0 : index
    %692 = vector.load %arg33[%c0_250, %c0_251] : memref<128x128xf32, #tpu.memory_space<vmem>>, vector<128x128xf32>
    %c0_252 = arith.constant 0 : index
    %c0_253 = arith.constant 0 : index
    %693 = vector.load %arg34[%c0_252, %c0_253] : memref<1x128xf32, #tpu.memory_space<vmem>>, vector<1x128xf32>
    %694 = vector.shape_cast %693 : vector<1x128xf32> to vector<1x128xf32>
    %695 = vector.broadcast %694 : vector<1x128xf32> to vector<4x128xf32>
    %c0_254 = arith.constant 0 : index
    %c0_255 = arith.constant 0 : index
    %696 = vector.load %arg31[%c0_254, %c0_255] : memref<16x128xf32, #tpu.memory_space<vmem>>, vector<16x128xf32>
    %cst_256 = arith.constant dense<0.000000e+00> : vector<4x128xf32>
    %697 = tpu.matmul %670, %696, %cst_256 {dimension_numbers = #tpu.dot_dimension_numbers<[1], [0], [0], [1], [0, 0, 1, 1], [], []>} : vector<4x16xf32>, vector<16x128xf32>, vector<4x128xf32> -> vector<4x128xf32>
    %c0_257 = arith.constant 0 : index
    %c0_258 = arith.constant 0 : index
    %698 = vector.load %arg32[%c0_257, %c0_258] : memref<1x128xf32, #tpu.memory_space<vmem>>, vector<1x128xf32>
    %699 = vector.broadcast %698 : vector<1x128xf32> to vector<4x128xf32>
    %700 = arith.addf %697, %699 : vector<4x128xf32>
    %701 = math.tanh %700 : vector<4x128xf32>
    %c0_259 = arith.constant 0 : index
    %c0_260 = arith.constant 0 : index
    %c0_261 = arith.constant 0 : index
    %702 = vector.load %arg5[%c0_259, %c0_260, %c0_261] : memref<5x4x6xf32, #tpu.memory_space<vmem>>, vector<1x4x6xf32>
    %703 = vector.shape_cast %702 : vector<1x4x6xf32> to vector<4x6xf32>
    %cst_262 = arith.constant dense<0.000000e+00> : vector<4x384xf32>
    %704 = tpu.matmul %703, %678, %cst_262 {dimension_numbers = #tpu.dot_dimension_numbers<[1], [0], [0], [1], [0, 0, 1, 1], [], []>} : vector<4x6xf32>, vector<6x384xf32>, vector<4x384xf32> -> vector<4x384xf32>
    %705 = arith.addf %704, %691 : vector<4x384xf32>
    %cst_263 = arith.constant dense<0.000000e+00> : vector<4x384xf32>
    %706 = tpu.matmul %701, %679, %cst_263 {dimension_numbers = #tpu.dot_dimension_numbers<[1], [0], [0], [1], [0, 0, 1, 1], [], []>} : vector<4x128xf32>, vector<128x384xf32>, vector<4x384xf32> -> vector<4x384xf32>
    %707 = arith.addf %706, %682 : vector<4x384xf32>
    %708 = vector.extract_strided_slice %705 {offsets = [0, 0], sizes = [4, 128], strides = [1, 1]} : vector<4x384xf32> to vector<4x128xf32>
    %709 = vector.extract_strided_slice %707 {offsets = [0, 0], sizes = [4, 128], strides = [1, 1]} : vector<4x384xf32> to vector<4x128xf32>
    %710 = arith.addf %708, %709 : vector<4x128xf32>
    %711 = arith.negf %710 : vector<4x128xf32>
    %712 = math.exp %711 : vector<4x128xf32>
    %cst_264 = arith.constant 1.000000e+00 : f32
    %713 = vector.broadcast %cst_264 : f32 to vector<4x128xf32>
    %714 = arith.addf %713, %712 : vector<4x128xf32>
    %715 = arith.divf %713, %714 : vector<4x128xf32>
    %716 = vector.extract_strided_slice %705 {offsets = [0, 128], sizes = [4, 128], strides = [1, 1]} : vector<4x384xf32> to vector<4x128xf32>
    %717 = vector.extract_strided_slice %707 {offsets = [0, 128], sizes = [4, 128], strides = [1, 1]} : vector<4x384xf32> to vector<4x128xf32>
    %718 = arith.addf %716, %717 : vector<4x128xf32>
    %719 = arith.negf %718 : vector<4x128xf32>
    %720 = math.exp %719 : vector<4x128xf32>
    %cst_265 = arith.constant 1.000000e+00 : f32
    %721 = vector.broadcast %cst_265 : f32 to vector<4x128xf32>
    %722 = arith.addf %721, %720 : vector<4x128xf32>
    %723 = arith.divf %721, %722 : vector<4x128xf32>
    %724 = vector.extract_strided_slice %705 {offsets = [0, 256], sizes = [4, 128], strides = [1, 1]} : vector<4x384xf32> to vector<4x128xf32>
    %725 = vector.extract_strided_slice %707 {offsets = [0, 256], sizes = [4, 128], strides = [1, 1]} : vector<4x384xf32> to vector<4x128xf32>
    %726 = arith.mulf %715, %725 : vector<4x128xf32>
    %727 = arith.addf %724, %726 : vector<4x128xf32>
    %728 = math.tanh %727 : vector<4x128xf32>
    %cst_266 = arith.constant 1.000000e+00 : f32
    %729 = vector.broadcast %cst_266 : f32 to vector<4x128xf32>
    %730 = arith.subf %729, %723 : vector<4x128xf32>
    %731 = arith.mulf %730, %728 : vector<4x128xf32>
    %732 = arith.mulf %723, %701 : vector<4x128xf32>
    %733 = arith.addf %731, %732 : vector<4x128xf32>
    %cst_267 = arith.constant dense<0.000000e+00> : vector<4x128xf32>
    %734 = tpu.matmul %733, %692, %cst_267 {dimension_numbers = #tpu.dot_dimension_numbers<[1], [0], [0], [1], [0, 0, 1, 1], [], []>} : vector<4x128xf32>, vector<128x128xf32>, vector<4x128xf32> -> vector<4x128xf32>
    %735 = arith.addf %734, %695 : vector<4x128xf32>
    %c0_268 = arith.constant 0 : index
    %c0_269 = arith.constant 0 : index
    %c0_270 = arith.constant 0 : index
    %736 = vector.load %arg36[%c0_268, %c0_269, %c0_270] : memref<4x5x128xf32, #tpu.memory_space<vmem>>, vector<4x1x128xf32>
    %737 = vector.shape_cast %736 : vector<4x1x128xf32> to vector<4x128xf32>
    %738 = vector.shape_cast %735 : vector<4x128xf32> to vector<4x1x128xf32>
    tpu.vector_store %arg36[%c0_268, %c0_269, %c0_270], %738 {strides = array<i32>} : memref<4x5x128xf32, #tpu.memory_space<vmem>>, vector<4x1x128xf32>,
    %c1_271 = arith.constant 1 : index
    %c0_272 = arith.constant 0 : index
    %c0_273 = arith.constant 0 : index
    %739 = vector.load %arg5[%c1_271, %c0_272, %c0_273] : memref<5x4x6xf32, #tpu.memory_space<vmem>>, vector<1x4x6xf32>
    %740 = vector.shape_cast %739 : vector<1x4x6xf32> to vector<4x6xf32>
    %cst_274 = arith.constant dense<0.000000e+00> : vector<4x384xf32>
    %741 = tpu.matmul %740, %678, %cst_274 {dimension_numbers = #tpu.dot_dimension_numbers<[1], [0], [0], [1], [0, 0, 1, 1], [], []>} : vector<4x6xf32>, vector<6x384xf32>, vector<4x384xf32> -> vector<4x384xf32>
    %742 = arith.addf %741, %691 : vector<4x384xf32>
    %cst_275 = arith.constant dense<0.000000e+00> : vector<4x384xf32>
    %743 = tpu.matmul %733, %679, %cst_275 {dimension_numbers = #tpu.dot_dimension_numbers<[1], [0], [0], [1], [0, 0, 1, 1], [], []>} : vector<4x128xf32>, vector<128x384xf32>, vector<4x384xf32> -> vector<4x384xf32>
    %744 = arith.addf %743, %682 : vector<4x384xf32>
    %745 = vector.extract_strided_slice %742 {offsets = [0, 0], sizes = [4, 128], strides = [1, 1]} : vector<4x384xf32> to vector<4x128xf32>
    %746 = vector.extract_strided_slice %744 {offsets = [0, 0], sizes = [4, 128], strides = [1, 1]} : vector<4x384xf32> to vector<4x128xf32>
    %747 = arith.addf %745, %746 : vector<4x128xf32>
    %748 = arith.negf %747 : vector<4x128xf32>
    %749 = math.exp %748 : vector<4x128xf32>
    %cst_276 = arith.constant 1.000000e+00 : f32
    %750 = vector.broadcast %cst_276 : f32 to vector<4x128xf32>
    %751 = arith.addf %750, %749 : vector<4x128xf32>
    %752 = arith.divf %750, %751 : vector<4x128xf32>
    %753 = vector.extract_strided_slice %742 {offsets = [0, 128], sizes = [4, 128], strides = [1, 1]} : vector<4x384xf32> to vector<4x128xf32>
    %754 = vector.extract_strided_slice %744 {offsets = [0, 128], sizes = [4, 128], strides = [1, 1]} : vector<4x384xf32> to vector<4x128xf32>
    %755 = arith.addf %753, %754 : vector<4x128xf32>
    %756 = arith.negf %755 : vector<4x128xf32>
    %757 = math.exp %756 : vector<4x128xf32>
    %cst_277 = arith.constant 1.000000e+00 : f32
    %758 = vector.broadcast %cst_277 : f32 to vector<4x128xf32>
    %759 = arith.addf %758, %757 : vector<4x128xf32>
    %760 = arith.divf %758, %759 : vector<4x128xf32>
    %761 = vector.extract_strided_slice %742 {offsets = [0, 256], sizes = [4, 128], strides = [1, 1]} : vector<4x384xf32> to vector<4x128xf32>
    %762 = vector.extract_strided_slice %744 {offsets = [0, 256], sizes = [4, 128], strides = [1, 1]} : vector<4x384xf32> to vector<4x128xf32>
    %763 = arith.mulf %752, %762 : vector<4x128xf32>
    %764 = arith.addf %761, %763 : vector<4x128xf32>
    %765 = math.tanh %764 : vector<4x128xf32>
    %cst_278 = arith.constant 1.000000e+00 : f32
    %766 = vector.broadcast %cst_278 : f32 to vector<4x128xf32>
    %767 = arith.subf %766, %760 : vector<4x128xf32>
    %768 = arith.mulf %767, %765 : vector<4x128xf32>
    %769 = arith.mulf %760, %733 : vector<4x128xf32>
    %770 = arith.addf %768, %769 : vector<4x128xf32>
    %cst_279 = arith.constant dense<0.000000e+00> : vector<4x128xf32>
    %771 = tpu.matmul %770, %692, %cst_279 {dimension_numbers = #tpu.dot_dimension_numbers<[1], [0], [0], [1], [0, 0, 1, 1], [], []>} : vector<4x128xf32>, vector<128x128xf32>, vector<4x128xf32> -> vector<4x128xf32>
    %772 = arith.addf %771, %695 : vector<4x128xf32>
    %c0_280 = arith.constant 0 : index
    %c1_281 = arith.constant 1 : index
    %c0_282 = arith.constant 0 : index
    %773 = vector.load %arg36[%c0_280, %c1_281, %c0_282] : memref<4x5x128xf32, #tpu.memory_space<vmem>>, vector<4x1x128xf32>
    %774 = vector.shape_cast %773 : vector<4x1x128xf32> to vector<4x128xf32>
    %775 = vector.shape_cast %772 : vector<4x128xf32> to vector<4x1x128xf32>
    tpu.vector_store %arg36[%c0_280, %c1_281, %c0_282], %775 {strides = array<i32>} : memref<4x5x128xf32, #tpu.memory_space<vmem>>, vector<4x1x128xf32>,
    %c2_283 = arith.constant 2 : index
    %c0_284 = arith.constant 0 : index
    %c0_285 = arith.constant 0 : index
    %776 = vector.load %arg5[%c2_283, %c0_284, %c0_285] : memref<5x4x6xf32, #tpu.memory_space<vmem>>, vector<1x4x6xf32>
    %777 = vector.shape_cast %776 : vector<1x4x6xf32> to vector<4x6xf32>
    %cst_286 = arith.constant dense<0.000000e+00> : vector<4x384xf32>
    %778 = tpu.matmul %777, %678, %cst_286 {dimension_numbers = #tpu.dot_dimension_numbers<[1], [0], [0], [1], [0, 0, 1, 1], [], []>} : vector<4x6xf32>, vector<6x384xf32>, vector<4x384xf32> -> vector<4x384xf32>
    %779 = arith.addf %778, %691 : vector<4x384xf32>
    %cst_287 = arith.constant dense<0.000000e+00> : vector<4x384xf32>
    %780 = tpu.matmul %770, %679, %cst_287 {dimension_numbers = #tpu.dot_dimension_numbers<[1], [0], [0], [1], [0, 0, 1, 1], [], []>} : vector<4x128xf32>, vector<128x384xf32>, vector<4x384xf32> -> vector<4x384xf32>
    %781 = arith.addf %780, %682 : vector<4x384xf32>
    %782 = vector.extract_strided_slice %779 {offsets = [0, 0], sizes = [4, 128], strides = [1, 1]} : vector<4x384xf32> to vector<4x128xf32>
    %783 = vector.extract_strided_slice %781 {offsets = [0, 0], sizes = [4, 128], strides = [1, 1]} : vector<4x384xf32> to vector<4x128xf32>
    %784 = arith.addf %782, %783 : vector<4x128xf32>
    %785 = arith.negf %784 : vector<4x128xf32>
    %786 = math.exp %785 : vector<4x128xf32>
    %cst_288 = arith.constant 1.000000e+00 : f32
    %787 = vector.broadcast %cst_288 : f32 to vector<4x128xf32>
    %788 = arith.addf %787, %786 : vector<4x128xf32>
    %789 = arith.divf %787, %788 : vector<4x128xf32>
    %790 = vector.extract_strided_slice %779 {offsets = [0, 128], sizes = [4, 128], strides = [1, 1]} : vector<4x384xf32> to vector<4x128xf32>
    %791 = vector.extract_strided_slice %781 {offsets = [0, 128], sizes = [4, 128], strides = [1, 1]} : vector<4x384xf32> to vector<4x128xf32>
    %792 = arith.addf %790, %791 : vector<4x128xf32>
    %793 = arith.negf %792 : vector<4x128xf32>
    %794 = math.exp %793 : vector<4x128xf32>
    %cst_289 = arith.constant 1.000000e+00 : f32
    %795 = vector.broadcast %cst_289 : f32 to vector<4x128xf32>
    %796 = arith.addf %795, %794 : vector<4x128xf32>
    %797 = arith.divf %795, %796 : vector<4x128xf32>
    %798 = vector.extract_strided_slice %779 {offsets = [0, 256], sizes = [4, 128], strides = [1, 1]} : vector<4x384xf32> to vector<4x128xf32>
    %799 = vector.extract_strided_slice %781 {offsets = [0, 256], sizes = [4, 128], strides = [1, 1]} : vector<4x384xf32> to vector<4x128xf32>
    %800 = arith.mulf %789, %799 : vector<4x128xf32>
    %801 = arith.addf %798, %800 : vector<4x128xf32>
    %802 = math.tanh %801 : vector<4x128xf32>
    %cst_290 = arith.constant 1.000000e+00 : f32
    %803 = vector.broadcast %cst_290 : f32 to vector<4x128xf32>
    %804 = arith.subf %803, %797 : vector<4x128xf32>
    %805 = arith.mulf %804, %802 : vector<4x128xf32>
    %806 = arith.mulf %797, %770 : vector<4x128xf32>
    %807 = arith.addf %805, %806 : vector<4x128xf32>
    %cst_291 = arith.constant dense<0.000000e+00> : vector<4x128xf32>
    %808 = tpu.matmul %807, %692, %cst_291 {dimension_numbers = #tpu.dot_dimension_numbers<[1], [0], [0], [1], [0, 0, 1, 1], [], []>} : vector<4x128xf32>, vector<128x128xf32>, vector<4x128xf32> -> vector<4x128xf32>
    %809 = arith.addf %808, %695 : vector<4x128xf32>
    %c0_292 = arith.constant 0 : index
    %c2_293 = arith.constant 2 : index
    %c0_294 = arith.constant 0 : index
    %810 = vector.load %arg36[%c0_292, %c2_293, %c0_294] : memref<4x5x128xf32, #tpu.memory_space<vmem>>, vector<4x1x128xf32>
    %811 = vector.shape_cast %810 : vector<4x1x128xf32> to vector<4x128xf32>
    %812 = vector.shape_cast %809 : vector<4x128xf32> to vector<4x1x128xf32>
    tpu.vector_store %arg36[%c0_292, %c2_293, %c0_294], %812 {strides = array<i32>} : memref<4x5x128xf32, #tpu.memory_space<vmem>>, vector<4x1x128xf32>,
    %c3_295 = arith.constant 3 : index
    %c0_296 = arith.constant 0 : index
    %c0_297 = arith.constant 0 : index
    %813 = vector.load %arg5[%c3_295, %c0_296, %c0_297] : memref<5x4x6xf32, #tpu.memory_space<vmem>>, vector<1x4x6xf32>
    %814 = vector.shape_cast %813 : vector<1x4x6xf32> to vector<4x6xf32>
    %cst_298 = arith.constant dense<0.000000e+00> : vector<4x384xf32>
    %815 = tpu.matmul %814, %678, %cst_298 {dimension_numbers = #tpu.dot_dimension_numbers<[1], [0], [0], [1], [0, 0, 1, 1], [], []>} : vector<4x6xf32>, vector<6x384xf32>, vector<4x384xf32> -> vector<4x384xf32>
    %816 = arith.addf %815, %691 : vector<4x384xf32>
    %cst_299 = arith.constant dense<0.000000e+00> : vector<4x384xf32>
    %817 = tpu.matmul %807, %679, %cst_299 {dimension_numbers = #tpu.dot_dimension_numbers<[1], [0], [0], [1], [0, 0, 1, 1], [], []>} : vector<4x128xf32>, vector<128x384xf32>, vector<4x384xf32> -> vector<4x384xf32>
    %818 = arith.addf %817, %682 : vector<4x384xf32>
    %819 = vector.extract_strided_slice %816 {offsets = [0, 0], sizes = [4, 128], strides = [1, 1]} : vector<4x384xf32> to vector<4x128xf32>
    %820 = vector.extract_strided_slice %818 {offsets = [0, 0], sizes = [4, 128], strides = [1, 1]} : vector<4x384xf32> to vector<4x128xf32>
    %821 = arith.addf %819, %820 : vector<4x128xf32>
    %822 = arith.negf %821 : vector<4x128xf32>
    %823 = math.exp %822 : vector<4x128xf32>
    %cst_300 = arith.constant 1.000000e+00 : f32
    %824 = vector.broadcast %cst_300 : f32 to vector<4x128xf32>
    %825 = arith.addf %824, %823 : vector<4x128xf32>
    %826 = arith.divf %824, %825 : vector<4x128xf32>
    %827 = vector.extract_strided_slice %816 {offsets = [0, 128], sizes = [4, 128], strides = [1, 1]} : vector<4x384xf32> to vector<4x128xf32>
    %828 = vector.extract_strided_slice %818 {offsets = [0, 128], sizes = [4, 128], strides = [1, 1]} : vector<4x384xf32> to vector<4x128xf32>
    %829 = arith.addf %827, %828 : vector<4x128xf32>
    %830 = arith.negf %829 : vector<4x128xf32>
    %831 = math.exp %830 : vector<4x128xf32>
    %cst_301 = arith.constant 1.000000e+00 : f32
    %832 = vector.broadcast %cst_301 : f32 to vector<4x128xf32>
    %833 = arith.addf %832, %831 : vector<4x128xf32>
    %834 = arith.divf %832, %833 : vector<4x128xf32>
    %835 = vector.extract_strided_slice %816 {offsets = [0, 256], sizes = [4, 128], strides = [1, 1]} : vector<4x384xf32> to vector<4x128xf32>
    %836 = vector.extract_strided_slice %818 {offsets = [0, 256], sizes = [4, 128], strides = [1, 1]} : vector<4x384xf32> to vector<4x128xf32>
    %837 = arith.mulf %826, %836 : vector<4x128xf32>
    %838 = arith.addf %835, %837 : vector<4x128xf32>
    %839 = math.tanh %838 : vector<4x128xf32>
    %cst_302 = arith.constant 1.000000e+00 : f32
    %840 = vector.broadcast %cst_302 : f32 to vector<4x128xf32>
    %841 = arith.subf %840, %834 : vector<4x128xf32>
    %842 = arith.mulf %841, %839 : vector<4x128xf32>
    %843 = arith.mulf %834, %807 : vector<4x128xf32>
    %844 = arith.addf %842, %843 : vector<4x128xf32>
    %cst_303 = arith.constant dense<0.000000e+00> : vector<4x128xf32>
    %845 = tpu.matmul %844, %692, %cst_303 {dimension_numbers = #tpu.dot_dimension_numbers<[1], [0], [0], [1], [0, 0, 1, 1], [], []>} : vector<4x128xf32>, vector<128x128xf32>, vector<4x128xf32> -> vector<4x128xf32>
    %846 = arith.addf %845, %695 : vector<4x128xf32>
    %c0_304 = arith.constant 0 : index
    %c3_305 = arith.constant 3 : index
    %c0_306 = arith.constant 0 : index
    %847 = vector.load %arg36[%c0_304, %c3_305, %c0_306] : memref<4x5x128xf32, #tpu.memory_space<vmem>>, vector<4x1x128xf32>
    %848 = vector.shape_cast %847 : vector<4x1x128xf32> to vector<4x128xf32>
    %849 = vector.shape_cast %846 : vector<4x128xf32> to vector<4x1x128xf32>
    tpu.vector_store %arg36[%c0_304, %c3_305, %c0_306], %849 {strides = array<i32>} : memref<4x5x128xf32, #tpu.memory_space<vmem>>, vector<4x1x128xf32>,
    %c4_307 = arith.constant 4 : index
    %c0_308 = arith.constant 0 : index
    %c0_309 = arith.constant 0 : index
    %850 = vector.load %arg5[%c4_307, %c0_308, %c0_309] : memref<5x4x6xf32, #tpu.memory_space<vmem>>, vector<1x4x6xf32>
    %851 = vector.shape_cast %850 : vector<1x4x6xf32> to vector<4x6xf32>
    %cst_310 = arith.constant dense<0.000000e+00> : vector<4x384xf32>
    %852 = tpu.matmul %851, %678, %cst_310 {dimension_numbers = #tpu.dot_dimension_numbers<[1], [0], [0], [1], [0, 0, 1, 1], [], []>} : vector<4x6xf32>, vector<6x384xf32>, vector<4x384xf32> -> vector<4x384xf32>
    %853 = arith.addf %852, %691 : vector<4x384xf32>
    %cst_311 = arith.constant dense<0.000000e+00> : vector<4x384xf32>
    %854 = tpu.matmul %844, %679, %cst_311 {dimension_numbers = #tpu.dot_dimension_numbers<[1], [0], [0], [1], [0, 0, 1, 1], [], []>} : vector<4x128xf32>, vector<128x384xf32>, vector<4x384xf32> -> vector<4x384xf32>
    %855 = arith.addf %854, %682 : vector<4x384xf32>
    %856 = vector.extract_strided_slice %853 {offsets = [0, 0], sizes = [4, 128], strides = [1, 1]} : vector<4x384xf32> to vector<4x128xf32>
    %857 = vector.extract_strided_slice %855 {offsets = [0, 0], sizes = [4, 128], strides = [1, 1]} : vector<4x384xf32> to vector<4x128xf32>
    %858 = arith.addf %856, %857 : vector<4x128xf32>
    %859 = arith.negf %858 : vector<4x128xf32>
    %860 = math.exp %859 : vector<4x128xf32>
    %cst_312 = arith.constant 1.000000e+00 : f32
    %861 = vector.broadcast %cst_312 : f32 to vector<4x128xf32>
    %862 = arith.addf %861, %860 : vector<4x128xf32>
    %863 = arith.divf %861, %862 : vector<4x128xf32>
    %864 = vector.extract_strided_slice %853 {offsets = [0, 128], sizes = [4, 128], strides = [1, 1]} : vector<4x384xf32> to vector<4x128xf32>
    %865 = vector.extract_strided_slice %855 {offsets = [0, 128], sizes = [4, 128], strides = [1, 1]} : vector<4x384xf32> to vector<4x128xf32>
    %866 = arith.addf %864, %865 : vector<4x128xf32>
    %867 = arith.negf %866 : vector<4x128xf32>
    %868 = math.exp %867 : vector<4x128xf32>
    %cst_313 = arith.constant 1.000000e+00 : f32
    %869 = vector.broadcast %cst_313 : f32 to vector<4x128xf32>
    %870 = arith.addf %869, %868 : vector<4x128xf32>
    %871 = arith.divf %869, %870 : vector<4x128xf32>
    %872 = vector.extract_strided_slice %853 {offsets = [0, 256], sizes = [4, 128], strides = [1, 1]} : vector<4x384xf32> to vector<4x128xf32>
    %873 = vector.extract_strided_slice %855 {offsets = [0, 256], sizes = [4, 128], strides = [1, 1]} : vector<4x384xf32> to vector<4x128xf32>
    %874 = arith.mulf %863, %873 : vector<4x128xf32>
    %875 = arith.addf %872, %874 : vector<4x128xf32>
    %876 = math.tanh %875 : vector<4x128xf32>
    %cst_314 = arith.constant 1.000000e+00 : f32
    %877 = vector.broadcast %cst_314 : f32 to vector<4x128xf32>
    %878 = arith.subf %877, %871 : vector<4x128xf32>
    %879 = arith.mulf %878, %876 : vector<4x128xf32>
    %880 = arith.mulf %871, %844 : vector<4x128xf32>
    %881 = arith.addf %879, %880 : vector<4x128xf32>
    %cst_315 = arith.constant dense<0.000000e+00> : vector<4x128xf32>
    %882 = tpu.matmul %881, %692, %cst_315 {dimension_numbers = #tpu.dot_dimension_numbers<[1], [0], [0], [1], [0, 0, 1, 1], [], []>} : vector<4x128xf32>, vector<128x128xf32>, vector<4x128xf32> -> vector<4x128xf32>
    %883 = arith.addf %882, %695 : vector<4x128xf32>
    %c0_316 = arith.constant 0 : index
    %c4_317 = arith.constant 4 : index
    %c0_318 = arith.constant 0 : index
    %884 = vector.load %arg36[%c0_316, %c4_317, %c0_318] : memref<4x5x128xf32, #tpu.memory_space<vmem>>, vector<4x1x128xf32>
    %885 = vector.shape_cast %884 : vector<4x1x128xf32> to vector<4x128xf32>
    %886 = vector.shape_cast %883 : vector<4x128xf32> to vector<4x1x128xf32>
    tpu.vector_store %arg36[%c0_316, %c4_317, %c0_318], %886 {strides = array<i32>} : memref<4x5x128xf32, #tpu.memory_space<vmem>>, vector<4x1x128xf32>,
    return
  }
}

</mosaic_0001>

<llo_original>
// kernel: program_vae_forward.1
$region0: #{program_vae_forward.1}
  #allocation0 [shape = 'u32[]', space=smem, size = 0x4, offset = 0x4, fixed_abs, tag = 'smem constant byte address 0x4 - core index']
  #allocation1 [shape = 'u32[144,128]{1,0:T(1,128)}', space=vmem, size = 0x12000, scoped, tag = 'internal scratch']
  %s0 = inlined_call_operand.smem [shape: u32[38], index: -1, kind: input, shape index: {}]
  %s1 = sld [smem:[%s0]]
  %s2 = scalar_lea.smem %s0, 1
  %s3 = sld [smem:[%s2]]
  %s4 = scalar_lea.smem %s0, 2
  %s5 = sld [smem:[%s4]]
  %s6 = scalar_lea.smem %s0, 3
  %s7 = sld [smem:[%s6]]
  %s8 = scalar_lea.smem %s0, 4
  %s9 = sld [smem:[%s8]]
  %s10 = scalar_lea.smem %s0, 5
  %s11 = sld [smem:[%s10]]
  %s12 = scalar_lea.smem %s0, 6
  %s13 = sld [smem:[%s12]]
  %s14 = scalar_lea.smem %s0, 7
  %s15 = sld [smem:[%s14]]
  %s16 = scalar_lea.smem %s0, 8
  %s17 = sld [smem:[%s16]]
  %s18 = scalar_lea.smem %s0, 9
  %s19 = sld [smem:[%s18]]
  %s20 = scalar_lea.smem %s0, 10
  %s21 = sld [smem:[%s20]]
  %s22 = scalar_lea.smem %s0, 11
  %s23 = sld [smem:[%s22]]
  %s24 = scalar_lea.smem %s0, 12
  %s25 = sld [smem:[%s24]]
  %s26 = scalar_lea.smem %s0, 13
  %s27 = sld [smem:[%s26]]
  %s28 = scalar_lea.smem %s0, 14
  %s29 = sld [smem:[%s28]]
  %s30 = scalar_lea.smem %s0, 15
  %s31 = sld [smem:[%s30]]
  %s32 = scalar_lea.smem %s0, 16
  %s33 = sld [smem:[%s32]]
  %s34 = scalar_lea.smem %s0, 17
  %s35 = sld [smem:[%s34]]
  %s36 = scalar_lea.smem %s0, 18
  %s37 = sld [smem:[%s36]]
  %s38 = scalar_lea.smem %s0, 19
  %s39 = sld [smem:[%s38]]
  %s40 = scalar_lea.smem %s0, 20
  %s41 = sld [smem:[%s40]]
  %s42 = scalar_lea.smem %s0, 21
  %s43 = sld [smem:[%s42]]
  %s44 = scalar_lea.smem %s0, 22
  %s45 = sld [smem:[%s44]]
  %s46 = scalar_lea.smem %s0, 23
  %s47 = sld [smem:[%s46]]
  %s48 = scalar_lea.smem %s0, 24
  %s49 = sld [smem:[%s48]]
  %s50 = scalar_lea.smem %s0, 25
  %s51 = sld [smem:[%s50]]
  %s52 = scalar_lea.smem %s0, 26
  %s53 = sld [smem:[%s52]]
  %s54 = scalar_lea.smem %s0, 27
  %s55 = sld [smem:[%s54]]
  %s56 = scalar_lea.smem %s0, 28
  %s57 = sld [smem:[%s56]]
  %s58 = scalar_lea.smem %s0, 29
  %s59 = sld [smem:[%s58]]
  %s60 = scalar_lea.smem %s0, 30
  %s61 = sld [smem:[%s60]]
  %s62 = scalar_lea.smem %s0, 31
  %s63 = sld [smem:[%s62]]
  %s64 = scalar_lea.smem %s0, 32
  %s65 = sld [smem:[%s64]]
  %s66 = scalar_lea.smem %s0, 33
  %s67 = sld [smem:[%s66]]
  %s68 = scalar_lea.smem %s0, 34
  %s69 = sld [smem:[%s68]]
  %s70 = scalar_lea.smem %s0, 35
  %s71 = sld [smem:[%s70]]
  %s72 = scalar_lea.smem %s0, 36
  %s73 = sld [smem:[%s72]]
  %s74 = scalar_lea.smem %s0, 37
  %s75 = sld [smem:[%s74]]
  %76 = xla_tuple %s71, %s73, %s75
  %s77 = sld [smem:[#allocation0]]
  $region166: #{program_vae_forward.1} parent=0
    _
  %s79 = ssub.s32 1, %s77
  %s80 = scalar_select 0, %s79, %s77
  $region1: #{program_vae_forward.1} parent=0
    #allocation2 [shape = 'u8[1024]{0}', space=vmem, size = 0x400, scoped, tag = 'output window, operand 2, single buffered']
    #allocation3 [shape = 's32[1]{0}', space=sflag, size = 0x4, scoped, tag = 'scoped memory for program_vae_forward.1']
    %81 = vsyncpa [#allocation3], 0
    // Predicated region
    $region2: #{program_vae_forward.1} parent=1 // pred_check
      _
    $region3: #{program_vae_forward.1} parent=1 // pred_check_branch
      %83 = sbr.rel (0) target = $region5
    $region4: #{program_vae_forward.1} parent=1 // pred_region
      _
    $region5: #{program_vae_forward.1} parent=1 // pred_fallthru
      _
    // Predicated region
    $region6: #{program_vae_forward.1} parent=1 // pred_check
      _
    $region7: #{program_vae_forward.1} parent=1 // pred_check_branch
      %85 = sbr.rel (0) target = $region9
    $region8: #{program_vae_forward.1} parent=1 // pred_region
      _
    $region9: #{program_vae_forward.1} parent=1 // pred_fallthru
      _
    // Predicated region
    $region10: #{program_vae_forward.1} parent=1 // pred_check
      _
    $region11: #{program_vae_forward.1} parent=1 // pred_check_branch
      %87 = sbr.rel (0) target = $region13
    $region12: #{program_vae_forward.1} parent=1 // pred_region
      _
    $region13: #{program_vae_forward.1} parent=1 // pred_fallthru
      _
    // Predicated region
    $region14: #{program_vae_forward.1} parent=1 // pred_check
      _
    $region15: #{program_vae_forward.1} parent=1 // pred_check_branch
      %89 = sbr.rel (0) target = $region17
    $region16: #{program_vae_forward.1} parent=1 // pred_region
      _
    $region17: #{program_vae_forward.1} parent=1 // pred_fallthru
      _
    // Predicated region
    $region18: #{program_vae_forward.1} parent=1 // pred_check
      _
    $region19: #{program_vae_forward.1} parent=1 // pred_check_branch
      %91 = sbr.rel (0) target = $region21
    $region20: #{program_vae_forward.1} parent=1 // pred_region
      _
    $region21: #{program_vae_forward.1} parent=1 // pred_fallthru
      _
    // Predicated region
    $region22: #{program_vae_forward.1} parent=1 // pred_check
      _
    $region23: #{program_vae_forward.1} parent=1 // pred_check_branch
      %93 = sbr.rel (0) target = $region25
    $region24: #{program_vae_forward.1} parent=1 // pred_region
      _
    $region25: #{program_vae_forward.1} parent=1 // pred_fallthru
      _
    // Predicated region
    $region26: #{program_vae_forward.1} parent=1 // pred_check
      _
    $region27: #{program_vae_forward.1} parent=1 // pred_check_branch
      %95 = sbr.rel (0) target = $region29
    $region28: #{program_vae_forward.1} parent=1 // pred_region
      _
    $region29: #{program_vae_forward.1} parent=1 // pred_fallthru
      _
    // Predicated region
    $region30: #{program_vae_forward.1} parent=1 // pred_check
      _
    $region31: #{program_vae_forward.1} parent=1 // pred_check_branch
      %97 = sbr.rel (0) target = $region33
    $region32: #{program_vae_forward.1} parent=1 // pred_region
      _
    $region33: #{program_vae_forward.1} parent=1 // pred_fallthru
      _
    // Predicated region
    $region34: #{program_vae_forward.1} parent=1 // pred_check
      _
    $region35: #{program_vae_forward.1} parent=1 // pred_check_branch
      %99 = sbr.rel (0) target = $region37
    $region36: #{program_vae_forward.1} parent=1 // pred_region
      _
    $region37: #{program_vae_forward.1} parent=1 // pred_fallthru
      _
    // Predicated region
    $region38: #{program_vae_forward.1} parent=1 // pred_check
      _
    $region39: #{program_vae_forward.1} parent=1 // pred_check_branch
      %101 = sbr.rel (0) target = $region41
    $region40: #{program_vae_forward.1} parent=1 // pred_region
      _
    $region41: #{program_vae_forward.1} parent=1 // pred_fallthru
      _
    // Predicated region
    $region42: #{program_vae_forward.1} parent=1 // pred_check
      _
    $region43: #{program_vae_forward.1} parent=1 // pred_check_branch
      %103 = sbr.rel (0) target = $region45
    $region44: #{program_vae_forward.1} parent=1 // pred_region
      _
    $region45: #{program_vae_forward.1} parent=1 // pred_fallthru
      _
    // Predicated region
    $region46: #{program_vae_forward.1} parent=1 // pred_check
      _
    $region47: #{program_vae_forward.1} parent=1 // pred_check_branch
      %105 = sbr.rel (0) target = $region49
    $region48: #{program_vae_forward.1} parent=1 // pred_region
      _
    $region49: #{program_vae_forward.1} parent=1 // pred_fallthru
      _
    // Predicated region
    $region50: #{program_vae_forward.1} parent=1 // pred_check
      _
    $region51: #{program_vae_forward.1} parent=1 // pred_check_branch
      %107 = sbr.rel (0) target = $region53
    $region52: #{program_vae_forward.1} parent=1 // pred_region
      _
    $region53: #{program_vae_forward.1} parent=1 // pred_fallthru
      _
    // Predicated region
    $region54: #{program_vae_forward.1} parent=1 // pred_check
      _
    $region55: #{program_vae_forward.1} parent=1 // pred_check_branch
      %109 = sbr.rel (0) target = $region57
    $region56: #{program_vae_forward.1} parent=1 // pred_region
      _
    $region57: #{program_vae_forward.1} parent=1 // pred_fallthru
      _
    // Predicated region
    $region58: #{program_vae_forward.1} parent=1 // pred_check
      _
    $region59: #{program_vae_forward.1} parent=1 // pred_check_branch
      %111 = sbr.rel (0) target = $region61
    $region60: #{program_vae_forward.1} parent=1 // pred_region
      _
    $region61: #{program_vae_forward.1} parent=1 // pred_fallthru
      _
    // Predicated region
    $region62: #{program_vae_forward.1} parent=1 // pred_check
      _
    $region63: #{program_vae_forward.1} parent=1 // pred_check_branch
      %113 = sbr.rel (0) target = $region65
    $region64: #{program_vae_forward.1} parent=1 // pred_region
      _
    $region65: #{program_vae_forward.1} parent=1 // pred_fallthru
      _
    // Predicated region
    $region66: #{program_vae_forward.1} parent=1 // pred_check
      _
    $region67: #{program_vae_forward.1} parent=1 // pred_check_branch
      %115 = sbr.rel (0) target = $region69
    $region68: #{program_vae_forward.1} parent=1 // pred_region
      _
    $region69: #{program_vae_forward.1} parent=1 // pred_fallthru
      _
    // Predicated region
    $region70: #{program_vae_forward.1} parent=1 // pred_check
      _
    $region71: #{program_vae_forward.1} parent=1 // pred_check_branch
      %117 = sbr.rel (0) target = $region73
    $region72: #{program_vae_forward.1} parent=1 // pred_region
      _
    $region73: #{program_vae_forward.1} parent=1 // pred_fallthru
      _
    // Predicated region
    $region74: #{program_vae_forward.1} parent=1 // pred_check
      _
    $region75: #{program_vae_forward.1} parent=1 // pred_check_branch
      %119 = sbr.rel (0) target = $region77
    $region76: #{program_vae_forward.1} parent=1 // pred_region
      _
    $region77: #{program_vae_forward.1} parent=1 // pred_fallthru
      _
    // Predicated region
    $region78: #{program_vae_forward.1} parent=1 // pred_check
      _
    $region79: #{program_vae_forward.1} parent=1 // pred_check_branch
      %121 = sbr.rel (0) target = $region81
    $region80: #{program_vae_forward.1} parent=1 // pred_region
      _
    $region81: #{program_vae_forward.1} parent=1 // pred_fallthru
      _
    // Predicated region
    $region82: #{program_vae_forward.1} parent=1 // pred_check
      _
    $region83: #{program_vae_forward.1} parent=1 // pred_check_branch
      %123 = sbr.rel (0) target = $region85
    $region84: #{program_vae_forward.1} parent=1 // pred_region
      _
    $region85: #{program_vae_forward.1} parent=1 // pred_fallthru
      _
    // Predicated region
    $region86: #{program_vae_forward.1} parent=1 // pred_check
      _
    $region87: #{program_vae_forward.1} parent=1 // pred_check_branch
      %125 = sbr.rel (0) target = $region89
    $region88: #{program_vae_forward.1} parent=1 // pred_region
      _
    $region89: #{program_vae_forward.1} parent=1 // pred_fallthru
      _
    // Predicated region
    $region90: #{program_vae_forward.1} parent=1 // pred_check
      _
    $region91: #{program_vae_forward.1} parent=1 // pred_check_branch
      %127 = sbr.rel (0) target = $region93
    $region92: #{program_vae_forward.1} parent=1 // pred_region
      _
    $region93: #{program_vae_forward.1} parent=1 // pred_fallthru
      _
    // Predicated region
    $region94: #{program_vae_forward.1} parent=1 // pred_check
      _
    $region95: #{program_vae_forward.1} parent=1 // pred_check_branch
      %129 = sbr.rel (0) target = $region97
    $region96: #{program_vae_forward.1} parent=1 // pred_region
      _
    $region97: #{program_vae_forward.1} parent=1 // pred_fallthru
      _
    // Predicated region
    $region98: #{program_vae_forward.1} parent=1 // pred_check
      _
    $region99: #{program_vae_forward.1} parent=1 // pred_check_branch
      %131 = sbr.rel (0) target = $region101
    $region100: #{program_vae_forward.1} parent=1 // pred_region
      _
    $region101: #{program_vae_forward.1} parent=1 // pred_fallthru
      _
    // Predicated region
    $region102: #{program_vae_forward.1} parent=1 // pred_check
      _
    $region103: #{program_vae_forward.1} parent=1 // pred_check_branch
      %133 = sbr.rel (0) target = $region105
    $region104: #{program_vae_forward.1} parent=1 // pred_region
      _
    $region105: #{program_vae_forward.1} parent=1 // pred_fallthru
      _
    // Predicated region
    $region106: #{program_vae_forward.1} parent=1 // pred_check
      _
    $region107: #{program_vae_forward.1} parent=1 // pred_check_branch
      %135 = sbr.rel (0) target = $region109
    $region108: #{program_vae_forward.1} parent=1 // pred_region
      _
    $region109: #{program_vae_forward.1} parent=1 // pred_fallthru
      _
    // Predicated region
    $region110: #{program_vae_forward.1} parent=1 // pred_check
      _
    $region111: #{program_vae_forward.1} parent=1 // pred_check_branch
      %137 = sbr.rel (0) target = $region113
    $region112: #{program_vae_forward.1} parent=1 // pred_region
      _
    $region113: #{program_vae_forward.1} parent=1 // pred_fallthru
      _
    // Predicated region
    $region114: #{program_vae_forward.1} parent=1 // pred_check
      _
    $region115: #{program_vae_forward.1} parent=1 // pred_check_branch
      %139 = sbr.rel (0) target = $region117
    $region116: #{program_vae_forward.1} parent=1 // pred_region
      _
    $region117: #{program_vae_forward.1} parent=1 // pred_fallthru
      _
    // Predicated region
    $region118: #{program_vae_forward.1} parent=1 // pred_check
      _
    $region119: #{program_vae_forward.1} parent=1 // pred_check_branch
      %141 = sbr.rel (0) target = $region121
    $region120: #{program_vae_forward.1} parent=1 // pred_region
      _
    $region121: #{program_vae_forward.1} parent=1 // pred_fallthru
      _
    // Predicated region
    $region122: #{program_vae_forward.1} parent=1 // pred_check
      _
    $region123: #{program_vae_forward.1} parent=1 // pred_check_branch
      %143 = sbr.rel (0) target = $region125
    $region124: #{program_vae_forward.1} parent=1 // pred_region
      _
    $region125: #{program_vae_forward.1} parent=1 // pred_fallthru
      _
    // Predicated region
    $region126: #{program_vae_forward.1} parent=1 // pred_check
      _
    $region127: #{program_vae_forward.1} parent=1 // pred_check_branch
      %145 = sbr.rel (0) target = $region129
    $region128: #{program_vae_forward.1} parent=1 // pred_region
      _
    $region129: #{program_vae_forward.1} parent=1 // pred_fallthru
      _
    // Predicated region
    $region130: #{program_vae_forward.1} parent=1 // pred_check
      _
    $region131: #{program_vae_forward.1} parent=1 // pred_check_branch
      %147 = sbr.rel (0) target = $region133
    $region132: #{program_vae_forward.1} parent=1 // pred_region
      _
    $region133: #{program_vae_forward.1} parent=1 // pred_fallthru
      _
    // Predicated region
    $region134: #{program_vae_forward.1} parent=1 // pred_check
      _
    $region135: #{program_vae_forward.1} parent=1 // pred_check_branch
      %149 = sbr.rel (0) target = $region137
    $region136: #{program_vae_forward.1} parent=1 // pred_region
      _
    $region137: #{program_vae_forward.1} parent=1 // pred_fallthru
      _
    // Predicated region
    $region138: #{program_vae_forward.1} parent=1 // pred_check
      _
    $region139: #{program_vae_forward.1} parent=1 // pred_check_branch
      %151 = sbr.rel (0) target = $region141
    $region140: #{program_vae_forward.1} parent=1 // pred_region
      _
    $region141: #{program_vae_forward.1} parent=1 // pred_fallthru
      _
    %v152 = vld [vmem:[%s13] sm:$0xff]
    %v153 = vld [vmem:[%s13 + $0x8] sm:$0xff]
    %v154 = vld [vmem:[%s13 + $0x10] sm:$0xff]
    %v155 = vld [vmem:[%s13 + $0x18] sm:$0xff]
    %v156 = vld [vmem:[%s13 + $0x20] sm:$0xff]
    %v157 = vld [vmem:[%s13 + $0x28] sm:$0xff]
    %v158 = vld [vmem:[%s15] sm:$0xff]
    %v159 = vld [vmem:[%s15 + $0x8] sm:$0xff]
    %v160 = vld [vmem:[%s15 + $0x10] sm:$0xff]
    %v161 = vld [vmem:[%s15 + $0x18] sm:$0xff]
    %v162 = vld [vmem:[%s15 + $0x20] sm:$0xff]
    %v163 = vld [vmem:[%s15 + $0x28] sm:$0xff]
    %v164 = vld [vmem:[%s15 + $0x30] sm:$0xff]
    %v165 = vld [vmem:[%s15 + $0x38] sm:$0xff]
    %v166 = vld [vmem:[%s15 + $0x40] sm:$0xff]
    %v167 = vld [vmem:[%s15 + $0x48] sm:$0xff]
    %v168 = vld [vmem:[%s15 + $0x50] sm:$0xff]
    %v169 = vld [vmem:[%s15 + $0x58] sm:$0xff]
    %v170 = vld [vmem:[%s15 + $0x60] sm:$0xff]
    %v171 = vld [vmem:[%s15 + $0x68] sm:$0xff]
    %v172 = vld [vmem:[%s15 + $0x70] sm:$0xff]
    %v173 = vld [vmem:[%s15 + $0x78] sm:$0xff]
    %v174 = vld [vmem:[%s15 + $0x80] sm:$0xff]
    %v175 = vld [vmem:[%s15 + $0x88] sm:$0xff]
    %v176 = vld [vmem:[%s15 + $0x90] sm:$0xff]
    %v177 = vld [vmem:[%s15 + $0x98] sm:$0xff]
    %v178 = vld [vmem:[%s15 + $0xa0] sm:$0xff]
    %v179 = vld [vmem:[%s15 + $0xa8] sm:$0xff]
    %v180 = vld [vmem:[%s15 + $0xb0] sm:$0xff]
    %v181 = vld [vmem:[%s15 + $0xb8] sm:$0xff]
    %v182 = vld [vmem:[%s15 + $0xc0] sm:$0xff]
    %v183 = vld [vmem:[%s15 + $0xc8] sm:$0xff]
    %v184 = vld [vmem:[%s15 + $0xd0] sm:$0xff]
    %v185 = vld [vmem:[%s15 + $0xd8] sm:$0xff]
    %v186 = vld [vmem:[%s15 + $0xe0] sm:$0xff]
    %v187 = vld [vmem:[%s15 + $0xe8] sm:$0xff]
    %v188 = vld [vmem:[%s15 + $0xf0] sm:$0xff]
    %v189 = vld [vmem:[%s15 + $0xf8] sm:$0xff]
    %v190 = vld [vmem:[%s15 + $0x100] sm:$0xff]
    %v191 = vld [vmem:[%s15 + $0x108] sm:$0xff]
    %v192 = vld [vmem:[%s15 + $0x110] sm:$0xff]
    %v193 = vld [vmem:[%s15 + $0x118] sm:$0xff]
    %v194 = vld [vmem:[%s15 + $0x120] sm:$0xff]
    %v195 = vld [vmem:[%s15 + $0x128] sm:$0xff]
    %v196 = vld [vmem:[%s15 + $0x130] sm:$0xff]
    %v197 = vld [vmem:[%s15 + $0x138] sm:$0xff]
    %v198 = vld [vmem:[%s15 + $0x140] sm:$0xff]
    %v199 = vld [vmem:[%s15 + $0x148] sm:$0xff]
    %v200 = vld [vmem:[%s15 + $0x150] sm:$0xff]
    %v201 = vld [vmem:[%s15 + $0x158] sm:$0xff]
    %v202 = vld [vmem:[%s15 + $0x160] sm:$0xff]
    %v203 = vld [vmem:[%s15 + $0x168] sm:$0xff]
    %v204 = vld [vmem:[%s15 + $0x170] sm:$0xff]
    %v205 = vld [vmem:[%s15 + $0x178] sm:$0xff]
    %v206 = vld [vmem:[%s17] sm:$0x7]
    %v208 = vlaneseq
    %v209 = vshrl.u32 %v208, 7
    %v210 = vsub.s32 0, %v209
    %v211 = vrot.slane %v206, %v210
    %v212 = vlaneseq
    %v213 = vshrl.u32 %v212, 7
    %v214 = vsub.s32 1, %v213
    %v215 = vrot.slane %v206, %v214
    %v216 = vlaneseq
    %v217 = vshrl.u32 %v216, 7
    %v218 = vsub.s32 2, %v217
    %v219 = vrot.slane %v206, %v218
    %v223 = vld [vmem:[%s19] sm:$0x7]
    %v225 = vlaneseq
    %v226 = vshrl.u32 %v225, 7
    %v227 = vsub.s32 0, %v226
    %v228 = vrot.slane %v223, %v227
    %v229 = vlaneseq
    %v230 = vshrl.u32 %v229, 7
    %v231 = vsub.s32 1, %v230
    %v232 = vrot.slane %v223, %v231
    %v233 = vlaneseq
    %v234 = vshrl.u32 %v233, 7
    %v235 = vsub.s32 2, %v234
    %v236 = vrot.slane %v223, %v235
    %v240 = vld [vmem:[%s1] sm:$0x3]
    %vm241 = vcmask 130048
    %v243 = vsel %vm241, %v240, 0
    %245 = vmatprep.subr.mxu0 %v153
    %246 = vmatpush1.msra.mxu0 %v152
    %247 = vmatprep.subr.mxu0 %v156
    %248 = vmatpush1.msra.mxu0 %v155
    %249 = vmatprep.subr.mxu0 0.0
    %250 = vmatpush1.msra.mxu0 0.0
    %251 = vmatprep.subr.mxu0 0.0
    %252 = vmatpush1.msra.mxu0 0.0
    %253 = vmatprep.subr.mxu0 0.0
    %254 = vmatpush1.msra.mxu0 0.0
    %255 = vmatprep.subr.mxu0 0.0
    %256 = vmatpush1.msra.mxu0 0.0
    %257 = vmatprep.subr.mxu0 0.0
    %258 = vmatpush1.msra.mxu0 0.0
    %259 = vmatprep.subr.mxu0 0.0
    %260 = vmatpush1.msra.mxu0 0.0
    %261 = vmatprep.subr.mxu0 0.0
    %262 = vmatpush1.msra.mxu0 0.0
    %263 = vmatprep.subr.mxu0 0.0
    %264 = vmatpush1.msra.mxu0 0.0
    %265 = vmatprep.subr.mxu0 0.0
    %266 = vmatpush1.msra.mxu0 0.0
    %267 = vmatprep.subr.mxu0 0.0
    %268 = vmatpush1.msra.mxu0 0.0
    %269 = vmatprep.subr.mxu0 0.0
    %270 = vmatpush1.msra.mxu0 0.0
    %271 = vmatprep.subr.mxu0 0.0
    %272 = vmatpush1.msra.mxu0 0.0
    %273 = vmatprep.subr.mxu0 0.0
    %274 = vmatpush1.msra.mxu0 0.0
    %275 = vmatprep.subr.mxu0 0.0
    %276 = vmatpush1.msra.mxu0 0.0
    %277 = vmatprep.subr.mxu0 0.0
    %278 = vmatpush1.msra.mxu0 0.0
    %279 = vmatprep.subr.mxu0 0.0
    %280 = vmatpush1.msra.mxu0 0.0
    %281 = vmatprep.subr.mxu0 0.0
    %282 = vmatpush1.msra.mxu0 0.0
    %283 = vmatprep.subr.mxu0 0.0
    %284 = vmatpush1.msra.mxu0 0.0
    %285 = vmatprep.subr.mxu0 0.0
    %286 = vmatpush1.msra.mxu0 0.0
    %287 = vmatprep.subr.mxu0 0.0
    %288 = vmatpush1.msra.mxu0 0.0
    %289 = vmatprep.subr.mxu0 0.0
    %290 = vmatpush1.msra.mxu0 0.0
    %291 = vmatprep.subr.mxu0 0.0
    %292 = vmatpush1.msra.mxu0 0.0
    %293 = vmatprep.subr.mxu0 0.0
    %294 = vmatpush1.msra.mxu0 0.0
    %295 = vmatprep.subr.mxu0 0.0
    %296 = vmatpush1.msra.mxu0 0.0
    %297 = vmatprep.subr.mxu0 0.0
    %298 = vmatpush1.msra.mxu0 0.0
    %299 = vmatprep.subr.mxu0 0.0
    %300 = vmatpush1.msra.mxu0 0.0
    %301 = vmatprep.subr.mxu0 0.0
    %302 = vmatpush1.msra.mxu0 0.0
    %303 = vmatprep.subr.mxu0 0.0
    %304 = vmatpush1.msra.mxu0 0.0
    %305 = vmatprep.subr.mxu0 0.0
    %306 = vmatpush1.msra.mxu0 0.0
    %307 = vmatprep.subr.mxu0 0.0
    %308 = vmatpush1.msra.mxu0 0.0
    %309 = vmatprep.mubr.f32.mxu0 0.0
    %310 = vmatmul.mubr.f32.gmra.mrb[0].mxu0 %v243
    %v311 = vpop.f32.mrb[0].mxu0
    %v312 = vadd.f32 %v211, %v311
    %v313 = vpop.f32.mrb[0].mxu0
    %v314 = vadd.f32 %v215, %v313
    %315 = vdwg.mxu0
    %316 = vmatprep.subr.mxu0 0.0
    %317 = vmatpush1.msra.mxu0 %v154
    %318 = vmatprep.subr.mxu0 0.0
    %319 = vmatpush1.msra.mxu0 %v157
    %320 = vmatprep.subr.mxu0 0.0
    %321 = vmatpush1.msra.mxu0 0.0
    %322 = vmatprep.subr.mxu0 0.0
    %323 = vmatpush1.msra.mxu0 0.0
    %324 = vmatprep.subr.mxu0 0.0
    %325 = vmatpush1.msra.mxu0 0.0
    %326 = vmatprep.subr.mxu0 0.0
    %327 = vmatpush1.msra.mxu0 0.0
    %328 = vmatprep.subr.mxu0 0.0
    %329 = vmatpush1.msra.mxu0 0.0
    %330 = vmatprep.subr.mxu0 0.0
    %331 = vmatpush1.msra.mxu0 0.0
    %332 = vmatprep.subr.mxu0 0.0
    %333 = vmatpush1.msra.mxu0 0.0
    %334 = vmatprep.subr.mxu0 0.0
    %335 = vmatpush1.msra.mxu0 0.0
    %336 = vmatprep.subr.mxu0 0.0
    %337 = vmatpush1.msra.mxu0 0.0
    %338 = vmatprep.subr.mxu0 0.0
    %339 = vmatpush1.msra.mxu0 0.0
    %340 = vmatprep.subr.mxu0 0.0
    %341 = vmatpush1.msra.mxu0 0.0
    %342 = vmatprep.subr.mxu0 0.0
    %343 = vmatpush1.msra.mxu0 0.0
    %344 = vmatprep.subr.mxu0 0.0
    %345 = vmatpush1.msra.mxu0 0.0
    %346 = vmatprep.subr.mxu0 0.0
    %347 = vmatpush1.msra.mxu0 0.0
    %348 = vmatprep.subr.mxu0 0.0
    %349 = vmatpush1.msra.mxu0 0.0
    %350 = vmatprep.subr.mxu0 0.0
    %351 = vmatpush1.msra.mxu0 0.0
    %352 = vmatprep.subr.mxu0 0.0
    %353 = vmatpush1.msra.mxu0 0.0
    %354 = vmatprep.subr.mxu0 0.0
    %355 = vmatpush1.msra.mxu0 0.0
    %356 = vmatprep.subr.mxu0 0.0
    %357 = vmatpush1.msra.mxu0 0.0
    %358 = vmatprep.subr.mxu0 0.0
    %359 = vmatpush1.msra.mxu0 0.0
    %360 = vmatprep.subr.mxu0 0.0
    %361 = vmatpush1.msra.mxu0 0.0
    %362 = vmatprep.subr.mxu0 0.0
    %363 = vmatpush1.msra.mxu0 0.0
    %364 = vmatprep.subr.mxu0 0.0
    %365 = vmatpush1.msra.mxu0 0.0
    %366 = vmatprep.subr.mxu0 0.0
    %367 = vmatpush1.msra.mxu0 0.0
    %368 = vmatprep.subr.mxu0 0.0
    %369 = vmatpush1.msra.mxu0 0.0
    %370 = vmatprep.subr.mxu0 0.0
    %371 = vmatpush1.msra.mxu0 0.0
    %372 = vmatprep.subr.mxu0 0.0
    %373 = vmatpush1.msra.mxu0 0.0
    %374 = vmatprep.subr.mxu0 0.0
    %375 = vmatpush1.msra.mxu0 0.0
    %376 = vmatprep.subr.mxu0 0.0
    %377 = vmatpush1.msra.mxu0 0.0
    %378 = vmatprep.subr.mxu0 0.0
    %379 = vmatpush1.msra.mxu0 0.0
    %380 = vmatprep.mubr.f32.mxu0 0.0
    %381 = vmatmul.mubr.f32.gmra.mrb[0].mxu0 %v243
    %v382 = vpop.f32.mrb[0].mxu0
    %v383 = vadd.f32 %v219, %v382
    %v384 = vpop.f32.mrb[0].mxu0
    %385 = vdwg.mxu0
    %386 = vmatprep.subr.mxu0 %v159
    %387 = vmatpush1.msra.mxu0 %v158
    %388 = vmatprep.subr.mxu0 %v162
    %389 = vmatpush1.msra.mxu0 %v161
    %390 = vmatprep.subr.mxu0 %v165
    %391 = vmatpush1.msra.mxu0 %v164
    %392 = vmatprep.subr.mxu0 %v168
    %393 = vmatpush1.msra.mxu0 %v167
    %394 = vmatprep.subr.mxu0 %v171
    %395 = vmatpush1.msra.mxu0 %v170
    %396 = vmatprep.subr.mxu0 %v174
    %397 = vmatpush1.msra.mxu0 %v173
    %398 = vmatprep.subr.mxu0 %v177
    %399 = vmatpush1.msra.mxu0 %v176
    %400 = vmatprep.subr.mxu0 %v180
    %401 = vmatpush1.msra.mxu0 %v179
    %402 = vmatprep.subr.mxu0 %v183
    %403 = vmatpush1.msra.mxu0 %v182
    %404 = vmatprep.subr.mxu0 %v186
    %405 = vmatpush1.msra.mxu0 %v185
    %406 = vmatprep.subr.mxu0 %v189
    %407 = vmatpush1.msra.mxu0 %v188
    %408 = vmatprep.subr.mxu0 %v192
    %409 = vmatpush1.msra.mxu0 %v191
    %410 = vmatprep.subr.mxu0 %v195
    %411 = vmatpush1.msra.mxu0 %v194
    %412 = vmatprep.subr.mxu0 %v198
    %413 = vmatpush1.msra.mxu0 %v197
    %414 = vmatprep.subr.mxu0 %v201
    %415 = vmatpush1.msra.mxu0 %v200
    %416 = vmatprep.subr.mxu0 %v204
    %417 = vmatpush1.msra.mxu0 %v203
    %418 = vmatprep.subr.mxu0 0.0
    %419 = vmatpush1.msra.mxu0 0.0
    %420 = vmatprep.subr.mxu0 0.0
    %421 = vmatpush1.msra.mxu0 0.0
    %422 = vmatprep.subr.mxu0 0.0
    %423 = vmatpush1.msra.mxu0 0.0
    %424 = vmatprep.subr.mxu0 0.0
    %425 = vmatpush1.msra.mxu0 0.0
    %426 = vmatprep.subr.mxu0 0.0
    %427 = vmatpush1.msra.mxu0 0.0
    %428 = vmatprep.subr.mxu0 0.0
    %429 = vmatpush1.msra.mxu0 0.0
    %430 = vmatprep.subr.mxu0 0.0
    %431 = vmatpush1.msra.mxu0 0.0
    %432 = vmatprep.subr.mxu0 0.0
    %433 = vmatpush1.msra.mxu0 0.0
    %434 = vmatprep.subr.mxu0 0.0
    %435 = vmatpush1.msra.mxu0 0.0
    %436 = vmatprep.subr.mxu0 0.0
    %437 = vmatpush1.msra.mxu0 0.0
    %438 = vmatprep.subr.mxu0 0.0
    %439 = vmatpush1.msra.mxu0 0.0
    %440 = vmatprep.subr.mxu0 0.0
    %441 = vmatpush1.msra.mxu0 0.0
    %442 = vmatprep.subr.mxu0 0.0
    %443 = vmatpush1.msra.mxu0 0.0
    %444 = vmatprep.subr.mxu0 0.0
    %445 = vmatpush1.msra.mxu0 0.0
    %446 = vmatprep.subr.mxu0 0.0
    %447 = vmatpush1.msra.mxu0 0.0
    %448 = vmatprep.subr.mxu0 0.0
    %449 = vmatpush1.msra.mxu0 0.0
    %450 = vmatprep.mubr.f32.mxu0 0.0
    %451 = vmatmul.mubr.f32.gmra.mrb[0].mxu0 0.0
    %v452 = vpop.f32.mrb[0].mxu0
    %v453 = vadd.f32 %v228, %v452
    %v454 = vpop.f32.mrb[0].mxu0
    %v455 = vadd.f32 %v232, %v454
    %456 = vdwg.mxu0
    %457 = vmatprep.subr.mxu0 0.0
    %458 = vmatpush1.msra.mxu0 %v160
    %459 = vmatprep.subr.mxu0 0.0
    %460 = vmatpush1.msra.mxu0 %v163
    %461 = vmatprep.subr.mxu0 0.0
    %462 = vmatpush1.msra.mxu0 %v166
    %463 = vmatprep.subr.mxu0 0.0
    %464 = vmatpush1.msra.mxu0 %v169
    %465 = vmatprep.subr.mxu0 0.0
    %466 = vmatpush1.msra.mxu0 %v172
    %467 = vmatprep.subr.mxu0 0.0
    %468 = vmatpush1.msra.mxu0 %v175
    %469 = vmatprep.subr.mxu0 0.0
    %470 = vmatpush1.msra.mxu0 %v178
    %471 = vmatprep.subr.mxu0 0.0
    %472 = vmatpush1.msra.mxu0 %v181
    %473 = vmatprep.subr.mxu0 0.0
    %474 = vmatpush1.msra.mxu0 %v184
    %475 = vmatprep.subr.mxu0 0.0
    %476 = vmatpush1.msra.mxu0 %v187
    %477 = vmatprep.subr.mxu0 0.0
    %478 = vmatpush1.msra.mxu0 %v190
    %479 = vmatprep.subr.mxu0 0.0
    %480 = vmatpush1.msra.mxu0 %v193
    %481 = vmatprep.subr.mxu0 0.0
    %482 = vmatpush1.msra.mxu0 %v196
    %483 = vmatprep.subr.mxu0 0.0
    %484 = vmatpush1.msra.mxu0 %v199
    %485 = vmatprep.subr.mxu0 0.0
    %486 = vmatpush1.msra.mxu0 %v202
    %487 = vmatprep.subr.mxu0 0.0
    %488 = vmatpush1.msra.mxu0 %v205
    %489 = vmatprep.subr.mxu0 0.0
    %490 = vmatpush1.msra.mxu0 0.0
    %491 = vmatprep.subr.mxu0 0.0
    %492 = vmatpush1.msra.mxu0 0.0
    %493 = vmatprep.subr.mxu0 0.0
    %494 = vmatpush1.msra.mxu0 0.0
    %495 = vmatprep.subr.mxu0 0.0
    %496 = vmatpush1.msra.mxu0 0.0
    %497 = vmatprep.subr.mxu0 0.0
    %498 = vmatpush1.msra.mxu0 0.0
    %499 = vmatprep.subr.mxu0 0.0
    %500 = vmatpush1.msra.mxu0 0.0
    %501 = vmatprep.subr.mxu0 0.0
    %502 = vmatpush1.msra.mxu0 0.0
    %503 = vmatprep.subr.mxu0 0.0
    %504 = vmatpush1.msra.mxu0 0.0
    %505 = vmatprep.subr.mxu0 0.0
    %506 = vmatpush1.msra.mxu0 0.0
    %507 = vmatprep.subr.mxu0 0.0
    %508 = vmatpush1.msra.mxu0 0.0
    %509 = vmatprep.subr.mxu0 0.0
    %510 = vmatpush1.msra.mxu0 0.0
    %511 = vmatprep.subr.mxu0 0.0
    %512 = vmatpush1.msra.mxu0 0.0
    %513 = vmatprep.subr.mxu0 0.0
    %514 = vmatpush1.msra.mxu0 0.0
    %515 = vmatprep.subr.mxu0 0.0
    %516 = vmatpush1.msra.mxu0 0.0
    %517 = vmatprep.subr.mxu0 0.0
    %518 = vmatpush1.msra.mxu0 0.0
    %519 = vmatprep.subr.mxu0 0.0
    %520 = vmatpush1.msra.mxu0 0.0
    %521 = vmatprep.mubr.f32.mxu0 0.0
    %522 = vmatmul.mubr.f32.gmra.mrb[0].mxu0 0.0
    %v523 = vpop.f32.mrb[0].mxu0
    %v524 = vadd.f32 %v236, %v523
    %v525 = vpop.f32.mrb[0].mxu0
    %526 = vdwg.mxu0
    %v527 = vadd.f32 %v312, %v453
    %v528 = vxor.u32 %v527, 2147483648
    %v529 = vmul.f32 %v528, 1.442695
    %v530 = vpow.pop %v529
    %v531 = vadd.f32 %v530, 1.0
    %v532 = vrcp.pop %v531
    %v533 = vmul.f32 1.0, %v532
    %v534 = vadd.f32 %v314, %v455
    %v535 = vxor.u32 %v534, 2147483648
    %v536 = vmul.f32 %v535, 1.442695
    %v537 = vpow.pop %v536
    %v538 = vadd.f32 %v537, 1.0
    %v539 = vrcp.pop %v538
    %v540 = vmul.f32 1.0, %v539
    %v541 = vmul.f32 %v533, %v524
    %v542 = vadd.f32 %v383, %v541
    %v543 = vtanh.pop %v542
    %v544 = vsub.f32 1.0, %v540
    %v545 = vmul.f32 %v544, %v543
    %v546 = vmul.f32 %v540, 0.0
    %v547 = vadd.f32 %v545, %v546
    %v548 = vld [vmem:[%s3] sm:$0x3]
    %550 = vset.pattern.permute.xlu0 0
    %551 = vperm.xlu0 %550, %v548
    %v552 = vpop.permute.xlu0 %551
    %v554 = vmul.f32 %v552, %v547
    %v555 = vsub.f32 1.0, %v548
    %557 = vset.pattern.permute.xlu0 0
    %558 = vperm.xlu0 %557, %v555
    %v559 = vpop.permute.xlu0 %558
    %v561 = vmul.f32 %v559, 0.0
    %v562 = vadd.f32 %v554, %v561
    %s563 = scalar_lea.vmem %s1, 2
    %v564 = vld [vmem:[%s563] sm:$0x3]
    %v566 = vsel %vm241, %v564, 0
    %568 = vmatprep.subr.mxu0 %v153
    %569 = vmatpush1.msra.mxu0 %v152
    %570 = vmatprep.subr.mxu0 %v156
    %571 = vmatpush1.msra.mxu0 %v155
    %572 = vmatprep.subr.mxu0 0.0
    %573 = vmatpush1.msra.mxu0 0.0
    %574 = vmatprep.subr.mxu0 0.0
    %575 = vmatpush1.msra.mxu0 0.0
    %576 = vmatprep.subr.mxu0 0.0
    %577 = vmatpush1.msra.mxu0 0.0
    %578 = vmatprep.subr.mxu0 0.0
    %579 = vmatpush1.msra.mxu0 0.0
    %580 = vmatprep.subr.mxu0 0.0
    %581 = vmatpush1.msra.mxu0 0.0
    %582 = vmatprep.subr.mxu0 0.0
    %583 = vmatpush1.msra.mxu0 0.0
    %584 = vmatprep.subr.mxu0 0.0
    %585 = vmatpush1.msra.mxu0 0.0
    %586 = vmatprep.subr.mxu0 0.0
    %587 = vmatpush1.msra.mxu0 0.0
    %588 = vmatprep.subr.mxu0 0.0
    %589 = vmatpush1.msra.mxu0 0.0
    %590 = vmatprep.subr.mxu0 0.0
    %591 = vmatpush1.msra.mxu0 0.0
    %592 = vmatprep.subr.mxu0 0.0
    %593 = vmatpush1.msra.mxu0 0.0
    %594 = vmatprep.subr.mxu0 0.0
    %595 = vmatpush1.msra.mxu0 0.0
    %596 = vmatprep.subr.mxu0 0.0
    %597 = vmatpush1.msra.mxu0 0.0
    %598 = vmatprep.subr.mxu0 0.0
    %599 = vmatpush1.msra.mxu0 0.0
    %600 = vmatprep.subr.mxu0 0.0
    %601 = vmatpush1.msra.mxu0 0.0
    %602 = vmatprep.subr.mxu0 0.0
    %603 = vmatpush1.msra.mxu0 0.0
    %604 = vmatprep.subr.mxu0 0.0
    %605 = vmatpush1.msra.mxu0 0.0
    %606 = vmatprep.subr.mxu0 0.0
    %607 = vmatpush1.msra.mxu0 0.0
    %608 = vmatprep.subr.mxu0 0.0
    %609 = vmatpush1.msra.mxu0 0.0
    %610 = vmatprep.subr.mxu0 0.0
    %611 = vmatpush1.msra.mxu0 0.0
    %612 = vmatprep.subr.mxu0 0.0
    %613 = vmatpush1.msra.mxu0 0.0
    %614 = vmatprep.subr.mxu0 0.0
    %615 = vmatpush1.msra.mxu0 0.0
    %616 = vmatprep.subr.mxu0 0.0
    %617 = vmatpush1.msra.mxu0 0.0
    %618 = vmatprep.subr.mxu0 0.0
    %619 = vmatpush1.msra.mxu0 0.0
    %620 = vmatprep.subr.mxu0 0.0
    %621 = vmatpush1.msra.mxu0 0.0
    %622 = vmatprep.subr.mxu0 0.0
    %623 = vmatpush1.msra.mxu0 0.0
    %624 = vmatprep.subr.mxu0 0.0
    %625 = vmatpush1.msra.mxu0 0.0
    %626 = vmatprep.subr.mxu0 0.0
    %627 = vmatpush1.msra.mxu0 0.0
    %628 = vmatprep.subr.mxu0 0.0
    %629 = vmatpush1.msra.mxu0 0.0
    %630 = vmatprep.subr.mxu0 0.0
    %631 = vmatpush1.msra.mxu0 0.0
    %632 = vmatprep.mubr.f32.mxu0 0.0
    %633 = vmatmul.mubr.f32.gmra.mrb[0].mxu0 %v566
    %v634 = vpop.f32.mrb[0].mxu0
    %v635 = vadd.f32 %v211, %v634
    %v636 = vpop.f32.mrb[0].mxu0
    %v637 = vadd.f32 %v215, %v636
    %638 = vdwg.mxu0
    %639 = vmatprep.subr.mxu0 0.0
    %640 = vmatpush1.msra.mxu0 %v154
    %641 = vmatprep.subr.mxu0 0.0
    %642 = vmatpush1.msra.mxu0 %v157
    %643 = vmatprep.subr.mxu0 0.0
    %644 = vmatpush1.msra.mxu0 0.0
    %645 = vmatprep.subr.mxu0 0.0
    %646 = vmatpush1.msra.mxu0 0.0
    %647 = vmatprep.subr.mxu0 0.0
    %648 = vmatpush1.msra.mxu0 0.0
    %649 = vmatprep.subr.mxu0 0.0
    %650 = vmatpush1.msra.mxu0 0.0
    %651 = vmatprep.subr.mxu0 0.0
    %652 = vmatpush1.msra.mxu0 0.0
    %653 = vmatprep.subr.mxu0 0.0
    %654 = vmatpush1.msra.mxu0 0.0
    %655 = vmatprep.subr.mxu0 0.0
    %656 = vmatpush1.msra.mxu0 0.0
    %657 = vmatprep.subr.mxu0 0.0
    %658 = vmatpush1.msra.mxu0 0.0
    %659 = vmatprep.subr.mxu0 0.0
    %660 = vmatpush1.msra.mxu0 0.0
    %661 = vmatprep.subr.mxu0 0.0
    %662 = vmatpush1.msra.mxu0 0.0
    %663 = vmatprep.subr.mxu0 0.0
    %664 = vmatpush1.msra.mxu0 0.0
    %665 = vmatprep.subr.mxu0 0.0
    %666 = vmatpush1.msra.mxu0 0.0
    %667 = vmatprep.subr.mxu0 0.0
    %668 = vmatpush1.msra.mxu0 0.0
    %669 = vmatprep.subr.mxu0 0.0
    %670 = vmatpush1.msra.mxu0 0.0
    %671 = vmatprep.subr.mxu0 0.0
    %672 = vmatpush1.msra.mxu0 0.0
    %673 = vmatprep.subr.mxu0 0.0
    %674 = vmatpush1.msra.mxu0 0.0
    %675 = vmatprep.subr.mxu0 0.0
    %676 = vmatpush1.msra.mxu0 0.0
    %677 = vmatprep.subr.mxu0 0.0
    %678 = vmatpush1.msra.mxu0 0.0
    %679 = vmatprep.subr.mxu0 0.0
    %680 = vmatpush1.msra.mxu0 0.0
    %681 = vmatprep.subr.mxu0 0.0
    %682 = vmatpush1.msra.mxu0 0.0
    %683 = vmatprep.subr.mxu0 0.0
    %684 = vmatpush1.msra.mxu0 0.0
    %685 = vmatprep.subr.mxu0 0.0
    %686 = vmatpush1.msra.mxu0 0.0
    %687 = vmatprep.subr.mxu0 0.0
    %688 = vmatpush1.msra.mxu0 0.0
    %689 = vmatprep.subr.mxu0 0.0
    %690 = vmatpush1.msra.mxu0 0.0
    %691 = vmatprep.subr.mxu0 0.0
    %692 = vmatpush1.msra.mxu0 0.0
    %693 = vmatprep.subr.mxu0 0.0
    %694 = vmatpush1.msra.mxu0 0.0
    %695 = vmatprep.subr.mxu0 0.0
    %696 = vmatpush1.msra.mxu0 0.0
    %697 = vmatprep.subr.mxu0 0.0
    %698 = vmatpush1.msra.mxu0 0.0
    %699 = vmatprep.subr.mxu0 0.0
    %700 = vmatpush1.msra.mxu0 0.0
    %701 = vmatprep.subr.mxu0 0.0
    %702 = vmatpush1.msra.mxu0 0.0
    %703 = vmatprep.mubr.f32.mxu0 0.0
    %704 = vmatmul.mubr.f32.gmra.mrb[0].mxu0 %v566
    %v705 = vpop.f32.mrb[0].mxu0
    %v706 = vadd.f32 %v219, %v705
    %v707 = vpop.f32.mrb[0].mxu0
    %708 = vdwg.mxu0
    %709 = vmatprep.subr.mxu0 %v159
    %710 = vmatpush1.msra.mxu0 %v158
    %711 = vmatprep.subr.mxu0 %v162
    %712 = vmatpush1.msra.mxu0 %v161
    %713 = vmatprep.subr.mxu0 %v165
    %714 = vmatpush1.msra.mxu0 %v164
    %715 = vmatprep.subr.mxu0 %v168
    %716 = vmatpush1.msra.mxu0 %v167
    %717 = vmatprep.subr.mxu0 %v171
    %718 = vmatpush1.msra.mxu0 %v170
    %719 = vmatprep.subr.mxu0 %v174
    %720 = vmatpush1.msra.mxu0 %v173
    %721 = vmatprep.subr.mxu0 %v177
    %722 = vmatpush1.msra.mxu0 %v176
    %723 = vmatprep.subr.mxu0 %v180
    %724 = vmatpush1.msra.mxu0 %v179
    %725 = vmatprep.subr.mxu0 %v183
    %726 = vmatpush1.msra.mxu0 %v182
    %727 = vmatprep.subr.mxu0 %v186
    %728 = vmatpush1.msra.mxu0 %v185
    %729 = vmatprep.subr.mxu0 %v189
    %730 = vmatpush1.msra.mxu0 %v188
    %731 = vmatprep.subr.mxu0 %v192
    %732 = vmatpush1.msra.mxu0 %v191
    %733 = vmatprep.subr.mxu0 %v195
    %734 = vmatpush1.msra.mxu0 %v194
    %735 = vmatprep.subr.mxu0 %v198
    %736 = vmatpush1.msra.mxu0 %v197
    %737 = vmatprep.subr.mxu0 %v201
    %738 = vmatpush1.msra.mxu0 %v200
    %739 = vmatprep.subr.mxu0 %v204
    %740 = vmatpush1.msra.mxu0 %v203
    %741 = vmatprep.subr.mxu0 0.0
    %742 = vmatpush1.msra.mxu0 0.0
    %743 = vmatprep.subr.mxu0 0.0
    %744 = vmatpush1.msra.mxu0 0.0
    %745 = vmatprep.subr.mxu0 0.0
    %746 = vmatpush1.msra.mxu0 0.0
    %747 = vmatprep.subr.mxu0 0.0
    %748 = vmatpush1.msra.mxu0 0.0
    %749 = vmatprep.subr.mxu0 0.0
    %750 = vmatpush1.msra.mxu0 0.0
    %751 = vmatprep.subr.mxu0 0.0
    %752 = vmatpush1.msra.mxu0 0.0
    %753 = vmatprep.subr.mxu0 0.0
    %754 = vmatpush1.msra.mxu0 0.0
    %755 = vmatprep.subr.mxu0 0.0
    %756 = vmatpush1.msra.mxu0 0.0
    %757 = vmatprep.subr.mxu0 0.0
    %758 = vmatpush1.msra.mxu0 0.0
    %759 = vmatprep.subr.mxu0 0.0
    %760 = vmatpush1.msra.mxu0 0.0
    %761 = vmatprep.subr.mxu0 0.0
    %762 = vmatpush1.msra.mxu0 0.0
    %763 = vmatprep.subr.mxu0 0.0
    %764 = vmatpush1.msra.mxu0 0.0
    %765 = vmatprep.subr.mxu0 0.0
    %766 = vmatpush1.msra.mxu0 0.0
    %767 = vmatprep.subr.mxu0 0.0
    %768 = vmatpush1.msra.mxu0 0.0
    %769 = vmatprep.subr.mxu0 0.0
    %770 = vmatpush1.msra.mxu0 0.0
    %771 = vmatprep.subr.mxu0 0.0
    %772 = vmatpush1.msra.mxu0 0.0
    %773 = vmatprep.mubr.f32.mxu0 0.0
    %774 = vmatmul.mubr.f32.gmra.mrb[0].mxu0 %v562
    %v775 = vpop.f32.mrb[0].mxu0
    %v776 = vadd.f32 %v228, %v775
    %v777 = vpop.f32.mrb[0].mxu0
    %v778 = vadd.f32 %v232, %v777
    %779 = vdwg.mxu0
    %780 = vmatprep.subr.mxu0 0.0
    %781 = vmatpush1.msra.mxu0 %v160
    %782 = vmatprep.subr.mxu0 0.0
    %783 = vmatpush1.msra.mxu0 %v163
    %784 = vmatprep.subr.mxu0 0.0
    %785 = vmatpush1.msra.mxu0 %v166
    %786 = vmatprep.subr.mxu0 0.0
    %787 = vmatpush1.msra.mxu0 %v169
    %788 = vmatprep.subr.mxu0 0.0
    %789 = vmatpush1.msra.mxu0 %v172
    %790 = vmatprep.subr.mxu0 0.0
    %791 = vmatpush1.msra.mxu0 %v175
    %792 = vmatprep.subr.mxu0 0.0
    %793 = vmatpush1.msra.mxu0 %v178
    %794 = vmatprep.subr.mxu0 0.0
    %795 = vmatpush1.msra.mxu0 %v181
    %796 = vmatprep.subr.mxu0 0.0
    %797 = vmatpush1.msra.mxu0 %v184
    %798 = vmatprep.subr.mxu0 0.0
    %799 = vmatpush1.msra.mxu0 %v187
    %800 = vmatprep.subr.mxu0 0.0
    %801 = vmatpush1.msra.mxu0 %v190
    %802 = vmatprep.subr.mxu0 0.0
    %803 = vmatpush1.msra.mxu0 %v193
    %804 = vmatprep.subr.mxu0 0.0
    %805 = vmatpush1.msra.mxu0 %v196
    %806 = vmatprep.subr.mxu0 0.0
    %807 = vmatpush1.msra.mxu0 %v199
    %808 = vmatprep.subr.mxu0 0.0
    %809 = vmatpush1.msra.mxu0 %v202
    %810 = vmatprep.subr.mxu0 0.0
    %811 = vmatpush1.msra.mxu0 %v205
    %812 = vmatprep.subr.mxu0 0.0
    %813 = vmatpush1.msra.mxu0 0.0
    %814 = vmatprep.subr.mxu0 0.0
    %815 = vmatpush1.msra.mxu0 0.0
    %816 = vmatprep.subr.mxu0 0.0
    %817 = vmatpush1.msra.mxu0 0.0
    %818 = vmatprep.subr.mxu0 0.0
    %819 = vmatpush1.msra.mxu0 0.0
    %820 = vmatprep.subr.mxu0 0.0
    %821 = vmatpush1.msra.mxu0 0.0
    %822 = vmatprep.subr.mxu0 0.0
    %823 = vmatpush1.msra.mxu0 0.0
    %824 = vmatprep.subr.mxu0 0.0
    %825 = vmatpush1.msra.mxu0 0.0
    %826 = vmatprep.subr.mxu0 0.0
    %827 = vmatpush1.msra.mxu0 0.0
    %828 = vmatprep.subr.mxu0 0.0
    %829 = vmatpush1.msra.mxu0 0.0
    %830 = vmatprep.subr.mxu0 0.0
    %831 = vmatpush1.msra.mxu0 0.0
    %832 = vmatprep.subr.mxu0 0.0
    %833 = vmatpush1.msra.mxu0 0.0
    %834 = vmatprep.subr.mxu0 0.0
    %835 = vmatpush1.msra.mxu0 0.0
    %836 = vmatprep.subr.mxu0 0.0
    %837 = vmatpush1.msra.mxu0 0.0
    %838 = vmatprep.subr.mxu0 0.0
    %839 = vmatpush1.msra.mxu0 0.0
    %840 = vmatprep.subr.mxu0 0.0
    %841 = vmatpush1.msra.mxu0 0.0
    %842 = vmatprep.subr.mxu0 0.0
    %843 = vmatpush1.msra.mxu0 0.0
    %844 = vmatprep.mubr.f32.mxu0 0.0
    %845 = vmatmul.mubr.f32.gmra.mrb[0].mxu0 %v562
    %v846 = vpop.f32.mrb[0].mxu0
    %v847 = vadd.f32 %v236, %v846
    %v848 = vpop.f32.mrb[0].mxu0
    %849 = vdwg.mxu0
    %v850 = vadd.f32 %v635, %v776
    %v851 = vxor.u32 %v850, 2147483648
    %v852 = vmul.f32 %v851, 1.442695
    %v853 = vpow.pop %v852
    %v854 = vadd.f32 %v853, 1.0
    %v855 = vrcp.pop %v854
    %v856 = vmul.f32 1.0, %v855
    %v857 = vadd.f32 %v637, %v778
    %v858 = vxor.u32 %v857, 2147483648
    %v859 = vmul.f32 %v858, 1.442695
    %v860 = vpow.pop %v859
    %v861 = vadd.f32 %v860, 1.0
    %v862 = vrcp.pop %v861
    %v863 = vmul.f32 1.0, %v862
    %v864 = vmul.f32 %v856, %v847
    %v865 = vadd.f32 %v706, %v864
    %v866 = vtanh.pop %v865
    %v867 = vsub.f32 1.0, %v863
    %v868 = vmul.f32 %v867, %v866
    %v869 = vmul.f32 %v863, %v562
    %v870 = vadd.f32 %v868, %v869
    %s871 = scalar_lea.vmem %s3, 2
    %v872 = vld [vmem:[%s871] sm:$0x3]
    %874 = vset.pattern.permute.xlu0 0
    %875 = vperm.xlu0 %874, %v872
    %v876 = vpop.permute.xlu0 %875
    %v878 = vmul.f32 %v876, %v870
    %v879 = vsub.f32 1.0, %v872
    %881 = vset.pattern.permute.xlu0 0
    %882 = vperm.xlu0 %881, %v879
    %v883 = vpop.permute.xlu0 %882
    %v885 = vmul.f32 %v883, %v562
    %v886 = vadd.f32 %v878, %v885
    %s887 = scalar_lea.vmem %s1, 4
    %v888 = vld [vmem:[%s887] sm:$0x3]
    %v890 = vsel %vm241, %v888, 0
    %892 = vmatprep.subr.mxu0 %v153
    %893 = vmatpush1.msra.mxu0 %v152
    %894 = vmatprep.subr.mxu0 %v156
    %895 = vmatpush1.msra.mxu0 %v155
    %896 = vmatprep.subr.mxu0 0.0
    %897 = vmatpush1.msra.mxu0 0.0
    %898 = vmatprep.subr.mxu0 0.0
    %899 = vmatpush1.msra.mxu0 0.0
    %900 = vmatprep.subr.mxu0 0.0
    %901 = vmatpush1.msra.mxu0 0.0
    %902 = vmatprep.subr.mxu0 0.0
    %903 = vmatpush1.msra.mxu0 0.0
    %904 = vmatprep.subr.mxu0 0.0
    %905 = vmatpush1.msra.mxu0 0.0
    %906 = vmatprep.subr.mxu0 0.0
    %907 = vmatpush1.msra.mxu0 0.0
    %908 = vmatprep.subr.mxu0 0.0
    %909 = vmatpush1.msra.mxu0 0.0
    %910 = vmatprep.subr.mxu0 0.0
    %911 = vmatpush1.msra.mxu0 0.0
    %912 = vmatprep.subr.mxu0 0.0
    %913 = vmatpush1.msra.mxu0 0.0
    %914 = vmatprep.subr.mxu0 0.0
    %915 = vmatpush1.msra.mxu0 0.0
    %916 = vmatprep.subr.mxu0 0.0
    %917 = vmatpush1.msra.mxu0 0.0
    %918 = vmatprep.subr.mxu0 0.0
    %919 = vmatpush1.msra.mxu0 0.0
    %920 = vmatprep.subr.mxu0 0.0
    %921 = vmatpush1.msra.mxu0 0.0
    %922 = vmatprep.subr.mxu0 0.0
    %923 = vmatpush1.msra.mxu0 0.0
    %924 = vmatprep.subr.mxu0 0.0
    %925 = vmatpush1.msra.mxu0 0.0
    %926 = vmatprep.subr.mxu0 0.0
    %927 = vmatpush1.msra.mxu0 0.0
    %928 = vmatprep.subr.mxu0 0.0
    %929 = vmatpush1.msra.mxu0 0.0
    %930 = vmatprep.subr.mxu0 0.0
    %931 = vmatpush1.msra.mxu0 0.0
    %932 = vmatprep.subr.mxu0 0.0
    %933 = vmatpush1.msra.mxu0 0.0
    %934 = vmatprep.subr.mxu0 0.0
    %935 = vmatpush1.msra.mxu0 0.0
    %936 = vmatprep.subr.mxu0 0.0
    %937 = vmatpush1.msra.mxu0 0.0
    %938 = vmatprep.subr.mxu0 0.0
    %939 = vmatpush1.msra.mxu0 0.0
    %940 = vmatprep.subr.mxu0 0.0
    %941 = vmatpush1.msra.mxu0 0.0
    %942 = vmatprep.subr.mxu0 0.0
    %943 = vmatpush1.msra.mxu0 0.0
    %944 = vmatprep.subr.mxu0 0.0
    %945 = vmatpush1.msra.mxu0 0.0
    %946 = vmatprep.subr.mxu0 0.0
    %947 = vmatpush1.msra.mxu0 0.0
    %948 = vmatprep.subr.mxu0 0.0
    %949 = vmatpush1.msra.mxu0 0.0
    %950 = vmatprep.subr.mxu0 0.0
    %951 = vmatpush1.msra.mxu0 0.0
    %952 = vmatprep.subr.mxu0 0.0
    %953 = vmatpush1.msra.mxu0 0.0
    %954 = vmatprep.subr.mxu0 0.0
    %955 = vmatpush1.msra.mxu0 0.0
    %956 = vmatprep.mubr.f32.mxu0 0.0
    %957 = vmatmul.mubr.f32.gmra.mrb[0].mxu0 %v890
    %v958 = vpop.f32.mrb[0].mxu0
    %v959 = vadd.f32 %v211, %v958
    %v960 = vpop.f32.mrb[0].mxu0
    %v961 = vadd.f32 %v215, %v960
    %962 = vdwg.mxu0
    %963 = vmatprep.subr.mxu0 0.0
    %964 = vmatpush1.msra.mxu0 %v154
    %965 = vmatprep.subr.mxu0 0.0
    %966 = vmatpush1.msra.mxu0 %v157
    %967 = vmatprep.subr.mxu0 0.0
    %968 = vmatpush1.msra.mxu0 0.0
    %969 = vmatprep.subr.mxu0 0.0
    %970 = vmatpush1.msra.mxu0 0.0
    %971 = vmatprep.subr.mxu0 0.0
    %972 = vmatpush1.msra.mxu0 0.0
    %973 = vmatprep.subr.mxu0 0.0
    %974 = vmatpush1.msra.mxu0 0.0
    %975 = vmatprep.subr.mxu0 0.0
    %976 = vmatpush1.msra.mxu0 0.0
    %977 = vmatprep.subr.mxu0 0.0
    %978 = vmatpush1.msra.mxu0 0.0
    %979 = vmatprep.subr.mxu0 0.0
    %980 = vmatpush1.msra.mxu0 0.0
    %981 = vmatprep.subr.mxu0 0.0
    %982 = vmatpush1.msra.mxu0 0.0
    %983 = vmatprep.subr.mxu0 0.0
    %984 = vmatpush1.msra.mxu0 0.0
    %985 = vmatprep.subr.mxu0 0.0
    %986 = vmatpush1.msra.mxu0 0.0
    %987 = vmatprep.subr.mxu0 0.0
    %988 = vmatpush1.msra.mxu0 0.0
    %989 = vmatprep.subr.mxu0 0.0
    %990 = vmatpush1.msra.mxu0 0.0
    %991 = vmatprep.subr.mxu0 0.0
    %992 = vmatpush1.msra.mxu0 0.0
    %993 = vmatprep.subr.mxu0 0.0
    %994 = vmatpush1.msra.mxu0 0.0
    %995 = vmatprep.subr.mxu0 0.0
    %996 = vmatpush1.msra.mxu0 0.0
    %997 = vmatprep.subr.mxu0 0.0
    %998 = vmatpush1.msra.mxu0 0.0
    %999 = vmatprep.subr.mxu0 0.0
    %1000 = vmatpush1.msra.mxu0 0.0
    %1001 = vmatprep.subr.mxu0 0.0
    %1002 = vmatpush1.msra.mxu0 0.0
    %1003 = vmatprep.subr.mxu0 0.0
    %1004 = vmatpush1.msra.mxu0 0.0
    %1005 = vmatprep.subr.mxu0 0.0
    %1006 = vmatpush1.msra.mxu0 0.0
    %1007 = vmatprep.subr.mxu0 0.0
    %1008 = vmatpush1.msra.mxu0 0.0
    %1009 = vmatprep.subr.mxu0 0.0
    %1010 = vmatpush1.msra.mxu0 0.0
    %1011 = vmatprep.subr.mxu0 0.0
    %1012 = vmatpush1.msra.mxu0 0.0
    %1013 = vmatprep.subr.mxu0 0.0
    %1014 = vmatpush1.msra.mxu0 0.0
    %1015 = vmatprep.subr.mxu0 0.0
    %1016 = vmatpush1.msra.mxu0 0.0
    %1017 = vmatprep.subr.mxu0 0.0
    %1018 = vmatpush1.msra.mxu0 0.0
    %1019 = vmatprep.subr.mxu0 0.0
    %1020 = vmatpush1.msra.mxu0 0.0
    %1021 = vmatprep.subr.mxu0 0.0
    %1022 = vmatpush1.msra.mxu0 0.0
    %1023 = vmatprep.subr.mxu0 0.0
    %1024 = vmatpush1.msra.mxu0 0.0
    %1025 = vmatprep.subr.mxu0 0.0
    %1026 = vmatpush1.msra.mxu0 0.0
    %1027 = vmatprep.mubr.f32.mxu0 0.0
    %1028 = vmatmul.mubr.f32.gmra.mrb[0].mxu0 %v890
    %v1029 = vpop.f32.mrb[0].mxu0
    %v1030 = vadd.f32 %v219, %v1029
    %v1031 = vpop.f32.mrb[0].mxu0
    %1032 = vdwg.mxu0
    %1033 = vmatprep.subr.mxu0 %v159
    %1034 = vmatpush1.msra.mxu0 %v158
    %1035 = vmatprep.subr.mxu0 %v162
    %1036 = vmatpush1.msra.mxu0 %v161
    %1037 = vmatprep.subr.mxu0 %v165
    %1038 = vmatpush1.msra.mxu0 %v164
    %1039 = vmatprep.subr.mxu0 %v168
    %1040 = vmatpush1.msra.mxu0 %v167
    %1041 = vmatprep.subr.mxu0 %v171
    %1042 = vmatpush1.msra.mxu0 %v170
    %1043 = vmatprep.subr.mxu0 %v174
    %1044 = vmatpush1.msra.mxu0 %v173
    %1045 = vmatprep.subr.mxu0 %v177
    %1046 = vmatpush1.msra.mxu0 %v176
    %1047 = vmatprep.subr.mxu0 %v180
    %1048 = vmatpush1.msra.mxu0 %v179
    %1049 = vmatprep.subr.mxu0 %v183
    %1050 = vmatpush1.msra.mxu0 %v182
    %1051 = vmatprep.subr.mxu0 %v186
    %1052 = vmatpush1.msra.mxu0 %v185
    %1053 = vmatprep.subr.mxu0 %v189
    %1054 = vmatpush1.msra.mxu0 %v188
    %1055 = vmatprep.subr.mxu0 %v192
    %1056 = vmatpush1.msra.mxu0 %v191
    %1057 = vmatprep.subr.mxu0 %v195
    %1058 = vmatpush1.msra.mxu0 %v194
    %1059 = vmatprep.subr.mxu0 %v198
    %1060 = vmatpush1.msra.mxu0 %v197
    %1061 = vmatprep.subr.mxu0 %v201
    %1062 = vmatpush1.msra.mxu0 %v200
    %1063 = vmatprep.subr.mxu0 %v204
    %1064 = vmatpush1.msra.mxu0 %v203
    %1065 = vmatprep.subr.mxu0 0.0
    %1066 = vmatpush1.msra.mxu0 0.0
    %1067 = vmatprep.subr.mxu0 0.0
    %1068 = vmatpush1.msra.mxu0 0.0
    %1069 = vmatprep.subr.mxu0 0.0
    %1070 = vmatpush1.msra.mxu0 0.0
    %1071 = vmatprep.subr.mxu0 0.0
    %1072 = vmatpush1.msra.mxu0 0.0
    %1073 = vmatprep.subr.mxu0 0.0
    %1074 = vmatpush1.msra.mxu0 0.0
    %1075 = vmatprep.subr.mxu0 0.0
    %1076 = vmatpush1.msra.mxu0 0.0
    %1077 = vmatprep.subr.mxu0 0.0
    %1078 = vmatpush1.msra.mxu0 0.0
    %1079 = vmatprep.subr.mxu0 0.0
    %1080 = vmatpush1.msra.mxu0 0.0
    %1081 = vmatprep.subr.mxu0 0.0
    %1082 = vmatpush1.msra.mxu0 0.0
    %1083 = vmatprep.subr.mxu0 0.0
    %1084 = vmatpush1.msra.mxu0 0.0
    %1085 = vmatprep.subr.mxu0 0.0
    %1086 = vmatpush1.msra.mxu0 0.0
    %1087 = vmatprep.subr.mxu0 0.0
    %1088 = vmatpush1.msra.mxu0 0.0
    %1089 = vmatprep.subr.mxu0 0.0
    %1090 = vmatpush1.msra.mxu0 0.0
    %1091 = vmatprep.subr.mxu0 0.0
    %1092 = vmatpush1.msra.mxu0 0.0
    %1093 = vmatprep.subr.mxu0 0.0
    %1094 = vmatpush1.msra.mxu0 0.0
    %1095 = vmatprep.subr.mxu0 0.0
    %1096 = vmatpush1.msra.mxu0 0.0
    %1097 = vmatprep.mubr.f32.mxu0 0.0
    %1098 = vmatmul.mubr.f32.gmra.mrb[0].mxu0 %v886
    %v1099 = vpop.f32.mrb[0].mxu0
    %v1100 = vadd.f32 %v228, %v1099
    %v1101 = vpop.f32.mrb[0].mxu0
    %v1102 = vadd.f32 %v232, %v1101
    %1103 = vdwg.mxu0
    %1104 = vmatprep.subr.mxu0 0.0
    %1105 = vmatpush1.msra.mxu0 %v160
    %1106 = vmatprep.subr.mxu0 0.0
    %1107 = vmatpush1.msra.mxu0 %v163
    %1108 = vmatprep.subr.mxu0 0.0
    %1109 = vmatpush1.msra.mxu0 %v166
    %1110 = vmatprep.subr.mxu0 0.0
    %1111 = vmatpush1.msra.mxu0 %v169
    %1112 = vmatprep.subr.mxu0 0.0
    %1113 = vmatpush1.msra.mxu0 %v172
    %1114 = vmatprep.subr.mxu0 0.0
    %1115 = vmatpush1.msra.mxu0 %v175
    %1116 = vmatprep.subr.mxu0 0.0
    %1117 = vmatpush1.msra.mxu0 %v178
    %1118 = vmatprep.subr.mxu0 0.0
    %1119 = vmatpush1.msra.mxu0 %v181
    %1120 = vmatprep.subr.mxu0 0.0
    %1121 = vmatpush1.msra.mxu0 %v184
    %1122 = vmatprep.subr.mxu0 0.0
    %1123 = vmatpush1.msra.mxu0 %v187
    %1124 = vmatprep.subr.mxu0 0.0
    %1125 = vmatpush1.msra.mxu0 %v190
    %1126 = vmatprep.subr.mxu0 0.0
    %1127 = vmatpush1.msra.mxu0 %v193
    %1128 = vmatprep.subr.mxu0 0.0
    %1129 = vmatpush1.msra.mxu0 %v196
    %1130 = vmatprep.subr.mxu0 0.0
    %1131 = vmatpush1.msra.mxu0 %v199
    %1132 = vmatprep.subr.mxu0 0.0
    %1133 = vmatpush1.msra.mxu0 %v202
    %1134 = vmatprep.subr.mxu0 0.0
    %1135 = vmatpush1.msra.mxu0 %v205
    %1136 = vmatprep.subr.mxu0 0.0
    %1137 = vmatpush1.msra.mxu0 0.0
    %1138 = vmatprep.subr.mxu0 0.0
    %1139 = vmatpush1.msra.mxu0 0.0
    %1140 = vmatprep.subr.mxu0 0.0
    %1141 = vmatpush1.msra.mxu0 0.0
    %1142 = vmatprep.subr.mxu0 0.0
    %1143 = vmatpush1.msra.mxu0 0.0
    %1144 = vmatprep.subr.mxu0 0.0
    %1145 = vmatpush1.msra.mxu0 0.0
    %1146 = vmatprep.subr.mxu0 0.0
    %1147 = vmatpush1.msra.mxu0 0.0
    %1148 = vmatprep.subr.mxu0 0.0
    %1149 = vmatpush1.msra.mxu0 0.0
    %1150 = vmatprep.subr.mxu0 0.0
    %1151 = vmatpush1.msra.mxu0 0.0
    %1152 = vmatprep.subr.mxu0 0.0
    %1153 = vmatpush1.msra.mxu0 0.0
    %1154 = vmatprep.subr.mxu0 0.0
    %1155 = vmatpush1.msra.mxu0 0.0
    %1156 = vmatprep.subr.mxu0 0.0
    %1157 = vmatpush1.msra.mxu0 0.0
    %1158 = vmatprep.subr.mxu0 0.0
    %1159 = vmatpush1.msra.mxu0 0.0
    %1160 = vmatprep.subr.mxu0 0.0
    %1161 = vmatpush1.msra.mxu0 0.0
    %1162 = vmatprep.subr.mxu0 0.0
    %1163 = vmatpush1.msra.mxu0 0.0
    %1164 = vmatprep.subr.mxu0 0.0
    %1165 = vmatpush1.msra.mxu0 0.0
    %1166 = vmatprep.subr.mxu0 0.0
    %1167 = vmatpush1.msra.mxu0 0.0
    %1168 = vmatprep.mubr.f32.mxu0 0.0
    %1169 = vmatmul.mubr.f32.gmra.mrb[0].mxu0 %v886
    %v1170 = vpop.f32.mrb[0].mxu0
    %v1171 = vadd.f32 %v236, %v1170
    %v1172 = vpop.f32.mrb[0].mxu0
    %1173 = vdwg.mxu0
    %v1174 = vadd.f32 %v959, %v1100
    %v1175 = vxor.u32 %v1174, 2147483648
    %v1176 = vmul.f32 %v1175, 1.442695
    %v1177 = vpow.pop %v1176
    %v1178 = vadd.f32 %v1177, 1.0
    %v1179 = vrcp.pop %v1178
    %v1180 = vmul.f32 1.0, %v1179
    %v1181 = vadd.f32 %v961, %v1102
    %v1182 = vxor.u32 %v1181, 2147483648
    %v1183 = vmul.f32 %v1182, 1.442695
    %v1184 = vpow.pop %v1183
    %v1185 = vadd.f32 %v1184, 1.0
    %v1186 = vrcp.pop %v1185
    %v1187 = vmul.f32 1.0, %v1186
    %v1188 = vmul.f32 %v1180, %v1171
    %v1189 = vadd.f32 %v1030, %v1188
    %v1190 = vtanh.pop %v1189
    %v1191 = vsub.f32 1.0, %v1187
    %v1192 = vmul.f32 %v1191, %v1190
    %v1193 = vmul.f32 %v1187, %v886
    %v1194 = vadd.f32 %v1192, %v1193
    %s1195 = scalar_lea.vmem %s3, 4
    %v1196 = vld [vmem:[%s1195] sm:$0x3]
    %1198 = vset.pattern.permute.xlu0 0
    %1199 = vperm.xlu0 %1198, %v1196
    %v1200 = vpop.permute.xlu0 %1199
    %v1202 = vmul.f32 %v1200, %v1194
    %v1203 = vsub.f32 1.0, %v1196
    %1205 = vset.pattern.permute.xlu0 0
    %1206 = vperm.xlu0 %1205, %v1203
    %v1207 = vpop.permute.xlu0 %1206
    %v1209 = vmul.f32 %v1207, %v886
    %v1210 = vadd.f32 %v1202, %v1209
    %s1211 = scalar_lea.vmem %s1, 6
    %v1212 = vld [vmem:[%s1211] sm:$0x3]
    %v1214 = vsel %vm241, %v1212, 0
    %1216 = vmatprep.subr.mxu0 %v153
    %1217 = vmatpush1.msra.mxu0 %v152
    %1218 = vmatprep.subr.mxu0 %v156
    %1219 = vmatpush1.msra.mxu0 %v155
    %1220 = vmatprep.subr.mxu0 0.0
    %1221 = vmatpush1.msra.mxu0 0.0
    %1222 = vmatprep.subr.mxu0 0.0
    %1223 = vmatpush1.msra.mxu0 0.0
    %1224 = vmatprep.subr.mxu0 0.0
    %1225 = vmatpush1.msra.mxu0 0.0
    %1226 = vmatprep.subr.mxu0 0.0
    %1227 = vmatpush1.msra.mxu0 0.0
    %1228 = vmatprep.subr.mxu0 0.0
    %1229 = vmatpush1.msra.mxu0 0.0
    %1230 = vmatprep.subr.mxu0 0.0
    %1231 = vmatpush1.msra.mxu0 0.0
    %1232 = vmatprep.subr.mxu0 0.0
    %1233 = vmatpush1.msra.mxu0 0.0
    %1234 = vmatprep.subr.mxu0 0.0
    %1235 = vmatpush1.msra.mxu0 0.0
    %1236 = vmatprep.subr.mxu0 0.0
    %1237 = vmatpush1.msra.mxu0 0.0
    %1238 = vmatprep.subr.mxu0 0.0
    %1239 = vmatpush1.msra.mxu0 0.0
    %1240 = vmatprep.subr.mxu0 0.0
    %1241 = vmatpush1.msra.mxu0 0.0
    %1242 = vmatprep.subr.mxu0 0.0
    %1243 = vmatpush1.msra.mxu0 0.0
    %1244 = vmatprep.subr.mxu0 0.0
    %1245 = vmatpush1.msra.mxu0 0.0
    %1246 = vmatprep.subr.mxu0 0.0
    %1247 = vmatpush1.msra.mxu0 0.0
    %1248 = vmatprep.subr.mxu0 0.0
    %1249 = vmatpush1.msra.mxu0 0.0
    %1250 = vmatprep.subr.mxu0 0.0
    %1251 = vmatpush1.msra.mxu0 0.0
    %1252 = vmatprep.subr.mxu0 0.0
    %1253 = vmatpush1.msra.mxu0 0.0
    %1254 = vmatprep.subr.mxu0 0.0
    %1255 = vmatpush1.msra.mxu0 0.0
    %1256 = vmatprep.subr.mxu0 0.0
    %1257 = vmatpush1.msra.mxu0 0.0
    %1258 = vmatprep.subr.mxu0 0.0
    %1259 = vmatpush1.msra.mxu0 0.0
    %1260 = vmatprep.subr.mxu0 0.0
    %1261 = vmatpush1.msra.mxu0 0.0
    %1262 = vmatprep.subr.mxu0 0.0
    %1263 = vmatpush1.msra.mxu0 0.0
    %1264 = vmatprep.subr.mxu0 0.0
    %1265 = vmatpush1.msra.mxu0 0.0
    %1266 = vmatprep.subr.mxu0 0.0
    %1267 = vmatpush1.msra.mxu0 0.0
    %1268 = vmatprep.subr.mxu0 0.0
    %1269 = vmatpush1.msra.mxu0 0.0
    %1270 = vmatprep.subr.mxu0 0.0
    %1271 = vmatpush1.msra.mxu0 0.0
    %1272 = vmatprep.subr.mxu0 0.0
    %1273 = vmatpush1.msra.mxu0 0.0
    %1274 = vmatprep.subr.mxu0 0.0
    %1275 = vmatpush1.msra.mxu0 0.0
    %1276 = vmatprep.subr.mxu0 0.0
    %1277 = vmatpush1.msra.mxu0 0.0
    %1278 = vmatprep.subr.mxu0 0.0
    %1279 = vmatpush1.msra.mxu0 0.0
    %1280 = vmatprep.mubr.f32.mxu0 0.0
    %1281 = vmatmul.mubr.f32.gmra.mrb[0].mxu0 %v1214
    %v1282 = vpop.f32.mrb[0].mxu0
    %v1283 = vadd.f32 %v211, %v1282
    %v1284 = vpop.f32.mrb[0].mxu0
    %v1285 = vadd.f32 %v215, %v1284
    %1286 = vdwg.mxu0
    %1287 = vmatprep.subr.mxu0 0.0
    %1288 = vmatpush1.msra.mxu0 %v154
    %1289 = vmatprep.subr.mxu0 0.0
    %1290 = vmatpush1.msra.mxu0 %v157
    %1291 = vmatprep.subr.mxu0 0.0
    %1292 = vmatpush1.msra.mxu0 0.0
    %1293 = vmatprep.subr.mxu0 0.0
    %1294 = vmatpush1.msra.mxu0 0.0
    %1295 = vmatprep.subr.mxu0 0.0
    %1296 = vmatpush1.msra.mxu0 0.0
    %1297 = vmatprep.subr.mxu0 0.0
    %1298 = vmatpush1.msra.mxu0 0.0
    %1299 = vmatprep.subr.mxu0 0.0
    %1300 = vmatpush1.msra.mxu0 0.0
    %1301 = vmatprep.subr.mxu0 0.0
    %1302 = vmatpush1.msra.mxu0 0.0
    %1303 = vmatprep.subr.mxu0 0.0
    %1304 = vmatpush1.msra.mxu0 0.0
    %1305 = vmatprep.subr.mxu0 0.0
    %1306 = vmatpush1.msra.mxu0 0.0
    %1307 = vmatprep.subr.mxu0 0.0
    %1308 = vmatpush1.msra.mxu0 0.0
    %1309 = vmatprep.subr.mxu0 0.0
    %1310 = vmatpush1.msra.mxu0 0.0
    %1311 = vmatprep.subr.mxu0 0.0
    %1312 = vmatpush1.msra.mxu0 0.0
    %1313 = vmatprep.subr.mxu0 0.0
    %1314 = vmatpush1.msra.mxu0 0.0
    %1315 = vmatprep.subr.mxu0 0.0
    %1316 = vmatpush1.msra.mxu0 0.0
    %1317 = vmatprep.subr.mxu0 0.0
    %1318 = vmatpush1.msra.mxu0 0.0
    %1319 = vmatprep.subr.mxu0 0.0
    %1320 = vmatpush1.msra.mxu0 0.0
    %1321 = vmatprep.subr.mxu0 0.0
    %1322 = vmatpush1.msra.mxu0 0.0
    %1323 = vmatprep.subr.mxu0 0.0
    %1324 = vmatpush1.msra.mxu0 0.0
    %1325 = vmatprep.subr.mxu0 0.0
    %1326 = vmatpush1.msra.mxu0 0.0
    %1327 = vmatprep.subr.mxu0 0.0
    %1328 = vmatpush1.msra.mxu0 0.0
    %1329 = vmatprep.subr.mxu0 0.0
    %1330 = vmatpush1.msra.mxu0 0.0
    %1331 = vmatprep.subr.mxu0 0.0
    %1332 = vmatpush1.msra.mxu0 0.0
    %1333 = vmatprep.subr.mxu0 0.0
    %1334 = vmatpush1.msra.mxu0 0.0
    %1335 = vmatprep.subr.mxu0 0.0
    %1336 = vmatpush1.msra.mxu0 0.0
    %1337 = vmatprep.subr.mxu0 0.0
    %1338 = vmatpush1.msra.mxu0 0.0
    %1339 = vmatprep.subr.mxu0 0.0
    %1340 = vmatpush1.msra.mxu0 0.0
    %1341 = vmatprep.subr.mxu0 0.0
    %1342 = vmatpush1.msra.mxu0 0.0
    %1343 = vmatprep.subr.mxu0 0.0
    %1344 = vmatpush1.msra.mxu0 0.0
    %1345 = vmatprep.subr.mxu0 0.0
    %1346 = vmatpush1.msra.mxu0 0.0
    %1347 = vmatprep.subr.mxu0 0.0
    %1348 = vmatpush1.msra.mxu0 0.0
    %1349 = vmatprep.subr.mxu0 0.0
    %1350 = vmatpush1.msra.mxu0 0.0
    %1351 = vmatprep.mubr.f32.mxu0 0.0
    %1352 = vmatmul.mubr.f32.gmra.mrb[0].mxu0 %v1214
    %v1353 = vpop.f32.mrb[0].mxu0
    %v1354 = vadd.f32 %v219, %v1353
    %v1355 = vpop.f32.mrb[0].mxu0
    %1356 = vdwg.mxu0
    %1357 = vmatprep.subr.mxu0 %v159
    %1358 = vmatpush1.msra.mxu0 %v158
    %1359 = vmatprep.subr.mxu0 %v162
    %1360 = vmatpush1.msra.mxu0 %v161
    %1361 = vmatprep.subr.mxu0 %v165
    %1362 = vmatpush1.msra.mxu0 %v164
    %1363 = vmatprep.subr.mxu0 %v168
    %1364 = vmatpush1.msra.mxu0 %v167
    %1365 = vmatprep.subr.mxu0 %v171
    %1366 = vmatpush1.msra.mxu0 %v170
    %1367 = vmatprep.subr.mxu0 %v174
    %1368 = vmatpush1.msra.mxu0 %v173
    %1369 = vmatprep.subr.mxu0 %v177
    %1370 = vmatpush1.msra.mxu0 %v176
    %1371 = vmatprep.subr.mxu0 %v180
    %1372 = vmatpush1.msra.mxu0 %v179
    %1373 = vmatprep.subr.mxu0 %v183
    %1374 = vmatpush1.msra.mxu0 %v182
    %1375 = vmatprep.subr.mxu0 %v186
    %1376 = vmatpush1.msra.mxu0 %v185
    %1377 = vmatprep.subr.mxu0 %v189
    %1378 = vmatpush1.msra.mxu0 %v188
    %1379 = vmatprep.subr.mxu0 %v192
    %1380 = vmatpush1.msra.mxu0 %v191
    %1381 = vmatprep.subr.mxu0 %v195
    %1382 = vmatpush1.msra.mxu0 %v194
    %1383 = vmatprep.subr.mxu0 %v198
    %1384 = vmatpush1.msra.mxu0 %v197
    %1385 = vmatprep.subr.mxu0 %v201
    %1386 = vmatpush1.msra.mxu0 %v200
    %1387 = vmatprep.subr.mxu0 %v204
    %1388 = vmatpush1.msra.mxu0 %v203
    %1389 = vmatprep.subr.mxu0 0.0
    %1390 = vmatpush1.msra.mxu0 0.0
    %1391 = vmatprep.subr.mxu0 0.0
    %1392 = vmatpush1.msra.mxu0 0.0
    %1393 = vmatprep.subr.mxu0 0.0
    %1394 = vmatpush1.msra.mxu0 0.0
    %1395 = vmatprep.subr.mxu0 0.0
    %1396 = vmatpush1.msra.mxu0 0.0
    %1397 = vmatprep.subr.mxu0 0.0
    %1398 = vmatpush1.msra.mxu0 0.0
    %1399 = vmatprep.subr.mxu0 0.0
    %1400 = vmatpush1.msra.mxu0 0.0
    %1401 = vmatprep.subr.mxu0 0.0
    %1402 = vmatpush1.msra.mxu0 0.0
    %1403 = vmatprep.subr.mxu0 0.0
    %1404 = vmatpush1.msra.mxu0 0.0
    %1405 = vmatprep.subr.mxu0 0.0
    %1406 = vmatpush1.msra.mxu0 0.0
    %1407 = vmatprep.subr.mxu0 0.0
    %1408 = vmatpush1.msra.mxu0 0.0
    %1409 = vmatprep.subr.mxu0 0.0
    %1410 = vmatpush1.msra.mxu0 0.0
    %1411 = vmatprep.subr.mxu0 0.0
    %1412 = vmatpush1.msra.mxu0 0.0
    %1413 = vmatprep.subr.mxu0 0.0
    %1414 = vmatpush1.msra.mxu0 0.0
    %1415 = vmatprep.subr.mxu0 0.0
    %1416 = vmatpush1.msra.mxu0 0.0
    %1417 = vmatprep.subr.mxu0 0.0
    %1418 = vmatpush1.msra.mxu0 0.0
    %1419 = vmatprep.subr.mxu0 0.0
    %1420 = vmatpush1.msra.mxu0 0.0
    %1421 = vmatprep.mubr.f32.mxu0 0.0
    %1422 = vmatmul.mubr.f32.gmra.mrb[0].mxu0 %v1210
    %v1423 = vpop.f32.mrb[0].mxu0
    %v1424 = vadd.f32 %v228, %v1423
    %v1425 = vpop.f32.mrb[0].mxu0
    %v1426 = vadd.f32 %v232, %v1425
    %1427 = vdwg.mxu0
    %1428 = vmatprep.subr.mxu0 0.0
    %1429 = vmatpush1.msra.mxu0 %v160
    %1430 = vmatprep.subr.mxu0 0.0
    %1431 = vmatpush1.msra.mxu0 %v163
    %1432 = vmatprep.subr.mxu0 0.0
    %1433 = vmatpush1.msra.mxu0 %v166
    %1434 = vmatprep.subr.mxu0 0.0
    %1435 = vmatpush1.msra.mxu0 %v169
    %1436 = vmatprep.subr.mxu0 0.0
    %1437 = vmatpush1.msra.mxu0 %v172
    %1438 = vmatprep.subr.mxu0 0.0
    %1439 = vmatpush1.msra.mxu0 %v175
    %1440 = vmatprep.subr.mxu0 0.0
    %1441 = vmatpush1.msra.mxu0 %v178
    %1442 = vmatprep.subr.mxu0 0.0
    %1443 = vmatpush1.msra.mxu0 %v181
    %1444 = vmatprep.subr.mxu0 0.0
    %1445 = vmatpush1.msra.mxu0 %v184
    %1446 = vmatprep.subr.mxu0 0.0
    %1447 = vmatpush1.msra.mxu0 %v187
    %1448 = vmatprep.subr.mxu0 0.0
    %1449 = vmatpush1.msra.mxu0 %v190
    %1450 = vmatprep.subr.mxu0 0.0
    %1451 = vmatpush1.msra.mxu0 %v193
    %1452 = vmatprep.subr.mxu0 0.0
    %1453 = vmatpush1.msra.mxu0 %v196
    %1454 = vmatprep.subr.mxu0 0.0
    %1455 = vmatpush1.msra.mxu0 %v199
    %1456 = vmatprep.subr.mxu0 0.0
    %1457 = vmatpush1.msra.mxu0 %v202
    %1458 = vmatprep.subr.mxu0 0.0
    %1459 = vmatpush1.msra.mxu0 %v205
    %1460 = vmatprep.subr.mxu0 0.0
    %1461 = vmatpush1.msra.mxu0 0.0
    %1462 = vmatprep.subr.mxu0 0.0
    %1463 = vmatpush1.msra.mxu0 0.0
    %1464 = vmatprep.subr.mxu0 0.0
    %1465 = vmatpush1.msra.mxu0 0.0
    %1466 = vmatprep.subr.mxu0 0.0
    %1467 = vmatpush1.msra.mxu0 0.0
    %1468 = vmatprep.subr.mxu0 0.0
    %1469 = vmatpush1.msra.mxu0 0.0
    %1470 = vmatprep.subr.mxu0 0.0
    %1471 = vmatpush1.msra.mxu0 0.0
    %1472 = vmatprep.subr.mxu0 0.0
    %1473 = vmatpush1.msra.mxu0 0.0
    %1474 = vmatprep.subr.mxu0 0.0
    %1475 = vmatpush1.msra.mxu0 0.0
    %1476 = vmatprep.subr.mxu0 0.0
    %1477 = vmatpush1.msra.mxu0 0.0
    %1478 = vmatprep.subr.mxu0 0.0
    %1479 = vmatpush1.msra.mxu0 0.0
    %1480 = vmatprep.subr.mxu0 0.0
    %1481 = vmatpush1.msra.mxu0 0.0
    %1482 = vmatprep.subr.mxu0 0.0
    %1483 = vmatpush1.msra.mxu0 0.0
    %1484 = vmatprep.subr.mxu0 0.0
    %1485 = vmatpush1.msra.mxu0 0.0
    %1486 = vmatprep.subr.mxu0 0.0
    %1487 = vmatpush1.msra.mxu0 0.0
    %1488 = vmatprep.subr.mxu0 0.0
    %1489 = vmatpush1.msra.mxu0 0.0
    %1490 = vmatprep.subr.mxu0 0.0
    %1491 = vmatpush1.msra.mxu0 0.0
    %1492 = vmatprep.mubr.f32.mxu0 0.0
    %1493 = vmatmul.mubr.f32.gmra.mrb[0].mxu0 %v1210
    %v1494 = vpop.f32.mrb[0].mxu0
    %v1495 = vadd.f32 %v236, %v1494
    %v1496 = vpop.f32.mrb[0].mxu0
    %1497 = vdwg.mxu0
    %v1498 = vadd.f32 %v1283, %v1424
    %v1499 = vxor.u32 %v1498, 2147483648
    %v1500 = vmul.f32 %v1499, 1.442695
    %v1501 = vpow.pop %v1500
    %v1502 = vadd.f32 %v1501, 1.0
    %v1503 = vrcp.pop %v1502
    %v1504 = vmul.f32 1.0, %v1503
    %v1505 = vadd.f32 %v1285, %v1426
    %v1506 = vxor.u32 %v1505, 2147483648
    %v1507 = vmul.f32 %v1506, 1.442695
    %v1508 = vpow.pop %v1507
    %v1509 = vadd.f32 %v1508, 1.0
    %v1510 = vrcp.pop %v1509
    %v1511 = vmul.f32 1.0, %v1510
    %v1512 = vmul.f32 %v1504, %v1495
    %v1513 = vadd.f32 %v1354, %v1512
    %v1514 = vtanh.pop %v1513
    %v1515 = vsub.f32 1.0, %v1511
    %v1516 = vmul.f32 %v1515, %v1514
    %v1517 = vmul.f32 %v1511, %v1210
    %v1518 = vadd.f32 %v1516, %v1517
    %s1519 = scalar_lea.vmem %s3, 6
    %v1520 = vld [vmem:[%s1519] sm:$0x3]
    %1522 = vset.pattern.permute.xlu0 0
    %1523 = vperm.xlu0 %1522, %v1520
    %v1524 = vpop.permute.xlu0 %1523
    %v1526 = vmul.f32 %v1524, %v1518
    %v1527 = vsub.f32 1.0, %v1520
    %1529 = vset.pattern.permute.xlu0 0
    %1530 = vperm.xlu0 %1529, %v1527
    %v1531 = vpop.permute.xlu0 %1530
    %v1533 = vmul.f32 %v1531, %v1210
    %v1534 = vadd.f32 %v1526, %v1533
    %s1535 = scalar_lea.vmem %s1, 8
    %v1536 = vld [vmem:[%s1535] sm:$0x3]
    %v1538 = vsel %vm241, %v1536, 0
    %1540 = vmatprep.subr.mxu0 %v153
    %1541 = vmatpush1.msra.mxu0 %v152
    %1542 = vmatprep.subr.mxu0 %v156
    %1543 = vmatpush1.msra.mxu0 %v155
    %1544 = vmatprep.subr.mxu0 0.0
    %1545 = vmatpush1.msra.mxu0 0.0
    %1546 = vmatprep.subr.mxu0 0.0
    %1547 = vmatpush1.msra.mxu0 0.0
    %1548 = vmatprep.subr.mxu0 0.0
    %1549 = vmatpush1.msra.mxu0 0.0
    %1550 = vmatprep.subr.mxu0 0.0
    %1551 = vmatpush1.msra.mxu0 0.0
    %1552 = vmatprep.subr.mxu0 0.0
    %1553 = vmatpush1.msra.mxu0 0.0
    %1554 = vmatprep.subr.mxu0 0.0
    %1555 = vmatpush1.msra.mxu0 0.0
    %1556 = vmatprep.subr.mxu0 0.0
    %1557 = vmatpush1.msra.mxu0 0.0
    %1558 = vmatprep.subr.mxu0 0.0
    %1559 = vmatpush1.msra.mxu0 0.0
    %1560 = vmatprep.subr.mxu0 0.0
    %1561 = vmatpush1.msra.mxu0 0.0
    %1562 = vmatprep.subr.mxu0 0.0
    %1563 = vmatpush1.msra.mxu0 0.0
    %1564 = vmatprep.subr.mxu0 0.0
    %1565 = vmatpush1.msra.mxu0 0.0
    %1566 = vmatprep.subr.mxu0 0.0
    %1567 = vmatpush1.msra.mxu0 0.0
    %1568 = vmatprep.subr.mxu0 0.0
    %1569 = vmatpush1.msra.mxu0 0.0
    %1570 = vmatprep.subr.mxu0 0.0
    %1571 = vmatpush1.msra.mxu0 0.0
    %1572 = vmatprep.subr.mxu0 0.0
    %1573 = vmatpush1.msra.mxu0 0.0
    %1574 = vmatprep.subr.mxu0 0.0
    %1575 = vmatpush1.msra.mxu0 0.0
    %1576 = vmatprep.subr.mxu0 0.0
    %1577 = vmatpush1.msra.mxu0 0.0
    %1578 = vmatprep.subr.mxu0 0.0
    %1579 = vmatpush1.msra.mxu0 0.0
    %1580 = vmatprep.subr.mxu0 0.0
    %1581 = vmatpush1.msra.mxu0 0.0
    %1582 = vmatprep.subr.mxu0 0.0
    %1583 = vmatpush1.msra.mxu0 0.0
    %1584 = vmatprep.subr.mxu0 0.0
    %1585 = vmatpush1.msra.mxu0 0.0
    %1586 = vmatprep.subr.mxu0 0.0
    %1587 = vmatpush1.msra.mxu0 0.0
    %1588 = vmatprep.subr.mxu0 0.0
    %1589 = vmatpush1.msra.mxu0 0.0
    %1590 = vmatprep.subr.mxu0 0.0
    %1591 = vmatpush1.msra.mxu0 0.0
    %1592 = vmatprep.subr.mxu0 0.0
    %1593 = vmatpush1.msra.mxu0 0.0
    %1594 = vmatprep.subr.mxu0 0.0
    %1595 = vmatpush1.msra.mxu0 0.0
    %1596 = vmatprep.subr.mxu0 0.0
    %1597 = vmatpush1.msra.mxu0 0.0
    %1598 = vmatprep.subr.mxu0 0.0
    %1599 = vmatpush1.msra.mxu0 0.0
    %1600 = vmatprep.subr.mxu0 0.0
    %1601 = vmatpush1.msra.mxu0 0.0
    %1602 = vmatprep.subr.mxu0 0.0
    %1603 = vmatpush1.msra.mxu0 0.0
    %1604 = vmatprep.mubr.f32.mxu0 0.0
    %1605 = vmatmul.mubr.f32.gmra.mrb[0].mxu0 %v1538
    %v1606 = vpop.f32.mrb[0].mxu0
    %v1607 = vadd.f32 %v211, %v1606
    %v1608 = vpop.f32.mrb[0].mxu0
    %v1609 = vadd.f32 %v215, %v1608
    %1610 = vdwg.mxu0
    %1611 = vmatprep.subr.mxu0 0.0
    %1612 = vmatpush1.msra.mxu0 %v154
    %1613 = vmatprep.subr.mxu0 0.0
    %1614 = vmatpush1.msra.mxu0 %v157
    %1615 = vmatprep.subr.mxu0 0.0
    %1616 = vmatpush1.msra.mxu0 0.0
    %1617 = vmatprep.subr.mxu0 0.0
    %1618 = vmatpush1.msra.mxu0 0.0
    %1619 = vmatprep.subr.mxu0 0.0
    %1620 = vmatpush1.msra.mxu0 0.0
    %1621 = vmatprep.subr.mxu0 0.0
    %1622 = vmatpush1.msra.mxu0 0.0
    %1623 = vmatprep.subr.mxu0 0.0
    %1624 = vmatpush1.msra.mxu0 0.0
    %1625 = vmatprep.subr.mxu0 0.0
    %1626 = vmatpush1.msra.mxu0 0.0
    %1627 = vmatprep.subr.mxu0 0.0
    %1628 = vmatpush1.msra.mxu0 0.0
    %1629 = vmatprep.subr.mxu0 0.0
    %1630 = vmatpush1.msra.mxu0 0.0
    %1631 = vmatprep.subr.mxu0 0.0
    %1632 = vmatpush1.msra.mxu0 0.0
    %1633 = vmatprep.subr.mxu0 0.0
    %1634 = vmatpush1.msra.mxu0 0.0
    %1635 = vmatprep.subr.mxu0 0.0
    %1636 = vmatpush1.msra.mxu0 0.0
    %1637 = vmatprep.subr.mxu0 0.0
    %1638 = vmatpush1.msra.mxu0 0.0
    %1639 = vmatprep.subr.mxu0 0.0
    %1640 = vmatpush1.msra.mxu0 0.0
    %1641 = vmatprep.subr.mxu0 0.0
    %1642 = vmatpush1.msra.mxu0 0.0
    %1643 = vmatprep.subr.mxu0 0.0
    %1644 = vmatpush1.msra.mxu0 0.0
    %1645 = vmatprep.subr.mxu0 0.0
    %1646 = vmatpush1.msra.mxu0 0.0
    %1647 = vmatprep.subr.mxu0 0.0
    %1648 = vmatpush1.msra.mxu0 0.0
    %1649 = vmatprep.subr.mxu0 0.0
    %1650 = vmatpush1.msra.mxu0 0.0
    %1651 = vmatprep.subr.mxu0 0.0
    %1652 = vmatpush1.msra.mxu0 0.0
    %1653 = vmatprep.subr.mxu0 0.0
    %1654 = vmatpush1.msra.mxu0 0.0
    %1655 = vmatprep.subr.mxu0 0.0
    %1656 = vmatpush1.msra.mxu0 0.0
    %1657 = vmatprep.subr.mxu0 0.0
    %1658 = vmatpush1.msra.mxu0 0.0
    %1659 = vmatprep.subr.mxu0 0.0
    %1660 = vmatpush1.msra.mxu0 0.0
    %1661 = vmatprep.subr.mxu0 0.0
    %1662 = vmatpush1.msra.mxu0 0.0
    %1663 = vmatprep.subr.mxu0 0.0
    %1664 = vmatpush1.msra.mxu0 0.0
    %1665 = vmatprep.subr.mxu0 0.0
    %1666 = vmatpush1.msra.mxu0 0.0
    %1667 = vmatprep.subr.mxu0 0.0
    %1668 = vmatpush1.msra.mxu0 0.0
    %1669 = vmatprep.subr.mxu0 0.0
    %1670 = vmatpush1.msra.mxu0 0.0
    %1671 = vmatprep.subr.mxu0 0.0
    %1672 = vmatpush1.msra.mxu0 0.0
    %1673 = vmatprep.subr.mxu0 0.0
    %1674 = vmatpush1.msra.mxu0 0.0
    %1675 = vmatprep.mubr.f32.mxu0 0.0
    %1676 = vmatmul.mubr.f32.gmra.mrb[0].mxu0 %v1538
    %v1677 = vpop.f32.mrb[0].mxu0
    %v1678 = vadd.f32 %v219, %v1677
    %v1679 = vpop.f32.mrb[0].mxu0
    %1680 = vdwg.mxu0
    %1681 = vmatprep.subr.mxu0 %v159
    %1682 = vmatpush1.msra.mxu0 %v158
    %1683 = vmatprep.subr.mxu0 %v162
    %1684 = vmatpush1.msra.mxu0 %v161
    %1685 = vmatprep.subr.mxu0 %v165
    %1686 = vmatpush1.msra.mxu0 %v164
    %1687 = vmatprep.subr.mxu0 %v168
    %1688 = vmatpush1.msra.mxu0 %v167
    %1689 = vmatprep.subr.mxu0 %v171
    %1690 = vmatpush1.msra.mxu0 %v170
    %1691 = vmatprep.subr.mxu0 %v174
    %1692 = vmatpush1.msra.mxu0 %v173
    %1693 = vmatprep.subr.mxu0 %v177
    %1694 = vmatpush1.msra.mxu0 %v176
    %1695 = vmatprep.subr.mxu0 %v180
    %1696 = vmatpush1.msra.mxu0 %v179
    %1697 = vmatprep.subr.mxu0 %v183
    %1698 = vmatpush1.msra.mxu0 %v182
    %1699 = vmatprep.subr.mxu0 %v186
    %1700 = vmatpush1.msra.mxu0 %v185
    %1701 = vmatprep.subr.mxu0 %v189
    %1702 = vmatpush1.msra.mxu0 %v188
    %1703 = vmatprep.subr.mxu0 %v192
    %1704 = vmatpush1.msra.mxu0 %v191
    %1705 = vmatprep.subr.mxu0 %v195
    %1706 = vmatpush1.msra.mxu0 %v194
    %1707 = vmatprep.subr.mxu0 %v198
    %1708 = vmatpush1.msra.mxu0 %v197
    %1709 = vmatprep.subr.mxu0 %v201
    %1710 = vmatpush1.msra.mxu0 %v200
    %1711 = vmatprep.subr.mxu0 %v204
    %1712 = vmatpush1.msra.mxu0 %v203
    %1713 = vmatprep.subr.mxu0 0.0
    %1714 = vmatpush1.msra.mxu0 0.0
    %1715 = vmatprep.subr.mxu0 0.0
    %1716 = vmatpush1.msra.mxu0 0.0
    %1717 = vmatprep.subr.mxu0 0.0
    %1718 = vmatpush1.msra.mxu0 0.0
    %1719 = vmatprep.subr.mxu0 0.0
    %1720 = vmatpush1.msra.mxu0 0.0
    %1721 = vmatprep.subr.mxu0 0.0
    %1722 = vmatpush1.msra.mxu0 0.0
    %1723 = vmatprep.subr.mxu0 0.0
    %1724 = vmatpush1.msra.mxu0 0.0
    %1725 = vmatprep.subr.mxu0 0.0
    %1726 = vmatpush1.msra.mxu0 0.0
    %1727 = vmatprep.subr.mxu0 0.0
    %1728 = vmatpush1.msra.mxu0 0.0
    %1729 = vmatprep.subr.mxu0 0.0
    %1730 = vmatpush1.msra.mxu0 0.0
    %1731 = vmatprep.subr.mxu0 0.0
    %1732 = vmatpush1.msra.mxu0 0.0
    %1733 = vmatprep.subr.mxu0 0.0
    %1734 = vmatpush1.msra.mxu0 0.0
    %1735 = vmatprep.subr.mxu0 0.0
    %1736 = vmatpush1.msra.mxu0 0.0
    %1737 = vmatprep.subr.mxu0 0.0
    %1738 = vmatpush1.msra.mxu0 0.0
    %1739 = vmatprep.subr.mxu0 0.0
    %1740 = vmatpush1.msra.mxu0 0.0
    %1741 = vmatprep.subr.mxu0 0.0
    %1742 = vmatpush1.msra.mxu0 0.0
    %1743 = vmatprep.subr.mxu0 0.0
    %1744 = vmatpush1.msra.mxu0 0.0
    %1745 = vmatprep.mubr.f32.mxu0 0.0
    %1746 = vmatmul.mubr.f32.gmra.mrb[0].mxu0 %v1534
    %v1747 = vpop.f32.mrb[0].mxu0
    %v1748 = vadd.f32 %v228, %v1747
    %v1749 = vpop.f32.mrb[0].mxu0
    %v1750 = vadd.f32 %v232, %v1749
    %1751 = vdwg.mxu0
    %1752 = vmatprep.subr.mxu0 0.0
    %1753 = vmatpush1.msra.mxu0 %v160
    %1754 = vmatprep.subr.mxu0 0.0
    %1755 = vmatpush1.msra.mxu0 %v163
    %1756 = vmatprep.subr.mxu0 0.0
    %1757 = vmatpush1.msra.mxu0 %v166
    %1758 = vmatprep.subr.mxu0 0.0
    %1759 = vmatpush1.msra.mxu0 %v169
    %1760 = vmatprep.subr.mxu0 0.0
    %1761 = vmatpush1.msra.mxu0 %v172
    %1762 = vmatprep.subr.mxu0 0.0
    %1763 = vmatpush1.msra.mxu0 %v175
    %1764 = vmatprep.subr.mxu0 0.0
    %1765 = vmatpush1.msra.mxu0 %v178
    %1766 = vmatprep.subr.mxu0 0.0
    %1767 = vmatpush1.msra.mxu0 %v181
    %1768 = vmatprep.subr.mxu0 0.0
    %1769 = vmatpush1.msra.mxu0 %v184
    %1770 = vmatprep.subr.mxu0 0.0
    %1771 = vmatpush1.msra.mxu0 %v187
    %1772 = vmatprep.subr.mxu0 0.0
    %1773 = vmatpush1.msra.mxu0 %v190
    %1774 = vmatprep.subr.mxu0 0.0
    %1775 = vmatpush1.msra.mxu0 %v193
    %1776 = vmatprep.subr.mxu0 0.0
    %1777 = vmatpush1.msra.mxu0 %v196
    %1778 = vmatprep.subr.mxu0 0.0
    %1779 = vmatpush1.msra.mxu0 %v199
    %1780 = vmatprep.subr.mxu0 0.0
    %1781 = vmatpush1.msra.mxu0 %v202
    %1782 = vmatprep.subr.mxu0 0.0
    %1783 = vmatpush1.msra.mxu0 %v205
    %1784 = vmatprep.subr.mxu0 0.0
    %1785 = vmatpush1.msra.mxu0 0.0
    %1786 = vmatprep.subr.mxu0 0.0
    %1787 = vmatpush1.msra.mxu0 0.0
    %1788 = vmatprep.subr.mxu0 0.0
    %1789 = vmatpush1.msra.mxu0 0.0
    %1790 = vmatprep.subr.mxu0 0.0
    %1791 = vmatpush1.msra.mxu0 0.0
    %1792 = vmatprep.subr.mxu0 0.0
    %1793 = vmatpush1.msra.mxu0 0.0
    %1794 = vmatprep.subr.mxu0 0.0
    %1795 = vmatpush1.msra.mxu0 0.0
    %1796 = vmatprep.subr.mxu0 0.0
    %1797 = vmatpush1.msra.mxu0 0.0
    %1798 = vmatprep.subr.mxu0 0.0
    %1799 = vmatpush1.msra.mxu0 0.0
    %1800 = vmatprep.subr.mxu0 0.0
    %1801 = vmatpush1.msra.mxu0 0.0
    %1802 = vmatprep.subr.mxu0 0.0
    %1803 = vmatpush1.msra.mxu0 0.0
    %1804 = vmatprep.subr.mxu0 0.0
    %1805 = vmatpush1.msra.mxu0 0.0
    %1806 = vmatprep.subr.mxu0 0.0
    %1807 = vmatpush1.msra.mxu0 0.0
    %1808 = vmatprep.subr.mxu0 0.0
    %1809 = vmatpush1.msra.mxu0 0.0
    %1810 = vmatprep.subr.mxu0 0.0
    %1811 = vmatpush1.msra.mxu0 0.0
    %1812 = vmatprep.subr.mxu0 0.0
    %1813 = vmatpush1.msra.mxu0 0.0
    %1814 = vmatprep.subr.mxu0 0.0
    %1815 = vmatpush1.msra.mxu0 0.0
    %1816 = vmatprep.mubr.f32.mxu0 0.0
    %1817 = vmatmul.mubr.f32.gmra.mrb[0].mxu0 %v1534
    %v1818 = vpop.f32.mrb[0].mxu0
    %v1819 = vadd.f32 %v236, %v1818
    %v1820 = vpop.f32.mrb[0].mxu0
    %1821 = vdwg.mxu0
    %v1822 = vadd.f32 %v1607, %v1748
    %v1823 = vxor.u32 %v1822, 2147483648
    %v1824 = vmul.f32 %v1823, 1.442695
    %v1825 = vpow.pop %v1824
    %v1826 = vadd.f32 %v1825, 1.0
    %v1827 = vrcp.pop %v1826
    %v1828 = vmul.f32 1.0, %v1827
    %v1829 = vadd.f32 %v1609, %v1750
    %v1830 = vxor.u32 %v1829, 2147483648
    %v1831 = vmul.f32 %v1830, 1.442695
    %v1832 = vpow.pop %v1831
    %v1833 = vadd.f32 %v1832, 1.0
    %v1834 = vrcp.pop %v1833
    %v1835 = vmul.f32 1.0, %v1834
    %v1836 = vmul.f32 %v1828, %v1819
    %v1837 = vadd.f32 %v1678, %v1836
    %v1838 = vtanh.pop %v1837
    %v1839 = vsub.f32 1.0, %v1835
    %v1840 = vmul.f32 %v1839, %v1838
    %v1841 = vmul.f32 %v1835, %v1534
    %v1842 = vadd.f32 %v1840, %v1841
    %s1843 = scalar_lea.vmem %s3, 8
    %v1844 = vld [vmem:[%s1843] sm:$0x3]
    %1846 = vset.pattern.permute.xlu0 0
    %1847 = vperm.xlu0 %1846, %v1844
    %v1848 = vpop.permute.xlu0 %1847
    %v1850 = vmul.f32 %v1848, %v1842
    %v1851 = vsub.f32 1.0, %v1844
    %1853 = vset.pattern.permute.xlu0 0
    %1854 = vperm.xlu0 %1853, %v1851
    %v1855 = vpop.permute.xlu0 %1854
    %v1857 = vmul.f32 %v1855, %v1534
    %v1858 = vadd.f32 %v1850, %v1857
    %s1859 = scalar_lea.vmem %s1, 10
    %v1860 = vld [vmem:[%s1859] sm:$0x3]
    %v1862 = vsel %vm241, %v1860, 0
    %1864 = vmatprep.subr.mxu0 %v153
    %1865 = vmatpush1.msra.mxu0 %v152
    %1866 = vmatprep.subr.mxu0 %v156
    %1867 = vmatpush1.msra.mxu0 %v155
    %1868 = vmatprep.subr.mxu0 0.0
    %1869 = vmatpush1.msra.mxu0 0.0
    %1870 = vmatprep.subr.mxu0 0.0
    %1871 = vmatpush1.msra.mxu0 0.0
    %1872 = vmatprep.subr.mxu0 0.0
    %1873 = vmatpush1.msra.mxu0 0.0
    %1874 = vmatprep.subr.mxu0 0.0
    %1875 = vmatpush1.msra.mxu0 0.0
    %1876 = vmatprep.subr.mxu0 0.0
    %1877 = vmatpush1.msra.mxu0 0.0
    %1878 = vmatprep.subr.mxu0 0.0
    %1879 = vmatpush1.msra.mxu0 0.0
    %1880 = vmatprep.subr.mxu0 0.0
    %1881 = vmatpush1.msra.mxu0 0.0
    %1882 = vmatprep.subr.mxu0 0.0
    %1883 = vmatpush1.msra.mxu0 0.0
    %1884 = vmatprep.subr.mxu0 0.0
    %1885 = vmatpush1.msra.mxu0 0.0
    %1886 = vmatprep.subr.mxu0 0.0
    %1887 = vmatpush1.msra.mxu0 0.0
    %1888 = vmatprep.subr.mxu0 0.0
    %1889 = vmatpush1.msra.mxu0 0.0
    %1890 = vmatprep.subr.mxu0 0.0
    %1891 = vmatpush1.msra.mxu0 0.0
    %1892 = vmatprep.subr.mxu0 0.0
    %1893 = vmatpush1.msra.mxu0 0.0
    %1894 = vmatprep.subr.mxu0 0.0
    %1895 = vmatpush1.msra.mxu0 0.0
    %1896 = vmatprep.subr.mxu0 0.0
    %1897 = vmatpush1.msra.mxu0 0.0
    %1898 = vmatprep.subr.mxu0 0.0
    %1899 = vmatpush1.msra.mxu0 0.0
    %1900 = vmatprep.subr.mxu0 0.0
    %1901 = vmatpush1.msra.mxu0 0.0
    %1902 = vmatprep.subr.mxu0 0.0
    %1903 = vmatpush1.msra.mxu0 0.0
    %1904 = vmatprep.subr.mxu0 0.0
    %1905 = vmatpush1.msra.mxu0 0.0
    %1906 = vmatprep.subr.mxu0 0.0
    %1907 = vmatpush1.msra.mxu0 0.0
    %1908 = vmatprep.subr.mxu0 0.0
    %1909 = vmatpush1.msra.mxu0 0.0
    %1910 = vmatprep.subr.mxu0 0.0
    %1911 = vmatpush1.msra.mxu0 0.0
    %1912 = vmatprep.subr.mxu0 0.0
    %1913 = vmatpush1.msra.mxu0 0.0
    %1914 = vmatprep.subr.mxu0 0.0
    %1915 = vmatpush1.msra.mxu0 0.0
    %1916 = vmatprep.subr.mxu0 0.0
    %1917 = vmatpush1.msra.mxu0 0.0
    %1918 = vmatprep.subr.mxu0 0.0
    %1919 = vmatpush1.msra.mxu0 0.0
    %1920 = vmatprep.subr.mxu0 0.0
    %1921 = vmatpush1.msra.mxu0 0.0
    %1922 = vmatprep.subr.mxu0 0.0
    %1923 = vmatpush1.msra.mxu0 0.0
    %1924 = vmatprep.subr.mxu0 0.0
    %1925 = vmatpush1.msra.mxu0 0.0
    %1926 = vmatprep.subr.mxu0 0.0
    %1927 = vmatpush1.msra.mxu0 0.0
    %1928 = vmatprep.mubr.f32.mxu0 0.0
    %1929 = vmatmul.mubr.f32.gmra.mrb[0].mxu0 %v1862
    %v1930 = vpop.f32.mrb[0].mxu0
    %v1931 = vadd.f32 %v211, %v1930
    %v1932 = vpop.f32.mrb[0].mxu0
    %v1933 = vadd.f32 %v215, %v1932
    %1934 = vdwg.mxu0
    %1935 = vmatprep.subr.mxu0 0.0
    %1936 = vmatpush1.msra.mxu0 %v154
    %1937 = vmatprep.subr.mxu0 0.0
    %1938 = vmatpush1.msra.mxu0 %v157
    %1939 = vmatprep.subr.mxu0 0.0
    %1940 = vmatpush1.msra.mxu0 0.0
    %1941 = vmatprep.subr.mxu0 0.0
    %1942 = vmatpush1.msra.mxu0 0.0
    %1943 = vmatprep.subr.mxu0 0.0
    %1944 = vmatpush1.msra.mxu0 0.0
    %1945 = vmatprep.subr.mxu0 0.0
    %1946 = vmatpush1.msra.mxu0 0.0
    %1947 = vmatprep.subr.mxu0 0.0
    %1948 = vmatpush1.msra.mxu0 0.0
    %1949 = vmatprep.subr.mxu0 0.0
    %1950 = vmatpush1.msra.mxu0 0.0
    %1951 = vmatprep.subr.mxu0 0.0
    %1952 = vmatpush1.msra.mxu0 0.0
    %1953 = vmatprep.subr.mxu0 0.0
    %1954 = vmatpush1.msra.mxu0 0.0
    %1955 = vmatprep.subr.mxu0 0.0
    %1956 = vmatpush1.msra.mxu0 0.0
    %1957 = vmatprep.subr.mxu0 0.0
    %1958 = vmatpush1.msra.mxu0 0.0
    %1959 = vmatprep.subr.mxu0 0.0
    %1960 = vmatpush1.msra.mxu0 0.0
    %1961 = vmatprep.subr.mxu0 0.0
    %1962 = vmatpush1.msra.mxu0 0.0
    %1963 = vmatprep.subr.mxu0 0.0
    %1964 = vmatpush1.msra.mxu0 0.0
    %1965 = vmatprep.subr.mxu0 0.0
    %1966 = vmatpush1.msra.mxu0 0.0
    %1967 = vmatprep.subr.mxu0 0.0
    %1968 = vmatpush1.msra.mxu0 0.0
    %1969 = vmatprep.subr.mxu0 0.0
    %1970 = vmatpush1.msra.mxu0 0.0
    %1971 = vmatprep.subr.mxu0 0.0
    %1972 = vmatpush1.msra.mxu0 0.0
    %1973 = vmatprep.subr.mxu0 0.0
    %1974 = vmatpush1.msra.mxu0 0.0
    %1975 = vmatprep.subr.mxu0 0.0
    %1976 = vmatpush1.msra.mxu0 0.0
    %1977 = vmatprep.subr.mxu0 0.0
    %1978 = vmatpush1.msra.mxu0 0.0
    %1979 = vmatprep.subr.mxu0 0.0
    %1980 = vmatpush1.msra.mxu0 0.0
    %1981 = vmatprep.subr.mxu0 0.0
    %1982 = vmatpush1.msra.mxu0 0.0
    %1983 = vmatprep.subr.mxu0 0.0
    %1984 = vmatpush1.msra.mxu0 0.0
    %1985 = vmatprep.subr.mxu0 0.0
    %1986 = vmatpush1.msra.mxu0 0.0
    %1987 = vmatprep.subr.mxu0 0.0
    %1988 = vmatpush1.msra.mxu0 0.0
    %1989 = vmatprep.subr.mxu0 0.0
    %1990 = vmatpush1.msra.mxu0 0.0
    %1991 = vmatprep.subr.mxu0 0.0
    %1992 = vmatpush1.msra.mxu0 0.0
    %1993 = vmatprep.subr.mxu0 0.0
    %1994 = vmatpush1.msra.mxu0 0.0
    %1995 = vmatprep.subr.mxu0 0.0
    %1996 = vmatpush1.msra.mxu0 0.0
    %1997 = vmatprep.subr.mxu0 0.0
    %1998 = vmatpush1.msra.mxu0 0.0
    %1999 = vmatprep.mubr.f32.mxu0 0.0
    %2000 = vmatmul.mubr.f32.gmra.mrb[0].mxu0 %v1862
    %v2001 = vpop.f32.mrb[0].mxu0
    %v2002 = vadd.f32 %v219, %v2001
    %v2003 = vpop.f32.mrb[0].mxu0
    %2004 = vdwg.mxu0
    %2005 = vmatprep.subr.mxu0 %v159
    %2006 = vmatpush1.msra.mxu0 %v158
    %2007 = vmatprep.subr.mxu0 %v162
    %2008 = vmatpush1.msra.mxu0 %v161
    %2009 = vmatprep.subr.mxu0 %v165
    %2010 = vmatpush1.msra.mxu0 %v164
    %2011 = vmatprep.subr.mxu0 %v168
    %2012 = vmatpush1.msra.mxu0 %v167
    %2013 = vmatprep.subr.mxu0 %v171
    %2014 = vmatpush1.msra.mxu0 %v170
    %2015 = vmatprep.subr.mxu0 %v174
    %2016 = vmatpush1.msra.mxu0 %v173
    %2017 = vmatprep.subr.mxu0 %v177
    %2018 = vmatpush1.msra.mxu0 %v176
    %2019 = vmatprep.subr.mxu0 %v180
    %2020 = vmatpush1.msra.mxu0 %v179
    %2021 = vmatprep.subr.mxu0 %v183
    %2022 = vmatpush1.msra.mxu0 %v182
    %2023 = vmatprep.subr.mxu0 %v186
    %2024 = vmatpush1.msra.mxu0 %v185
    %2025 = vmatprep.subr.mxu0 %v189
    %2026 = vmatpush1.msra.mxu0 %v188
    %2027 = vmatprep.subr.mxu0 %v192
    %2028 = vmatpush1.msra.mxu0 %v191
    %2029 = vmatprep.subr.mxu0 %v195
    %2030 = vmatpush1.msra.mxu0 %v194
    %2031 = vmatprep.subr.mxu0 %v198
    %2032 = vmatpush1.msra.mxu0 %v197
    %2033 = vmatprep.subr.mxu0 %v201
    %2034 = vmatpush1.msra.mxu0 %v200
    %2035 = vmatprep.subr.mxu0 %v204
    %2036 = vmatpush1.msra.mxu0 %v203
    %2037 = vmatprep.subr.mxu0 0.0
    %2038 = vmatpush1.msra.mxu0 0.0
    %2039 = vmatprep.subr.mxu0 0.0
    %2040 = vmatpush1.msra.mxu0 0.0
    %2041 = vmatprep.subr.mxu0 0.0
    %2042 = vmatpush1.msra.mxu0 0.0
    %2043 = vmatprep.subr.mxu0 0.0
    %2044 = vmatpush1.msra.mxu0 0.0
    %2045 = vmatprep.subr.mxu0 0.0
    %2046 = vmatpush1.msra.mxu0 0.0
    %2047 = vmatprep.subr.mxu0 0.0
    %2048 = vmatpush1.msra.mxu0 0.0
    %2049 = vmatprep.subr.mxu0 0.0
    %2050 = vmatpush1.msra.mxu0 0.0
    %2051 = vmatprep.subr.mxu0 0.0
    %2052 = vmatpush1.msra.mxu0 0.0
    %2053 = vmatprep.subr.mxu0 0.0
    %2054 = vmatpush1.msra.mxu0 0.0
    %2055 = vmatprep.subr.mxu0 0.0
    %2056 = vmatpush1.msra.mxu0 0.0
    %2057 = vmatprep.subr.mxu0 0.0
    %2058 = vmatpush1.msra.mxu0 0.0
    %2059 = vmatprep.subr.mxu0 0.0
    %2060 = vmatpush1.msra.mxu0 0.0
    %2061 = vmatprep.subr.mxu0 0.0
    %2062 = vmatpush1.msra.mxu0 0.0
    %2063 = vmatprep.subr.mxu0 0.0
    %2064 = vmatpush1.msra.mxu0 0.0
    %2065 = vmatprep.subr.mxu0 0.0
    %2066 = vmatpush1.msra.mxu0 0.0
    %2067 = vmatprep.subr.mxu0 0.0
    %2068 = vmatpush1.msra.mxu0 0.0
    %2069 = vmatprep.mubr.f32.mxu0 0.0
    %2070 = vmatmul.mubr.f32.gmra.mrb[0].mxu0 %v1858
    %v2071 = vpop.f32.mrb[0].mxu0
    %v2072 = vadd.f32 %v228, %v2071
    %v2073 = vpop.f32.mrb[0].mxu0
    %v2074 = vadd.f32 %v232, %v2073
    %2075 = vdwg.mxu0
    %2076 = vmatprep.subr.mxu0 0.0
    %2077 = vmatpush1.msra.mxu0 %v160
    %2078 = vmatprep.subr.mxu0 0.0
    %2079 = vmatpush1.msra.mxu0 %v163
    %2080 = vmatprep.subr.mxu0 0.0
    %2081 = vmatpush1.msra.mxu0 %v166
    %2082 = vmatprep.subr.mxu0 0.0
    %2083 = vmatpush1.msra.mxu0 %v169
    %2084 = vmatprep.subr.mxu0 0.0
    %2085 = vmatpush1.msra.mxu0 %v172
    %2086 = vmatprep.subr.mxu0 0.0
    %2087 = vmatpush1.msra.mxu0 %v175
    %2088 = vmatprep.subr.mxu0 0.0
    %2089 = vmatpush1.msra.mxu0 %v178
    %2090 = vmatprep.subr.mxu0 0.0
    %2091 = vmatpush1.msra.mxu0 %v181
    %2092 = vmatprep.subr.mxu0 0.0
    %2093 = vmatpush1.msra.mxu0 %v184
    %2094 = vmatprep.subr.mxu0 0.0
    %2095 = vmatpush1.msra.mxu0 %v187
    %2096 = vmatprep.subr.mxu0 0.0
    %2097 = vmatpush1.msra.mxu0 %v190
    %2098 = vmatprep.subr.mxu0 0.0
    %2099 = vmatpush1.msra.mxu0 %v193
    %2100 = vmatprep.subr.mxu0 0.0
    %2101 = vmatpush1.msra.mxu0 %v196
    %2102 = vmatprep.subr.mxu0 0.0
    %2103 = vmatpush1.msra.mxu0 %v199
    %2104 = vmatprep.subr.mxu0 0.0
    %2105 = vmatpush1.msra.mxu0 %v202
    %2106 = vmatprep.subr.mxu0 0.0
    %2107 = vmatpush1.msra.mxu0 %v205
    %2108 = vmatprep.subr.mxu0 0.0
    %2109 = vmatpush1.msra.mxu0 0.0
    %2110 = vmatprep.subr.mxu0 0.0
    %2111 = vmatpush1.msra.mxu0 0.0
    %2112 = vmatprep.subr.mxu0 0.0
    %2113 = vmatpush1.msra.mxu0 0.0
    %2114 = vmatprep.subr.mxu0 0.0
    %2115 = vmatpush1.msra.mxu0 0.0
    %2116 = vmatprep.subr.mxu0 0.0
    %2117 = vmatpush1.msra.mxu0 0.0
    %2118 = vmatprep.subr.mxu0 0.0
    %2119 = vmatpush1.msra.mxu0 0.0
    %2120 = vmatprep.subr.mxu0 0.0
    %2121 = vmatpush1.msra.mxu0 0.0
    %2122 = vmatprep.subr.mxu0 0.0
    %2123 = vmatpush1.msra.mxu0 0.0
    %2124 = vmatprep.subr.mxu0 0.0
    %2125 = vmatpush1.msra.mxu0 0.0
    %2126 = vmatprep.subr.mxu0 0.0
    %2127 = vmatpush1.msra.mxu0 0.0
    %2128 = vmatprep.subr.mxu0 0.0
    %2129 = vmatpush1.msra.mxu0 0.0
    %2130 = vmatprep.subr.mxu0 0.0
    %2131 = vmatpush1.msra.mxu0 0.0
    %2132 = vmatprep.subr.mxu0 0.0
    %2133 = vmatpush1.msra.mxu0 0.0
    %2134 = vmatprep.subr.mxu0 0.0
    %2135 = vmatpush1.msra.mxu0 0.0
    %2136 = vmatprep.subr.mxu0 0.0
    %2137 = vmatpush1.msra.mxu0 0.0
    %2138 = vmatprep.subr.mxu0 0.0
    %2139 = vmatpush1.msra.mxu0 0.0
    %2140 = vmatprep.mubr.f32.mxu0 0.0
    %2141 = vmatmul.mubr.f32.gmra.mrb[0].mxu0 %v1858
    %v2142 = vpop.f32.mrb[0].mxu0
    %v2143 = vadd.f32 %v236, %v2142
    %v2144 = vpop.f32.mrb[0].mxu0
    %2145 = vdwg.mxu0
    %v2146 = vadd.f32 %v1931, %v2072
    %v2147 = vxor.u32 %v2146, 2147483648
    %v2148 = vmul.f32 %v2147, 1.442695
    %v2149 = vpow.pop %v2148
    %v2150 = vadd.f32 %v2149, 1.0
    %v2151 = vrcp.pop %v2150
    %v2152 = vmul.f32 1.0, %v2151
    %v2153 = vadd.f32 %v1933, %v2074
    %v2154 = vxor.u32 %v2153, 2147483648
    %v2155 = vmul.f32 %v2154, 1.442695
    %v2156 = vpow.pop %v2155
    %v2157 = vadd.f32 %v2156, 1.0
    %v2158 = vrcp.pop %v2157
    %v2159 = vmul.f32 1.0, %v2158
    %v2160 = vmul.f32 %v2152, %v2143
    %v2161 = vadd.f32 %v2002, %v2160
    %v2162 = vtanh.pop %v2161
    %v2163 = vsub.f32 1.0, %v2159
    %v2164 = vmul.f32 %v2163, %v2162
    %v2165 = vmul.f32 %v2159, %v1858
    %v2166 = vadd.f32 %v2164, %v2165
    %s2167 = scalar_lea.vmem %s3, 10
    %v2168 = vld [vmem:[%s2167] sm:$0x3]
    %2170 = vset.pattern.permute.xlu0 0
    %2171 = vperm.xlu0 %2170, %v2168
    %v2172 = vpop.permute.xlu0 %2171
    %v2174 = vmul.f32 %v2172, %v2166
    %v2175 = vsub.f32 1.0, %v2168
    %2177 = vset.pattern.permute.xlu0 0
    %2178 = vperm.xlu0 %2177, %v2175
    %v2179 = vpop.permute.xlu0 %2178
    %v2181 = vmul.f32 %v2179, %v1858
    %v2182 = vadd.f32 %v2174, %v2181
    %s2183 = scalar_lea.vmem %s1, 12
    %v2184 = vld [vmem:[%s2183] sm:$0x3]
    %v2186 = vsel %vm241, %v2184, 0
    %2188 = vmatprep.subr.mxu0 %v153
    %2189 = vmatpush1.msra.mxu0 %v152
    %2190 = vmatprep.subr.mxu0 %v156
    %2191 = vmatpush1.msra.mxu0 %v155
    %2192 = vmatprep.subr.mxu0 0.0
    %2193 = vmatpush1.msra.mxu0 0.0
    %2194 = vmatprep.subr.mxu0 0.0
    %2195 = vmatpush1.msra.mxu0 0.0
    %2196 = vmatprep.subr.mxu0 0.0
    %2197 = vmatpush1.msra.mxu0 0.0
    %2198 = vmatprep.subr.mxu0 0.0
    %2199 = vmatpush1.msra.mxu0 0.0
    %2200 = vmatprep.subr.mxu0 0.0
    %2201 = vmatpush1.msra.mxu0 0.0
    %2202 = vmatprep.subr.mxu0 0.0
    %2203 = vmatpush1.msra.mxu0 0.0
    %2204 = vmatprep.subr.mxu0 0.0
    %2205 = vmatpush1.msra.mxu0 0.0
    %2206 = vmatprep.subr.mxu0 0.0
    %2207 = vmatpush1.msra.mxu0 0.0
    %2208 = vmatprep.subr.mxu0 0.0
    %2209 = vmatpush1.msra.mxu0 0.0
    %2210 = vmatprep.subr.mxu0 0.0
    %2211 = vmatpush1.msra.mxu0 0.0
    %2212 = vmatprep.subr.mxu0 0.0
    %2213 = vmatpush1.msra.mxu0 0.0
    %2214 = vmatprep.subr.mxu0 0.0
    %2215 = vmatpush1.msra.mxu0 0.0
    %2216 = vmatprep.subr.mxu0 0.0
    %2217 = vmatpush1.msra.mxu0 0.0
    %2218 = vmatprep.subr.mxu0 0.0
    %2219 = vmatpush1.msra.mxu0 0.0
    %2220 = vmatprep.subr.mxu0 0.0
    %2221 = vmatpush1.msra.mxu0 0.0
    %2222 = vmatprep.subr.mxu0 0.0
    %2223 = vmatpush1.msra.mxu0 0.0
    %2224 = vmatprep.subr.mxu0 0.0
    %2225 = vmatpush1.msra.mxu0 0.0
    %2226 = vmatprep.subr.mxu0 0.0
    %2227 = vmatpush1.msra.mxu0 0.0
    %2228 = vmatprep.subr.mxu0 0.0
    %2229 = vmatpush1.msra.mxu0 0.0
    %2230 = vmatprep.subr.mxu0 0.0
    %2231 = vmatpush1.msra.mxu0 0.0
    %2232 = vmatprep.subr.mxu0 0.0
    %2233 = vmatpush1.msra.mxu0 0.0
    %2234 = vmatprep.subr.mxu0 0.0
    %2235 = vmatpush1.msra.mxu0 0.0
    %2236 = vmatprep.subr.mxu0 0.0
    %2237 = vmatpush1.msra.mxu0 0.0
    %2238 = vmatprep.subr.mxu0 0.0
    %2239 = vmatpush1.msra.mxu0 0.0
    %2240 = vmatprep.subr.mxu0 0.0
    %2241 = vmatpush1.msra.mxu0 0.0
    %2242 = vmatprep.subr.mxu0 0.0
    %2243 = vmatpush1.msra.mxu0 0.0
    %2244 = vmatprep.subr.mxu0 0.0
    %2245 = vmatpush1.msra.mxu0 0.0
    %2246 = vmatprep.subr.mxu0 0.0
    %2247 = vmatpush1.msra.mxu0 0.0
    %2248 = vmatprep.subr.mxu0 0.0
    %2249 = vmatpush1.msra.mxu0 0.0
    %2250 = vmatprep.subr.mxu0 0.0
    %2251 = vmatpush1.msra.mxu0 0.0
    %2252 = vmatprep.mubr.f32.mxu0 0.0
    %2253 = vmatmul.mubr.f32.gmra.mrb[0].mxu0 %v2186
    %v2254 = vpop.f32.mrb[0].mxu0
    %v2255 = vadd.f32 %v211, %v2254
    %v2256 = vpop.f32.mrb[0].mxu0
    %v2257 = vadd.f32 %v215, %v2256
    %2258 = vdwg.mxu0
    %2259 = vmatprep.subr.mxu0 0.0
    %2260 = vmatpush1.msra.mxu0 %v154
    %2261 = vmatprep.subr.mxu0 0.0
    %2262 = vmatpush1.msra.mxu0 %v157
    %2263 = vmatprep.subr.mxu0 0.0
    %2264 = vmatpush1.msra.mxu0 0.0
    %2265 = vmatprep.subr.mxu0 0.0
    %2266 = vmatpush1.msra.mxu0 0.0
    %2267 = vmatprep.subr.mxu0 0.0
    %2268 = vmatpush1.msra.mxu0 0.0
    %2269 = vmatprep.subr.mxu0 0.0
    %2270 = vmatpush1.msra.mxu0 0.0
    %2271 = vmatprep.subr.mxu0 0.0
    %2272 = vmatpush1.msra.mxu0 0.0
    %2273 = vmatprep.subr.mxu0 0.0
    %2274 = vmatpush1.msra.mxu0 0.0
    %2275 = vmatprep.subr.mxu0 0.0
    %2276 = vmatpush1.msra.mxu0 0.0
    %2277 = vmatprep.subr.mxu0 0.0
    %2278 = vmatpush1.msra.mxu0 0.0
    %2279 = vmatprep.subr.mxu0 0.0
    %2280 = vmatpush1.msra.mxu0 0.0
    %2281 = vmatprep.subr.mxu0 0.0
    %2282 = vmatpush1.msra.mxu0 0.0
    %2283 = vmatprep.subr.mxu0 0.0
    %2284 = vmatpush1.msra.mxu0 0.0
    %2285 = vmatprep.subr.mxu0 0.0
    %2286 = vmatpush1.msra.mxu0 0.0
    %2287 = vmatprep.subr.mxu0 0.0
    %2288 = vmatpush1.msra.mxu0 0.0
    %2289 = vmatprep.subr.mxu0 0.0
    %2290 = vmatpush1.msra.mxu0 0.0
    %2291 = vmatprep.subr.mxu0 0.0
    %2292 = vmatpush1.msra.mxu0 0.0
    %2293 = vmatprep.subr.mxu0 0.0
    %2294 = vmatpush1.msra.mxu0 0.0
    %2295 = vmatprep.subr.mxu0 0.0
    %2296 = vmatpush1.msra.mxu0 0.0
    %2297 = vmatprep.subr.mxu0 0.0
    %2298 = vmatpush1.msra.mxu0 0.0
    %2299 = vmatprep.subr.mxu0 0.0
    %2300 = vmatpush1.msra.mxu0 0.0
    %2301 = vmatprep.subr.mxu0 0.0
    %2302 = vmatpush1.msra.mxu0 0.0
    %2303 = vmatprep.subr.mxu0 0.0
    %2304 = vmatpush1.msra.mxu0 0.0
    %2305 = vmatprep.subr.mxu0 0.0
    %2306 = vmatpush1.msra.mxu0 0.0
    %2307 = vmatprep.subr.mxu0 0.0
    %2308 = vmatpush1.msra.mxu0 0.0
    %2309 = vmatprep.subr.mxu0 0.0
    %2310 = vmatpush1.msra.mxu0 0.0
    %2311 = vmatprep.subr.mxu0 0.0
    %2312 = vmatpush1.msra.mxu0 0.0
    %2313 = vmatprep.subr.mxu0 0.0
    %2314 = vmatpush1.msra.mxu0 0.0
    %2315 = vmatprep.subr.mxu0 0.0
    %2316 = vmatpush1.msra.mxu0 0.0
    %2317 = vmatprep.subr.mxu0 0.0
    %2318 = vmatpush1.msra.mxu0 0.0
    %2319 = vmatprep.subr.mxu0 0.0
    %2320 = vmatpush1.msra.mxu0 0.0
    %2321 = vmatprep.subr.mxu0 0.0
    %2322 = vmatpush1.msra.mxu0 0.0
    %2323 = vmatprep.mubr.f32.mxu0 0.0
    %2324 = vmatmul.mubr.f32.gmra.mrb[0].mxu0 %v2186
    %v2325 = vpop.f32.mrb[0].mxu0
    %v2326 = vadd.f32 %v219, %v2325
    %v2327 = vpop.f32.mrb[0].mxu0
    %2328 = vdwg.mxu0
    %2329 = vmatprep.subr.mxu0 %v159
    %2330 = vmatpush1.msra.mxu0 %v158
    %2331 = vmatprep.subr.mxu0 %v162
    %2332 = vmatpush1.msra.mxu0 %v161
    %2333 = vmatprep.subr.mxu0 %v165
    %2334 = vmatpush1.msra.mxu0 %v164
    %2335 = vmatprep.subr.mxu0 %v168
    %2336 = vmatpush1.msra.mxu0 %v167
    %2337 = vmatprep.subr.mxu0 %v171
    %2338 = vmatpush1.msra.mxu0 %v170
    %2339 = vmatprep.subr.mxu0 %v174
    %2340 = vmatpush1.msra.mxu0 %v173
    %2341 = vmatprep.subr.mxu0 %v177
    %2342 = vmatpush1.msra.mxu0 %v176
    %2343 = vmatprep.subr.mxu0 %v180
    %2344 = vmatpush1.msra.mxu0 %v179
    %2345 = vmatprep.subr.mxu0 %v183
    %2346 = vmatpush1.msra.mxu0 %v182
    %2347 = vmatprep.subr.mxu0 %v186
    %2348 = vmatpush1.msra.mxu0 %v185
    %2349 = vmatprep.subr.mxu0 %v189
    %2350 = vmatpush1.msra.mxu0 %v188
    %2351 = vmatprep.subr.mxu0 %v192
    %2352 = vmatpush1.msra.mxu0 %v191
    %2353 = vmatprep.subr.mxu0 %v195
    %2354 = vmatpush1.msra.mxu0 %v194
    %2355 = vmatprep.subr.mxu0 %v198
    %2356 = vmatpush1.msra.mxu0 %v197
    %2357 = vmatprep.subr.mxu0 %v201
    %2358 = vmatpush1.msra.mxu0 %v200
    %2359 = vmatprep.subr.mxu0 %v204
    %2360 = vmatpush1.msra.mxu0 %v203
    %2361 = vmatprep.subr.mxu0 0.0
    %2362 = vmatpush1.msra.mxu0 0.0
    %2363 = vmatprep.subr.mxu0 0.0
    %2364 = vmatpush1.msra.mxu0 0.0
    %2365 = vmatprep.subr.mxu0 0.0
    %2366 = vmatpush1.msra.mxu0 0.0
    %2367 = vmatprep.subr.mxu0 0.0
    %2368 = vmatpush1.msra.mxu0 0.0
    %2369 = vmatprep.subr.mxu0 0.0
    %2370 = vmatpush1.msra.mxu0 0.0
    %2371 = vmatprep.subr.mxu0 0.0
    %2372 = vmatpush1.msra.mxu0 0.0
    %2373 = vmatprep.subr.mxu0 0.0
    %2374 = vmatpush1.msra.mxu0 0.0
    %2375 = vmatprep.subr.mxu0 0.0
    %2376 = vmatpush1.msra.mxu0 0.0
    %2377 = vmatprep.subr.mxu0 0.0
    %2378 = vmatpush1.msra.mxu0 0.0
    %2379 = vmatprep.subr.mxu0 0.0
    %2380 = vmatpush1.msra.mxu0 0.0
    %2381 = vmatprep.subr.mxu0 0.0
    %2382 = vmatpush1.msra.mxu0 0.0
    %2383 = vmatprep.subr.mxu0 0.0
    %2384 = vmatpush1.msra.mxu0 0.0
    %2385 = vmatprep.subr.mxu0 0.0
    %2386 = vmatpush1.msra.mxu0 0.0
    %2387 = vmatprep.subr.mxu0 0.0
    %2388 = vmatpush1.msra.mxu0 0.0
    %2389 = vmatprep.subr.mxu0 0.0
    %2390 = vmatpush1.msra.mxu0 0.0
    %2391 = vmatprep.subr.mxu0 0.0
    %2392 = vmatpush1.msra.mxu0 0.0
    %2393 = vmatprep.mubr.f32.mxu0 0.0
    %2394 = vmatmul.mubr.f32.gmra.mrb[0].mxu0 %v2182
    %v2395 = vpop.f32.mrb[0].mxu0
    %v2396 = vadd.f32 %v228, %v2395
    %v2397 = vpop.f32.mrb[0].mxu0
    %v2398 = vadd.f32 %v232, %v2397
    %2399 = vdwg.mxu0
    %2400 = vmatprep.subr.mxu0 0.0
    %2401 = vmatpush1.msra.mxu0 %v160
    %2402 = vmatprep.subr.mxu0 0.0
    %2403 = vmatpush1.msra.mxu0 %v163
    %2404 = vmatprep.subr.mxu0 0.0
    %2405 = vmatpush1.msra.mxu0 %v166
    %2406 = vmatprep.subr.mxu0 0.0
    %2407 = vmatpush1.msra.mxu0 %v169
    %2408 = vmatprep.subr.mxu0 0.0
    %2409 = vmatpush1.msra.mxu0 %v172
    %2410 = vmatprep.subr.mxu0 0.0
    %2411 = vmatpush1.msra.mxu0 %v175
    %2412 = vmatprep.subr.mxu0 0.0
    %2413 = vmatpush1.msra.mxu0 %v178
    %2414 = vmatprep.subr.mxu0 0.0
    %2415 = vmatpush1.msra.mxu0 %v181
    %2416 = vmatprep.subr.mxu0 0.0
    %2417 = vmatpush1.msra.mxu0 %v184
    %2418 = vmatprep.subr.mxu0 0.0
    %2419 = vmatpush1.msra.mxu0 %v187
    %2420 = vmatprep.subr.mxu0 0.0
    %2421 = vmatpush1.msra.mxu0 %v190
    %2422 = vmatprep.subr.mxu0 0.0
    %2423 = vmatpush1.msra.mxu0 %v193
    %2424 = vmatprep.subr.mxu0 0.0
    %2425 = vmatpush1.msra.mxu0 %v196
    %2426 = vmatprep.subr.mxu0 0.0
    %2427 = vmatpush1.msra.mxu0 %v199
    %2428 = vmatprep.subr.mxu0 0.0
    %2429 = vmatpush1.msra.mxu0 %v202
    %2430 = vmatprep.subr.mxu0 0.0
    %2431 = vmatpush1.msra.mxu0 %v205
    %2432 = vmatprep.subr.mxu0 0.0
    %2433 = vmatpush1.msra.mxu0 0.0
    %2434 = vmatprep.subr.mxu0 0.0
    %2435 = vmatpush1.msra.mxu0 0.0
    %2436 = vmatprep.subr.mxu0 0.0
    %2437 = vmatpush1.msra.mxu0 0.0
    %2438 = vmatprep.subr.mxu0 0.0
    %2439 = vmatpush1.msra.mxu0 0.0
    %2440 = vmatprep.subr.mxu0 0.0
    %2441 = vmatpush1.msra.mxu0 0.0
    %2442 = vmatprep.subr.mxu0 0.0
    %2443 = vmatpush1.msra.mxu0 0.0
    %2444 = vmatprep.subr.mxu0 0.0
    %2445 = vmatpush1.msra.mxu0 0.0
    %2446 = vmatprep.subr.mxu0 0.0
    %2447 = vmatpush1.msra.mxu0 0.0
    %2448 = vmatprep.subr.mxu0 0.0
    %2449 = vmatpush1.msra.mxu0 0.0
    %2450 = vmatprep.subr.mxu0 0.0
    %2451 = vmatpush1.msra.mxu0 0.0
    %2452 = vmatprep.subr.mxu0 0.0
    %2453 = vmatpush1.msra.mxu0 0.0
    %2454 = vmatprep.subr.mxu0 0.0
    %2455 = vmatpush1.msra.mxu0 0.0
    %2456 = vmatprep.subr.mxu0 0.0
    %2457 = vmatpush1.msra.mxu0 0.0
    %2458 = vmatprep.subr.mxu0 0.0
    %2459 = vmatpush1.msra.mxu0 0.0
    %2460 = vmatprep.subr.mxu0 0.0
    %2461 = vmatpush1.msra.mxu0 0.0
    %2462 = vmatprep.subr.mxu0 0.0
    %2463 = vmatpush1.msra.mxu0 0.0
    %2464 = vmatprep.mubr.f32.mxu0 0.0
    %2465 = vmatmul.mubr.f32.gmra.mrb[0].mxu0 %v2182
    %v2466 = vpop.f32.mrb[0].mxu0
    %v2467 = vadd.f32 %v236, %v2466
    %v2468 = vpop.f32.mrb[0].mxu0
    %2469 = vdwg.mxu0
    %v2470 = vadd.f32 %v2255, %v2396
    %v2471 = vxor.u32 %v2470, 2147483648
    %v2472 = vmul.f32 %v2471, 1.442695
    %v2473 = vpow.pop %v2472
    %v2474 = vadd.f32 %v2473, 1.0
    %v2475 = vrcp.pop %v2474
    %v2476 = vmul.f32 1.0, %v2475
    %v2477 = vadd.f32 %v2257, %v2398
    %v2478 = vxor.u32 %v2477, 2147483648
    %v2479 = vmul.f32 %v2478, 1.442695
    %v2480 = vpow.pop %v2479
    %v2481 = vadd.f32 %v2480, 1.0
    %v2482 = vrcp.pop %v2481
    %v2483 = vmul.f32 1.0, %v2482
    %v2484 = vmul.f32 %v2476, %v2467
    %v2485 = vadd.f32 %v2326, %v2484
    %v2486 = vtanh.pop %v2485
    %v2487 = vsub.f32 1.0, %v2483
    %v2488 = vmul.f32 %v2487, %v2486
    %v2489 = vmul.f32 %v2483, %v2182
    %v2490 = vadd.f32 %v2488, %v2489
    %s2491 = scalar_lea.vmem %s3, 12
    %v2492 = vld [vmem:[%s2491] sm:$0x3]
    %2494 = vset.pattern.permute.xlu0 0
    %2495 = vperm.xlu0 %2494, %v2492
    %v2496 = vpop.permute.xlu0 %2495
    %v2498 = vmul.f32 %v2496, %v2490
    %v2499 = vsub.f32 1.0, %v2492
    %2501 = vset.pattern.permute.xlu0 0
    %2502 = vperm.xlu0 %2501, %v2499
    %v2503 = vpop.permute.xlu0 %2502
    %v2505 = vmul.f32 %v2503, %v2182
    %v2506 = vadd.f32 %v2498, %v2505
    %s2507 = scalar_lea.vmem %s1, 14
    %v2508 = vld [vmem:[%s2507] sm:$0x3]
    %v2510 = vsel %vm241, %v2508, 0
    %2512 = vmatprep.subr.mxu0 %v153
    %2513 = vmatpush1.msra.mxu0 %v152
    %2514 = vmatprep.subr.mxu0 %v156
    %2515 = vmatpush1.msra.mxu0 %v155
    %2516 = vmatprep.subr.mxu0 0.0
    %2517 = vmatpush1.msra.mxu0 0.0
    %2518 = vmatprep.subr.mxu0 0.0
    %2519 = vmatpush1.msra.mxu0 0.0
    %2520 = vmatprep.subr.mxu0 0.0
    %2521 = vmatpush1.msra.mxu0 0.0
    %2522 = vmatprep.subr.mxu0 0.0
    %2523 = vmatpush1.msra.mxu0 0.0
    %2524 = vmatprep.subr.mxu0 0.0
    %2525 = vmatpush1.msra.mxu0 0.0
    %2526 = vmatprep.subr.mxu0 0.0
    %2527 = vmatpush1.msra.mxu0 0.0
    %2528 = vmatprep.subr.mxu0 0.0
    %2529 = vmatpush1.msra.mxu0 0.0
    %2530 = vmatprep.subr.mxu0 0.0
    %2531 = vmatpush1.msra.mxu0 0.0
    %2532 = vmatprep.subr.mxu0 0.0
    %2533 = vmatpush1.msra.mxu0 0.0
    %2534 = vmatprep.subr.mxu0 0.0
    %2535 = vmatpush1.msra.mxu0 0.0
    %2536 = vmatprep.subr.mxu0 0.0
    %2537 = vmatpush1.msra.mxu0 0.0
    %2538 = vmatprep.subr.mxu0 0.0
    %2539 = vmatpush1.msra.mxu0 0.0
    %2540 = vmatprep.subr.mxu0 0.0
    %2541 = vmatpush1.msra.mxu0 0.0
    %2542 = vmatprep.subr.mxu0 0.0
    %2543 = vmatpush1.msra.mxu0 0.0
    %2544 = vmatprep.subr.mxu0 0.0
    %2545 = vmatpush1.msra.mxu0 0.0
    %2546 = vmatprep.subr.mxu0 0.0
    %2547 = vmatpush1.msra.mxu0 0.0
    %2548 = vmatprep.subr.mxu0 0.0
    %2549 = vmatpush1.msra.mxu0 0.0
    %2550 = vmatprep.subr.mxu0 0.0
    %2551 = vmatpush1.msra.mxu0 0.0
    %2552 = vmatprep.subr.mxu0 0.0
    %2553 = vmatpush1.msra.mxu0 0.0
    %2554 = vmatprep.subr.mxu0 0.0
    %2555 = vmatpush1.msra.mxu0 0.0
    %2556 = vmatprep.subr.mxu0 0.0
    %2557 = vmatpush1.msra.mxu0 0.0
    %2558 = vmatprep.subr.mxu0 0.0
    %2559 = vmatpush1.msra.mxu0 0.0
    %2560 = vmatprep.subr.mxu0 0.0
    %2561 = vmatpush1.msra.mxu0 0.0
    %2562 = vmatprep.subr.mxu0 0.0
    %2563 = vmatpush1.msra.mxu0 0.0
    %2564 = vmatprep.subr.mxu0 0.0
    %2565 = vmatpush1.msra.mxu0 0.0
    %2566 = vmatprep.subr.mxu0 0.0
    %2567 = vmatpush1.msra.mxu0 0.0
    %2568 = vmatprep.subr.mxu0 0.0
    %2569 = vmatpush1.msra.mxu0 0.0
    %2570 = vmatprep.subr.mxu0 0.0
    %2571 = vmatpush1.msra.mxu0 0.0
    %2572 = vmatprep.subr.mxu0 0.0
    %2573 = vmatpush1.msra.mxu0 0.0
    %2574 = vmatprep.subr.mxu0 0.0
    %2575 = vmatpush1.msra.mxu0 0.0
    %2576 = vmatprep.mubr.f32.mxu0 0.0
    %2577 = vmatmul.mubr.f32.gmra.mrb[0].mxu0 %v2510
    %v2578 = vpop.f32.mrb[0].mxu0
    %v2579 = vadd.f32 %v211, %v2578
    %v2580 = vpop.f32.mrb[0].mxu0
    %v2581 = vadd.f32 %v215, %v2580
    %2582 = vdwg.mxu0
    %2583 = vmatprep.subr.mxu0 0.0
    %2584 = vmatpush1.msra.mxu0 %v154
    %2585 = vmatprep.subr.mxu0 0.0
    %2586 = vmatpush1.msra.mxu0 %v157
    %2587 = vmatprep.subr.mxu0 0.0
    %2588 = vmatpush1.msra.mxu0 0.0
    %2589 = vmatprep.subr.mxu0 0.0
    %2590 = vmatpush1.msra.mxu0 0.0
    %2591 = vmatprep.subr.mxu0 0.0
    %2592 = vmatpush1.msra.mxu0 0.0
    %2593 = vmatprep.subr.mxu0 0.0
    %2594 = vmatpush1.msra.mxu0 0.0
    %2595 = vmatprep.subr.mxu0 0.0
    %2596 = vmatpush1.msra.mxu0 0.0
    %2597 = vmatprep.subr.mxu0 0.0
    %2598 = vmatpush1.msra.mxu0 0.0
    %2599 = vmatprep.subr.mxu0 0.0
    %2600 = vmatpush1.msra.mxu0 0.0
    %2601 = vmatprep.subr.mxu0 0.0
    %2602 = vmatpush1.msra.mxu0 0.0
    %2603 = vmatprep.subr.mxu0 0.0
    %2604 = vmatpush1.msra.mxu0 0.0
    %2605 = vmatprep.subr.mxu0 0.0
    %2606 = vmatpush1.msra.mxu0 0.0
    %2607 = vmatprep.subr.mxu0 0.0
    %2608 = vmatpush1.msra.mxu0 0.0
    %2609 = vmatprep.subr.mxu0 0.0
    %2610 = vmatpush1.msra.mxu0 0.0
    %2611 = vmatprep.subr.mxu0 0.0
    %2612 = vmatpush1.msra.mxu0 0.0
    %2613 = vmatprep.subr.mxu0 0.0
    %2614 = vmatpush1.msra.mxu0 0.0
    %2615 = vmatprep.subr.mxu0 0.0
    %2616 = vmatpush1.msra.mxu0 0.0
    %2617 = vmatprep.subr.mxu0 0.0
    %2618 = vmatpush1.msra.mxu0 0.0
    %2619 = vmatprep.subr.mxu0 0.0
    %2620 = vmatpush1.msra.mxu0 0.0
    %2621 = vmatprep.subr.mxu0 0.0
    %2622 = vmatpush1.msra.mxu0 0.0
    %2623 = vmatprep.subr.mxu0 0.0
    %2624 = vmatpush1.msra.mxu0 0.0
    %2625 = vmatprep.subr.mxu0 0.0
    %2626 = vmatpush1.msra.mxu0 0.0
    %2627 = vmatprep.subr.mxu0 0.0
    %2628 = vmatpush1.msra.mxu0 0.0
    %2629 = vmatprep.subr.mxu0 0.0
    %2630 = vmatpush1.msra.mxu0 0.0
    %2631 = vmatprep.subr.mxu0 0.0
    %2632 = vmatpush1.msra.mxu0 0.0
    %2633 = vmatprep.subr.mxu0 0.0
    %2634 = vmatpush1.msra.mxu0 0.0
    %2635 = vmatprep.subr.mxu0 0.0
    %2636 = vmatpush1.msra.mxu0 0.0
    %2637 = vmatprep.subr.mxu0 0.0
    %2638 = vmatpush1.msra.mxu0 0.0
    %2639 = vmatprep.subr.mxu0 0.0
    %2640 = vmatpush1.msra.mxu0 0.0
    %2641 = vmatprep.subr.mxu0 0.0
    %2642 = vmatpush1.msra.mxu0 0.0
    %2643 = vmatprep.subr.mxu0 0.0
    %2644 = vmatpush1.msra.mxu0 0.0
    %2645 = vmatprep.subr.mxu0 0.0
    %2646 = vmatpush1.msra.mxu0 0.0
    %2647 = vmatprep.mubr.f32.mxu0 0.0
    %2648 = vmatmul.mubr.f32.gmra.mrb[0].mxu0 %v2510
    %v2649 = vpop.f32.mrb[0].mxu0
    %v2650 = vadd.f32 %v219, %v2649
    %v2651 = vpop.f32.mrb[0].mxu0
    %2652 = vdwg.mxu0
    %2653 = vmatprep.subr.mxu0 %v159
    %2654 = vmatpush1.msra.mxu0 %v158
    %2655 = vmatprep.subr.mxu0 %v162
    %2656 = vmatpush1.msra.mxu0 %v161
    %2657 = vmatprep.subr.mxu0 %v165
    %2658 = vmatpush1.msra.mxu0 %v164
    %2659 = vmatprep.subr.mxu0 %v168
    %2660 = vmatpush1.msra.mxu0 %v167
    %2661 = vmatprep.subr.mxu0 %v171
    %2662 = vmatpush1.msra.mxu0 %v170
    %2663 = vmatprep.subr.mxu0 %v174
    %2664 = vmatpush1.msra.mxu0 %v173
    %2665 = vmatprep.subr.mxu0 %v177
    %2666 = vmatpush1.msra.mxu0 %v176
    %2667 = vmatprep.subr.mxu0 %v180
    %2668 = vmatpush1.msra.mxu0 %v179
    %2669 = vmatprep.subr.mxu0 %v183
    %2670 = vmatpush1.msra.mxu0 %v182
    %2671 = vmatprep.subr.mxu0 %v186
    %2672 = vmatpush1.msra.mxu0 %v185
    %2673 = vmatprep.subr.mxu0 %v189
    %2674 = vmatpush1.msra.mxu0 %v188
    %2675 = vmatprep.subr.mxu0 %v192
    %2676 = vmatpush1.msra.mxu0 %v191
    %2677 = vmatprep.subr.mxu0 %v195
    %2678 = vmatpush1.msra.mxu0 %v194
    %2679 = vmatprep.subr.mxu0 %v198
    %2680 = vmatpush1.msra.mxu0 %v197
    %2681 = vmatprep.subr.mxu0 %v201
    %2682 = vmatpush1.msra.mxu0 %v200
    %2683 = vmatprep.subr.mxu0 %v204
    %2684 = vmatpush1.msra.mxu0 %v203
    %2685 = vmatprep.subr.mxu0 0.0
    %2686 = vmatpush1.msra.mxu0 0.0
    %2687 = vmatprep.subr.mxu0 0.0
    %2688 = vmatpush1.msra.mxu0 0.0
    %2689 = vmatprep.subr.mxu0 0.0
    %2690 = vmatpush1.msra.mxu0 0.0
    %2691 = vmatprep.subr.mxu0 0.0
    %2692 = vmatpush1.msra.mxu0 0.0
    %2693 = vmatprep.subr.mxu0 0.0
    %2694 = vmatpush1.msra.mxu0 0.0
    %2695 = vmatprep.subr.mxu0 0.0
    %2696 = vmatpush1.msra.mxu0 0.0
    %2697 = vmatprep.subr.mxu0 0.0
    %2698 = vmatpush1.msra.mxu0 0.0
    %2699 = vmatprep.subr.mxu0 0.0
    %2700 = vmatpush1.msra.mxu0 0.0
    %2701 = vmatprep.subr.mxu0 0.0
    %2702 = vmatpush1.msra.mxu0 0.0
    %2703 = vmatprep.subr.mxu0 0.0
    %2704 = vmatpush1.msra.mxu0 0.0
    %2705 = vmatprep.subr.mxu0 0.0
    %2706 = vmatpush1.msra.mxu0 0.0
    %2707 = vmatprep.subr.mxu0 0.0
    %2708 = vmatpush1.msra.mxu0 0.0
    %2709 = vmatprep.subr.mxu0 0.0
    %2710 = vmatpush1.msra.mxu0 0.0
    %2711 = vmatprep.subr.mxu0 0.0
    %2712 = vmatpush1.msra.mxu0 0.0
    %2713 = vmatprep.subr.mxu0 0.0
    %2714 = vmatpush1.msra.mxu0 0.0
    %2715 = vmatprep.subr.mxu0 0.0
    %2716 = vmatpush1.msra.mxu0 0.0
    %2717 = vmatprep.mubr.f32.mxu0 0.0
    %2718 = vmatmul.mubr.f32.gmra.mrb[0].mxu0 %v2506
    %v2719 = vpop.f32.mrb[0].mxu0
    %v2720 = vadd.f32 %v228, %v2719
    %v2721 = vpop.f32.mrb[0].mxu0
    %v2722 = vadd.f32 %v232, %v2721
    %2723 = vdwg.mxu0
    %2724 = vmatprep.subr.mxu0 0.0
    %2725 = vmatpush1.msra.mxu0 %v160
    %2726 = vmatprep.subr.mxu0 0.0
    %2727 = vmatpush1.msra.mxu0 %v163
    %2728 = vmatprep.subr.mxu0 0.0
    %2729 = vmatpush1.msra.mxu0 %v166
    %2730 = vmatprep.subr.mxu0 0.0
    %2731 = vmatpush1.msra.mxu0 %v169
    %2732 = vmatprep.subr.mxu0 0.0
    %2733 = vmatpush1.msra.mxu0 %v172
    %2734 = vmatprep.subr.mxu0 0.0
    %2735 = vmatpush1.msra.mxu0 %v175
    %2736 = vmatprep.subr.mxu0 0.0
    %2737 = vmatpush1.msra.mxu0 %v178
    %2738 = vmatprep.subr.mxu0 0.0
    %2739 = vmatpush1.msra.mxu0 %v181
    %2740 = vmatprep.subr.mxu0 0.0
    %2741 = vmatpush1.msra.mxu0 %v184
    %2742 = vmatprep.subr.mxu0 0.0
    %2743 = vmatpush1.msra.mxu0 %v187
    %2744 = vmatprep.subr.mxu0 0.0
    %2745 = vmatpush1.msra.mxu0 %v190
    %2746 = vmatprep.subr.mxu0 0.0
    %2747 = vmatpush1.msra.mxu0 %v193
    %2748 = vmatprep.subr.mxu0 0.0
    %2749 = vmatpush1.msra.mxu0 %v196
    %2750 = vmatprep.subr.mxu0 0.0
    %2751 = vmatpush1.msra.mxu0 %v199
    %2752 = vmatprep.subr.mxu0 0.0
    %2753 = vmatpush1.msra.mxu0 %v202
    %2754 = vmatprep.subr.mxu0 0.0
    %2755 = vmatpush1.msra.mxu0 %v205
    %2756 = vmatprep.subr.mxu0 0.0
    %2757 = vmatpush1.msra.mxu0 0.0
    %2758 = vmatprep.subr.mxu0 0.0
    %2759 = vmatpush1.msra.mxu0 0.0
    %2760 = vmatprep.subr.mxu0 0.0
    %2761 = vmatpush1.msra.mxu0 0.0
    %2762 = vmatprep.subr.mxu0 0.0
    %2763 = vmatpush1.msra.mxu0 0.0
    %2764 = vmatprep.subr.mxu0 0.0
    %2765 = vmatpush1.msra.mxu0 0.0
    %2766 = vmatprep.subr.mxu0 0.0
    %2767 = vmatpush1.msra.mxu0 0.0
    %2768 = vmatprep.subr.mxu0 0.0
    %2769 = vmatpush1.msra.mxu0 0.0
    %2770 = vmatprep.subr.mxu0 0.0
    %2771 = vmatpush1.msra.mxu0 0.0
    %2772 = vmatprep.subr.mxu0 0.0
    %2773 = vmatpush1.msra.mxu0 0.0
    %2774 = vmatprep.subr.mxu0 0.0
    %2775 = vmatpush1.msra.mxu0 0.0
    %2776 = vmatprep.subr.mxu0 0.0
    %2777 = vmatpush1.msra.mxu0 0.0
    %2778 = vmatprep.subr.mxu0 0.0
    %2779 = vmatpush1.msra.mxu0 0.0
    %2780 = vmatprep.subr.mxu0 0.0
    %2781 = vmatpush1.msra.mxu0 0.0
    %2782 = vmatprep.subr.mxu0 0.0
    %2783 = vmatpush1.msra.mxu0 0.0
    %2784 = vmatprep.subr.mxu0 0.0
    %2785 = vmatpush1.msra.mxu0 0.0
    %2786 = vmatprep.subr.mxu0 0.0
    %2787 = vmatpush1.msra.mxu0 0.0
    %2788 = vmatprep.mubr.f32.mxu0 0.0
    %2789 = vmatmul.mubr.f32.gmra.mrb[0].mxu0 %v2506
    %v2790 = vpop.f32.mrb[0].mxu0
    %v2791 = vadd.f32 %v236, %v2790
    %v2792 = vpop.f32.mrb[0].mxu0
    %2793 = vdwg.mxu0
    %v2794 = vadd.f32 %v2579, %v2720
    %v2795 = vxor.u32 %v2794, 2147483648
    %v2796 = vmul.f32 %v2795, 1.442695
    %v2797 = vpow.pop %v2796
    %v2798 = vadd.f32 %v2797, 1.0
    %v2799 = vrcp.pop %v2798
    %v2800 = vmul.f32 1.0, %v2799
    %v2801 = vadd.f32 %v2581, %v2722
    %v2802 = vxor.u32 %v2801, 2147483648
    %v2803 = vmul.f32 %v2802, 1.442695
    %v2804 = vpow.pop %v2803
    %v2805 = vadd.f32 %v2804, 1.0
    %v2806 = vrcp.pop %v2805
    %v2807 = vmul.f32 1.0, %v2806
    %v2808 = vmul.f32 %v2800, %v2791
    %v2809 = vadd.f32 %v2650, %v2808
    %v2810 = vtanh.pop %v2809
    %v2811 = vsub.f32 1.0, %v2807
    %v2812 = vmul.f32 %v2811, %v2810
    %v2813 = vmul.f32 %v2807, %v2506
    %v2814 = vadd.f32 %v2812, %v2813
    %s2815 = scalar_lea.vmem %s3, 14
    %v2816 = vld [vmem:[%s2815] sm:$0x3]
    %2818 = vset.pattern.permute.xlu0 0
    %2819 = vperm.xlu0 %2818, %v2816
    %v2820 = vpop.permute.xlu0 %2819
    %v2822 = vmul.f32 %v2820, %v2814
    %v2823 = vsub.f32 1.0, %v2816
    %2825 = vset.pattern.permute.xlu0 0
    %2826 = vperm.xlu0 %2825, %v2823
    %v2827 = vpop.permute.xlu0 %2826
    %v2829 = vmul.f32 %v2827, %v2506
    %v2830 = vadd.f32 %v2822, %v2829
    %v2831 = vld [vmem:[%s21] sm:$0xff]
    %v2832 = vld [vmem:[%s21 + $0x8] sm:$0xff]
    %v2833 = vld [vmem:[%s21 + $0x10] sm:$0xff]
    %v2834 = vld [vmem:[%s21 + $0x18] sm:$0xff]
    %v2835 = vld [vmem:[%s21 + $0x20] sm:$0xff]
    %v2836 = vld [vmem:[%s21 + $0x28] sm:$0xff]
    %v2837 = vld [vmem:[%s21 + $0x30] sm:$0xff]
    %v2838 = vld [vmem:[%s21 + $0x38] sm:$0xff]
    %v2839 = vld [vmem:[%s21 + $0x40] sm:$0xff]
    %v2840 = vld [vmem:[%s21 + $0x48] sm:$0xff]
    %v2841 = vld [vmem:[%s21 + $0x50] sm:$0xff]
    %v2842 = vld [vmem:[%s21 + $0x58] sm:$0xff]
    %v2843 = vld [vmem:[%s21 + $0x60] sm:$0xff]
    %v2844 = vld [vmem:[%s21 + $0x68] sm:$0xff]
    %v2845 = vld [vmem:[%s21 + $0x70] sm:$0xff]
    %v2846 = vld [vmem:[%s21 + $0x78] sm:$0xff]
    %v2847 = vld [vmem:[%s23] sm:$0x1]
    %v2849 = vlaneseq
    %v2850 = vshrl.u32 %v2849, 7
    %v2851 = vsub.s32 0, %v2850
    %v2852 = vrot.slane %v2847, %v2851
    %2854 = vmatprep.subr.mxu0 0.0
    %2855 = vmatpush1.msra.mxu0 %v2831
    %2856 = vmatprep.subr.mxu0 0.0
    %2857 = vmatpush1.msra.mxu0 %v2832
    %2858 = vmatprep.subr.mxu0 0.0
    %2859 = vmatpush1.msra.mxu0 %v2833
    %2860 = vmatprep.subr.mxu0 0.0
    %2861 = vmatpush1.msra.mxu0 %v2834
    %2862 = vmatprep.subr.mxu0 0.0
    %2863 = vmatpush1.msra.mxu0 %v2835
    %2864 = vmatprep.subr.mxu0 0.0
    %2865 = vmatpush1.msra.mxu0 %v2836
    %2866 = vmatprep.subr.mxu0 0.0
    %2867 = vmatpush1.msra.mxu0 %v2837
    %2868 = vmatprep.subr.mxu0 0.0
    %2869 = vmatpush1.msra.mxu0 %v2838
    %2870 = vmatprep.subr.mxu0 0.0
    %2871 = vmatpush1.msra.mxu0 %v2839
    %2872 = vmatprep.subr.mxu0 0.0
    %2873 = vmatpush1.msra.mxu0 %v2840
    %2874 = vmatprep.subr.mxu0 0.0
    %2875 = vmatpush1.msra.mxu0 %v2841
    %2876 = vmatprep.subr.mxu0 0.0
    %2877 = vmatpush1.msra.mxu0 %v2842
    %2878 = vmatprep.subr.mxu0 0.0
    %2879 = vmatpush1.msra.mxu0 %v2843
    %2880 = vmatprep.subr.mxu0 0.0
    %2881 = vmatpush1.msra.mxu0 %v2844
    %2882 = vmatprep.subr.mxu0 0.0
    %2883 = vmatpush1.msra.mxu0 %v2845
    %2884 = vmatprep.subr.mxu0 0.0
    %2885 = vmatpush1.msra.mxu0 %v2846
    %2886 = vmatprep.subr.mxu0 0.0
    %2887 = vmatpush1.msra.mxu0 0.0
    %2888 = vmatprep.subr.mxu0 0.0
    %2889 = vmatpush1.msra.mxu0 0.0
    %2890 = vmatprep.subr.mxu0 0.0
    %2891 = vmatpush1.msra.mxu0 0.0
    %2892 = vmatprep.subr.mxu0 0.0
    %2893 = vmatpush1.msra.mxu0 0.0
    %2894 = vmatprep.subr.mxu0 0.0
    %2895 = vmatpush1.msra.mxu0 0.0
    %2896 = vmatprep.subr.mxu0 0.0
    %2897 = vmatpush1.msra.mxu0 0.0
    %2898 = vmatprep.subr.mxu0 0.0
    %2899 = vmatpush1.msra.mxu0 0.0
    %2900 = vmatprep.subr.mxu0 0.0
    %2901 = vmatpush1.msra.mxu0 0.0
    %2902 = vmatprep.subr.mxu0 0.0
    %2903 = vmatpush1.msra.mxu0 0.0
    %2904 = vmatprep.subr.mxu0 0.0
    %2905 = vmatpush1.msra.mxu0 0.0
    %2906 = vmatprep.subr.mxu0 0.0
    %2907 = vmatpush1.msra.mxu0 0.0
    %2908 = vmatprep.subr.mxu0 0.0
    %2909 = vmatpush1.msra.mxu0 0.0
    %2910 = vmatprep.subr.mxu0 0.0
    %2911 = vmatpush1.msra.mxu0 0.0
    %2912 = vmatprep.subr.mxu0 0.0
    %2913 = vmatpush1.msra.mxu0 0.0
    %2914 = vmatprep.subr.mxu0 0.0
    %2915 = vmatpush1.msra.mxu0 0.0
    %2916 = vmatprep.subr.mxu0 0.0
    %2917 = vmatpush1.msra.mxu0 0.0
    %2918 = vmatprep.mubr.f32.mxu0 0.0
    %2919 = vmatmul.mubr.f32.gmra.mrb[0].mxu0 %v2830
    %v2920 = vpop.f32.mrb[0].mxu0
    %v2921 = vadd.f32 %v2852, %v2920
    %v2922 = vpop.f32.mrb[0].mxu0
    %2923 = vdwg.mxu0
    %v2924 = vld [vmem:[%s25] sm:$0xff]
    %v2925 = vld [vmem:[%s25 + $0x8] sm:$0xff]
    %v2926 = vld [vmem:[%s25 + $0x10] sm:$0xff]
    %v2927 = vld [vmem:[%s25 + $0x18] sm:$0xff]
    %v2928 = vld [vmem:[%s25 + $0x20] sm:$0xff]
    %v2929 = vld [vmem:[%s25 + $0x28] sm:$0xff]
    %v2930 = vld [vmem:[%s25 + $0x30] sm:$0xff]
    %v2931 = vld [vmem:[%s25 + $0x38] sm:$0xff]
    %v2932 = vld [vmem:[%s25 + $0x40] sm:$0xff]
    %v2933 = vld [vmem:[%s25 + $0x48] sm:$0xff]
    %v2934 = vld [vmem:[%s25 + $0x50] sm:$0xff]
    %v2935 = vld [vmem:[%s25 + $0x58] sm:$0xff]
    %v2936 = vld [vmem:[%s25 + $0x60] sm:$0xff]
    %v2937 = vld [vmem:[%s25 + $0x68] sm:$0xff]
    %v2938 = vld [vmem:[%s25 + $0x70] sm:$0xff]
    %v2939 = vld [vmem:[%s25 + $0x78] sm:$0xff]
    %v2940 = vld [vmem:[%s27] sm:$0x1]
    %v2942 = vlaneseq
    %v2943 = vshrl.u32 %v2942, 7
    %v2944 = vsub.s32 0, %v2943
    %v2945 = vrot.slane %v2940, %v2944
    %2947 = vmatprep.subr.mxu0 0.0
    %2948 = vmatpush1.msra.mxu0 %v2924
    %2949 = vmatprep.subr.mxu0 0.0
    %2950 = vmatpush1.msra.mxu0 %v2925
    %2951 = vmatprep.subr.mxu0 0.0
    %2952 = vmatpush1.msra.mxu0 %v2926
    %2953 = vmatprep.subr.mxu0 0.0
    %2954 = vmatpush1.msra.mxu0 %v2927
    %2955 = vmatprep.subr.mxu0 0.0
    %2956 = vmatpush1.msra.mxu0 %v2928
    %2957 = vmatprep.subr.mxu0 0.0
    %2958 = vmatpush1.msra.mxu0 %v2929
    %2959 = vmatprep.subr.mxu0 0.0
    %2960 = vmatpush1.msra.mxu0 %v2930
    %2961 = vmatprep.subr.mxu0 0.0
    %2962 = vmatpush1.msra.mxu0 %v2931
    %2963 = vmatprep.subr.mxu0 0.0
    %2964 = vmatpush1.msra.mxu0 %v2932
    %2965 = vmatprep.subr.mxu0 0.0
    %2966 = vmatpush1.msra.mxu0 %v2933
    %2967 = vmatprep.subr.mxu0 0.0
    %2968 = vmatpush1.msra.mxu0 %v2934
    %2969 = vmatprep.subr.mxu0 0.0
    %2970 = vmatpush1.msra.mxu0 %v2935
    %2971 = vmatprep.subr.mxu0 0.0
    %2972 = vmatpush1.msra.mxu0 %v2936
    %2973 = vmatprep.subr.mxu0 0.0
    %2974 = vmatpush1.msra.mxu0 %v2937
    %2975 = vmatprep.subr.mxu0 0.0
    %2976 = vmatpush1.msra.mxu0 %v2938
    %2977 = vmatprep.subr.mxu0 0.0
    %2978 = vmatpush1.msra.mxu0 %v2939
    %2979 = vmatprep.subr.mxu0 0.0
    %2980 = vmatpush1.msra.mxu0 0.0
    %2981 = vmatprep.subr.mxu0 0.0
    %2982 = vmatpush1.msra.mxu0 0.0
    %2983 = vmatprep.subr.mxu0 0.0
    %2984 = vmatpush1.msra.mxu0 0.0
    %2985 = vmatprep.subr.mxu0 0.0
    %2986 = vmatpush1.msra.mxu0 0.0
    %2987 = vmatprep.subr.mxu0 0.0
    %2988 = vmatpush1.msra.mxu0 0.0
    %2989 = vmatprep.subr.mxu0 0.0
    %2990 = vmatpush1.msra.mxu0 0.0
    %2991 = vmatprep.subr.mxu0 0.0
    %2992 = vmatpush1.msra.mxu0 0.0
    %2993 = vmatprep.subr.mxu0 0.0
    %2994 = vmatpush1.msra.mxu0 0.0
    %2995 = vmatprep.subr.mxu0 0.0
    %2996 = vmatpush1.msra.mxu0 0.0
    %2997 = vmatprep.subr.mxu0 0.0
    %2998 = vmatpush1.msra.mxu0 0.0
    %2999 = vmatprep.subr.mxu0 0.0
    %3000 = vmatpush1.msra.mxu0 0.0
    %3001 = vmatprep.subr.mxu0 0.0
    %3002 = vmatpush1.msra.mxu0 0.0
    %3003 = vmatprep.subr.mxu0 0.0
    %3004 = vmatpush1.msra.mxu0 0.0
    %3005 = vmatprep.subr.mxu0 0.0
    %3006 = vmatpush1.msra.mxu0 0.0
    %3007 = vmatprep.subr.mxu0 0.0
    %3008 = vmatpush1.msra.mxu0 0.0
    %3009 = vmatprep.subr.mxu0 0.0
    %3010 = vmatpush1.msra.mxu0 0.0
    %3011 = vmatprep.mubr.f32.mxu0 0.0
    %3012 = vmatmul.mubr.f32.gmra.mrb[0].mxu0 %v2830
    %v3013 = vpop.f32.mrb[0].mxu0
    %v3014 = vadd.f32 %v2945, %v3013
    %v3015 = vpop.f32.mrb[0].mxu0
    %3016 = vdwg.mxu0
    %v3017 = vmul.f32 %v3014, 1.442695
    %v3018 = vpow.pop %v3017
    %v3019 = vld [vmem:[%s5] sm:$0x3]
    %v3020 = vmul.f32 %v3018, %v3019
    %v3021 = vadd.f32 %v2921, %v3020
    %vm3022 = vcmask 123904
    %3023 = vst.msk [vmem:[#allocation2] sm:$0x3] %vm3022, %v3021
    %v3024 = vld [vmem:[%s29] sm:$0xff]
    %v3025 = vld [vmem:[%s29 + $0x8] sm:$0xff]
    %v3026 = vld [vmem:[%s29 + $0x10] sm:$0xff]
    %v3027 = vld [vmem:[%s29 + $0x18] sm:$0xff]
    %v3028 = vld [vmem:[%s29 + $0x20] sm:$0xff]
    %v3029 = vld [vmem:[%s29 + $0x28] sm:$0xff]
    %v3030 = vld [vmem:[%s33] sm:$0xff]
    %v3031 = vld [vmem:[%s33 + $0x8] sm:$0xff]
    %v3032 = vld [vmem:[%s33 + $0x10] sm:$0xff]
    %v3033 = vld [vmem:[%s33 + $0x18] sm:$0xff]
    %v3034 = vld [vmem:[%s33 + $0x20] sm:$0xff]
    %v3035 = vld [vmem:[%s33 + $0x28] sm:$0xff]
    %v3036 = vld [vmem:[%s33 + $0x30] sm:$0xff]
    %v3037 = vld [vmem:[%s33 + $0x38] sm:$0xff]
    %v3038 = vld [vmem:[%s33 + $0x40] sm:$0xff]
    %v3039 = vld [vmem:[%s33 + $0x48] sm:$0xff]
    %v3040 = vld [vmem:[%s33 + $0x50] sm:$0xff]
    %v3041 = vld [vmem:[%s33 + $0x58] sm:$0xff]
    %v3042 = vld [vmem:[%s33 + $0x60] sm:$0xff]
    %v3043 = vld [vmem:[%s33 + $0x68] sm:$0xff]
    %v3044 = vld [vmem:[%s33 + $0x70] sm:$0xff]
    %v3045 = vld [vmem:[%s33 + $0x78] sm:$0xff]
    %v3046 = vld [vmem:[%s33 + $0x80] sm:$0xff]
    %v3047 = vld [vmem:[%s33 + $0x88] sm:$0xff]
    %v3048 = vld [vmem:[%s33 + $0x90] sm:$0xff]
    %v3049 = vld [vmem:[%s33 + $0x98] sm:$0xff]
    %v3050 = vld [vmem:[%s33 + $0xa0] sm:$0xff]
    %v3051 = vld [vmem:[%s33 + $0xa8] sm:$0xff]
    %v3052 = vld [vmem:[%s33 + $0xb0] sm:$0xff]
    %v3053 = vld [vmem:[%s33 + $0xb8] sm:$0xff]
    %v3054 = vld [vmem:[%s33 + $0xc0] sm:$0xff]
    %v3055 = vld [vmem:[%s33 + $0xc8] sm:$0xff]
    %v3056 = vld [vmem:[%s33 + $0xd0] sm:$0xff]
    %v3057 = vld [vmem:[%s33 + $0xd8] sm:$0xff]
    %v3058 = vld [vmem:[%s33 + $0xe0] sm:$0xff]
    %v3059 = vld [vmem:[%s33 + $0xe8] sm:$0xff]
    %v3060 = vld [vmem:[%s33 + $0xf0] sm:$0xff]
    %v3061 = vld [vmem:[%s33 + $0xf8] sm:$0xff]
    %v3062 = vld [vmem:[%s33 + $0x100] sm:$0xff]
    %v3063 = vld [vmem:[%s33 + $0x108] sm:$0xff]
    %v3064 = vld [vmem:[%s33 + $0x110] sm:$0xff]
    %v3065 = vld [vmem:[%s33 + $0x118] sm:$0xff]
    %v3066 = vld [vmem:[%s33 + $0x120] sm:$0xff]
    %v3067 = vld [vmem:[%s33 + $0x128] sm:$0xff]
    %v3068 = vld [vmem:[%s33 + $0x130] sm:$0xff]
    %v3069 = vld [vmem:[%s33 + $0x138] sm:$0xff]
    %v3070 = vld [vmem:[%s33 + $0x140] sm:$0xff]
    %v3071 = vld [vmem:[%s33 + $0x148] sm:$0xff]
    %v3072 = vld [vmem:[%s33 + $0x150] sm:$0xff]
    %v3073 = vld [vmem:[%s33 + $0x158] sm:$0xff]
    %v3074 = vld [vmem:[%s33 + $0x160] sm:$0xff]
    %v3075 = vld [vmem:[%s33 + $0x168] sm:$0xff]
    %v3076 = vld [vmem:[%s33 + $0x170] sm:$0xff]
    %v3077 = vld [vmem:[%s33 + $0x178] sm:$0xff]
    %v3078 = vld [vmem:[%s37] sm:$0x7]
    %v3080 = vlaneseq
    %v3081 = vshrl.u32 %v3080, 7
    %v3082 = vsub.s32 0, %v3081
    %v3083 = vrot.slane %v3078, %v3082
    %v3084 = vlaneseq
    %v3085 = vshrl.u32 %v3084, 7
    %v3086 = vsub.s32 1, %v3085
    %v3087 = vrot.slane %v3078, %v3086
    %v3088 = vlaneseq
    %v3089 = vshrl.u32 %v3088, 7
    %v3090 = vsub.s32 2, %v3089
    %v3091 = vrot.slane %v3078, %v3090
    %v3095 = vld [vmem:[%s31] sm:$0xff]
    %v3096 = vld [vmem:[%s31 + $0x8] sm:$0xff]
    %v3097 = vld [vmem:[%s31 + $0x10] sm:$0xff]
    %v3098 = vld [vmem:[%s31 + $0x18] sm:$0xff]
    %v3099 = vld [vmem:[%s31 + $0x20] sm:$0xff]
    %v3100 = vld [vmem:[%s31 + $0x28] sm:$0xff]
    %v3101 = vld [vmem:[%s35] sm:$0x7]
    %v3103 = vlaneseq
    %v3104 = vshrl.u32 %v3103, 7
    %v3105 = vsub.s32 0, %v3104
    %v3106 = vrot.slane %v3101, %v3105
    %v3107 = vlaneseq
    %v3108 = vshrl.u32 %v3107, 7
    %v3109 = vsub.s32 1, %v3108
    %v3110 = vrot.slane %v3101, %v3109
    %v3111 = vlaneseq
    %v3112 = vshrl.u32 %v3111, 7
    %v3113 = vsub.s32 2, %v3112
    %v3114 = vrot.slane %v3101, %v3113
    %v3119 = vsel %vm241, %v3021, 0
    %3121 = vmatprep.subr.mxu0 %v3096
    %3122 = vmatpush1.msra.mxu0 %v3095
    %3123 = vmatprep.subr.mxu0 %v3099
    %3124 = vmatpush1.msra.mxu0 %v3098
    %3125 = vmatprep.subr.mxu0 0.0
    %3126 = vmatpush1.msra.mxu0 0.0
    %3127 = vmatprep.subr.mxu0 0.0
    %3128 = vmatpush1.msra.mxu0 0.0
    %3129 = vmatprep.subr.mxu0 0.0
    %3130 = vmatpush1.msra.mxu0 0.0
    %3131 = vmatprep.subr.mxu0 0.0
    %3132 = vmatpush1.msra.mxu0 0.0
    %3133 = vmatprep.subr.mxu0 0.0
    %3134 = vmatpush1.msra.mxu0 0.0
    %3135 = vmatprep.subr.mxu0 0.0
    %3136 = vmatpush1.msra.mxu0 0.0
    %3137 = vmatprep.subr.mxu0 0.0
    %3138 = vmatpush1.msra.mxu0 0.0
    %3139 = vmatprep.subr.mxu0 0.0
    %3140 = vmatpush1.msra.mxu0 0.0
    %3141 = vmatprep.subr.mxu0 0.0
    %3142 = vmatpush1.msra.mxu0 0.0
    %3143 = vmatprep.subr.mxu0 0.0
    %3144 = vmatpush1.msra.mxu0 0.0
    %3145 = vmatprep.subr.mxu0 0.0
    %3146 = vmatpush1.msra.mxu0 0.0
    %3147 = vmatprep.subr.mxu0 0.0
    %3148 = vmatpush1.msra.mxu0 0.0
    %3149 = vmatprep.subr.mxu0 0.0
    %3150 = vmatpush1.msra.mxu0 0.0
    %3151 = vmatprep.subr.mxu0 0.0
    %3152 = vmatpush1.msra.mxu0 0.0
    %3153 = vmatprep.subr.mxu0 0.0
    %3154 = vmatpush1.msra.mxu0 0.0
    %3155 = vmatprep.subr.mxu0 0.0
    %3156 = vmatpush1.msra.mxu0 0.0
    %3157 = vmatprep.subr.mxu0 0.0
    %3158 = vmatpush1.msra.mxu0 0.0
    %3159 = vmatprep.subr.mxu0 0.0
    %3160 = vmatpush1.msra.mxu0 0.0
    %3161 = vmatprep.subr.mxu0 0.0
    %3162 = vmatpush1.msra.mxu0 0.0
    %3163 = vmatprep.subr.mxu0 0.0
    %3164 = vmatpush1.msra.mxu0 0.0
    %3165 = vmatprep.subr.mxu0 0.0
    %3166 = vmatpush1.msra.mxu0 0.0
    %3167 = vmatprep.subr.mxu0 0.0
    %3168 = vmatpush1.msra.mxu0 0.0
    %3169 = vmatprep.subr.mxu0 0.0
    %3170 = vmatpush1.msra.mxu0 0.0
    %3171 = vmatprep.subr.mxu0 0.0
    %3172 = vmatpush1.msra.mxu0 0.0
    %3173 = vmatprep.subr.mxu0 0.0
    %3174 = vmatpush1.msra.mxu0 0.0
    %3175 = vmatprep.subr.mxu0 0.0
    %3176 = vmatpush1.msra.mxu0 0.0
    %3177 = vmatprep.subr.mxu0 0.0
    %3178 = vmatpush1.msra.mxu0 0.0
    %3179 = vmatprep.subr.mxu0 0.0
    %3180 = vmatpush1.msra.mxu0 0.0
    %3181 = vmatprep.subr.mxu0 0.0
    %3182 = vmatpush1.msra.mxu0 0.0
    %3183 = vmatprep.subr.mxu0 0.0
    %3184 = vmatpush1.msra.mxu0 0.0
    %3185 = vmatprep.mubr.f32.mxu0 0.0
    %3186 = vmatmul.mubr.f32.gmra.mrb[0].mxu0 %v3119
    %v3187 = vpop.f32.mrb[0].mxu0
    %v3188 = vadd.f32 %v3106, %v3187
    %v3189 = vpop.f32.mrb[0].mxu0
    %v3190 = vadd.f32 %v3110, %v3189
    %3191 = vdwg.mxu0
    %3192 = vmatprep.subr.mxu0 0.0
    %3193 = vmatpush1.msra.mxu0 %v3097
    %3194 = vmatprep.subr.mxu0 0.0
    %3195 = vmatpush1.msra.mxu0 %v3100
    %3196 = vmatprep.subr.mxu0 0.0
    %3197 = vmatpush1.msra.mxu0 0.0
    %3198 = vmatprep.subr.mxu0 0.0
    %3199 = vmatpush1.msra.mxu0 0.0
    %3200 = vmatprep.subr.mxu0 0.0
    %3201 = vmatpush1.msra.mxu0 0.0
    %3202 = vmatprep.subr.mxu0 0.0
    %3203 = vmatpush1.msra.mxu0 0.0
    %3204 = vmatprep.subr.mxu0 0.0
    %3205 = vmatpush1.msra.mxu0 0.0
    %3206 = vmatprep.subr.mxu0 0.0
    %3207 = vmatpush1.msra.mxu0 0.0
    %3208 = vmatprep.subr.mxu0 0.0
    %3209 = vmatpush1.msra.mxu0 0.0
    %3210 = vmatprep.subr.mxu0 0.0
    %3211 = vmatpush1.msra.mxu0 0.0
    %3212 = vmatprep.subr.mxu0 0.0
    %3213 = vmatpush1.msra.mxu0 0.0
    %3214 = vmatprep.subr.mxu0 0.0
    %3215 = vmatpush1.msra.mxu0 0.0
    %3216 = vmatprep.subr.mxu0 0.0
    %3217 = vmatpush1.msra.mxu0 0.0
    %3218 = vmatprep.subr.mxu0 0.0
    %3219 = vmatpush1.msra.mxu0 0.0
    %3220 = vmatprep.subr.mxu0 0.0
    %3221 = vmatpush1.msra.mxu0 0.0
    %3222 = vmatprep.subr.mxu0 0.0
    %3223 = vmatpush1.msra.mxu0 0.0
    %3224 = vmatprep.subr.mxu0 0.0
    %3225 = vmatpush1.msra.mxu0 0.0
    %3226 = vmatprep.subr.mxu0 0.0
    %3227 = vmatpush1.msra.mxu0 0.0
    %3228 = vmatprep.subr.mxu0 0.0
    %3229 = vmatpush1.msra.mxu0 0.0
    %3230 = vmatprep.subr.mxu0 0.0
    %3231 = vmatpush1.msra.mxu0 0.0
    %3232 = vmatprep.subr.mxu0 0.0
    %3233 = vmatpush1.msra.mxu0 0.0
    %3234 = vmatprep.subr.mxu0 0.0
    %3235 = vmatpush1.msra.mxu0 0.0
    %3236 = vmatprep.subr.mxu0 0.0
    %3237 = vmatpush1.msra.mxu0 0.0
    %3238 = vmatprep.subr.mxu0 0.0
    %3239 = vmatpush1.msra.mxu0 0.0
    %3240 = vmatprep.subr.mxu0 0.0
    %3241 = vmatpush1.msra.mxu0 0.0
    %3242 = vmatprep.subr.mxu0 0.0
    %3243 = vmatpush1.msra.mxu0 0.0
    %3244 = vmatprep.subr.mxu0 0.0
    %3245 = vmatpush1.msra.mxu0 0.0
    %3246 = vmatprep.subr.mxu0 0.0
    %3247 = vmatpush1.msra.mxu0 0.0
    %3248 = vmatprep.subr.mxu0 0.0
    %3249 = vmatpush1.msra.mxu0 0.0
    %3250 = vmatprep.subr.mxu0 0.0
    %3251 = vmatpush1.msra.mxu0 0.0
    %3252 = vmatprep.subr.mxu0 0.0
    %3253 = vmatpush1.msra.mxu0 0.0
    %3254 = vmatprep.subr.mxu0 0.0
    %3255 = vmatpush1.msra.mxu0 0.0
    %3256 = vmatprep.mubr.f32.mxu0 0.0
    %3257 = vmatmul.mubr.f32.gmra.mrb[0].mxu0 %v3119
    %v3258 = vpop.f32.mrb[0].mxu0
    %v3259 = vadd.f32 %v3114, %v3258
    %v3260 = vpop.f32.mrb[0].mxu0
    %3261 = vdwg.mxu0
    %v3262 = vld [vmem:[%s43] sm:$0xff]
    %v3263 = vld [vmem:[%s43 + $0x8] sm:$0xff]
    %v3264 = vld [vmem:[%s43 + $0x10] sm:$0xff]
    %v3265 = vld [vmem:[%s43 + $0x18] sm:$0xff]
    %v3266 = vld [vmem:[%s43 + $0x20] sm:$0xff]
    %v3267 = vld [vmem:[%s43 + $0x28] sm:$0xff]
    %v3268 = vld [vmem:[%s43 + $0x30] sm:$0xff]
    %v3269 = vld [vmem:[%s43 + $0x38] sm:$0xff]
    %v3270 = vld [vmem:[%s43 + $0x40] sm:$0xff]
    %v3271 = vld [vmem:[%s43 + $0x48] sm:$0xff]
    %v3272 = vld [vmem:[%s43 + $0x50] sm:$0xff]
    %v3273 = vld [vmem:[%s43 + $0x58] sm:$0xff]
    %v3274 = vld [vmem:[%s43 + $0x60] sm:$0xff]
    %v3275 = vld [vmem:[%s43 + $0x68] sm:$0xff]
    %v3276 = vld [vmem:[%s43 + $0x70] sm:$0xff]
    %v3277 = vld [vmem:[%s43 + $0x78] sm:$0xff]
    %v3278 = vld [vmem:[%s45] sm:$0x1]
    %v3280 = vlaneseq
    %v3281 = vshrl.u32 %v3280, 7
    %v3282 = vsub.s32 0, %v3281
    %v3283 = vrot.slane %v3278, %v3282
    %v3285 = vld [vmem:[%s39] sm:$0xff]
    %v3286 = vld [vmem:[%s39 + $0x8] sm:$0xff]
    %v3287 = vld [vmem:[%s41] sm:$0x1]
    %v3289 = vlaneseq
    %v3290 = vshrl.u32 %v3289, 7
    %v3291 = vsub.s32 0, %v3290
    %v3292 = vrot.slane %v3287, %v3291
    %3294 = vmatprep.subr.mxu0 0.0
    %3295 = vmatpush1.msra.mxu0 %v3285
    %3296 = vmatprep.subr.mxu0 0.0
    %3297 = vmatpush1.msra.mxu0 %v3286
    %3298 = vmatprep.subr.mxu0 0.0
    %3299 = vmatpush1.msra.mxu0 0.0
    %3300 = vmatprep.subr.mxu0 0.0
    %3301 = vmatpush1.msra.mxu0 0.0
    %3302 = vmatprep.subr.mxu0 0.0
    %3303 = vmatpush1.msra.mxu0 0.0
    %3304 = vmatprep.subr.mxu0 0.0
    %3305 = vmatpush1.msra.mxu0 0.0
    %3306 = vmatprep.subr.mxu0 0.0
    %3307 = vmatpush1.msra.mxu0 0.0
    %3308 = vmatprep.subr.mxu0 0.0
    %3309 = vmatpush1.msra.mxu0 0.0
    %3310 = vmatprep.subr.mxu0 0.0
    %3311 = vmatpush1.msra.mxu0 0.0
    %3312 = vmatprep.subr.mxu0 0.0
    %3313 = vmatpush1.msra.mxu0 0.0
    %3314 = vmatprep.subr.mxu0 0.0
    %3315 = vmatpush1.msra.mxu0 0.0
    %3316 = vmatprep.subr.mxu0 0.0
    %3317 = vmatpush1.msra.mxu0 0.0
    %3318 = vmatprep.subr.mxu0 0.0
    %3319 = vmatpush1.msra.mxu0 0.0
    %3320 = vmatprep.subr.mxu0 0.0
    %3321 = vmatpush1.msra.mxu0 0.0
    %3322 = vmatprep.subr.mxu0 0.0
    %3323 = vmatpush1.msra.mxu0 0.0
    %3324 = vmatprep.subr.mxu0 0.0
    %3325 = vmatpush1.msra.mxu0 0.0
    %3326 = vmatprep.subr.mxu0 0.0
    %3327 = vmatpush1.msra.mxu0 0.0
    %3328 = vmatprep.subr.mxu0 0.0
    %3329 = vmatpush1.msra.mxu0 0.0
    %3330 = vmatprep.subr.mxu0 0.0
    %3331 = vmatpush1.msra.mxu0 0.0
    %3332 = vmatprep.subr.mxu0 0.0
    %3333 = vmatpush1.msra.mxu0 0.0
    %3334 = vmatprep.subr.mxu0 0.0
    %3335 = vmatpush1.msra.mxu0 0.0
    %3336 = vmatprep.subr.mxu0 0.0
    %3337 = vmatpush1.msra.mxu0 0.0
    %3338 = vmatprep.subr.mxu0 0.0
    %3339 = vmatpush1.msra.mxu0 0.0
    %3340 = vmatprep.subr.mxu0 0.0
    %3341 = vmatpush1.msra.mxu0 0.0
    %3342 = vmatprep.subr.mxu0 0.0
    %3343 = vmatpush1.msra.mxu0 0.0
    %3344 = vmatprep.subr.mxu0 0.0
    %3345 = vmatpush1.msra.mxu0 0.0
    %3346 = vmatprep.subr.mxu0 0.0
    %3347 = vmatpush1.msra.mxu0 0.0
    %3348 = vmatprep.subr.mxu0 0.0
    %3349 = vmatpush1.msra.mxu0 0.0
    %3350 = vmatprep.subr.mxu0 0.0
    %3351 = vmatpush1.msra.mxu0 0.0
    %3352 = vmatprep.subr.mxu0 0.0
    %3353 = vmatpush1.msra.mxu0 0.0
    %3354 = vmatprep.subr.mxu0 0.0
    %3355 = vmatpush1.msra.mxu0 0.0
    %3356 = vmatprep.subr.mxu0 0.0
    %3357 = vmatpush1.msra.mxu0 0.0
    %3358 = vmatprep.mubr.f32.mxu0 0.0
    %3359 = vmatmul.mubr.f32.gmra.mrb[0].mxu0 %v3119
    %v3360 = vpop.f32.mrb[0].mxu0
    %v3361 = vadd.f32 %v3292, %v3360
    %v3362 = vpop.f32.mrb[0].mxu0
    %3363 = vdwg.mxu0
    %v3364 = vtanh.pop %v3361
    %v3365 = vld [vmem:[%s1] sm:$0x3]
    %v3367 = vsel %vm241, %v3365, 0
    %3369 = vmatprep.subr.mxu0 %v3025
    %3370 = vmatpush1.msra.mxu0 %v3024
    %3371 = vmatprep.subr.mxu0 %v3028
    %3372 = vmatpush1.msra.mxu0 %v3027
    %3373 = vmatprep.subr.mxu0 0.0
    %3374 = vmatpush1.msra.mxu0 0.0
    %3375 = vmatprep.subr.mxu0 0.0
    %3376 = vmatpush1.msra.mxu0 0.0
    %3377 = vmatprep.subr.mxu0 0.0
    %3378 = vmatpush1.msra.mxu0 0.0
    %3379 = vmatprep.subr.mxu0 0.0
    %3380 = vmatpush1.msra.mxu0 0.0
    %3381 = vmatprep.subr.mxu0 0.0
    %3382 = vmatpush1.msra.mxu0 0.0
    %3383 = vmatprep.subr.mxu0 0.0
    %3384 = vmatpush1.msra.mxu0 0.0
    %3385 = vmatprep.subr.mxu0 0.0
    %3386 = vmatpush1.msra.mxu0 0.0
    %3387 = vmatprep.subr.mxu0 0.0
    %3388 = vmatpush1.msra.mxu0 0.0
    %3389 = vmatprep.subr.mxu0 0.0
    %3390 = vmatpush1.msra.mxu0 0.0
    %3391 = vmatprep.subr.mxu0 0.0
    %3392 = vmatpush1.msra.mxu0 0.0
    %3393 = vmatprep.subr.mxu0 0.0
    %3394 = vmatpush1.msra.mxu0 0.0
    %3395 = vmatprep.subr.mxu0 0.0
    %3396 = vmatpush1.msra.mxu0 0.0
    %3397 = vmatprep.subr.mxu0 0.0
    %3398 = vmatpush1.msra.mxu0 0.0
    %3399 = vmatprep.subr.mxu0 0.0
    %3400 = vmatpush1.msra.mxu0 0.0
    %3401 = vmatprep.subr.mxu0 0.0
    %3402 = vmatpush1.msra.mxu0 0.0
    %3403 = vmatprep.subr.mxu0 0.0
    %3404 = vmatpush1.msra.mxu0 0.0
    %3405 = vmatprep.subr.mxu0 0.0
    %3406 = vmatpush1.msra.mxu0 0.0
    %3407 = vmatprep.subr.mxu0 0.0
    %3408 = vmatpush1.msra.mxu0 0.0
    %3409 = vmatprep.subr.mxu0 0.0
    %3410 = vmatpush1.msra.mxu0 0.0
    %3411 = vmatprep.subr.mxu0 0.0
    %3412 = vmatpush1.msra.mxu0 0.0
    %3413 = vmatprep.subr.mxu0 0.0
    %3414 = vmatpush1.msra.mxu0 0.0
    %3415 = vmatprep.subr.mxu0 0.0
    %3416 = vmatpush1.msra.mxu0 0.0
    %3417 = vmatprep.subr.mxu0 0.0
    %3418 = vmatpush1.msra.mxu0 0.0
    %3419 = vmatprep.subr.mxu0 0.0
    %3420 = vmatpush1.msra.mxu0 0.0
    %3421 = vmatprep.subr.mxu0 0.0
    %3422 = vmatpush1.msra.mxu0 0.0
    %3423 = vmatprep.subr.mxu0 0.0
    %3424 = vmatpush1.msra.mxu0 0.0
    %3425 = vmatprep.subr.mxu0 0.0
    %3426 = vmatpush1.msra.mxu0 0.0
    %3427 = vmatprep.subr.mxu0 0.0
    %3428 = vmatpush1.msra.mxu0 0.0
    %3429 = vmatprep.subr.mxu0 0.0
    %3430 = vmatpush1.msra.mxu0 0.0
    %3431 = vmatprep.subr.mxu0 0.0
    %3432 = vmatpush1.msra.mxu0 0.0
    %3433 = vmatprep.mubr.f32.mxu0 0.0
    %3434 = vmatmul.mubr.f32.gmra.mrb[0].mxu0 %v3367
    %v3435 = vpop.f32.mrb[0].mxu0
    %v3436 = vadd.f32 %v3188, %v3435
    %v3437 = vpop.f32.mrb[0].mxu0
    %v3438 = vadd.f32 %v3190, %v3437
    %3439 = vdwg.mxu0
    %3440 = vmatprep.subr.mxu0 0.0
    %3441 = vmatpush1.msra.mxu0 %v3026
    %3442 = vmatprep.subr.mxu0 0.0
    %3443 = vmatpush1.msra.mxu0 %v3029
    %3444 = vmatprep.subr.mxu0 0.0
    %3445 = vmatpush1.msra.mxu0 0.0
    %3446 = vmatprep.subr.mxu0 0.0
    %3447 = vmatpush1.msra.mxu0 0.0
    %3448 = vmatprep.subr.mxu0 0.0
    %3449 = vmatpush1.msra.mxu0 0.0
    %3450 = vmatprep.subr.mxu0 0.0
    %3451 = vmatpush1.msra.mxu0 0.0
    %3452 = vmatprep.subr.mxu0 0.0
    %3453 = vmatpush1.msra.mxu0 0.0
    %3454 = vmatprep.subr.mxu0 0.0
    %3455 = vmatpush1.msra.mxu0 0.0
    %3456 = vmatprep.subr.mxu0 0.0
    %3457 = vmatpush1.msra.mxu0 0.0
    %3458 = vmatprep.subr.mxu0 0.0
    %3459 = vmatpush1.msra.mxu0 0.0
    %3460 = vmatprep.subr.mxu0 0.0
    %3461 = vmatpush1.msra.mxu0 0.0
    %3462 = vmatprep.subr.mxu0 0.0
    %3463 = vmatpush1.msra.mxu0 0.0
    %3464 = vmatprep.subr.mxu0 0.0
    %3465 = vmatpush1.msra.mxu0 0.0
    %3466 = vmatprep.subr.mxu0 0.0
    %3467 = vmatpush1.msra.mxu0 0.0
    %3468 = vmatprep.subr.mxu0 0.0
    %3469 = vmatpush1.msra.mxu0 0.0
    %3470 = vmatprep.subr.mxu0 0.0
    %3471 = vmatpush1.msra.mxu0 0.0
    %3472 = vmatprep.subr.mxu0 0.0
    %3473 = vmatpush1.msra.mxu0 0.0
    %3474 = vmatprep.subr.mxu0 0.0
    %3475 = vmatpush1.msra.mxu0 0.0
    %3476 = vmatprep.subr.mxu0 0.0
    %3477 = vmatpush1.msra.mxu0 0.0
    %3478 = vmatprep.subr.mxu0 0.0
    %3479 = vmatpush1.msra.mxu0 0.0
    %3480 = vmatprep.subr.mxu0 0.0
    %3481 = vmatpush1.msra.mxu0 0.0
    %3482 = vmatprep.subr.mxu0 0.0
    %3483 = vmatpush1.msra.mxu0 0.0
    %3484 = vmatprep.subr.mxu0 0.0
    %3485 = vmatpush1.msra.mxu0 0.0
    %3486 = vmatprep.subr.mxu0 0.0
    %3487 = vmatpush1.msra.mxu0 0.0
    %3488 = vmatprep.subr.mxu0 0.0
    %3489 = vmatpush1.msra.mxu0 0.0
    %3490 = vmatprep.subr.mxu0 0.0
    %3491 = vmatpush1.msra.mxu0 0.0
    %3492 = vmatprep.subr.mxu0 0.0
    %3493 = vmatpush1.msra.mxu0 0.0
    %3494 = vmatprep.subr.mxu0 0.0
    %3495 = vmatpush1.msra.mxu0 0.0
    %3496 = vmatprep.subr.mxu0 0.0
    %3497 = vmatpush1.msra.mxu0 0.0
    %3498 = vmatprep.subr.mxu0 0.0
    %3499 = vmatpush1.msra.mxu0 0.0
    %3500 = vmatprep.subr.mxu0 0.0
    %3501 = vmatpush1.msra.mxu0 0.0
    %3502 = vmatprep.subr.mxu0 0.0
    %3503 = vmatpush1.msra.mxu0 0.0
    %3504 = vmatprep.mubr.f32.mxu0 0.0
    %3505 = vmatmul.mubr.f32.gmra.mrb[0].mxu0 %v3367
    %v3506 = vpop.f32.mrb[0].mxu0
    %v3507 = vadd.f32 %v3259, %v3506
    %v3508 = vpop.f32.mrb[0].mxu0
    %3509 = vdwg.mxu0
    %3510 = vmatprep.subr.mxu0 %v3031
    %3511 = vmatpush1.msra.mxu0 %v3030
    %3512 = vmatprep.subr.mxu0 %v3034
    %3513 = vmatpush1.msra.mxu0 %v3033
    %3514 = vmatprep.subr.mxu0 %v3037
    %3515 = vmatpush1.msra.mxu0 %v3036
    %3516 = vmatprep.subr.mxu0 %v3040
    %3517 = vmatpush1.msra.mxu0 %v3039
    %3518 = vmatprep.subr.mxu0 %v3043
    %3519 = vmatpush1.msra.mxu0 %v3042
    %3520 = vmatprep.subr.mxu0 %v3046
    %3521 = vmatpush1.msra.mxu0 %v3045
    %3522 = vmatprep.subr.mxu0 %v3049
    %3523 = vmatpush1.msra.mxu0 %v3048
    %3524 = vmatprep.subr.mxu0 %v3052
    %3525 = vmatpush1.msra.mxu0 %v3051
    %3526 = vmatprep.subr.mxu0 %v3055
    %3527 = vmatpush1.msra.mxu0 %v3054
    %3528 = vmatprep.subr.mxu0 %v3058
    %3529 = vmatpush1.msra.mxu0 %v3057
    %3530 = vmatprep.subr.mxu0 %v3061
    %3531 = vmatpush1.msra.mxu0 %v3060
    %3532 = vmatprep.subr.mxu0 %v3064
    %3533 = vmatpush1.msra.mxu0 %v3063
    %3534 = vmatprep.subr.mxu0 %v3067
    %3535 = vmatpush1.msra.mxu0 %v3066
    %3536 = vmatprep.subr.mxu0 %v3070
    %3537 = vmatpush1.msra.mxu0 %v3069
    %3538 = vmatprep.subr.mxu0 %v3073
    %3539 = vmatpush1.msra.mxu0 %v3072
    %3540 = vmatprep.subr.mxu0 %v3076
    %3541 = vmatpush1.msra.mxu0 %v3075
    %3542 = vmatprep.subr.mxu0 0.0
    %3543 = vmatpush1.msra.mxu0 0.0
    %3544 = vmatprep.subr.mxu0 0.0
    %3545 = vmatpush1.msra.mxu0 0.0
    %3546 = vmatprep.subr.mxu0 0.0
    %3547 = vmatpush1.msra.mxu0 0.0
    %3548 = vmatprep.subr.mxu0 0.0
    %3549 = vmatpush1.msra.mxu0 0.0
    %3550 = vmatprep.subr.mxu0 0.0
    %3551 = vmatpush1.msra.mxu0 0.0
    %3552 = vmatprep.subr.mxu0 0.0
    %3553 = vmatpush1.msra.mxu0 0.0
    %3554 = vmatprep.subr.mxu0 0.0
    %3555 = vmatpush1.msra.mxu0 0.0
    %3556 = vmatprep.subr.mxu0 0.0
    %3557 = vmatpush1.msra.mxu0 0.0
    %3558 = vmatprep.subr.mxu0 0.0
    %3559 = vmatpush1.msra.mxu0 0.0
    %3560 = vmatprep.subr.mxu0 0.0
    %3561 = vmatpush1.msra.mxu0 0.0
    %3562 = vmatprep.subr.mxu0 0.0
    %3563 = vmatpush1.msra.mxu0 0.0
    %3564 = vmatprep.subr.mxu0 0.0
    %3565 = vmatpush1.msra.mxu0 0.0
    %3566 = vmatprep.subr.mxu0 0.0
    %3567 = vmatpush1.msra.mxu0 0.0
    %3568 = vmatprep.subr.mxu0 0.0
    %3569 = vmatpush1.msra.mxu0 0.0
    %3570 = vmatprep.subr.mxu0 0.0
    %3571 = vmatpush1.msra.mxu0 0.0
    %3572 = vmatprep.subr.mxu0 0.0
    %3573 = vmatpush1.msra.mxu0 0.0
    %3574 = vmatprep.mubr.f32.mxu0 0.0
    %3575 = vmatmul.mubr.f32.gmra.mrb[0].mxu0 %v3364
    %v3576 = vpop.f32.mrb[0].mxu0
    %v3577 = vadd.f32 %v3083, %v3576
    %v3578 = vpop.f32.mrb[0].mxu0
    %v3579 = vadd.f32 %v3087, %v3578
    %3580 = vdwg.mxu0
    %3581 = vmatprep.subr.mxu0 0.0
    %3582 = vmatpush1.msra.mxu0 %v3032
    %3583 = vmatprep.subr.mxu0 0.0
    %3584 = vmatpush1.msra.mxu0 %v3035
    %3585 = vmatprep.subr.mxu0 0.0
    %3586 = vmatpush1.msra.mxu0 %v3038
    %3587 = vmatprep.subr.mxu0 0.0
    %3588 = vmatpush1.msra.mxu0 %v3041
    %3589 = vmatprep.subr.mxu0 0.0
    %3590 = vmatpush1.msra.mxu0 %v3044
    %3591 = vmatprep.subr.mxu0 0.0
    %3592 = vmatpush1.msra.mxu0 %v3047
    %3593 = vmatprep.subr.mxu0 0.0
    %3594 = vmatpush1.msra.mxu0 %v3050
    %3595 = vmatprep.subr.mxu0 0.0
    %3596 = vmatpush1.msra.mxu0 %v3053
    %3597 = vmatprep.subr.mxu0 0.0
    %3598 = vmatpush1.msra.mxu0 %v3056
    %3599 = vmatprep.subr.mxu0 0.0
    %3600 = vmatpush1.msra.mxu0 %v3059
    %3601 = vmatprep.subr.mxu0 0.0
    %3602 = vmatpush1.msra.mxu0 %v3062
    %3603 = vmatprep.subr.mxu0 0.0
    %3604 = vmatpush1.msra.mxu0 %v3065
    %3605 = vmatprep.subr.mxu0 0.0
    %3606 = vmatpush1.msra.mxu0 %v3068
    %3607 = vmatprep.subr.mxu0 0.0
    %3608 = vmatpush1.msra.mxu0 %v3071
    %3609 = vmatprep.subr.mxu0 0.0
    %3610 = vmatpush1.msra.mxu0 %v3074
    %3611 = vmatprep.subr.mxu0 0.0
    %3612 = vmatpush1.msra.mxu0 %v3077
    %3613 = vmatprep.subr.mxu0 0.0
    %3614 = vmatpush1.msra.mxu0 0.0
    %3615 = vmatprep.subr.mxu0 0.0
    %3616 = vmatpush1.msra.mxu0 0.0
    %3617 = vmatprep.subr.mxu0 0.0
    %3618 = vmatpush1.msra.mxu0 0.0
    %3619 = vmatprep.subr.mxu0 0.0
    %3620 = vmatpush1.msra.mxu0 0.0
    %3621 = vmatprep.subr.mxu0 0.0
    %3622 = vmatpush1.msra.mxu0 0.0
    %3623 = vmatprep.subr.mxu0 0.0
    %3624 = vmatpush1.msra.mxu0 0.0
    %3625 = vmatprep.subr.mxu0 0.0
    %3626 = vmatpush1.msra.mxu0 0.0
    %3627 = vmatprep.subr.mxu0 0.0
    %3628 = vmatpush1.msra.mxu0 0.0
    %3629 = vmatprep.subr.mxu0 0.0
    %3630 = vmatpush1.msra.mxu0 0.0
    %3631 = vmatprep.subr.mxu0 0.0
    %3632 = vmatpush1.msra.mxu0 0.0
    %3633 = vmatprep.subr.mxu0 0.0
    %3634 = vmatpush1.msra.mxu0 0.0
    %3635 = vmatprep.subr.mxu0 0.0
    %3636 = vmatpush1.msra.mxu0 0.0
    %3637 = vmatprep.subr.mxu0 0.0
    %3638 = vmatpush1.msra.mxu0 0.0
    %3639 = vmatprep.subr.mxu0 0.0
    %3640 = vmatpush1.msra.mxu0 0.0
    %3641 = vmatprep.subr.mxu0 0.0
    %3642 = vmatpush1.msra.mxu0 0.0
    %3643 = vmatprep.subr.mxu0 0.0
    %3644 = vmatpush1.msra.mxu0 0.0
    %3645 = vmatprep.mubr.f32.mxu0 0.0
    %3646 = vmatmul.mubr.f32.gmra.mrb[0].mxu0 %v3364
    %v3647 = vpop.f32.mrb[0].mxu0
    %v3648 = vadd.f32 %v3091, %v3647
    %v3649 = vpop.f32.mrb[0].mxu0
    %3650 = vdwg.mxu0
    %v3651 = vadd.f32 %v3436, %v3577
    %v3652 = vxor.u32 %v3651, 2147483648
    %v3653 = vmul.f32 %v3652, 1.442695
    %v3654 = vpow.pop %v3653
    %v3655 = vadd.f32 %v3654, 1.0
    %v3656 = vrcp.pop %v3655
    %v3657 = vmul.f32 1.0, %v3656
    %v3658 = vadd.f32 %v3438, %v3579
    %v3659 = vxor.u32 %v3658, 2147483648
    %v3660 = vmul.f32 %v3659, 1.442695
    %v3661 = vpow.pop %v3660
    %v3662 = vadd.f32 %v3661, 1.0
    %v3663 = vrcp.pop %v3662
    %v3664 = vmul.f32 1.0, %v3663
    %v3665 = vmul.f32 %v3657, %v3648
    %v3666 = vadd.f32 %v3507, %v3665
    %v3667 = vtanh.pop %v3666
    %v3668 = vsub.f32 1.0, %v3664
    %v3669 = vmul.f32 %v3668, %v3667
    %v3670 = vmul.f32 %v3664, %v3364
    %v3671 = vadd.f32 %v3669, %v3670
    %3672 = vmatprep.subr.mxu0 0.0
    %3673 = vmatpush1.msra.mxu0 %v3262
    %3674 = vmatprep.subr.mxu0 0.0
    %3675 = vmatpush1.msra.mxu0 %v3263
    %3676 = vmatprep.subr.mxu0 0.0
    %3677 = vmatpush1.msra.mxu0 %v3264
    %3678 = vmatprep.subr.mxu0 0.0
    %3679 = vmatpush1.msra.mxu0 %v3265
    %3680 = vmatprep.subr.mxu0 0.0
    %3681 = vmatpush1.msra.mxu0 %v3266
    %3682 = vmatprep.subr.mxu0 0.0
    %3683 = vmatpush1.msra.mxu0 %v3267
    %3684 = vmatprep.subr.mxu0 0.0
    %3685 = vmatpush1.msra.mxu0 %v3268
    %3686 = vmatprep.subr.mxu0 0.0
    %3687 = vmatpush1.msra.mxu0 %v3269
    %3688 = vmatprep.subr.mxu0 0.0
    %3689 = vmatpush1.msra.mxu0 %v3270
    %3690 = vmatprep.subr.mxu0 0.0
    %3691 = vmatpush1.msra.mxu0 %v3271
    %3692 = vmatprep.subr.mxu0 0.0
    %3693 = vmatpush1.msra.mxu0 %v3272
    %3694 = vmatprep.subr.mxu0 0.0
    %3695 = vmatpush1.msra.mxu0 %v3273
    %3696 = vmatprep.subr.mxu0 0.0
    %3697 = vmatpush1.msra.mxu0 %v3274
    %3698 = vmatprep.subr.mxu0 0.0
    %3699 = vmatpush1.msra.mxu0 %v3275
    %3700 = vmatprep.subr.mxu0 0.0
    %3701 = vmatpush1.msra.mxu0 %v3276
    %3702 = vmatprep.subr.mxu0 0.0
    %3703 = vmatpush1.msra.mxu0 %v3277
    %3704 = vmatprep.subr.mxu0 0.0
    %3705 = vmatpush1.msra.mxu0 0.0
    %3706 = vmatprep.subr.mxu0 0.0
    %3707 = vmatpush1.msra.mxu0 0.0
    %3708 = vmatprep.subr.mxu0 0.0
    %3709 = vmatpush1.msra.mxu0 0.0
    %3710 = vmatprep.subr.mxu0 0.0
    %3711 = vmatpush1.msra.mxu0 0.0
    %3712 = vmatprep.subr.mxu0 0.0
    %3713 = vmatpush1.msra.mxu0 0.0
    %3714 = vmatprep.subr.mxu0 0.0
    %3715 = vmatpush1.msra.mxu0 0.0
    %3716 = vmatprep.subr.mxu0 0.0
    %3717 = vmatpush1.msra.mxu0 0.0
    %3718 = vmatprep.subr.mxu0 0.0
    %3719 = vmatpush1.msra.mxu0 0.0
    %3720 = vmatprep.subr.mxu0 0.0
    %3721 = vmatpush1.msra.mxu0 0.0
    %3722 = vmatprep.subr.mxu0 0.0
    %3723 = vmatpush1.msra.mxu0 0.0
    %3724 = vmatprep.subr.mxu0 0.0
    %3725 = vmatpush1.msra.mxu0 0.0
    %3726 = vmatprep.subr.mxu0 0.0
    %3727 = vmatpush1.msra.mxu0 0.0
    %3728 = vmatprep.subr.mxu0 0.0
    %3729 = vmatpush1.msra.mxu0 0.0
    %3730 = vmatprep.subr.mxu0 0.0
    %3731 = vmatpush1.msra.mxu0 0.0
    %3732 = vmatprep.subr.mxu0 0.0
    %3733 = vmatpush1.msra.mxu0 0.0
    %3734 = vmatprep.subr.mxu0 0.0
    %3735 = vmatpush1.msra.mxu0 0.0
    %3736 = vmatprep.mubr.f32.mxu0 0.0
    %3737 = vmatmul.mubr.f32.gmra.mrb[0].mxu0 %v3671
    %v3738 = vpop.f32.mrb[0].mxu0
    %v3739 = vadd.f32 %v3283, %v3738
    %v3740 = vpop.f32.mrb[0].mxu0
    %3741 = vdwg.mxu0
    %v3744 = vunpack.c.l.s4 1966171168
    %v3745 = vunpack.c.0.s8 %v3744
    %v3746 = vlaneseq
    %v3747 = vshrl.u32 %v3746, 7
    %v3748 = vsub.s32 %v3745, %v3747
    %v3749 = vrot.slane %v3739, %v3748
    %v3750 = vcombine.high %v3749, %v3749
    %v3752 = vunpack.c.l.s4 1966171168
    %v3753 = vunpack.c.0.s8 %v3752
    %v3754 = vlaneseq
    %v3755 = vshrl.u32 %v3754, 7
    %v3756 = vsub.s32 %v3753, %v3755
    %v3757 = vrot.slane %v3749, %v3756
    %v3759 = vunpack.c.l.s4 1966171168
    %v3760 = vunpack.c.0.s8 %v3759
    %v3761 = vlaneseq
    %v3762 = vshrl.u32 %v3761, 7
    %v3763 = vsub.s32 %v3760, %v3762
    %v3764 = vrot.slane %v3750, %v3763
    %3767 = vst [vmem:[%s71] sm:$0x1] %v3757
    %3768 = vst [vmem:[%s71 + $0x8] sm:$0x1] %v3764
    %v3769 = vld [vmem:[%s563] sm:$0x3]
    %v3771 = vsel %vm241, %v3769, 0
    %3773 = vmatprep.subr.mxu0 %v3025
    %3774 = vmatpush1.msra.mxu0 %v3024
    %3775 = vmatprep.subr.mxu0 %v3028
    %3776 = vmatpush1.msra.mxu0 %v3027
    %3777 = vmatprep.subr.mxu0 0.0
    %3778 = vmatpush1.msra.mxu0 0.0
    %3779 = vmatprep.subr.mxu0 0.0
    %3780 = vmatpush1.msra.mxu0 0.0
    %3781 = vmatprep.subr.mxu0 0.0
    %3782 = vmatpush1.msra.mxu0 0.0
    %3783 = vmatprep.subr.mxu0 0.0
    %3784 = vmatpush1.msra.mxu0 0.0
    %3785 = vmatprep.subr.mxu0 0.0
    %3786 = vmatpush1.msra.mxu0 0.0
    %3787 = vmatprep.subr.mxu0 0.0
    %3788 = vmatpush1.msra.mxu0 0.0
    %3789 = vmatprep.subr.mxu0 0.0
    %3790 = vmatpush1.msra.mxu0 0.0
    %3791 = vmatprep.subr.mxu0 0.0
    %3792 = vmatpush1.msra.mxu0 0.0
    %3793 = vmatprep.subr.mxu0 0.0
    %3794 = vmatpush1.msra.mxu0 0.0
    %3795 = vmatprep.subr.mxu0 0.0
    %3796 = vmatpush1.msra.mxu0 0.0
    %3797 = vmatprep.subr.mxu0 0.0
    %3798 = vmatpush1.msra.mxu0 0.0
    %3799 = vmatprep.subr.mxu0 0.0
    %3800 = vmatpush1.msra.mxu0 0.0
    %3801 = vmatprep.subr.mxu0 0.0
    %3802 = vmatpush1.msra.mxu0 0.0
    %3803 = vmatprep.subr.mxu0 0.0
    %3804 = vmatpush1.msra.mxu0 0.0
    %3805 = vmatprep.subr.mxu0 0.0
    %3806 = vmatpush1.msra.mxu0 0.0
    %3807 = vmatprep.subr.mxu0 0.0
    %3808 = vmatpush1.msra.mxu0 0.0
    %3809 = vmatprep.subr.mxu0 0.0
    %3810 = vmatpush1.msra.mxu0 0.0
    %3811 = vmatprep.subr.mxu0 0.0
    %3812 = vmatpush1.msra.mxu0 0.0
    %3813 = vmatprep.subr.mxu0 0.0
    %3814 = vmatpush1.msra.mxu0 0.0
    %3815 = vmatprep.subr.mxu0 0.0
    %3816 = vmatpush1.msra.mxu0 0.0
    %3817 = vmatprep.subr.mxu0 0.0
    %3818 = vmatpush1.msra.mxu0 0.0
    %3819 = vmatprep.subr.mxu0 0.0
    %3820 = vmatpush1.msra.mxu0 0.0
    %3821 = vmatprep.subr.mxu0 0.0
    %3822 = vmatpush1.msra.mxu0 0.0
    %3823 = vmatprep.subr.mxu0 0.0
    %3824 = vmatpush1.msra.mxu0 0.0
    %3825 = vmatprep.subr.mxu0 0.0
    %3826 = vmatpush1.msra.mxu0 0.0
    %3827 = vmatprep.subr.mxu0 0.0
    %3828 = vmatpush1.msra.mxu0 0.0
    %3829 = vmatprep.subr.mxu0 0.0
    %3830 = vmatpush1.msra.mxu0 0.0
    %3831 = vmatprep.subr.mxu0 0.0
    %3832 = vmatpush1.msra.mxu0 0.0
    %3833 = vmatprep.subr.mxu0 0.0
    %3834 = vmatpush1.msra.mxu0 0.0
    %3835 = vmatprep.subr.mxu0 0.0
    %3836 = vmatpush1.msra.mxu0 0.0
    %3837 = vmatprep.mubr.f32.mxu0 0.0
    %3838 = vmatmul.mubr.f32.gmra.mrb[0].mxu0 %v3771
    %v3839 = vpop.f32.mrb[0].mxu0
    %v3840 = vadd.f32 %v3188, %v3839
    %v3841 = vpop.f32.mrb[0].mxu0
    %v3842 = vadd.f32 %v3190, %v3841
    %3843 = vdwg.mxu0
    %3844 = vmatprep.subr.mxu0 0.0
    %3845 = vmatpush1.msra.mxu0 %v3026
    %3846 = vmatprep.subr.mxu0 0.0
    %3847 = vmatpush1.msra.mxu0 %v3029
    %3848 = vmatprep.subr.mxu0 0.0
    %3849 = vmatpush1.msra.mxu0 0.0
    %3850 = vmatprep.subr.mxu0 0.0
    %3851 = vmatpush1.msra.mxu0 0.0
    %3852 = vmatprep.subr.mxu0 0.0
    %3853 = vmatpush1.msra.mxu0 0.0
    %3854 = vmatprep.subr.mxu0 0.0
    %3855 = vmatpush1.msra.mxu0 0.0
    %3856 = vmatprep.subr.mxu0 0.0
    %3857 = vmatpush1.msra.mxu0 0.0
    %3858 = vmatprep.subr.mxu0 0.0
    %3859 = vmatpush1.msra.mxu0 0.0
    %3860 = vmatprep.subr.mxu0 0.0
    %3861 = vmatpush1.msra.mxu0 0.0
    %3862 = vmatprep.subr.mxu0 0.0
    %3863 = vmatpush1.msra.mxu0 0.0
    %3864 = vmatprep.subr.mxu0 0.0
    %3865 = vmatpush1.msra.mxu0 0.0
    %3866 = vmatprep.subr.mxu0 0.0
    %3867 = vmatpush1.msra.mxu0 0.0
    %3868 = vmatprep.subr.mxu0 0.0
    %3869 = vmatpush1.msra.mxu0 0.0
    %3870 = vmatprep.subr.mxu0 0.0
    %3871 = vmatpush1.msra.mxu0 0.0
    %3872 = vmatprep.subr.mxu0 0.0
    %3873 = vmatpush1.msra.mxu0 0.0
    %3874 = vmatprep.subr.mxu0 0.0
    %3875 = vmatpush1.msra.mxu0 0.0
    %3876 = vmatprep.subr.mxu0 0.0
    %3877 = vmatpush1.msra.mxu0 0.0
    %3878 = vmatprep.subr.mxu0 0.0
    %3879 = vmatpush1.msra.mxu0 0.0
    %3880 = vmatprep.subr.mxu0 0.0
    %3881 = vmatpush1.msra.mxu0 0.0
    %3882 = vmatprep.subr.mxu0 0.0
    %3883 = vmatpush1.msra.mxu0 0.0
    %3884 = vmatprep.subr.mxu0 0.0
    %3885 = vmatpush1.msra.mxu0 0.0
    %3886 = vmatprep.subr.mxu0 0.0
    %3887 = vmatpush1.msra.mxu0 0.0
    %3888 = vmatprep.subr.mxu0 0.0
    %3889 = vmatpush1.msra.mxu0 0.0
    %3890 = vmatprep.subr.mxu0 0.0
    %3891 = vmatpush1.msra.mxu0 0.0
    %3892 = vmatprep.subr.mxu0 0.0
    %3893 = vmatpush1.msra.mxu0 0.0
    %3894 = vmatprep.subr.mxu0 0.0
    %3895 = vmatpush1.msra.mxu0 0.0
    %3896 = vmatprep.subr.mxu0 0.0
    %3897 = vmatpush1.msra.mxu0 0.0
    %3898 = vmatprep.subr.mxu0 0.0
    %3899 = vmatpush1.msra.mxu0 0.0
    %3900 = vmatprep.subr.mxu0 0.0
    %3901 = vmatpush1.msra.mxu0 0.0
    %3902 = vmatprep.subr.mxu0 0.0
    %3903 = vmatpush1.msra.mxu0 0.0
    %3904 = vmatprep.subr.mxu0 0.0
    %3905 = vmatpush1.msra.mxu0 0.0
    %3906 = vmatprep.subr.mxu0 0.0
    %3907 = vmatpush1.msra.mxu0 0.0
    %3908 = vmatprep.mubr.f32.mxu0 0.0
    %3909 = vmatmul.mubr.f32.gmra.mrb[0].mxu0 %v3771
    %v3910 = vpop.f32.mrb[0].mxu0
    %v3911 = vadd.f32 %v3259, %v3910
    %v3912 = vpop.f32.mrb[0].mxu0
    %3913 = vdwg.mxu0
    %3914 = vmatprep.subr.mxu0 %v3031
    %3915 = vmatpush1.msra.mxu0 %v3030
    %3916 = vmatprep.subr.mxu0 %v3034
    %3917 = vmatpush1.msra.mxu0 %v3033
    %3918 = vmatprep.subr.mxu0 %v3037
    %3919 = vmatpush1.msra.mxu0 %v3036
    %3920 = vmatprep.subr.mxu0 %v3040
    %3921 = vmatpush1.msra.mxu0 %v3039
    %3922 = vmatprep.subr.mxu0 %v3043
    %3923 = vmatpush1.msra.mxu0 %v3042
    %3924 = vmatprep.subr.mxu0 %v3046
    %3925 = vmatpush1.msra.mxu0 %v3045
    %3926 = vmatprep.subr.mxu0 %v3049
    %3927 = vmatpush1.msra.mxu0 %v3048
    %3928 = vmatprep.subr.mxu0 %v3052
    %3929 = vmatpush1.msra.mxu0 %v3051
    %3930 = vmatprep.subr.mxu0 %v3055
    %3931 = vmatpush1.msra.mxu0 %v3054
    %3932 = vmatprep.subr.mxu0 %v3058
    %3933 = vmatpush1.msra.mxu0 %v3057
    %3934 = vmatprep.subr.mxu0 %v3061
    %3935 = vmatpush1.msra.mxu0 %v3060
    %3936 = vmatprep.subr.mxu0 %v3064
    %3937 = vmatpush1.msra.mxu0 %v3063
    %3938 = vmatprep.subr.mxu0 %v3067
    %3939 = vmatpush1.msra.mxu0 %v3066
    %3940 = vmatprep.subr.mxu0 %v3070
    %3941 = vmatpush1.msra.mxu0 %v3069
    %3942 = vmatprep.subr.mxu0 %v3073
    %3943 = vmatpush1.msra.mxu0 %v3072
    %3944 = vmatprep.subr.mxu0 %v3076
    %3945 = vmatpush1.msra.mxu0 %v3075
    %3946 = vmatprep.subr.mxu0 0.0
    %3947 = vmatpush1.msra.mxu0 0.0
    %3948 = vmatprep.subr.mxu0 0.0
    %3949 = vmatpush1.msra.mxu0 0.0
    %3950 = vmatprep.subr.mxu0 0.0
    %3951 = vmatpush1.msra.mxu0 0.0
    %3952 = vmatprep.subr.mxu0 0.0
    %3953 = vmatpush1.msra.mxu0 0.0
    %3954 = vmatprep.subr.mxu0 0.0
    %3955 = vmatpush1.msra.mxu0 0.0
    %3956 = vmatprep.subr.mxu0 0.0
    %3957 = vmatpush1.msra.mxu0 0.0
    %3958 = vmatprep.subr.mxu0 0.0
    %3959 = vmatpush1.msra.mxu0 0.0
    %3960 = vmatprep.subr.mxu0 0.0
    %3961 = vmatpush1.msra.mxu0 0.0
    %3962 = vmatprep.subr.mxu0 0.0
    %3963 = vmatpush1.msra.mxu0 0.0
    %3964 = vmatprep.subr.mxu0 0.0
    %3965 = vmatpush1.msra.mxu0 0.0
    %3966 = vmatprep.subr.mxu0 0.0
    %3967 = vmatpush1.msra.mxu0 0.0
    %3968 = vmatprep.subr.mxu0 0.0
    %3969 = vmatpush1.msra.mxu0 0.0
    %3970 = vmatprep.subr.mxu0 0.0
    %3971 = vmatpush1.msra.mxu0 0.0
    %3972 = vmatprep.subr.mxu0 0.0
    %3973 = vmatpush1.msra.mxu0 0.0
    %3974 = vmatprep.subr.mxu0 0.0
    %3975 = vmatpush1.msra.mxu0 0.0
    %3976 = vmatprep.subr.mxu0 0.0
    %3977 = vmatpush1.msra.mxu0 0.0
    %3978 = vmatprep.mubr.f32.mxu0 0.0
    %3979 = vmatmul.mubr.f32.gmra.mrb[0].mxu0 %v3671
    %v3980 = vpop.f32.mrb[0].mxu0
    %v3981 = vadd.f32 %v3083, %v3980
    %v3982 = vpop.f32.mrb[0].mxu0
    %v3983 = vadd.f32 %v3087, %v3982
    %3984 = vdwg.mxu0
    %3985 = vmatprep.subr.mxu0 0.0
    %3986 = vmatpush1.msra.mxu0 %v3032
    %3987 = vmatprep.subr.mxu0 0.0
    %3988 = vmatpush1.msra.mxu0 %v3035
    %3989 = vmatprep.subr.mxu0 0.0
    %3990 = vmatpush1.msra.mxu0 %v3038
    %3991 = vmatprep.subr.mxu0 0.0
    %3992 = vmatpush1.msra.mxu0 %v3041
    %3993 = vmatprep.subr.mxu0 0.0
    %3994 = vmatpush1.msra.mxu0 %v3044
    %3995 = vmatprep.subr.mxu0 0.0
    %3996 = vmatpush1.msra.mxu0 %v3047
    %3997 = vmatprep.subr.mxu0 0.0
    %3998 = vmatpush1.msra.mxu0 %v3050
    %3999 = vmatprep.subr.mxu0 0.0
    %4000 = vmatpush1.msra.mxu0 %v3053
    %4001 = vmatprep.subr.mxu0 0.0
    %4002 = vmatpush1.msra.mxu0 %v3056
    %4003 = vmatprep.subr.mxu0 0.0
    %4004 = vmatpush1.msra.mxu0 %v3059
    %4005 = vmatprep.subr.mxu0 0.0
    %4006 = vmatpush1.msra.mxu0 %v3062
    %4007 = vmatprep.subr.mxu0 0.0
    %4008 = vmatpush1.msra.mxu0 %v3065
    %4009 = vmatprep.subr.mxu0 0.0
    %4010 = vmatpush1.msra.mxu0 %v3068
    %4011 = vmatprep.subr.mxu0 0.0
    %4012 = vmatpush1.msra.mxu0 %v3071
    %4013 = vmatprep.subr.mxu0 0.0
    %4014 = vmatpush1.msra.mxu0 %v3074
    %4015 = vmatprep.subr.mxu0 0.0
    %4016 = vmatpush1.msra.mxu0 %v3077
    %4017 = vmatprep.subr.mxu0 0.0
    %4018 = vmatpush1.msra.mxu0 0.0
    %4019 = vmatprep.subr.mxu0 0.0
    %4020 = vmatpush1.msra.mxu0 0.0
    %4021 = vmatprep.subr.mxu0 0.0
    %4022 = vmatpush1.msra.mxu0 0.0
    %4023 = vmatprep.subr.mxu0 0.0
    %4024 = vmatpush1.msra.mxu0 0.0
    %4025 = vmatprep.subr.mxu0 0.0
    %4026 = vmatpush1.msra.mxu0 0.0
    %4027 = vmatprep.subr.mxu0 0.0
    %4028 = vmatpush1.msra.mxu0 0.0
    %4029 = vmatprep.subr.mxu0 0.0
    %4030 = vmatpush1.msra.mxu0 0.0
    %4031 = vmatprep.subr.mxu0 0.0
    %4032 = vmatpush1.msra.mxu0 0.0
    %4033 = vmatprep.subr.mxu0 0.0
    %4034 = vmatpush1.msra.mxu0 0.0
    %4035 = vmatprep.subr.mxu0 0.0
    %4036 = vmatpush1.msra.mxu0 0.0
    %4037 = vmatprep.subr.mxu0 0.0
    %4038 = vmatpush1.msra.mxu0 0.0
    %4039 = vmatprep.subr.mxu0 0.0
    %4040 = vmatpush1.msra.mxu0 0.0
    %4041 = vmatprep.subr.mxu0 0.0
    %4042 = vmatpush1.msra.mxu0 0.0
    %4043 = vmatprep.subr.mxu0 0.0
    %4044 = vmatpush1.msra.mxu0 0.0
    %4045 = vmatprep.subr.mxu0 0.0
    %4046 = vmatpush1.msra.mxu0 0.0
    %4047 = vmatprep.subr.mxu0 0.0
    %4048 = vmatpush1.msra.mxu0 0.0
    %4049 = vmatprep.mubr.f32.mxu0 0.0
    %4050 = vmatmul.mubr.f32.gmra.mrb[0].mxu0 %v3671
    %v4051 = vpop.f32.mrb[0].mxu0
    %v4052 = vadd.f32 %v3091, %v4051
    %v4053 = vpop.f32.mrb[0].mxu0
    %4054 = vdwg.mxu0
    %v4055 = vadd.f32 %v3840, %v3981
    %v4056 = vxor.u32 %v4055, 2147483648
    %v4057 = vmul.f32 %v4056, 1.442695
    %v4058 = vpow.pop %v4057
    %v4059 = vadd.f32 %v4058, 1.0
    %v4060 = vrcp.pop %v4059
    %v4061 = vmul.f32 1.0, %v4060
    %v4062 = vadd.f32 %v3842, %v3983
    %v4063 = vxor.u32 %v4062, 2147483648
    %v4064 = vmul.f32 %v4063, 1.442695
    %v4065 = vpow.pop %v4064
    %v4066 = vadd.f32 %v4065, 1.0
    %v4067 = vrcp.pop %v4066
    %v4068 = vmul.f32 1.0, %v4067
    %v4069 = vmul.f32 %v4061, %v4052
    %v4070 = vadd.f32 %v3911, %v4069
    %v4071 = vtanh.pop %v4070
    %v4072 = vsub.f32 1.0, %v4068
    %v4073 = vmul.f32 %v4072, %v4071
    %v4074 = vmul.f32 %v4068, %v3671
    %v4075 = vadd.f32 %v4073, %v4074
    %4076 = vmatprep.subr.mxu0 0.0
    %4077 = vmatpush1.msra.mxu0 %v3262
    %4078 = vmatprep.subr.mxu0 0.0
    %4079 = vmatpush1.msra.mxu0 %v3263
    %4080 = vmatprep.subr.mxu0 0.0
    %4081 = vmatpush1.msra.mxu0 %v3264
    %4082 = vmatprep.subr.mxu0 0.0
    %4083 = vmatpush1.msra.mxu0 %v3265
    %4084 = vmatprep.subr.mxu0 0.0
    %4085 = vmatpush1.msra.mxu0 %v3266
    %4086 = vmatprep.subr.mxu0 0.0
    %4087 = vmatpush1.msra.mxu0 %v3267
    %4088 = vmatprep.subr.mxu0 0.0
    %4089 = vmatpush1.msra.mxu0 %v3268
    %4090 = vmatprep.subr.mxu0 0.0
    %4091 = vmatpush1.msra.mxu0 %v3269
    %4092 = vmatprep.subr.mxu0 0.0
    %4093 = vmatpush1.msra.mxu0 %v3270
    %4094 = vmatprep.subr.mxu0 0.0
    %4095 = vmatpush1.msra.mxu0 %v3271
    %4096 = vmatprep.subr.mxu0 0.0
    %4097 = vmatpush1.msra.mxu0 %v3272
    %4098 = vmatprep.subr.mxu0 0.0
    %4099 = vmatpush1.msra.mxu0 %v3273
    %4100 = vmatprep.subr.mxu0 0.0
    %4101 = vmatpush1.msra.mxu0 %v3274
    %4102 = vmatprep.subr.mxu0 0.0
    %4103 = vmatpush1.msra.mxu0 %v3275
    %4104 = vmatprep.subr.mxu0 0.0
    %4105 = vmatpush1.msra.mxu0 %v3276
    %4106 = vmatprep.subr.mxu0 0.0
    %4107 = vmatpush1.msra.mxu0 %v3277
    %4108 = vmatprep.subr.mxu0 0.0
    %4109 = vmatpush1.msra.mxu0 0.0
    %4110 = vmatprep.subr.mxu0 0.0
    %4111 = vmatpush1.msra.mxu0 0.0
    %4112 = vmatprep.subr.mxu0 0.0
    %4113 = vmatpush1.msra.mxu0 0.0
    %4114 = vmatprep.subr.mxu0 0.0
    %4115 = vmatpush1.msra.mxu0 0.0
    %4116 = vmatprep.subr.mxu0 0.0
    %4117 = vmatpush1.msra.mxu0 0.0
    %4118 = vmatprep.subr.mxu0 0.0
    %4119 = vmatpush1.msra.mxu0 0.0
    %4120 = vmatprep.subr.mxu0 0.0
    %4121 = vmatpush1.msra.mxu0 0.0
    %4122 = vmatprep.subr.mxu0 0.0
    %4123 = vmatpush1.msra.mxu0 0.0
    %4124 = vmatprep.subr.mxu0 0.0
    %4125 = vmatpush1.msra.mxu0 0.0
    %4126 = vmatprep.subr.mxu0 0.0
    %4127 = vmatpush1.msra.mxu0 0.0
    %4128 = vmatprep.subr.mxu0 0.0
    %4129 = vmatpush1.msra.mxu0 0.0
    %4130 = vmatprep.subr.mxu0 0.0
    %4131 = vmatpush1.msra.mxu0 0.0
    %4132 = vmatprep.subr.mxu0 0.0
    %4133 = vmatpush1.msra.mxu0 0.0
    %4134 = vmatprep.subr.mxu0 0.0
    %4135 = vmatpush1.msra.mxu0 0.0
    %4136 = vmatprep.subr.mxu0 0.0
    %4137 = vmatpush1.msra.mxu0 0.0
    %4138 = vmatprep.subr.mxu0 0.0
    %4139 = vmatpush1.msra.mxu0 0.0
    %4140 = vmatprep.mubr.f32.mxu0 0.0
    %4141 = vmatmul.mubr.f32.gmra.mrb[0].mxu0 %v4075
    %v4142 = vpop.f32.mrb[0].mxu0
    %v4143 = vadd.f32 %v3283, %v4142
    %v4144 = vpop.f32.mrb[0].mxu0
    %4145 = vdwg.mxu0
    %v4148 = vunpack.c.l.s4 1966171168
    %v4149 = vunpack.c.0.s8 %v4148
    %v4150 = vlaneseq
    %v4151 = vshrl.u32 %v4150, 7
    %v4152 = vsub.s32 %v4149, %v4151
    %v4153 = vrot.slane %v4143, %v4152
    %v4154 = vcombine.high %v4153, %v4153
    %v4156 = vunpack.c.l.s4 1966171168
    %v4157 = vunpack.c.0.s8 %v4156
    %v4158 = vlaneseq
    %v4159 = vshrl.u32 %v4158, 7
    %v4160 = vsub.s32 %v4157, %v4159
    %v4161 = vrot.slane %v4153, %v4160
    %v4163 = vunpack.c.l.s4 1966171168
    %v4164 = vunpack.c.0.s8 %v4163
    %v4165 = vlaneseq
    %v4166 = vshrl.u32 %v4165, 7
    %v4167 = vsub.s32 %v4164, %v4166
    %v4168 = vrot.slane %v4154, %v4167
    %4171 = vst [vmem:[%s71 + $0x1] sm:$0x1] %v4161
    %4172 = vst [vmem:[%s71 + $0x9] sm:$0x1] %v4168
    %v4173 = vld [vmem:[%s887] sm:$0x3]
    %v4175 = vsel %vm241, %v4173, 0
    %4177 = vmatprep.subr.mxu0 %v3025
    %4178 = vmatpush1.msra.mxu0 %v3024
    %4179 = vmatprep.subr.mxu0 %v3028
    %4180 = vmatpush1.msra.mxu0 %v3027
    %4181 = vmatprep.subr.mxu0 0.0
    %4182 = vmatpush1.msra.mxu0 0.0
    %4183 = vmatprep.subr.mxu0 0.0
    %4184 = vmatpush1.msra.mxu0 0.0
    %4185 = vmatprep.subr.mxu0 0.0
    %4186 = vmatpush1.msra.mxu0 0.0
    %4187 = vmatprep.subr.mxu0 0.0
    %4188 = vmatpush1.msra.mxu0 0.0
    %4189 = vmatprep.subr.mxu0 0.0
    %4190 = vmatpush1.msra.mxu0 0.0
    %4191 = vmatprep.subr.mxu0 0.0
    %4192 = vmatpush1.msra.mxu0 0.0
    %4193 = vmatprep.subr.mxu0 0.0
    %4194 = vmatpush1.msra.mxu0 0.0
    %4195 = vmatprep.subr.mxu0 0.0
    %4196 = vmatpush1.msra.mxu0 0.0
    %4197 = vmatprep.subr.mxu0 0.0
    %4198 = vmatpush1.msra.mxu0 0.0
    %4199 = vmatprep.subr.mxu0 0.0
    %4200 = vmatpush1.msra.mxu0 0.0
    %4201 = vmatprep.subr.mxu0 0.0
    %4202 = vmatpush1.msra.mxu0 0.0
    %4203 = vmatprep.subr.mxu0 0.0
    %4204 = vmatpush1.msra.mxu0 0.0
    %4205 = vmatprep.subr.mxu0 0.0
    %4206 = vmatpush1.msra.mxu0 0.0
    %4207 = vmatprep.subr.mxu0 0.0
    %4208 = vmatpush1.msra.mxu0 0.0
    %4209 = vmatprep.subr.mxu0 0.0
    %4210 = vmatpush1.msra.mxu0 0.0
    %4211 = vmatprep.subr.mxu0 0.0
    %4212 = vmatpush1.msra.mxu0 0.0
    %4213 = vmatprep.subr.mxu0 0.0
    %4214 = vmatpush1.msra.mxu0 0.0
    %4215 = vmatprep.subr.mxu0 0.0
    %4216 = vmatpush1.msra.mxu0 0.0
    %4217 = vmatprep.subr.mxu0 0.0
    %4218 = vmatpush1.msra.mxu0 0.0
    %4219 = vmatprep.subr.mxu0 0.0
    %4220 = vmatpush1.msra.mxu0 0.0
    %4221 = vmatprep.subr.mxu0 0.0
    %4222 = vmatpush1.msra.mxu0 0.0
    %4223 = vmatprep.subr.mxu0 0.0
    %4224 = vmatpush1.msra.mxu0 0.0
    %4225 = vmatprep.subr.mxu0 0.0
    %4226 = vmatpush1.msra.mxu0 0.0
    %4227 = vmatprep.subr.mxu0 0.0
    %4228 = vmatpush1.msra.mxu0 0.0
    %4229 = vmatprep.subr.mxu0 0.0
    %4230 = vmatpush1.msra.mxu0 0.0
    %4231 = vmatprep.subr.mxu0 0.0
    %4232 = vmatpush1.msra.mxu0 0.0
    %4233 = vmatprep.subr.mxu0 0.0
    %4234 = vmatpush1.msra.mxu0 0.0
    %4235 = vmatprep.subr.mxu0 0.0
    %4236 = vmatpush1.msra.mxu0 0.0
    %4237 = vmatprep.subr.mxu0 0.0
    %4238 = vmatpush1.msra.mxu0 0.0
    %4239 = vmatprep.subr.mxu0 0.0
    %4240 = vmatpush1.msra.mxu0 0.0
    %4241 = vmatprep.mubr.f32.mxu0 0.0
    %4242 = vmatmul.mubr.f32.gmra.mrb[0].mxu0 %v4175
    %v4243 = vpop.f32.mrb[0].mxu0
    %v4244 = vadd.f32 %v3188, %v4243
    %v4245 = vpop.f32.mrb[0].mxu0
    %v4246 = vadd.f32 %v3190, %v4245
    %4247 = vdwg.mxu0
    %4248 = vmatprep.subr.mxu0 0.0
    %4249 = vmatpush1.msra.mxu0 %v3026
    %4250 = vmatprep.subr.mxu0 0.0
    %4251 = vmatpush1.msra.mxu0 %v3029
    %4252 = vmatprep.subr.mxu0 0.0
    %4253 = vmatpush1.msra.mxu0 0.0
    %4254 = vmatprep.subr.mxu0 0.0
    %4255 = vmatpush1.msra.mxu0 0.0
    %4256 = vmatprep.subr.mxu0 0.0
    %4257 = vmatpush1.msra.mxu0 0.0
    %4258 = vmatprep.subr.mxu0 0.0
    %4259 = vmatpush1.msra.mxu0 0.0
    %4260 = vmatprep.subr.mxu0 0.0
    %4261 = vmatpush1.msra.mxu0 0.0
    %4262 = vmatprep.subr.mxu0 0.0
    %4263 = vmatpush1.msra.mxu0 0.0
    %4264 = vmatprep.subr.mxu0 0.0
    %4265 = vmatpush1.msra.mxu0 0.0
    %4266 = vmatprep.subr.mxu0 0.0
    %4267 = vmatpush1.msra.mxu0 0.0
    %4268 = vmatprep.subr.mxu0 0.0
    %4269 = vmatpush1.msra.mxu0 0.0
    %4270 = vmatprep.subr.mxu0 0.0
    %4271 = vmatpush1.msra.mxu0 0.0
    %4272 = vmatprep.subr.mxu0 0.0
    %4273 = vmatpush1.msra.mxu0 0.0
    %4274 = vmatprep.subr.mxu0 0.0
    %4275 = vmatpush1.msra.mxu0 0.0
    %4276 = vmatprep.subr.mxu0 0.0
    %4277 = vmatpush1.msra.mxu0 0.0
    %4278 = vmatprep.subr.mxu0 0.0
    %4279 = vmatpush1.msra.mxu0 0.0
    %4280 = vmatprep.subr.mxu0 0.0
    %4281 = vmatpush1.msra.mxu0 0.0
    %4282 = vmatprep.subr.mxu0 0.0
    %4283 = vmatpush1.msra.mxu0 0.0
    %4284 = vmatprep.subr.mxu0 0.0
    %4285 = vmatpush1.msra.mxu0 0.0
    %4286 = vmatprep.subr.mxu0 0.0
    %4287 = vmatpush1.msra.mxu0 0.0
    %4288 = vmatprep.subr.mxu0 0.0
    %4289 = vmatpush1.msra.mxu0 0.0
    %4290 = vmatprep.subr.mxu0 0.0
    %4291 = vmatpush1.msra.mxu0 0.0
    %4292 = vmatprep.subr.mxu0 0.0
    %4293 = vmatpush1.msra.mxu0 0.0
    %4294 = vmatprep.subr.mxu0 0.0
    %4295 = vmatpush1.msra.mxu0 0.0
    %4296 = vmatprep.subr.mxu0 0.0
    %4297 = vmatpush1.msra.mxu0 0.0
    %4298 = vmatprep.subr.mxu0 0.0
    %4299 = vmatpush1.msra.mxu0 0.0
    %4300 = vmatprep.subr.mxu0 0.0
    %4301 = vmatpush1.msra.mxu0 0.0
    %4302 = vmatprep.subr.mxu0 0.0
    %4303 = vmatpush1.msra.mxu0 0.0
    %4304 = vmatprep.subr.mxu0 0.0
    %4305 = vmatpush1.msra.mxu0 0.0
    %4306 = vmatprep.subr.mxu0 0.0
    %4307 = vmatpush1.msra.mxu0 0.0
    %4308 = vmatprep.subr.mxu0 0.0
    %4309 = vmatpush1.msra.mxu0 0.0
    %4310 = vmatprep.subr.mxu0 0.0
    %4311 = vmatpush1.msra.mxu0 0.0
    %4312 = vmatprep.mubr.f32.mxu0 0.0
    %4313 = vmatmul.mubr.f32.gmra.mrb[0].mxu0 %v4175
    %v4314 = vpop.f32.mrb[0].mxu0
    %v4315 = vadd.f32 %v3259, %v4314
    %v4316 = vpop.f32.mrb[0].mxu0
    %4317 = vdwg.mxu0
    %4318 = vmatprep.subr.mxu0 %v3031
    %4319 = vmatpush1.msra.mxu0 %v3030
    %4320 = vmatprep.subr.mxu0 %v3034
    %4321 = vmatpush1.msra.mxu0 %v3033
    %4322 = vmatprep.subr.mxu0 %v3037
    %4323 = vmatpush1.msra.mxu0 %v3036
    %4324 = vmatprep.subr.mxu0 %v3040
    %4325 = vmatpush1.msra.mxu0 %v3039
    %4326 = vmatprep.subr.mxu0 %v3043
    %4327 = vmatpush1.msra.mxu0 %v3042
    %4328 = vmatprep.subr.mxu0 %v3046
    %4329 = vmatpush1.msra.mxu0 %v3045
    %4330 = vmatprep.subr.mxu0 %v3049
    %4331 = vmatpush1.msra.mxu0 %v3048
    %4332 = vmatprep.subr.mxu0 %v3052
    %4333 = vmatpush1.msra.mxu0 %v3051
    %4334 = vmatprep.subr.mxu0 %v3055
    %4335 = vmatpush1.msra.mxu0 %v3054
    %4336 = vmatprep.subr.mxu0 %v3058
    %4337 = vmatpush1.msra.mxu0 %v3057
    %4338 = vmatprep.subr.mxu0 %v3061
    %4339 = vmatpush1.msra.mxu0 %v3060
    %4340 = vmatprep.subr.mxu0 %v3064
    %4341 = vmatpush1.msra.mxu0 %v3063
    %4342 = vmatprep.subr.mxu0 %v3067
    %4343 = vmatpush1.msra.mxu0 %v3066
    %4344 = vmatprep.subr.mxu0 %v3070
    %4345 = vmatpush1.msra.mxu0 %v3069
    %4346 = vmatprep.subr.mxu0 %v3073
    %4347 = vmatpush1.msra.mxu0 %v3072
    %4348 = vmatprep.subr.mxu0 %v3076
    %4349 = vmatpush1.msra.mxu0 %v3075
    %4350 = vmatprep.subr.mxu0 0.0
    %4351 = vmatpush1.msra.mxu0 0.0
    %4352 = vmatprep.subr.mxu0 0.0
    %4353 = vmatpush1.msra.mxu0 0.0
    %4354 = vmatprep.subr.mxu0 0.0
    %4355 = vmatpush1.msra.mxu0 0.0
    %4356 = vmatprep.subr.mxu0 0.0
    %4357 = vmatpush1.msra.mxu0 0.0
    %4358 = vmatprep.subr.mxu0 0.0
    %4359 = vmatpush1.msra.mxu0 0.0
    %4360 = vmatprep.subr.mxu0 0.0
    %4361 = vmatpush1.msra.mxu0 0.0
    %4362 = vmatprep.subr.mxu0 0.0
    %4363 = vmatpush1.msra.mxu0 0.0
    %4364 = vmatprep.subr.mxu0 0.0
    %4365 = vmatpush1.msra.mxu0 0.0
    %4366 = vmatprep.subr.mxu0 0.0
    %4367 = vmatpush1.msra.mxu0 0.0
    %4368 = vmatprep.subr.mxu0 0.0
    %4369 = vmatpush1.msra.mxu0 0.0
    %4370 = vmatprep.subr.mxu0 0.0
    %4371 = vmatpush1.msra.mxu0 0.0
    %4372 = vmatprep.subr.mxu0 0.0
    %4373 = vmatpush1.msra.mxu0 0.0
    %4374 = vmatprep.subr.mxu0 0.0
    %4375 = vmatpush1.msra.mxu0 0.0
    %4376 = vmatprep.subr.mxu0 0.0
    %4377 = vmatpush1.msra.mxu0 0.0
    %4378 = vmatprep.subr.mxu0 0.0
    %4379 = vmatpush1.msra.mxu0 0.0
    %4380 = vmatprep.subr.mxu0 0.0
    %4381 = vmatpush1.msra.mxu0 0.0
    %4382 = vmatprep.mubr.f32.mxu0 0.0
    %4383 = vmatmul.mubr.f32.gmra.mrb[0].mxu0 %v4075
    %v4384 = vpop.f32.mrb[0].mxu0
    %v4385 = vadd.f32 %v3083, %v4384
    %v4386 = vpop.f32.mrb[0].mxu0
    %v4387 = vadd.f32 %v3087, %v4386
    %4388 = vdwg.mxu0
    %4389 = vmatprep.subr.mxu0 0.0
    %4390 = vmatpush1.msra.mxu0 %v3032
    %4391 = vmatprep.subr.mxu0 0.0
    %4392 = vmatpush1.msra.mxu0 %v3035
    %4393 = vmatprep.subr.mxu0 0.0
    %4394 = vmatpush1.msra.mxu0 %v3038
    %4395 = vmatprep.subr.mxu0 0.0
    %4396 = vmatpush1.msra.mxu0 %v3041
    %4397 = vmatprep.subr.mxu0 0.0
    %4398 = vmatpush1.msra.mxu0 %v3044
    %4399 = vmatprep.subr.mxu0 0.0
    %4400 = vmatpush1.msra.mxu0 %v3047
    %4401 = vmatprep.subr.mxu0 0.0
    %4402 = vmatpush1.msra.mxu0 %v3050
    %4403 = vmatprep.subr.mxu0 0.0
    %4404 = vmatpush1.msra.mxu0 %v3053
    %4405 = vmatprep.subr.mxu0 0.0
    %4406 = vmatpush1.msra.mxu0 %v3056
    %4407 = vmatprep.subr.mxu0 0.0
    %4408 = vmatpush1.msra.mxu0 %v3059
    %4409 = vmatprep.subr.mxu0 0.0
    %4410 = vmatpush1.msra.mxu0 %v3062
    %4411 = vmatprep.subr.mxu0 0.0
    %4412 = vmatpush1.msra.mxu0 %v3065
    %4413 = vmatprep.subr.mxu0 0.0
    %4414 = vmatpush1.msra.mxu0 %v3068
    %4415 = vmatprep.subr.mxu0 0.0
    %4416 = vmatpush1.msra.mxu0 %v3071
    %4417 = vmatprep.subr.mxu0 0.0
    %4418 = vmatpush1.msra.mxu0 %v3074
    %4419 = vmatprep.subr.mxu0 0.0
    %4420 = vmatpush1.msra.mxu0 %v3077
    %4421 = vmatprep.subr.mxu0 0.0
    %4422 = vmatpush1.msra.mxu0 0.0
    %4423 = vmatprep.subr.mxu0 0.0
    %4424 = vmatpush1.msra.mxu0 0.0
    %4425 = vmatprep.subr.mxu0 0.0
    %4426 = vmatpush1.msra.mxu0 0.0
    %4427 = vmatprep.subr.mxu0 0.0
    %4428 = vmatpush1.msra.mxu0 0.0
    %4429 = vmatprep.subr.mxu0 0.0
    %4430 = vmatpush1.msra.mxu0 0.0
    %4431 = vmatprep.subr.mxu0 0.0
    %4432 = vmatpush1.msra.mxu0 0.0
    %4433 = vmatprep.subr.mxu0 0.0
    %4434 = vmatpush1.msra.mxu0 0.0
    %4435 = vmatprep.subr.mxu0 0.0
    %4436 = vmatpush1.msra.mxu0 0.0
    %4437 = vmatprep.subr.mxu0 0.0
    %4438 = vmatpush1.msra.mxu0 0.0
    %4439 = vmatprep.subr.mxu0 0.0
    %4440 = vmatpush1.msra.mxu0 0.0
    %4441 = vmatprep.subr.mxu0 0.0
    %4442 = vmatpush1.msra.mxu0 0.0
    %4443 = vmatprep.subr.mxu0 0.0
    %4444 = vmatpush1.msra.mxu0 0.0
    %4445 = vmatprep.subr.mxu0 0.0
    %4446 = vmatpush1.msra.mxu0 0.0
    %4447 = vmatprep.subr.mxu0 0.0
    %4448 = vmatpush1.msra.mxu0 0.0
    %4449 = vmatprep.subr.mxu0 0.0
    %4450 = vmatpush1.msra.mxu0 0.0
    %4451 = vmatprep.subr.mxu0 0.0
    %4452 = vmatpush1.msra.mxu0 0.0
    %4453 = vmatprep.mubr.f32.mxu0 0.0
    %4454 = vmatmul.mubr.f32.gmra.mrb[0].mxu0 %v4075
    %v4455 = vpop.f32.mrb[0].mxu0
    %v4456 = vadd.f32 %v3091, %v4455
    %v4457 = vpop.f32.mrb[0].mxu0
    %4458 = vdwg.mxu0
    %v4459 = vadd.f32 %v4244, %v4385
    %v4460 = vxor.u32 %v4459, 2147483648
    %v4461 = vmul.f32 %v4460, 1.442695
    %v4462 = vpow.pop %v4461
    %v4463 = vadd.f32 %v4462, 1.0
    %v4464 = vrcp.pop %v4463
    %v4465 = vmul.f32 1.0, %v4464
    %v4466 = vadd.f32 %v4246, %v4387
    %v4467 = vxor.u32 %v4466, 2147483648
    %v4468 = vmul.f32 %v4467, 1.442695
    %v4469 = vpow.pop %v4468
    %v4470 = vadd.f32 %v4469, 1.0
    %v4471 = vrcp.pop %v4470
    %v4472 = vmul.f32 1.0, %v4471
    %v4473 = vmul.f32 %v4465, %v4456
    %v4474 = vadd.f32 %v4315, %v4473
    %v4475 = vtanh.pop %v4474
    %v4476 = vsub.f32 1.0, %v4472
    %v4477 = vmul.f32 %v4476, %v4475
    %v4478 = vmul.f32 %v4472, %v4075
    %v4479 = vadd.f32 %v4477, %v4478
    %4480 = vmatprep.subr.mxu0 0.0
    %4481 = vmatpush1.msra.mxu0 %v3262
    %4482 = vmatprep.subr.mxu0 0.0
    %4483 = vmatpush1.msra.mxu0 %v3263
    %4484 = vmatprep.subr.mxu0 0.0
    %4485 = vmatpush1.msra.mxu0 %v3264
    %4486 = vmatprep.subr.mxu0 0.0
    %4487 = vmatpush1.msra.mxu0 %v3265
    %4488 = vmatprep.subr.mxu0 0.0
    %4489 = vmatpush1.msra.mxu0 %v3266
    %4490 = vmatprep.subr.mxu0 0.0
    %4491 = vmatpush1.msra.mxu0 %v3267
    %4492 = vmatprep.subr.mxu0 0.0
    %4493 = vmatpush1.msra.mxu0 %v3268
    %4494 = vmatprep.subr.mxu0 0.0
    %4495 = vmatpush1.msra.mxu0 %v3269
    %4496 = vmatprep.subr.mxu0 0.0
    %4497 = vmatpush1.msra.mxu0 %v3270
    %4498 = vmatprep.subr.mxu0 0.0
    %4499 = vmatpush1.msra.mxu0 %v3271
    %4500 = vmatprep.subr.mxu0 0.0
    %4501 = vmatpush1.msra.mxu0 %v3272
    %4502 = vmatprep.subr.mxu0 0.0
    %4503 = vmatpush1.msra.mxu0 %v3273
    %4504 = vmatprep.subr.mxu0 0.0
    %4505 = vmatpush1.msra.mxu0 %v3274
    %4506 = vmatprep.subr.mxu0 0.0
    %4507 = vmatpush1.msra.mxu0 %v3275
    %4508 = vmatprep.subr.mxu0 0.0
    %4509 = vmatpush1.msra.mxu0 %v3276
    %4510 = vmatprep.subr.mxu0 0.0
    %4511 = vmatpush1.msra.mxu0 %v3277
    %4512 = vmatprep.subr.mxu0 0.0
    %4513 = vmatpush1.msra.mxu0 0.0
    %4514 = vmatprep.subr.mxu0 0.0
    %4515 = vmatpush1.msra.mxu0 0.0
    %4516 = vmatprep.subr.mxu0 0.0
    %4517 = vmatpush1.msra.mxu0 0.0
    %4518 = vmatprep.subr.mxu0 0.0
    %4519 = vmatpush1.msra.mxu0 0.0
    %4520 = vmatprep.subr.mxu0 0.0
    %4521 = vmatpush1.msra.mxu0 0.0
    %4522 = vmatprep.subr.mxu0 0.0
    %4523 = vmatpush1.msra.mxu0 0.0
    %4524 = vmatprep.subr.mxu0 0.0
    %4525 = vmatpush1.msra.mxu0 0.0
    %4526 = vmatprep.subr.mxu0 0.0
    %4527 = vmatpush1.msra.mxu0 0.0
    %4528 = vmatprep.subr.mxu0 0.0
    %4529 = vmatpush1.msra.mxu0 0.0
    %4530 = vmatprep.subr.mxu0 0.0
    %4531 = vmatpush1.msra.mxu0 0.0
    %4532 = vmatprep.subr.mxu0 0.0
    %4533 = vmatpush1.msra.mxu0 0.0
    %4534 = vmatprep.subr.mxu0 0.0
    %4535 = vmatpush1.msra.mxu0 0.0
    %4536 = vmatprep.subr.mxu0 0.0
    %4537 = vmatpush1.msra.mxu0 0.0
    %4538 = vmatprep.subr.mxu0 0.0
    %4539 = vmatpush1.msra.mxu0 0.0
    %4540 = vmatprep.subr.mxu0 0.0
    %4541 = vmatpush1.msra.mxu0 0.0
    %4542 = vmatprep.subr.mxu0 0.0
    %4543 = vmatpush1.msra.mxu0 0.0
    %4544 = vmatprep.mubr.f32.mxu0 0.0
    %4545 = vmatmul.mubr.f32.gmra.mrb[0].mxu0 %v4479
    %v4546 = vpop.f32.mrb[0].mxu0
    %v4547 = vadd.f32 %v3283, %v4546
    %v4548 = vpop.f32.mrb[0].mxu0
    %4549 = vdwg.mxu0
    %v4552 = vunpack.c.l.s4 1966171168
    %v4553 = vunpack.c.0.s8 %v4552
    %v4554 = vlaneseq
    %v4555 = vshrl.u32 %v4554, 7
    %v4556 = vsub.s32 %v4553, %v4555
    %v4557 = vrot.slane %v4547, %v4556
    %v4558 = vcombine.high %v4557, %v4557
    %v4560 = vunpack.c.l.s4 1966171168
    %v4561 = vunpack.c.0.s8 %v4560
    %v4562 = vlaneseq
    %v4563 = vshrl.u32 %v4562, 7
    %v4564 = vsub.s32 %v4561, %v4563
    %v4565 = vrot.slane %v4557, %v4564
    %v4567 = vunpack.c.l.s4 1966171168
    %v4568 = vunpack.c.0.s8 %v4567
    %v4569 = vlaneseq
    %v4570 = vshrl.u32 %v4569, 7
    %v4571 = vsub.s32 %v4568, %v4570
    %v4572 = vrot.slane %v4558, %v4571
    %4575 = vst [vmem:[%s71 + $0x2] sm:$0x1] %v4565
    %4576 = vst [vmem:[%s71 + $0xa] sm:$0x1] %v4572
    %v4577 = vld [vmem:[%s1211] sm:$0x3]
    %v4579 = vsel %vm241, %v4577, 0
    %4581 = vmatprep.subr.mxu0 %v3025
    %4582 = vmatpush1.msra.mxu0 %v3024
    %4583 = vmatprep.subr.mxu0 %v3028
    %4584 = vmatpush1.msra.mxu0 %v3027
    %4585 = vmatprep.subr.mxu0 0.0
    %4586 = vmatpush1.msra.mxu0 0.0
    %4587 = vmatprep.subr.mxu0 0.0
    %4588 = vmatpush1.msra.mxu0 0.0
    %4589 = vmatprep.subr.mxu0 0.0
    %4590 = vmatpush1.msra.mxu0 0.0
    %4591 = vmatprep.subr.mxu0 0.0
    %4592 = vmatpush1.msra.mxu0 0.0
    %4593 = vmatprep.subr.mxu0 0.0
    %4594 = vmatpush1.msra.mxu0 0.0
    %4595 = vmatprep.subr.mxu0 0.0
    %4596 = vmatpush1.msra.mxu0 0.0
    %4597 = vmatprep.subr.mxu0 0.0
    %4598 = vmatpush1.msra.mxu0 0.0
    %4599 = vmatprep.subr.mxu0 0.0
    %4600 = vmatpush1.msra.mxu0 0.0
    %4601 = vmatprep.subr.mxu0 0.0
    %4602 = vmatpush1.msra.mxu0 0.0
    %4603 = vmatprep.subr.mxu0 0.0
    %4604 = vmatpush1.msra.mxu0 0.0
    %4605 = vmatprep.subr.mxu0 0.0
    %4606 = vmatpush1.msra.mxu0 0.0
    %4607 = vmatprep.subr.mxu0 0.0
    %4608 = vmatpush1.msra.mxu0 0.0
    %4609 = vmatprep.subr.mxu0 0.0
    %4610 = vmatpush1.msra.mxu0 0.0
    %4611 = vmatprep.subr.mxu0 0.0
    %4612 = vmatpush1.msra.mxu0 0.0
    %4613 = vmatprep.subr.mxu0 0.0
    %4614 = vmatpush1.msra.mxu0 0.0
    %4615 = vmatprep.subr.mxu0 0.0
    %4616 = vmatpush1.msra.mxu0 0.0
    %4617 = vmatprep.subr.mxu0 0.0
    %4618 = vmatpush1.msra.mxu0 0.0
    %4619 = vmatprep.subr.mxu0 0.0
    %4620 = vmatpush1.msra.mxu0 0.0
    %4621 = vmatprep.subr.mxu0 0.0
    %4622 = vmatpush1.msra.mxu0 0.0
    %4623 = vmatprep.subr.mxu0 0.0
    %4624 = vmatpush1.msra.mxu0 0.0
    %4625 = vmatprep.subr.mxu0 0.0
    %4626 = vmatpush1.msra.mxu0 0.0
    %4627 = vmatprep.subr.mxu0 0.0
    %4628 = vmatpush1.msra.mxu0 0.0
    %4629 = vmatprep.subr.mxu0 0.0
    %4630 = vmatpush1.msra.mxu0 0.0
    %4631 = vmatprep.subr.mxu0 0.0
    %4632 = vmatpush1.msra.mxu0 0.0
    %4633 = vmatprep.subr.mxu0 0.0
    %4634 = vmatpush1.msra.mxu0 0.0
    %4635 = vmatprep.subr.mxu0 0.0
    %4636 = vmatpush1.msra.mxu0 0.0
    %4637 = vmatprep.subr.mxu0 0.0
    %4638 = vmatpush1.msra.mxu0 0.0
    %4639 = vmatprep.subr.mxu0 0.0
    %4640 = vmatpush1.msra.mxu0 0.0
    %4641 = vmatprep.subr.mxu0 0.0
    %4642 = vmatpush1.msra.mxu0 0.0
    %4643 = vmatprep.subr.mxu0 0.0
    %4644 = vmatpush1.msra.mxu0 0.0
    %4645 = vmatprep.mubr.f32.mxu0 0.0
    %4646 = vmatmul.mubr.f32.gmra.mrb[0].mxu0 %v4579
    %v4647 = vpop.f32.mrb[0].mxu0
    %v4648 = vadd.f32 %v3188, %v4647
    %v4649 = vpop.f32.mrb[0].mxu0
    %v4650 = vadd.f32 %v3190, %v4649
    %4651 = vdwg.mxu0
    %4652 = vmatprep.subr.mxu0 0.0
    %4653 = vmatpush1.msra.mxu0 %v3026
    %4654 = vmatprep.subr.mxu0 0.0
    %4655 = vmatpush1.msra.mxu0 %v3029
    %4656 = vmatprep.subr.mxu0 0.0
    %4657 = vmatpush1.msra.mxu0 0.0
    %4658 = vmatprep.subr.mxu0 0.0
    %4659 = vmatpush1.msra.mxu0 0.0
    %4660 = vmatprep.subr.mxu0 0.0
    %4661 = vmatpush1.msra.mxu0 0.0
    %4662 = vmatprep.subr.mxu0 0.0
    %4663 = vmatpush1.msra.mxu0 0.0
    %4664 = vmatprep.subr.mxu0 0.0
    %4665 = vmatpush1.msra.mxu0 0.0
    %4666 = vmatprep.subr.mxu0 0.0
    %4667 = vmatpush1.msra.mxu0 0.0
    %4668 = vmatprep.subr.mxu0 0.0
    %4669 = vmatpush1.msra.mxu0 0.0
    %4670 = vmatprep.subr.mxu0 0.0
    %4671 = vmatpush1.msra.mxu0 0.0
    %4672 = vmatprep.subr.mxu0 0.0
    %4673 = vmatpush1.msra.mxu0 0.0
    %4674 = vmatprep.subr.mxu0 0.0
    %4675 = vmatpush1.msra.mxu0 0.0
    %4676 = vmatprep.subr.mxu0 0.0
    %4677 = vmatpush1.msra.mxu0 0.0
    %4678 = vmatprep.subr.mxu0 0.0
    %4679 = vmatpush1.msra.mxu0 0.0
    %4680 = vmatprep.subr.mxu0 0.0
    %4681 = vmatpush1.msra.mxu0 0.0
    %4682 = vmatprep.subr.mxu0 0.0
    %4683 = vmatpush1.msra.mxu0 0.0
    %4684 = vmatprep.subr.mxu0 0.0
    %4685 = vmatpush1.msra.mxu0 0.0
    %4686 = vmatprep.subr.mxu0 0.0
    %4687 = vmatpush1.msra.mxu0 0.0
    %4688 = vmatprep.subr.mxu0 0.0
    %4689 = vmatpush1.msra.mxu0 0.0
    %4690 = vmatprep.subr.mxu0 0.0
    %4691 = vmatpush1.msra.mxu0 0.0
    %4692 = vmatprep.subr.mxu0 0.0
    %4693 = vmatpush1.msra.mxu0 0.0
    %4694 = vmatprep.subr.mxu0 0.0
    %4695 = vmatpush1.msra.mxu0 0.0
    %4696 = vmatprep.subr.mxu0 0.0
    %4697 = vmatpush1.msra.mxu0 0.0
    %4698 = vmatprep.subr.mxu0 0.0
    %4699 = vmatpush1.msra.mxu0 0.0
    %4700 = vmatprep.subr.mxu0 0.0
    %4701 = vmatpush1.msra.mxu0 0.0
    %4702 = vmatprep.subr.mxu0 0.0
    %4703 = vmatpush1.msra.mxu0 0.0
    %4704 = vmatprep.subr.mxu0 0.0
    %4705 = vmatpush1.msra.mxu0 0.0
    %4706 = vmatprep.subr.mxu0 0.0
    %4707 = vmatpush1.msra.mxu0 0.0
    %4708 = vmatprep.subr.mxu0 0.0
    %4709 = vmatpush1.msra.mxu0 0.0
    %4710 = vmatprep.subr.mxu0 0.0
    %4711 = vmatpush1.msra.mxu0 0.0
    %4712 = vmatprep.subr.mxu0 0.0
    %4713 = vmatpush1.msra.mxu0 0.0
    %4714 = vmatprep.subr.mxu0 0.0
    %4715 = vmatpush1.msra.mxu0 0.0
    %4716 = vmatprep.mubr.f32.mxu0 0.0
    %4717 = vmatmul.mubr.f32.gmra.mrb[0].mxu0 %v4579
    %v4718 = vpop.f32.mrb[0].mxu0
    %v4719 = vadd.f32 %v3259, %v4718
    %v4720 = vpop.f32.mrb[0].mxu0
    %4721 = vdwg.mxu0
    %4722 = vmatprep.subr.mxu0 %v3031
    %4723 = vmatpush1.msra.mxu0 %v3030
    %4724 = vmatprep.subr.mxu0 %v3034
    %4725 = vmatpush1.msra.mxu0 %v3033
    %4726 = vmatprep.subr.mxu0 %v3037
    %4727 = vmatpush1.msra.mxu0 %v3036
    %4728 = vmatprep.subr.mxu0 %v3040
    %4729 = vmatpush1.msra.mxu0 %v3039
    %4730 = vmatprep.subr.mxu0 %v3043
    %4731 = vmatpush1.msra.mxu0 %v3042
    %4732 = vmatprep.subr.mxu0 %v3046
    %4733 = vmatpush1.msra.mxu0 %v3045
    %4734 = vmatprep.subr.mxu0 %v3049
    %4735 = vmatpush1.msra.mxu0 %v3048
    %4736 = vmatprep.subr.mxu0 %v3052
    %4737 = vmatpush1.msra.mxu0 %v3051
    %4738 = vmatprep.subr.mxu0 %v3055
    %4739 = vmatpush1.msra.mxu0 %v3054
    %4740 = vmatprep.subr.mxu0 %v3058
    %4741 = vmatpush1.msra.mxu0 %v3057
    %4742 = vmatprep.subr.mxu0 %v3061
    %4743 = vmatpush1.msra.mxu0 %v3060
    %4744 = vmatprep.subr.mxu0 %v3064
    %4745 = vmatpush1.msra.mxu0 %v3063
    %4746 = vmatprep.subr.mxu0 %v3067
    %4747 = vmatpush1.msra.mxu0 %v3066
    %4748 = vmatprep.subr.mxu0 %v3070
    %4749 = vmatpush1.msra.mxu0 %v3069
    %4750 = vmatprep.subr.mxu0 %v3073
    %4751 = vmatpush1.msra.mxu0 %v3072
    %4752 = vmatprep.subr.mxu0 %v3076
    %4753 = vmatpush1.msra.mxu0 %v3075
    %4754 = vmatprep.subr.mxu0 0.0
    %4755 = vmatpush1.msra.mxu0 0.0
    %4756 = vmatprep.subr.mxu0 0.0
    %4757 = vmatpush1.msra.mxu0 0.0
    %4758 = vmatprep.subr.mxu0 0.0
    %4759 = vmatpush1.msra.mxu0 0.0
    %4760 = vmatprep.subr.mxu0 0.0
    %4761 = vmatpush1.msra.mxu0 0.0
    %4762 = vmatprep.subr.mxu0 0.0
    %4763 = vmatpush1.msra.mxu0 0.0
    %4764 = vmatprep.subr.mxu0 0.0
    %4765 = vmatpush1.msra.mxu0 0.0
    %4766 = vmatprep.subr.mxu0 0.0
    %4767 = vmatpush1.msra.mxu0 0.0
    %4768 = vmatprep.subr.mxu0 0.0
    %4769 = vmatpush1.msra.mxu0 0.0
    %4770 = vmatprep.subr.mxu0 0.0
    %4771 = vmatpush1.msra.mxu0 0.0
    %4772 = vmatprep.subr.mxu0 0.0
    %4773 = vmatpush1.msra.mxu0 0.0
    %4774 = vmatprep.subr.mxu0 0.0
    %4775 = vmatpush1.msra.mxu0 0.0
    %4776 = vmatprep.subr.mxu0 0.0
    %4777 = vmatpush1.msra.mxu0 0.0
    %4778 = vmatprep.subr.mxu0 0.0
    %4779 = vmatpush1.msra.mxu0 0.0
    %4780 = vmatprep.subr.mxu0 0.0
    %4781 = vmatpush1.msra.mxu0 0.0
    %4782 = vmatprep.subr.mxu0 0.0
    %4783 = vmatpush1.msra.mxu0 0.0
    %4784 = vmatprep.subr.mxu0 0.0
    %4785 = vmatpush1.msra.mxu0 0.0
    %4786 = vmatprep.mubr.f32.mxu0 0.0
    %4787 = vmatmul.mubr.f32.gmra.mrb[0].mxu0 %v4479
    %v4788 = vpop.f32.mrb[0].mxu0
    %v4789 = vadd.f32 %v3083, %v4788
    %v4790 = vpop.f32.mrb[0].mxu0
    %v4791 = vadd.f32 %v3087, %v4790
    %4792 = vdwg.mxu0
    %4793 = vmatprep.subr.mxu0 0.0
    %4794 = vmatpush1.msra.mxu0 %v3032
    %4795 = vmatprep.subr.mxu0 0.0
    %4796 = vmatpush1.msra.mxu0 %v3035
    %4797 = vmatprep.subr.mxu0 0.0
    %4798 = vmatpush1.msra.mxu0 %v3038
    %4799 = vmatprep.subr.mxu0 0.0
    %4800 = vmatpush1.msra.mxu0 %v3041
    %4801 = vmatprep.subr.mxu0 0.0
    %4802 = vmatpush1.msra.mxu0 %v3044
    %4803 = vmatprep.subr.mxu0 0.0
    %4804 = vmatpush1.msra.mxu0 %v3047
    %4805 = vmatprep.subr.mxu0 0.0
    %4806 = vmatpush1.msra.mxu0 %v3050
    %4807 = vmatprep.subr.mxu0 0.0
    %4808 = vmatpush1.msra.mxu0 %v3053
    %4809 = vmatprep.subr.mxu0 0.0
    %4810 = vmatpush1.msra.mxu0 %v3056
    %4811 = vmatprep.subr.mxu0 0.0
    %4812 = vmatpush1.msra.mxu0 %v3059
    %4813 = vmatprep.subr.mxu0 0.0
    %4814 = vmatpush1.msra.mxu0 %v3062
    %4815 = vmatprep.subr.mxu0 0.0
    %4816 = vmatpush1.msra.mxu0 %v3065
    %4817 = vmatprep.subr.mxu0 0.0
    %4818 = vmatpush1.msra.mxu0 %v3068
    %4819 = vmatprep.subr.mxu0 0.0
    %4820 = vmatpush1.msra.mxu0 %v3071
    %4821 = vmatprep.subr.mxu0 0.0
    %4822 = vmatpush1.msra.mxu0 %v3074
    %4823 = vmatprep.subr.mxu0 0.0
    %4824 = vmatpush1.msra.mxu0 %v3077
    %4825 = vmatprep.subr.mxu0 0.0
    %4826 = vmatpush1.msra.mxu0 0.0
    %4827 = vmatprep.subr.mxu0 0.0
    %4828 = vmatpush1.msra.mxu0 0.0
    %4829 = vmatprep.subr.mxu0 0.0
    %4830 = vmatpush1.msra.mxu0 0.0
    %4831 = vmatprep.subr.mxu0 0.0
    %4832 = vmatpush1.msra.mxu0 0.0
    %4833 = vmatprep.subr.mxu0 0.0
    %4834 = vmatpush1.msra.mxu0 0.0
    %4835 = vmatprep.subr.mxu0 0.0
    %4836 = vmatpush1.msra.mxu0 0.0
    %4837 = vmatprep.subr.mxu0 0.0
    %4838 = vmatpush1.msra.mxu0 0.0
    %4839 = vmatprep.subr.mxu0 0.0
    %4840 = vmatpush1.msra.mxu0 0.0
    %4841 = vmatprep.subr.mxu0 0.0
    %4842 = vmatpush1.msra.mxu0 0.0
    %4843 = vmatprep.subr.mxu0 0.0
    %4844 = vmatpush1.msra.mxu0 0.0
    %4845 = vmatprep.subr.mxu0 0.0
    %4846 = vmatpush1.msra.mxu0 0.0
    %4847 = vmatprep.subr.mxu0 0.0
    %4848 = vmatpush1.msra.mxu0 0.0
    %4849 = vmatprep.subr.mxu0 0.0
    %4850 = vmatpush1.msra.mxu0 0.0
    %4851 = vmatprep.subr.mxu0 0.0
    %4852 = vmatpush1.msra.mxu0 0.0
    %4853 = vmatprep.subr.mxu0 0.0
    %4854 = vmatpush1.msra.mxu0 0.0
    %4855 = vmatprep.subr.mxu0 0.0
    %4856 = vmatpush1.msra.mxu0 0.0
    %4857 = vmatprep.mubr.f32.mxu0 0.0
    %4858 = vmatmul.mubr.f32.gmra.mrb[0].mxu0 %v4479
    %v4859 = vpop.f32.mrb[0].mxu0
    %v4860 = vadd.f32 %v3091, %v4859
    %v4861 = vpop.f32.mrb[0].mxu0
    %4862 = vdwg.mxu0
    %v4863 = vadd.f32 %v4648, %v4789
    %v4864 = vxor.u32 %v4863, 2147483648
    %v4865 = vmul.f32 %v4864, 1.442695
    %v4866 = vpow.pop %v4865
    %v4867 = vadd.f32 %v4866, 1.0
    %v4868 = vrcp.pop %v4867
    %v4869 = vmul.f32 1.0, %v4868
    %v4870 = vadd.f32 %v4650, %v4791
    %v4871 = vxor.u32 %v4870, 2147483648
    %v4872 = vmul.f32 %v4871, 1.442695
    %v4873 = vpow.pop %v4872
    %v4874 = vadd.f32 %v4873, 1.0
    %v4875 = vrcp.pop %v4874
    %v4876 = vmul.f32 1.0, %v4875
    %v4877 = vmul.f32 %v4869, %v4860
    %v4878 = vadd.f32 %v4719, %v4877
    %v4879 = vtanh.pop %v4878
    %v4880 = vsub.f32 1.0, %v4876
    %v4881 = vmul.f32 %v4880, %v4879
    %v4882 = vmul.f32 %v4876, %v4479
    %v4883 = vadd.f32 %v4881, %v4882
    %4884 = vmatprep.subr.mxu0 0.0
    %4885 = vmatpush1.msra.mxu0 %v3262
    %4886 = vmatprep.subr.mxu0 0.0
    %4887 = vmatpush1.msra.mxu0 %v3263
    %4888 = vmatprep.subr.mxu0 0.0
    %4889 = vmatpush1.msra.mxu0 %v3264
    %4890 = vmatprep.subr.mxu0 0.0
    %4891 = vmatpush1.msra.mxu0 %v3265
    %4892 = vmatprep.subr.mxu0 0.0
    %4893 = vmatpush1.msra.mxu0 %v3266
    %4894 = vmatprep.subr.mxu0 0.0
    %4895 = vmatpush1.msra.mxu0 %v3267
    %4896 = vmatprep.subr.mxu0 0.0
    %4897 = vmatpush1.msra.mxu0 %v3268
    %4898 = vmatprep.subr.mxu0 0.0
    %4899 = vmatpush1.msra.mxu0 %v3269
    %4900 = vmatprep.subr.mxu0 0.0
    %4901 = vmatpush1.msra.mxu0 %v3270
    %4902 = vmatprep.subr.mxu0 0.0
    %4903 = vmatpush1.msra.mxu0 %v3271
    %4904 = vmatprep.subr.mxu0 0.0
    %4905 = vmatpush1.msra.mxu0 %v3272
    %4906 = vmatprep.subr.mxu0 0.0
    %4907 = vmatpush1.msra.mxu0 %v3273
    %4908 = vmatprep.subr.mxu0 0.0
    %4909 = vmatpush1.msra.mxu0 %v3274
    %4910 = vmatprep.subr.mxu0 0.0
    %4911 = vmatpush1.msra.mxu0 %v3275
    %4912 = vmatprep.subr.mxu0 0.0
    %4913 = vmatpush1.msra.mxu0 %v3276
    %4914 = vmatprep.subr.mxu0 0.0
    %4915 = vmatpush1.msra.mxu0 %v3277
    %4916 = vmatprep.subr.mxu0 0.0
    %4917 = vmatpush1.msra.mxu0 0.0
    %4918 = vmatprep.subr.mxu0 0.0
    %4919 = vmatpush1.msra.mxu0 0.0
    %4920 = vmatprep.subr.mxu0 0.0
    %4921 = vmatpush1.msra.mxu0 0.0
    %4922 = vmatprep.subr.mxu0 0.0
    %4923 = vmatpush1.msra.mxu0 0.0
    %4924 = vmatprep.subr.mxu0 0.0
    %4925 = vmatpush1.msra.mxu0 0.0
    %4926 = vmatprep.subr.mxu0 0.0
    %4927 = vmatpush1.msra.mxu0 0.0
    %4928 = vmatprep.subr.mxu0 0.0
    %4929 = vmatpush1.msra.mxu0 0.0
    %4930 = vmatprep.subr.mxu0 0.0
    %4931 = vmatpush1.msra.mxu0 0.0
    %4932 = vmatprep.subr.mxu0 0.0
    %4933 = vmatpush1.msra.mxu0 0.0
    %4934 = vmatprep.subr.mxu0 0.0
    %4935 = vmatpush1.msra.mxu0 0.0
    %4936 = vmatprep.subr.mxu0 0.0
    %4937 = vmatpush1.msra.mxu0 0.0
    %4938 = vmatprep.subr.mxu0 0.0
    %4939 = vmatpush1.msra.mxu0 0.0
    %4940 = vmatprep.subr.mxu0 0.0
    %4941 = vmatpush1.msra.mxu0 0.0
    %4942 = vmatprep.subr.mxu0 0.0
    %4943 = vmatpush1.msra.mxu0 0.0
    %4944 = vmatprep.subr.mxu0 0.0
    %4945 = vmatpush1.msra.mxu0 0.0
    %4946 = vmatprep.subr.mxu0 0.0
    %4947 = vmatpush1.msra.mxu0 0.0
    %4948 = vmatprep.mubr.f32.mxu0 0.0
    %4949 = vmatmul.mubr.f32.gmra.mrb[0].mxu0 %v4883
    %v4950 = vpop.f32.mrb[0].mxu0
    %v4951 = vadd.f32 %v3283, %v4950
    %v4952 = vpop.f32.mrb[0].mxu0
    %4953 = vdwg.mxu0
    %v4956 = vunpack.c.l.s4 1966171168
    %v4957 = vunpack.c.0.s8 %v4956
    %v4958 = vlaneseq
    %v4959 = vshrl.u32 %v4958, 7
    %v4960 = vsub.s32 %v4957, %v4959
    %v4961 = vrot.slane %v4951, %v4960
    %v4962 = vcombine.high %v4961, %v4961
    %v4964 = vunpack.c.l.s4 1966171168
    %v4965 = vunpack.c.0.s8 %v4964
    %v4966 = vlaneseq
    %v4967 = vshrl.u32 %v4966, 7
    %v4968 = vsub.s32 %v4965, %v4967
    %v4969 = vrot.slane %v4961, %v4968
    %v4971 = vunpack.c.l.s4 1966171168
    %v4972 = vunpack.c.0.s8 %v4971
    %v4973 = vlaneseq
    %v4974 = vshrl.u32 %v4973, 7
    %v4975 = vsub.s32 %v4972, %v4974
    %v4976 = vrot.slane %v4962, %v4975
    %4979 = vst [vmem:[%s71 + $0x3] sm:$0x1] %v4969
    %4980 = vst [vmem:[%s71 + $0xb] sm:$0x1] %v4976
    %v4981 = vld [vmem:[%s1535] sm:$0x3]
    %v4983 = vsel %vm241, %v4981, 0
    %4985 = vmatprep.subr.mxu0 %v3025
    %4986 = vmatpush1.msra.mxu0 %v3024
    %4987 = vmatprep.subr.mxu0 %v3028
    %4988 = vmatpush1.msra.mxu0 %v3027
    %4989 = vmatprep.subr.mxu0 0.0
    %4990 = vmatpush1.msra.mxu0 0.0
    %4991 = vmatprep.subr.mxu0 0.0
    %4992 = vmatpush1.msra.mxu0 0.0
    %4993 = vmatprep.subr.mxu0 0.0
    %4994 = vmatpush1.msra.mxu0 0.0
    %4995 = vmatprep.subr.mxu0 0.0
    %4996 = vmatpush1.msra.mxu0 0.0
    %4997 = vmatprep.subr.mxu0 0.0
    %4998 = vmatpush1.msra.mxu0 0.0
    %4999 = vmatprep.subr.mxu0 0.0
    %5000 = vmatpush1.msra.mxu0 0.0
    %5001 = vmatprep.subr.mxu0 0.0
    %5002 = vmatpush1.msra.mxu0 0.0
    %5003 = vmatprep.subr.mxu0 0.0
    %5004 = vmatpush1.msra.mxu0 0.0
    %5005 = vmatprep.subr.mxu0 0.0
    %5006 = vmatpush1.msra.mxu0 0.0
    %5007 = vmatprep.subr.mxu0 0.0
    %5008 = vmatpush1.msra.mxu0 0.0
    %5009 = vmatprep.subr.mxu0 0.0
    %5010 = vmatpush1.msra.mxu0 0.0
    %5011 = vmatprep.subr.mxu0 0.0
    %5012 = vmatpush1.msra.mxu0 0.0
    %5013 = vmatprep.subr.mxu0 0.0
    %5014 = vmatpush1.msra.mxu0 0.0
    %5015 = vmatprep.subr.mxu0 0.0
    %5016 = vmatpush1.msra.mxu0 0.0
    %5017 = vmatprep.subr.mxu0 0.0
    %5018 = vmatpush1.msra.mxu0 0.0
    %5019 = vmatprep.subr.mxu0 0.0
    %5020 = vmatpush1.msra.mxu0 0.0
    %5021 = vmatprep.subr.mxu0 0.0
    %5022 = vmatpush1.msra.mxu0 0.0
    %5023 = vmatprep.subr.mxu0 0.0
    %5024 = vmatpush1.msra.mxu0 0.0
    %5025 = vmatprep.subr.mxu0 0.0
    %5026 = vmatpush1.msra.mxu0 0.0
    %5027 = vmatprep.subr.mxu0 0.0
    %5028 = vmatpush1.msra.mxu0 0.0
    %5029 = vmatprep.subr.mxu0 0.0
    %5030 = vmatpush1.msra.mxu0 0.0
    %5031 = vmatprep.subr.mxu0 0.0
    %5032 = vmatpush1.msra.mxu0 0.0
    %5033 = vmatprep.subr.mxu0 0.0
    %5034 = vmatpush1.msra.mxu0 0.0
    %5035 = vmatprep.subr.mxu0 0.0
    %5036 = vmatpush1.msra.mxu0 0.0
    %5037 = vmatprep.subr.mxu0 0.0
    %5038 = vmatpush1.msra.mxu0 0.0
    %5039 = vmatprep.subr.mxu0 0.0
    %5040 = vmatpush1.msra.mxu0 0.0
    %5041 = vmatprep.subr.mxu0 0.0
    %5042 = vmatpush1.msra.mxu0 0.0
    %5043 = vmatprep.subr.mxu0 0.0
    %5044 = vmatpush1.msra.mxu0 0.0
    %5045 = vmatprep.subr.mxu0 0.0
    %5046 = vmatpush1.msra.mxu0 0.0
    %5047 = vmatprep.subr.mxu0 0.0
    %5048 = vmatpush1.msra.mxu0 0.0
    %5049 = vmatprep.mubr.f32.mxu0 0.0
    %5050 = vmatmul.mubr.f32.gmra.mrb[0].mxu0 %v4983
    %v5051 = vpop.f32.mrb[0].mxu0
    %v5052 = vadd.f32 %v3188, %v5051
    %v5053 = vpop.f32.mrb[0].mxu0
    %v5054 = vadd.f32 %v3190, %v5053
    %5055 = vdwg.mxu0
    %5056 = vmatprep.subr.mxu0 0.0
    %5057 = vmatpush1.msra.mxu0 %v3026
    %5058 = vmatprep.subr.mxu0 0.0
    %5059 = vmatpush1.msra.mxu0 %v3029
    %5060 = vmatprep.subr.mxu0 0.0
    %5061 = vmatpush1.msra.mxu0 0.0
    %5062 = vmatprep.subr.mxu0 0.0
    %5063 = vmatpush1.msra.mxu0 0.0
    %5064 = vmatprep.subr.mxu0 0.0
    %5065 = vmatpush1.msra.mxu0 0.0
    %5066 = vmatprep.subr.mxu0 0.0
    %5067 = vmatpush1.msra.mxu0 0.0
    %5068 = vmatprep.subr.mxu0 0.0
    %5069 = vmatpush1.msra.mxu0 0.0
    %5070 = vmatprep.subr.mxu0 0.0
    %5071 = vmatpush1.msra.mxu0 0.0
    %5072 = vmatprep.subr.mxu0 0.0
    %5073 = vmatpush1.msra.mxu0 0.0
    %5074 = vmatprep.subr.mxu0 0.0
    %5075 = vmatpush1.msra.mxu0 0.0
    %5076 = vmatprep.subr.mxu0 0.0
    %5077 = vmatpush1.msra.mxu0 0.0
    %5078 = vmatprep.subr.mxu0 0.0
    %5079 = vmatpush1.msra.mxu0 0.0
    %5080 = vmatprep.subr.mxu0 0.0
    %5081 = vmatpush1.msra.mxu0 0.0
    %5082 = vmatprep.subr.mxu0 0.0
    %5083 = vmatpush1.msra.mxu0 0.0
    %5084 = vmatprep.subr.mxu0 0.0
    %5085 = vmatpush1.msra.mxu0 0.0
    %5086 = vmatprep.subr.mxu0 0.0
    %5087 = vmatpush1.msra.mxu0 0.0
    %5088 = vmatprep.subr.mxu0 0.0
    %5089 = vmatpush1.msra.mxu0 0.0
    %5090 = vmatprep.subr.mxu0 0.0
    %5091 = vmatpush1.msra.mxu0 0.0
    %5092 = vmatprep.subr.mxu0 0.0
    %5093 = vmatpush1.msra.mxu0 0.0
    %5094 = vmatprep.subr.mxu0 0.0
    %5095 = vmatpush1.msra.mxu0 0.0
    %5096 = vmatprep.subr.mxu0 0.0
    %5097 = vmatpush1.msra.mxu0 0.0
    %5098 = vmatprep.subr.mxu0 0.0
    %5099 = vmatpush1.msra.mxu0 0.0
    %5100 = vmatprep.subr.mxu0 0.0
    %5101 = vmatpush1.msra.mxu0 0.0
    %5102 = vmatprep.subr.mxu0 0.0
    %5103 = vmatpush1.msra.mxu0 0.0
    %5104 = vmatprep.subr.mxu0 0.0
    %5105 = vmatpush1.msra.mxu0 0.0
    %5106 = vmatprep.subr.mxu0 0.0
    %5107 = vmatpush1.msra.mxu0 0.0
    %5108 = vmatprep.subr.mxu0 0.0
    %5109 = vmatpush1.msra.mxu0 0.0
    %5110 = vmatprep.subr.mxu0 0.0
    %5111 = vmatpush1.msra.mxu0 0.0
    %5112 = vmatprep.subr.mxu0 0.0
    %5113 = vmatpush1.msra.mxu0 0.0
    %5114 = vmatprep.subr.mxu0 0.0
    %5115 = vmatpush1.msra.mxu0 0.0
    %5116 = vmatprep.subr.mxu0 0.0
    %5117 = vmatpush1.msra.mxu0 0.0
    %5118 = vmatprep.subr.mxu0 0.0
    %5119 = vmatpush1.msra.mxu0 0.0
    %5120 = vmatprep.mubr.f32.mxu0 0.0
    %5121 = vmatmul.mubr.f32.gmra.mrb[0].mxu0 %v4983
    %v5122 = vpop.f32.mrb[0].mxu0
    %v5123 = vadd.f32 %v3259, %v5122
    %v5124 = vpop.f32.mrb[0].mxu0
    %5125 = vdwg.mxu0
    %5126 = vmatprep.subr.mxu0 %v3031
    %5127 = vmatpush1.msra.mxu0 %v3030
    %5128 = vmatprep.subr.mxu0 %v3034
    %5129 = vmatpush1.msra.mxu0 %v3033
    %5130 = vmatprep.subr.mxu0 %v3037
    %5131 = vmatpush1.msra.mxu0 %v3036
    %5132 = vmatprep.subr.mxu0 %v3040
    %5133 = vmatpush1.msra.mxu0 %v3039
    %5134 = vmatprep.subr.mxu0 %v3043
    %5135 = vmatpush1.msra.mxu0 %v3042
    %5136 = vmatprep.subr.mxu0 %v3046
    %5137 = vmatpush1.msra.mxu0 %v3045
    %5138 = vmatprep.subr.mxu0 %v3049
    %5139 = vmatpush1.msra.mxu0 %v3048
    %5140 = vmatprep.subr.mxu0 %v3052
    %5141 = vmatpush1.msra.mxu0 %v3051
    %5142 = vmatprep.subr.mxu0 %v3055
    %5143 = vmatpush1.msra.mxu0 %v3054
    %5144 = vmatprep.subr.mxu0 %v3058
    %5145 = vmatpush1.msra.mxu0 %v3057
    %5146 = vmatprep.subr.mxu0 %v3061
    %5147 = vmatpush1.msra.mxu0 %v3060
    %5148 = vmatprep.subr.mxu0 %v3064
    %5149 = vmatpush1.msra.mxu0 %v3063
    %5150 = vmatprep.subr.mxu0 %v3067
    %5151 = vmatpush1.msra.mxu0 %v3066
    %5152 = vmatprep.subr.mxu0 %v3070
    %5153 = vmatpush1.msra.mxu0 %v3069
    %5154 = vmatprep.subr.mxu0 %v3073
    %5155 = vmatpush1.msra.mxu0 %v3072
    %5156 = vmatprep.subr.mxu0 %v3076
    %5157 = vmatpush1.msra.mxu0 %v3075
    %5158 = vmatprep.subr.mxu0 0.0
    %5159 = vmatpush1.msra.mxu0 0.0
    %5160 = vmatprep.subr.mxu0 0.0
    %5161 = vmatpush1.msra.mxu0 0.0
    %5162 = vmatprep.subr.mxu0 0.0
    %5163 = vmatpush1.msra.mxu0 0.0
    %5164 = vmatprep.subr.mxu0 0.0
    %5165 = vmatpush1.msra.mxu0 0.0
    %5166 = vmatprep.subr.mxu0 0.0
    %5167 = vmatpush1.msra.mxu0 0.0
    %5168 = vmatprep.subr.mxu0 0.0
    %5169 = vmatpush1.msra.mxu0 0.0
    %5170 = vmatprep.subr.mxu0 0.0
    %5171 = vmatpush1.msra.mxu0 0.0
    %5172 = vmatprep.subr.mxu0 0.0
    %5173 = vmatpush1.msra.mxu0 0.0
    %5174 = vmatprep.subr.mxu0 0.0
    %5175 = vmatpush1.msra.mxu0 0.0
    %5176 = vmatprep.subr.mxu0 0.0
    %5177 = vmatpush1.msra.mxu0 0.0
    %5178 = vmatprep.subr.mxu0 0.0
    %5179 = vmatpush1.msra.mxu0 0.0
    %5180 = vmatprep.subr.mxu0 0.0
    %5181 = vmatpush1.msra.mxu0 0.0
    %5182 = vmatprep.subr.mxu0 0.0
    %5183 = vmatpush1.msra.mxu0 0.0
    %5184 = vmatprep.subr.mxu0 0.0
    %5185 = vmatpush1.msra.mxu0 0.0
    %5186 = vmatprep.subr.mxu0 0.0
    %5187 = vmatpush1.msra.mxu0 0.0
    %5188 = vmatprep.subr.mxu0 0.0
    %5189 = vmatpush1.msra.mxu0 0.0
    %5190 = vmatprep.mubr.f32.mxu0 0.0
    %5191 = vmatmul.mubr.f32.gmra.mrb[0].mxu0 %v4883
    %v5192 = vpop.f32.mrb[0].mxu0
    %v5193 = vadd.f32 %v3083, %v5192
    %v5194 = vpop.f32.mrb[0].mxu0
    %v5195 = vadd.f32 %v3087, %v5194
    %5196 = vdwg.mxu0
    %5197 = vmatprep.subr.mxu0 0.0
    %5198 = vmatpush1.msra.mxu0 %v3032
    %5199 = vmatprep.subr.mxu0 0.0
    %5200 = vmatpush1.msra.mxu0 %v3035
    %5201 = vmatprep.subr.mxu0 0.0
    %5202 = vmatpush1.msra.mxu0 %v3038
    %5203 = vmatprep.subr.mxu0 0.0
    %5204 = vmatpush1.msra.mxu0 %v3041
    %5205 = vmatprep.subr.mxu0 0.0
    %5206 = vmatpush1.msra.mxu0 %v3044
    %5207 = vmatprep.subr.mxu0 0.0
    %5208 = vmatpush1.msra.mxu0 %v3047
    %5209 = vmatprep.subr.mxu0 0.0
    %5210 = vmatpush1.msra.mxu0 %v3050
    %5211 = vmatprep.subr.mxu0 0.0
    %5212 = vmatpush1.msra.mxu0 %v3053
    %5213 = vmatprep.subr.mxu0 0.0
    %5214 = vmatpush1.msra.mxu0 %v3056
    %5215 = vmatprep.subr.mxu0 0.0
    %5216 = vmatpush1.msra.mxu0 %v3059
    %5217 = vmatprep.subr.mxu0 0.0
    %5218 = vmatpush1.msra.mxu0 %v3062
    %5219 = vmatprep.subr.mxu0 0.0
    %5220 = vmatpush1.msra.mxu0 %v3065
    %5221 = vmatprep.subr.mxu0 0.0
    %5222 = vmatpush1.msra.mxu0 %v3068
    %5223 = vmatprep.subr.mxu0 0.0
    %5224 = vmatpush1.msra.mxu0 %v3071
    %5225 = vmatprep.subr.mxu0 0.0
    %5226 = vmatpush1.msra.mxu0 %v3074
    %5227 = vmatprep.subr.mxu0 0.0
    %5228 = vmatpush1.msra.mxu0 %v3077
    %5229 = vmatprep.subr.mxu0 0.0
    %5230 = vmatpush1.msra.mxu0 0.0
    %5231 = vmatprep.subr.mxu0 0.0
    %5232 = vmatpush1.msra.mxu0 0.0
    %5233 = vmatprep.subr.mxu0 0.0
    %5234 = vmatpush1.msra.mxu0 0.0
    %5235 = vmatprep.subr.mxu0 0.0
    %5236 = vmatpush1.msra.mxu0 0.0
    %5237 = vmatprep.subr.mxu0 0.0
    %5238 = vmatpush1.msra.mxu0 0.0
    %5239 = vmatprep.subr.mxu0 0.0
    %5240 = vmatpush1.msra.mxu0 0.0
    %5241 = vmatprep.subr.mxu0 0.0
    %5242 = vmatpush1.msra.mxu0 0.0
    %5243 = vmatprep.subr.mxu0 0.0
    %5244 = vmatpush1.msra.mxu0 0.0
    %5245 = vmatprep.subr.mxu0 0.0
    %5246 = vmatpush1.msra.mxu0 0.0
    %5247 = vmatprep.subr.mxu0 0.0
    %5248 = vmatpush1.msra.mxu0 0.0
    %5249 = vmatprep.subr.mxu0 0.0
    %5250 = vmatpush1.msra.mxu0 0.0
    %5251 = vmatprep.subr.mxu0 0.0
    %5252 = vmatpush1.msra.mxu0 0.0
    %5253 = vmatprep.subr.mxu0 0.0
    %5254 = vmatpush1.msra.mxu0 0.0
    %5255 = vmatprep.subr.mxu0 0.0
    %5256 = vmatpush1.msra.mxu0 0.0
    %5257 = vmatprep.subr.mxu0 0.0
    %5258 = vmatpush1.msra.mxu0 0.0
    %5259 = vmatprep.subr.mxu0 0.0
    %5260 = vmatpush1.msra.mxu0 0.0
    %5261 = vmatprep.mubr.f32.mxu0 0.0
    %5262 = vmatmul.mubr.f32.gmra.mrb[0].mxu0 %v4883
    %v5263 = vpop.f32.mrb[0].mxu0
    %v5264 = vadd.f32 %v3091, %v5263
    %v5265 = vpop.f32.mrb[0].mxu0
    %5266 = vdwg.mxu0
    %v5267 = vadd.f32 %v5052, %v5193
    %v5268 = vxor.u32 %v5267, 2147483648
    %v5269 = vmul.f32 %v5268, 1.442695
    %v5270 = vpow.pop %v5269
    %v5271 = vadd.f32 %v5270, 1.0
    %v5272 = vrcp.pop %v5271
    %v5273 = vmul.f32 1.0, %v5272
    %v5274 = vadd.f32 %v5054, %v5195
    %v5275 = vxor.u32 %v5274, 2147483648
    %v5276 = vmul.f32 %v5275, 1.442695
    %v5277 = vpow.pop %v5276
    %v5278 = vadd.f32 %v5277, 1.0
    %v5279 = vrcp.pop %v5278
    %v5280 = vmul.f32 1.0, %v5279
    %v5281 = vmul.f32 %v5273, %v5264
    %v5282 = vadd.f32 %v5123, %v5281
    %v5283 = vtanh.pop %v5282
    %v5284 = vsub.f32 1.0, %v5280
    %v5285 = vmul.f32 %v5284, %v5283
    %v5286 = vmul.f32 %v5280, %v4883
    %v5287 = vadd.f32 %v5285, %v5286
    %5288 = vmatprep.subr.mxu0 0.0
    %5289 = vmatpush1.msra.mxu0 %v3262
    %5290 = vmatprep.subr.mxu0 0.0
    %5291 = vmatpush1.msra.mxu0 %v3263
    %5292 = vmatprep.subr.mxu0 0.0
    %5293 = vmatpush1.msra.mxu0 %v3264
    %5294 = vmatprep.subr.mxu0 0.0
    %5295 = vmatpush1.msra.mxu0 %v3265
    %5296 = vmatprep.subr.mxu0 0.0
    %5297 = vmatpush1.msra.mxu0 %v3266
    %5298 = vmatprep.subr.mxu0 0.0
    %5299 = vmatpush1.msra.mxu0 %v3267
    %5300 = vmatprep.subr.mxu0 0.0
    %5301 = vmatpush1.msra.mxu0 %v3268
    %5302 = vmatprep.subr.mxu0 0.0
    %5303 = vmatpush1.msra.mxu0 %v3269
    %5304 = vmatprep.subr.mxu0 0.0
    %5305 = vmatpush1.msra.mxu0 %v3270
    %5306 = vmatprep.subr.mxu0 0.0
    %5307 = vmatpush1.msra.mxu0 %v3271
    %5308 = vmatprep.subr.mxu0 0.0
    %5309 = vmatpush1.msra.mxu0 %v3272
    %5310 = vmatprep.subr.mxu0 0.0
    %5311 = vmatpush1.msra.mxu0 %v3273
    %5312 = vmatprep.subr.mxu0 0.0
    %5313 = vmatpush1.msra.mxu0 %v3274
    %5314 = vmatprep.subr.mxu0 0.0
    %5315 = vmatpush1.msra.mxu0 %v3275
    %5316 = vmatprep.subr.mxu0 0.0
    %5317 = vmatpush1.msra.mxu0 %v3276
    %5318 = vmatprep.subr.mxu0 0.0
    %5319 = vmatpush1.msra.mxu0 %v3277
    %5320 = vmatprep.subr.mxu0 0.0
    %5321 = vmatpush1.msra.mxu0 0.0
    %5322 = vmatprep.subr.mxu0 0.0
    %5323 = vmatpush1.msra.mxu0 0.0
    %5324 = vmatprep.subr.mxu0 0.0
    %5325 = vmatpush1.msra.mxu0 0.0
    %5326 = vmatprep.subr.mxu0 0.0
    %5327 = vmatpush1.msra.mxu0 0.0
    %5328 = vmatprep.subr.mxu0 0.0
    %5329 = vmatpush1.msra.mxu0 0.0
    %5330 = vmatprep.subr.mxu0 0.0
    %5331 = vmatpush1.msra.mxu0 0.0
    %5332 = vmatprep.subr.mxu0 0.0
    %5333 = vmatpush1.msra.mxu0 0.0
    %5334 = vmatprep.subr.mxu0 0.0
    %5335 = vmatpush1.msra.mxu0 0.0
    %5336 = vmatprep.subr.mxu0 0.0
    %5337 = vmatpush1.msra.mxu0 0.0
    %5338 = vmatprep.subr.mxu0 0.0
    %5339 = vmatpush1.msra.mxu0 0.0
    %5340 = vmatprep.subr.mxu0 0.0
    %5341 = vmatpush1.msra.mxu0 0.0
    %5342 = vmatprep.subr.mxu0 0.0
    %5343 = vmatpush1.msra.mxu0 0.0
    %5344 = vmatprep.subr.mxu0 0.0
    %5345 = vmatpush1.msra.mxu0 0.0
    %5346 = vmatprep.subr.mxu0 0.0
    %5347 = vmatpush1.msra.mxu0 0.0
    %5348 = vmatprep.subr.mxu0 0.0
    %5349 = vmatpush1.msra.mxu0 0.0
    %5350 = vmatprep.subr.mxu0 0.0
    %5351 = vmatpush1.msra.mxu0 0.0
    %5352 = vmatprep.mubr.f32.mxu0 0.0
    %5353 = vmatmul.mubr.f32.gmra.mrb[0].mxu0 %v5287
    %v5354 = vpop.f32.mrb[0].mxu0
    %v5355 = vadd.f32 %v3283, %v5354
    %v5356 = vpop.f32.mrb[0].mxu0
    %5357 = vdwg.mxu0
    %v5360 = vunpack.c.l.s4 1966171168
    %v5361 = vunpack.c.0.s8 %v5360
    %v5362 = vlaneseq
    %v5363 = vshrl.u32 %v5362, 7
    %v5364 = vsub.s32 %v5361, %v5363
    %v5365 = vrot.slane %v5355, %v5364
    %v5366 = vcombine.high %v5365, %v5365
    %v5368 = vunpack.c.l.s4 1966171168
    %v5369 = vunpack.c.0.s8 %v5368
    %v5370 = vlaneseq
    %v5371 = vshrl.u32 %v5370, 7
    %v5372 = vsub.s32 %v5369, %v5371
    %v5373 = vrot.slane %v5365, %v5372
    %v5375 = vunpack.c.l.s4 1966171168
    %v5376 = vunpack.c.0.s8 %v5375
    %v5377 = vlaneseq
    %v5378 = vshrl.u32 %v5377, 7
    %v5379 = vsub.s32 %v5376, %v5378
    %v5380 = vrot.slane %v5366, %v5379
    %5383 = vst [vmem:[%s71 + $0x4] sm:$0x1] %v5373
    %5384 = vst [vmem:[%s71 + $0xc] sm:$0x1] %v5380
    %v5385 = vld [vmem:[%s1859] sm:$0x3]
    %v5387 = vsel %vm241, %v5385, 0
    %5389 = vmatprep.subr.mxu0 %v3025
    %5390 = vmatpush1.msra.mxu0 %v3024
    %5391 = vmatprep.subr.mxu0 %v3028
    %5392 = vmatpush1.msra.mxu0 %v3027
    %5393 = vmatprep.subr.mxu0 0.0
    %5394 = vmatpush1.msra.mxu0 0.0
    %5395 = vmatprep.subr.mxu0 0.0
    %5396 = vmatpush1.msra.mxu0 0.0
    %5397 = vmatprep.subr.mxu0 0.0
    %5398 = vmatpush1.msra.mxu0 0.0
    %5399 = vmatprep.subr.mxu0 0.0
    %5400 = vmatpush1.msra.mxu0 0.0
    %5401 = vmatprep.subr.mxu0 0.0
    %5402 = vmatpush1.msra.mxu0 0.0
    %5403 = vmatprep.subr.mxu0 0.0
    %5404 = vmatpush1.msra.mxu0 0.0
    %5405 = vmatprep.subr.mxu0 0.0
    %5406 = vmatpush1.msra.mxu0 0.0
    %5407 = vmatprep.subr.mxu0 0.0
    %5408 = vmatpush1.msra.mxu0 0.0
    %5409 = vmatprep.subr.mxu0 0.0
    %5410 = vmatpush1.msra.mxu0 0.0
    %5411 = vmatprep.subr.mxu0 0.0
    %5412 = vmatpush1.msra.mxu0 0.0
    %5413 = vmatprep.subr.mxu0 0.0
    %5414 = vmatpush1.msra.mxu0 0.0
    %5415 = vmatprep.subr.mxu0 0.0
    %5416 = vmatpush1.msra.mxu0 0.0
    %5417 = vmatprep.subr.mxu0 0.0
    %5418 = vmatpush1.msra.mxu0 0.0
    %5419 = vmatprep.subr.mxu0 0.0
    %5420 = vmatpush1.msra.mxu0 0.0
    %5421 = vmatprep.subr.mxu0 0.0
    %5422 = vmatpush1.msra.mxu0 0.0
    %5423 = vmatprep.subr.mxu0 0.0
    %5424 = vmatpush1.msra.mxu0 0.0
    %5425 = vmatprep.subr.mxu0 0.0
    %5426 = vmatpush1.msra.mxu0 0.0
    %5427 = vmatprep.subr.mxu0 0.0
    %5428 = vmatpush1.msra.mxu0 0.0
    %5429 = vmatprep.subr.mxu0 0.0
    %5430 = vmatpush1.msra.mxu0 0.0
    %5431 = vmatprep.subr.mxu0 0.0
    %5432 = vmatpush1.msra.mxu0 0.0
    %5433 = vmatprep.subr.mxu0 0.0
    %5434 = vmatpush1.msra.mxu0 0.0
    %5435 = vmatprep.subr.mxu0 0.0
    %5436 = vmatpush1.msra.mxu0 0.0
    %5437 = vmatprep.subr.mxu0 0.0
    %5438 = vmatpush1.msra.mxu0 0.0
    %5439 = vmatprep.subr.mxu0 0.0
    %5440 = vmatpush1.msra.mxu0 0.0
    %5441 = vmatprep.subr.mxu0 0.0
    %5442 = vmatpush1.msra.mxu0 0.0
    %5443 = vmatprep.subr.mxu0 0.0
    %5444 = vmatpush1.msra.mxu0 0.0
    %5445 = vmatprep.subr.mxu0 0.0
    %5446 = vmatpush1.msra.mxu0 0.0
    %5447 = vmatprep.subr.mxu0 0.0
    %5448 = vmatpush1.msra.mxu0 0.0
    %5449 = vmatprep.subr.mxu0 0.0
    %5450 = vmatpush1.msra.mxu0 0.0
    %5451 = vmatprep.subr.mxu0 0.0
    %5452 = vmatpush1.msra.mxu0 0.0
    %5453 = vmatprep.mubr.f32.mxu0 0.0
    %5454 = vmatmul.mubr.f32.gmra.mrb[0].mxu0 %v5387
    %v5455 = vpop.f32.mrb[0].mxu0
    %v5456 = vadd.f32 %v3188, %v5455
    %v5457 = vpop.f32.mrb[0].mxu0
    %v5458 = vadd.f32 %v3190, %v5457
    %5459 = vdwg.mxu0
    %5460 = vmatprep.subr.mxu0 0.0
    %5461 = vmatpush1.msra.mxu0 %v3026
    %5462 = vmatprep.subr.mxu0 0.0
    %5463 = vmatpush1.msra.mxu0 %v3029
    %5464 = vmatprep.subr.mxu0 0.0
    %5465 = vmatpush1.msra.mxu0 0.0
    %5466 = vmatprep.subr.mxu0 0.0
    %5467 = vmatpush1.msra.mxu0 0.0
    %5468 = vmatprep.subr.mxu0 0.0
    %5469 = vmatpush1.msra.mxu0 0.0
    %5470 = vmatprep.subr.mxu0 0.0
    %5471 = vmatpush1.msra.mxu0 0.0
    %5472 = vmatprep.subr.mxu0 0.0
    %5473 = vmatpush1.msra.mxu0 0.0
    %5474 = vmatprep.subr.mxu0 0.0
    %5475 = vmatpush1.msra.mxu0 0.0
    %5476 = vmatprep.subr.mxu0 0.0
    %5477 = vmatpush1.msra.mxu0 0.0
    %5478 = vmatprep.subr.mxu0 0.0
    %5479 = vmatpush1.msra.mxu0 0.0
    %5480 = vmatprep.subr.mxu0 0.0
    %5481 = vmatpush1.msra.mxu0 0.0
    %5482 = vmatprep.subr.mxu0 0.0
    %5483 = vmatpush1.msra.mxu0 0.0
    %5484 = vmatprep.subr.mxu0 0.0
    %5485 = vmatpush1.msra.mxu0 0.0
    %5486 = vmatprep.subr.mxu0 0.0
    %5487 = vmatpush1.msra.mxu0 0.0
    %5488 = vmatprep.subr.mxu0 0.0
    %5489 = vmatpush1.msra.mxu0 0.0
    %5490 = vmatprep.subr.mxu0 0.0
    %5491 = vmatpush1.msra.mxu0 0.0
    %5492 = vmatprep.subr.mxu0 0.0
    %5493 = vmatpush1.msra.mxu0 0.0
    %5494 = vmatprep.subr.mxu0 0.0
    %5495 = vmatpush1.msra.mxu0 0.0
    %5496 = vmatprep.subr.mxu0 0.0
    %5497 = vmatpush1.msra.mxu0 0.0
    %5498 = vmatprep.subr.mxu0 0.0
    %5499 = vmatpush1.msra.mxu0 0.0
    %5500 = vmatprep.subr.mxu0 0.0
    %5501 = vmatpush1.msra.mxu0 0.0
    %5502 = vmatprep.subr.mxu0 0.0
    %5503 = vmatpush1.msra.mxu0 0.0
    %5504 = vmatprep.subr.mxu0 0.0
    %5505 = vmatpush1.msra.mxu0 0.0
    %5506 = vmatprep.subr.mxu0 0.0
    %5507 = vmatpush1.msra.mxu0 0.0
    %5508 = vmatprep.subr.mxu0 0.0
    %5509 = vmatpush1.msra.mxu0 0.0
    %5510 = vmatprep.subr.mxu0 0.0
    %5511 = vmatpush1.msra.mxu0 0.0
    %5512 = vmatprep.subr.mxu0 0.0
    %5513 = vmatpush1.msra.mxu0 0.0
    %5514 = vmatprep.subr.mxu0 0.0
    %5515 = vmatpush1.msra.mxu0 0.0
    %5516 = vmatprep.subr.mxu0 0.0
    %5517 = vmatpush1.msra.mxu0 0.0
    %5518 = vmatprep.subr.mxu0 0.0
    %5519 = vmatpush1.msra.mxu0 0.0
    %5520 = vmatprep.subr.mxu0 0.0
    %5521 = vmatpush1.msra.mxu0 0.0
    %5522 = vmatprep.subr.mxu0 0.0
    %5523 = vmatpush1.msra.mxu0 0.0
    %5524 = vmatprep.mubr.f32.mxu0 0.0
    %5525 = vmatmul.mubr.f32.gmra.mrb[0].mxu0 %v5387
    %v5526 = vpop.f32.mrb[0].mxu0
    %v5527 = vadd.f32 %v3259, %v5526
    %v5528 = vpop.f32.mrb[0].mxu0
    %5529 = vdwg.mxu0
    %5530 = vmatprep.subr.mxu0 %v3031
    %5531 = vmatpush1.msra.mxu0 %v3030
    %5532 = vmatprep.subr.mxu0 %v3034
    %5533 = vmatpush1.msra.mxu0 %v3033
    %5534 = vmatprep.subr.mxu0 %v3037
    %5535 = vmatpush1.msra.mxu0 %v3036
    %5536 = vmatprep.subr.mxu0 %v3040
    %5537 = vmatpush1.msra.mxu0 %v3039
    %5538 = vmatprep.subr.mxu0 %v3043
    %5539 = vmatpush1.msra.mxu0 %v3042
    %5540 = vmatprep.subr.mxu0 %v3046
    %5541 = vmatpush1.msra.mxu0 %v3045
    %5542 = vmatprep.subr.mxu0 %v3049
    %5543 = vmatpush1.msra.mxu0 %v3048
    %5544 = vmatprep.subr.mxu0 %v3052
    %5545 = vmatpush1.msra.mxu0 %v3051
    %5546 = vmatprep.subr.mxu0 %v3055
    %5547 = vmatpush1.msra.mxu0 %v3054
    %5548 = vmatprep.subr.mxu0 %v3058
    %5549 = vmatpush1.msra.mxu0 %v3057
    %5550 = vmatprep.subr.mxu0 %v3061
    %5551 = vmatpush1.msra.mxu0 %v3060
    %5552 = vmatprep.subr.mxu0 %v3064
    %5553 = vmatpush1.msra.mxu0 %v3063
    %5554 = vmatprep.subr.mxu0 %v3067
    %5555 = vmatpush1.msra.mxu0 %v3066
    %5556 = vmatprep.subr.mxu0 %v3070
    %5557 = vmatpush1.msra.mxu0 %v3069
    %5558 = vmatprep.subr.mxu0 %v3073
    %5559 = vmatpush1.msra.mxu0 %v3072
    %5560 = vmatprep.subr.mxu0 %v3076
    %5561 = vmatpush1.msra.mxu0 %v3075
    %5562 = vmatprep.subr.mxu0 0.0
    %5563 = vmatpush1.msra.mxu0 0.0
    %5564 = vmatprep.subr.mxu0 0.0
    %5565 = vmatpush1.msra.mxu0 0.0
    %5566 = vmatprep.subr.mxu0 0.0
    %5567 = vmatpush1.msra.mxu0 0.0
    %5568 = vmatprep.subr.mxu0 0.0
    %5569 = vmatpush1.msra.mxu0 0.0
    %5570 = vmatprep.subr.mxu0 0.0
    %5571 = vmatpush1.msra.mxu0 0.0
    %5572 = vmatprep.subr.mxu0 0.0
    %5573 = vmatpush1.msra.mxu0 0.0
    %5574 = vmatprep.subr.mxu0 0.0
    %5575 = vmatpush1.msra.mxu0 0.0
    %5576 = vmatprep.subr.mxu0 0.0
    %5577 = vmatpush1.msra.mxu0 0.0
    %5578 = vmatprep.subr.mxu0 0.0
    %5579 = vmatpush1.msra.mxu0 0.0
    %5580 = vmatprep.subr.mxu0 0.0
    %5581 = vmatpush1.msra.mxu0 0.0
    %5582 = vmatprep.subr.mxu0 0.0
    %5583 = vmatpush1.msra.mxu0 0.0
    %5584 = vmatprep.subr.mxu0 0.0
    %5585 = vmatpush1.msra.mxu0 0.0
    %5586 = vmatprep.subr.mxu0 0.0
    %5587 = vmatpush1.msra.mxu0 0.0
    %5588 = vmatprep.subr.mxu0 0.0
    %5589 = vmatpush1.msra.mxu0 0.0
    %5590 = vmatprep.subr.mxu0 0.0
    %5591 = vmatpush1.msra.mxu0 0.0
    %5592 = vmatprep.subr.mxu0 0.0
    %5593 = vmatpush1.msra.mxu0 0.0
    %5594 = vmatprep.mubr.f32.mxu0 0.0
    %5595 = vmatmul.mubr.f32.gmra.mrb[0].mxu0 %v5287
    %v5596 = vpop.f32.mrb[0].mxu0
    %v5597 = vadd.f32 %v3083, %v5596
    %v5598 = vpop.f32.mrb[0].mxu0
    %v5599 = vadd.f32 %v3087, %v5598
    %5600 = vdwg.mxu0
    %5601 = vmatprep.subr.mxu0 0.0
    %5602 = vmatpush1.msra.mxu0 %v3032
    %5603 = vmatprep.subr.mxu0 0.0
    %5604 = vmatpush1.msra.mxu0 %v3035
    %5605 = vmatprep.subr.mxu0 0.0
    %5606 = vmatpush1.msra.mxu0 %v3038
    %5607 = vmatprep.subr.mxu0 0.0
    %5608 = vmatpush1.msra.mxu0 %v3041
    %5609 = vmatprep.subr.mxu0 0.0
    %5610 = vmatpush1.msra.mxu0 %v3044
    %5611 = vmatprep.subr.mxu0 0.0
    %5612 = vmatpush1.msra.mxu0 %v3047
    %5613 = vmatprep.subr.mxu0 0.0
    %5614 = vmatpush1.msra.mxu0 %v3050
    %5615 = vmatprep.subr.mxu0 0.0
    %5616 = vmatpush1.msra.mxu0 %v3053
    %5617 = vmatprep.subr.mxu0 0.0
    %5618 = vmatpush1.msra.mxu0 %v3056
    %5619 = vmatprep.subr.mxu0 0.0
    %5620 = vmatpush1.msra.mxu0 %v3059
    %5621 = vmatprep.subr.mxu0 0.0
    %5622 = vmatpush1.msra.mxu0 %v3062
    %5623 = vmatprep.subr.mxu0 0.0
    %5624 = vmatpush1.msra.mxu0 %v3065
    %5625 = vmatprep.subr.mxu0 0.0
    %5626 = vmatpush1.msra.mxu0 %v3068
    %5627 = vmatprep.subr.mxu0 0.0
    %5628 = vmatpush1.msra.mxu0 %v3071
    %5629 = vmatprep.subr.mxu0 0.0
    %5630 = vmatpush1.msra.mxu0 %v3074
    %5631 = vmatprep.subr.mxu0 0.0
    %5632 = vmatpush1.msra.mxu0 %v3077
    %5633 = vmatprep.subr.mxu0 0.0
    %5634 = vmatpush1.msra.mxu0 0.0
    %5635 = vmatprep.subr.mxu0 0.0
    %5636 = vmatpush1.msra.mxu0 0.0
    %5637 = vmatprep.subr.mxu0 0.0
    %5638 = vmatpush1.msra.mxu0 0.0
    %5639 = vmatprep.subr.mxu0 0.0
    %5640 = vmatpush1.msra.mxu0 0.0
    %5641 = vmatprep.subr.mxu0 0.0
    %5642 = vmatpush1.msra.mxu0 0.0
    %5643 = vmatprep.subr.mxu0 0.0
    %5644 = vmatpush1.msra.mxu0 0.0
    %5645 = vmatprep.subr.mxu0 0.0
    %5646 = vmatpush1.msra.mxu0 0.0
    %5647 = vmatprep.subr.mxu0 0.0
    %5648 = vmatpush1.msra.mxu0 0.0
    %5649 = vmatprep.subr.mxu0 0.0
    %5650 = vmatpush1.msra.mxu0 0.0
    %5651 = vmatprep.subr.mxu0 0.0
    %5652 = vmatpush1.msra.mxu0 0.0
    %5653 = vmatprep.subr.mxu0 0.0
    %5654 = vmatpush1.msra.mxu0 0.0
    %5655 = vmatprep.subr.mxu0 0.0
    %5656 = vmatpush1.msra.mxu0 0.0
    %5657 = vmatprep.subr.mxu0 0.0
    %5658 = vmatpush1.msra.mxu0 0.0
    %5659 = vmatprep.subr.mxu0 0.0
    %5660 = vmatpush1.msra.mxu0 0.0
    %5661 = vmatprep.subr.mxu0 0.0
    %5662 = vmatpush1.msra.mxu0 0.0
    %5663 = vmatprep.subr.mxu0 0.0
    %5664 = vmatpush1.msra.mxu0 0.0
    %5665 = vmatprep.mubr.f32.mxu0 0.0
    %5666 = vmatmul.mubr.f32.gmra.mrb[0].mxu0 %v5287
    %v5667 = vpop.f32.mrb[0].mxu0
    %v5668 = vadd.f32 %v3091, %v5667
    %v5669 = vpop.f32.mrb[0].mxu0
    %5670 = vdwg.mxu0
    %v5671 = vadd.f32 %v5456, %v5597
    %v5672 = vxor.u32 %v5671, 2147483648
    %v5673 = vmul.f32 %v5672, 1.442695
    %v5674 = vpow.pop %v5673
    %v5675 = vadd.f32 %v5674, 1.0
    %v5676 = vrcp.pop %v5675
    %v5677 = vmul.f32 1.0, %v5676
    %v5678 = vadd.f32 %v5458, %v5599
    %v5679 = vxor.u32 %v5678, 2147483648
    %v5680 = vmul.f32 %v5679, 1.442695
    %v5681 = vpow.pop %v5680
    %v5682 = vadd.f32 %v5681, 1.0
    %v5683 = vrcp.pop %v5682
    %v5684 = vmul.f32 1.0, %v5683
    %v5685 = vmul.f32 %v5677, %v5668
    %v5686 = vadd.f32 %v5527, %v5685
    %v5687 = vtanh.pop %v5686
    %v5688 = vsub.f32 1.0, %v5684
    %v5689 = vmul.f32 %v5688, %v5687
    %v5690 = vmul.f32 %v5684, %v5287
    %v5691 = vadd.f32 %v5689, %v5690
    %5692 = vmatprep.subr.mxu0 0.0
    %5693 = vmatpush1.msra.mxu0 %v3262
    %5694 = vmatprep.subr.mxu0 0.0
    %5695 = vmatpush1.msra.mxu0 %v3263
    %5696 = vmatprep.subr.mxu0 0.0
    %5697 = vmatpush1.msra.mxu0 %v3264
    %5698 = vmatprep.subr.mxu0 0.0
    %5699 = vmatpush1.msra.mxu0 %v3265
    %5700 = vmatprep.subr.mxu0 0.0
    %5701 = vmatpush1.msra.mxu0 %v3266
    %5702 = vmatprep.subr.mxu0 0.0
    %5703 = vmatpush1.msra.mxu0 %v3267
    %5704 = vmatprep.subr.mxu0 0.0
    %5705 = vmatpush1.msra.mxu0 %v3268
    %5706 = vmatprep.subr.mxu0 0.0
    %5707 = vmatpush1.msra.mxu0 %v3269
    %5708 = vmatprep.subr.mxu0 0.0
    %5709 = vmatpush1.msra.mxu0 %v3270
    %5710 = vmatprep.subr.mxu0 0.0
    %5711 = vmatpush1.msra.mxu0 %v3271
    %5712 = vmatprep.subr.mxu0 0.0
    %5713 = vmatpush1.msra.mxu0 %v3272
    %5714 = vmatprep.subr.mxu0 0.0
    %5715 = vmatpush1.msra.mxu0 %v3273
    %5716 = vmatprep.subr.mxu0 0.0
    %5717 = vmatpush1.msra.mxu0 %v3274
    %5718 = vmatprep.subr.mxu0 0.0
    %5719 = vmatpush1.msra.mxu0 %v3275
    %5720 = vmatprep.subr.mxu0 0.0
    %5721 = vmatpush1.msra.mxu0 %v3276
    %5722 = vmatprep.subr.mxu0 0.0
    %5723 = vmatpush1.msra.mxu0 %v3277
    %5724 = vmatprep.subr.mxu0 0.0
    %5725 = vmatpush1.msra.mxu0 0.0
    %5726 = vmatprep.subr.mxu0 0.0
    %5727 = vmatpush1.msra.mxu0 0.0
    %5728 = vmatprep.subr.mxu0 0.0
    %5729 = vmatpush1.msra.mxu0 0.0
    %5730 = vmatprep.subr.mxu0 0.0
    %5731 = vmatpush1.msra.mxu0 0.0
    %5732 = vmatprep.subr.mxu0 0.0
    %5733 = vmatpush1.msra.mxu0 0.0
    %5734 = vmatprep.subr.mxu0 0.0
    %5735 = vmatpush1.msra.mxu0 0.0
    %5736 = vmatprep.subr.mxu0 0.0
    %5737 = vmatpush1.msra.mxu0 0.0
    %5738 = vmatprep.subr.mxu0 0.0
    %5739 = vmatpush1.msra.mxu0 0.0
    %5740 = vmatprep.subr.mxu0 0.0
    %5741 = vmatpush1.msra.mxu0 0.0
    %5742 = vmatprep.subr.mxu0 0.0
    %5743 = vmatpush1.msra.mxu0 0.0
    %5744 = vmatprep.subr.mxu0 0.0
    %5745 = vmatpush1.msra.mxu0 0.0
    %5746 = vmatprep.subr.mxu0 0.0
    %5747 = vmatpush1.msra.mxu0 0.0
    %5748 = vmatprep.subr.mxu0 0.0
    %5749 = vmatpush1.msra.mxu0 0.0
    %5750 = vmatprep.subr.mxu0 0.0
    %5751 = vmatpush1.msra.mxu0 0.0
    %5752 = vmatprep.subr.mxu0 0.0
    %5753 = vmatpush1.msra.mxu0 0.0
    %5754 = vmatprep.subr.mxu0 0.0
    %5755 = vmatpush1.msra.mxu0 0.0
    %5756 = vmatprep.mubr.f32.mxu0 0.0
    %5757 = vmatmul.mubr.f32.gmra.mrb[0].mxu0 %v5691
    %v5758 = vpop.f32.mrb[0].mxu0
    %v5759 = vadd.f32 %v3283, %v5758
    %v5760 = vpop.f32.mrb[0].mxu0
    %5761 = vdwg.mxu0
    %v5764 = vunpack.c.l.s4 1966171168
    %v5765 = vunpack.c.0.s8 %v5764
    %v5766 = vlaneseq
    %v5767 = vshrl.u32 %v5766, 7
    %v5768 = vsub.s32 %v5765, %v5767
    %v5769 = vrot.slane %v5759, %v5768
    %v5770 = vcombine.high %v5769, %v5769
    %v5772 = vunpack.c.l.s4 1966171168
    %v5773 = vunpack.c.0.s8 %v5772
    %v5774 = vlaneseq
    %v5775 = vshrl.u32 %v5774, 7
    %v5776 = vsub.s32 %v5773, %v5775
    %v5777 = vrot.slane %v5769, %v5776
    %v5779 = vunpack.c.l.s4 1966171168
    %v5780 = vunpack.c.0.s8 %v5779
    %v5781 = vlaneseq
    %v5782 = vshrl.u32 %v5781, 7
    %v5783 = vsub.s32 %v5780, %v5782
    %v5784 = vrot.slane %v5770, %v5783
    %5787 = vst [vmem:[%s71 + $0x5] sm:$0x1] %v5777
    %5788 = vst [vmem:[%s71 + $0xd] sm:$0x1] %v5784
    %v5789 = vld [vmem:[%s2183] sm:$0x3]
    %v5791 = vsel %vm241, %v5789, 0
    %5793 = vmatprep.subr.mxu0 %v3025
    %5794 = vmatpush1.msra.mxu0 %v3024
    %5795 = vmatprep.subr.mxu0 %v3028
    %5796 = vmatpush1.msra.mxu0 %v3027
    %5797 = vmatprep.subr.mxu0 0.0
    %5798 = vmatpush1.msra.mxu0 0.0
    %5799 = vmatprep.subr.mxu0 0.0
    %5800 = vmatpush1.msra.mxu0 0.0
    %5801 = vmatprep.subr.mxu0 0.0
    %5802 = vmatpush1.msra.mxu0 0.0
    %5803 = vmatprep.subr.mxu0 0.0
    %5804 = vmatpush1.msra.mxu0 0.0
    %5805 = vmatprep.subr.mxu0 0.0
    %5806 = vmatpush1.msra.mxu0 0.0
    %5807 = vmatprep.subr.mxu0 0.0
    %5808 = vmatpush1.msra.mxu0 0.0
    %5809 = vmatprep.subr.mxu0 0.0
    %5810 = vmatpush1.msra.mxu0 0.0
    %5811 = vmatprep.subr.mxu0 0.0
    %5812 = vmatpush1.msra.mxu0 0.0
    %5813 = vmatprep.subr.mxu0 0.0
    %5814 = vmatpush1.msra.mxu0 0.0
    %5815 = vmatprep.subr.mxu0 0.0
    %5816 = vmatpush1.msra.mxu0 0.0
    %5817 = vmatprep.subr.mxu0 0.0
    %5818 = vmatpush1.msra.mxu0 0.0
    %5819 = vmatprep.subr.mxu0 0.0
    %5820 = vmatpush1.msra.mxu0 0.0
    %5821 = vmatprep.subr.mxu0 0.0
    %5822 = vmatpush1.msra.mxu0 0.0
    %5823 = vmatprep.subr.mxu0 0.0
    %5824 = vmatpush1.msra.mxu0 0.0
    %5825 = vmatprep.subr.mxu0 0.0
    %5826 = vmatpush1.msra.mxu0 0.0
    %5827 = vmatprep.subr.mxu0 0.0
    %5828 = vmatpush1.msra.mxu0 0.0
    %5829 = vmatprep.subr.mxu0 0.0
    %5830 = vmatpush1.msra.mxu0 0.0
    %5831 = vmatprep.subr.mxu0 0.0
    %5832 = vmatpush1.msra.mxu0 0.0
    %5833 = vmatprep.subr.mxu0 0.0
    %5834 = vmatpush1.msra.mxu0 0.0
    %5835 = vmatprep.subr.mxu0 0.0
    %5836 = vmatpush1.msra.mxu0 0.0
    %5837 = vmatprep.subr.mxu0 0.0
    %5838 = vmatpush1.msra.mxu0 0.0
    %5839 = vmatprep.subr.mxu0 0.0
    %5840 = vmatpush1.msra.mxu0 0.0
    %5841 = vmatprep.subr.mxu0 0.0
    %5842 = vmatpush1.msra.mxu0 0.0
    %5843 = vmatprep.subr.mxu0 0.0
    %5844 = vmatpush1.msra.mxu0 0.0
    %5845 = vmatprep.subr.mxu0 0.0
    %5846 = vmatpush1.msra.mxu0 0.0
    %5847 = vmatprep.subr.mxu0 0.0
    %5848 = vmatpush1.msra.mxu0 0.0
    %5849 = vmatprep.subr.mxu0 0.0
    %5850 = vmatpush1.msra.mxu0 0.0
    %5851 = vmatprep.subr.mxu0 0.0
    %5852 = vmatpush1.msra.mxu0 0.0
    %5853 = vmatprep.subr.mxu0 0.0
    %5854 = vmatpush1.msra.mxu0 0.0
    %5855 = vmatprep.subr.mxu0 0.0
    %5856 = vmatpush1.msra.mxu0 0.0
    %5857 = vmatprep.mubr.f32.mxu0 0.0
    %5858 = vmatmul.mubr.f32.gmra.mrb[0].mxu0 %v5791
    %v5859 = vpop.f32.mrb[0].mxu0
    %v5860 = vadd.f32 %v3188, %v5859
    %v5861 = vpop.f32.mrb[0].mxu0
    %v5862 = vadd.f32 %v3190, %v5861
    %5863 = vdwg.mxu0
    %5864 = vmatprep.subr.mxu0 0.0
    %5865 = vmatpush1.msra.mxu0 %v3026
    %5866 = vmatprep.subr.mxu0 0.0
    %5867 = vmatpush1.msra.mxu0 %v3029
    %5868 = vmatprep.subr.mxu0 0.0
    %5869 = vmatpush1.msra.mxu0 0.0
    %5870 = vmatprep.subr.mxu0 0.0
    %5871 = vmatpush1.msra.mxu0 0.0
    %5872 = vmatprep.subr.mxu0 0.0
    %5873 = vmatpush1.msra.mxu0 0.0
    %5874 = vmatprep.subr.mxu0 0.0
    %5875 = vmatpush1.msra.mxu0 0.0
    %5876 = vmatprep.subr.mxu0 0.0
    %5877 = vmatpush1.msra.mxu0 0.0
    %5878 = vmatprep.subr.mxu0 0.0
    %5879 = vmatpush1.msra.mxu0 0.0
    %5880 = vmatprep.subr.mxu0 0.0
    %5881 = vmatpush1.msra.mxu0 0.0
    %5882 = vmatprep.subr.mxu0 0.0
    %5883 = vmatpush1.msra.mxu0 0.0
    %5884 = vmatprep.subr.mxu0 0.0
    %5885 = vmatpush1.msra.mxu0 0.0
    %5886 = vmatprep.subr.mxu0 0.0
    %5887 = vmatpush1.msra.mxu0 0.0
    %5888 = vmatprep.subr.mxu0 0.0
    %5889 = vmatpush1.msra.mxu0 0.0
    %5890 = vmatprep.subr.mxu0 0.0
    %5891 = vmatpush1.msra.mxu0 0.0
    %5892 = vmatprep.subr.mxu0 0.0
    %5893 = vmatpush1.msra.mxu0 0.0
    %5894 = vmatprep.subr.mxu0 0.0
    %5895 = vmatpush1.msra.mxu0 0.0
    %5896 = vmatprep.subr.mxu0 0.0
    %5897 = vmatpush1.msra.mxu0 0.0
    %5898 = vmatprep.subr.mxu0 0.0
    %5899 = vmatpush1.msra.mxu0 0.0
    %5900 = vmatprep.subr.mxu0 0.0
    %5901 = vmatpush1.msra.mxu0 0.0
    %5902 = vmatprep.subr.mxu0 0.0
    %5903 = vmatpush1.msra.mxu0 0.0
    %5904 = vmatprep.subr.mxu0 0.0
    %5905 = vmatpush1.msra.mxu0 0.0
    %5906 = vmatprep.subr.mxu0 0.0
    %5907 = vmatpush1.msra.mxu0 0.0
    %5908 = vmatprep.subr.mxu0 0.0
    %5909 = vmatpush1.msra.mxu0 0.0
    %5910 = vmatprep.subr.mxu0 0.0
    %5911 = vmatpush1.msra.mxu0 0.0
    %5912 = vmatprep.subr.mxu0 0.0
    %5913 = vmatpush1.msra.mxu0 0.0
    %5914 = vmatprep.subr.mxu0 0.0
    %5915 = vmatpush1.msra.mxu0 0.0
    %5916 = vmatprep.subr.mxu0 0.0
    %5917 = vmatpush1.msra.mxu0 0.0
    %5918 = vmatprep.subr.mxu0 0.0
    %5919 = vmatpush1.msra.mxu0 0.0
    %5920 = vmatprep.subr.mxu0 0.0
    %5921 = vmatpush1.msra.mxu0 0.0
    %5922 = vmatprep.subr.mxu0 0.0
    %5923 = vmatpush1.msra.mxu0 0.0
    %5924 = vmatprep.subr.mxu0 0.0
    %5925 = vmatpush1.msra.mxu0 0.0
    %5926 = vmatprep.subr.mxu0 0.0
    %5927 = vmatpush1.msra.mxu0 0.0
    %5928 = vmatprep.mubr.f32.mxu0 0.0
    %5929 = vmatmul.mubr.f32.gmra.mrb[0].mxu0 %v5791
    %v5930 = vpop.f32.mrb[0].mxu0
    %v5931 = vadd.f32 %v3259, %v5930
    %v5932 = vpop.f32.mrb[0].mxu0
    %5933 = vdwg.mxu0
    %5934 = vmatprep.subr.mxu0 %v3031
    %5935 = vmatpush1.msra.mxu0 %v3030
    %5936 = vmatprep.subr.mxu0 %v3034
    %5937 = vmatpush1.msra.mxu0 %v3033
    %5938 = vmatprep.subr.mxu0 %v3037
    %5939 = vmatpush1.msra.mxu0 %v3036
    %5940 = vmatprep.subr.mxu0 %v3040
    %5941 = vmatpush1.msra.mxu0 %v3039
    %5942 = vmatprep.subr.mxu0 %v3043
    %5943 = vmatpush1.msra.mxu0 %v3042
    %5944 = vmatprep.subr.mxu0 %v3046
    %5945 = vmatpush1.msra.mxu0 %v3045
    %5946 = vmatprep.subr.mxu0 %v3049
    %5947 = vmatpush1.msra.mxu0 %v3048
    %5948 = vmatprep.subr.mxu0 %v3052
    %5949 = vmatpush1.msra.mxu0 %v3051
    %5950 = vmatprep.subr.mxu0 %v3055
    %5951 = vmatpush1.msra.mxu0 %v3054
    %5952 = vmatprep.subr.mxu0 %v3058
    %5953 = vmatpush1.msra.mxu0 %v3057
    %5954 = vmatprep.subr.mxu0 %v3061
    %5955 = vmatpush1.msra.mxu0 %v3060
    %5956 = vmatprep.subr.mxu0 %v3064
    %5957 = vmatpush1.msra.mxu0 %v3063
    %5958 = vmatprep.subr.mxu0 %v3067
    %5959 = vmatpush1.msra.mxu0 %v3066
    %5960 = vmatprep.subr.mxu0 %v3070
    %5961 = vmatpush1.msra.mxu0 %v3069
    %5962 = vmatprep.subr.mxu0 %v3073
    %5963 = vmatpush1.msra.mxu0 %v3072
    %5964 = vmatprep.subr.mxu0 %v3076
    %5965 = vmatpush1.msra.mxu0 %v3075
    %5966 = vmatprep.subr.mxu0 0.0
    %5967 = vmatpush1.msra.mxu0 0.0
    %5968 = vmatprep.subr.mxu0 0.0
    %5969 = vmatpush1.msra.mxu0 0.0
    %5970 = vmatprep.subr.mxu0 0.0
    %5971 = vmatpush1.msra.mxu0 0.0
    %5972 = vmatprep.subr.mxu0 0.0
    %5973 = vmatpush1.msra.mxu0 0.0
    %5974 = vmatprep.subr.mxu0 0.0
    %5975 = vmatpush1.msra.mxu0 0.0
    %5976 = vmatprep.subr.mxu0 0.0
    %5977 = vmatpush1.msra.mxu0 0.0
    %5978 = vmatprep.subr.mxu0 0.0
    %5979 = vmatpush1.msra.mxu0 0.0
    %5980 = vmatprep.subr.mxu0 0.0
    %5981 = vmatpush1.msra.mxu0 0.0
    %5982 = vmatprep.subr.mxu0 0.0
    %5983 = vmatpush1.msra.mxu0 0.0
    %5984 = vmatprep.subr.mxu0 0.0
    %5985 = vmatpush1.msra.mxu0 0.0
    %5986 = vmatprep.subr.mxu0 0.0
    %5987 = vmatpush1.msra.mxu0 0.0
    %5988 = vmatprep.subr.mxu0 0.0
    %5989 = vmatpush1.msra.mxu0 0.0
    %5990 = vmatprep.subr.mxu0 0.0
    %5991 = vmatpush1.msra.mxu0 0.0
    %5992 = vmatprep.subr.mxu0 0.0
    %5993 = vmatpush1.msra.mxu0 0.0
    %5994 = vmatprep.subr.mxu0 0.0
    %5995 = vmatpush1.msra.mxu0 0.0
    %5996 = vmatprep.subr.mxu0 0.0
    %5997 = vmatpush1.msra.mxu0 0.0
    %5998 = vmatprep.mubr.f32.mxu0 0.0
    %5999 = vmatmul.mubr.f32.gmra.mrb[0].mxu0 %v5691
    %v6000 = vpop.f32.mrb[0].mxu0
    %v6001 = vadd.f32 %v3083, %v6000
    %v6002 = vpop.f32.mrb[0].mxu0
    %v6003 = vadd.f32 %v3087, %v6002
    %6004 = vdwg.mxu0
    %6005 = vmatprep.subr.mxu0 0.0
    %6006 = vmatpush1.msra.mxu0 %v3032
    %6007 = vmatprep.subr.mxu0 0.0
    %6008 = vmatpush1.msra.mxu0 %v3035
    %6009 = vmatprep.subr.mxu0 0.0
    %6010 = vmatpush1.msra.mxu0 %v3038
    %6011 = vmatprep.subr.mxu0 0.0
    %6012 = vmatpush1.msra.mxu0 %v3041
    %6013 = vmatprep.subr.mxu0 0.0
    %6014 = vmatpush1.msra.mxu0 %v3044
    %6015 = vmatprep.subr.mxu0 0.0
    %6016 = vmatpush1.msra.mxu0 %v3047
    %6017 = vmatprep.subr.mxu0 0.0
    %6018 = vmatpush1.msra.mxu0 %v3050
    %6019 = vmatprep.subr.mxu0 0.0
    %6020 = vmatpush1.msra.mxu0 %v3053
    %6021 = vmatprep.subr.mxu0 0.0
    %6022 = vmatpush1.msra.mxu0 %v3056
    %6023 = vmatprep.subr.mxu0 0.0
    %6024 = vmatpush1.msra.mxu0 %v3059
    %6025 = vmatprep.subr.mxu0 0.0
    %6026 = vmatpush1.msra.mxu0 %v3062
    %6027 = vmatprep.subr.mxu0 0.0
    %6028 = vmatpush1.msra.mxu0 %v3065
    %6029 = vmatprep.subr.mxu0 0.0
    %6030 = vmatpush1.msra.mxu0 %v3068
    %6031 = vmatprep.subr.mxu0 0.0
    %6032 = vmatpush1.msra.mxu0 %v3071
    %6033 = vmatprep.subr.mxu0 0.0
    %6034 = vmatpush1.msra.mxu0 %v3074
    %6035 = vmatprep.subr.mxu0 0.0
    %6036 = vmatpush1.msra.mxu0 %v3077
    %6037 = vmatprep.subr.mxu0 0.0
    %6038 = vmatpush1.msra.mxu0 0.0
    %6039 = vmatprep.subr.mxu0 0.0
    %6040 = vmatpush1.msra.mxu0 0.0
    %6041 = vmatprep.subr.mxu0 0.0
    %6042 = vmatpush1.msra.mxu0 0.0
    %6043 = vmatprep.subr.mxu0 0.0
    %6044 = vmatpush1.msra.mxu0 0.0
    %6045 = vmatprep.subr.mxu0 0.0
    %6046 = vmatpush1.msra.mxu0 0.0
    %6047 = vmatprep.subr.mxu0 0.0
    %6048 = vmatpush1.msra.mxu0 0.0
    %6049 = vmatprep.subr.mxu0 0.0
    %6050 = vmatpush1.msra.mxu0 0.0
    %6051 = vmatprep.subr.mxu0 0.0
    %6052 = vmatpush1.msra.mxu0 0.0
    %6053 = vmatprep.subr.mxu0 0.0
    %6054 = vmatpush1.msra.mxu0 0.0
    %6055 = vmatprep.subr.mxu0 0.0
    %6056 = vmatpush1.msra.mxu0 0.0
    %6057 = vmatprep.subr.mxu0 0.0
    %6058 = vmatpush1.msra.mxu0 0.0
    %6059 = vmatprep.subr.mxu0 0.0
    %6060 = vmatpush1.msra.mxu0 0.0
    %6061 = vmatprep.subr.mxu0 0.0
    %6062 = vmatpush1.msra.mxu0 0.0
    %6063 = vmatprep.subr.mxu0 0.0
    %6064 = vmatpush1.msra.mxu0 0.0
    %6065 = vmatprep.subr.mxu0 0.0
    %6066 = vmatpush1.msra.mxu0 0.0
    %6067 = vmatprep.subr.mxu0 0.0
    %6068 = vmatpush1.msra.mxu0 0.0
    %6069 = vmatprep.mubr.f32.mxu0 0.0
    %6070 = vmatmul.mubr.f32.gmra.mrb[0].mxu0 %v5691
    %v6071 = vpop.f32.mrb[0].mxu0
    %v6072 = vadd.f32 %v3091, %v6071
    %v6073 = vpop.f32.mrb[0].mxu0
    %6074 = vdwg.mxu0
    %v6075 = vadd.f32 %v5860, %v6001
    %v6076 = vxor.u32 %v6075, 2147483648
    %v6077 = vmul.f32 %v6076, 1.442695
    %v6078 = vpow.pop %v6077
    %v6079 = vadd.f32 %v6078, 1.0
    %v6080 = vrcp.pop %v6079
    %v6081 = vmul.f32 1.0, %v6080
    %v6082 = vadd.f32 %v5862, %v6003
    %v6083 = vxor.u32 %v6082, 2147483648
    %v6084 = vmul.f32 %v6083, 1.442695
    %v6085 = vpow.pop %v6084
    %v6086 = vadd.f32 %v6085, 1.0
    %v6087 = vrcp.pop %v6086
    %v6088 = vmul.f32 1.0, %v6087
    %v6089 = vmul.f32 %v6081, %v6072
    %v6090 = vadd.f32 %v5931, %v6089
    %v6091 = vtanh.pop %v6090
    %v6092 = vsub.f32 1.0, %v6088
    %v6093 = vmul.f32 %v6092, %v6091
    %v6094 = vmul.f32 %v6088, %v5691
    %v6095 = vadd.f32 %v6093, %v6094
    %6096 = vmatprep.subr.mxu0 0.0
    %6097 = vmatpush1.msra.mxu0 %v3262
    %6098 = vmatprep.subr.mxu0 0.0
    %6099 = vmatpush1.msra.mxu0 %v3263
    %6100 = vmatprep.subr.mxu0 0.0
    %6101 = vmatpush1.msra.mxu0 %v3264
    %6102 = vmatprep.subr.mxu0 0.0
    %6103 = vmatpush1.msra.mxu0 %v3265
    %6104 = vmatprep.subr.mxu0 0.0
    %6105 = vmatpush1.msra.mxu0 %v3266
    %6106 = vmatprep.subr.mxu0 0.0
    %6107 = vmatpush1.msra.mxu0 %v3267
    %6108 = vmatprep.subr.mxu0 0.0
    %6109 = vmatpush1.msra.mxu0 %v3268
    %6110 = vmatprep.subr.mxu0 0.0
    %6111 = vmatpush1.msra.mxu0 %v3269
    %6112 = vmatprep.subr.mxu0 0.0
    %6113 = vmatpush1.msra.mxu0 %v3270
    %6114 = vmatprep.subr.mxu0 0.0
    %6115 = vmatpush1.msra.mxu0 %v3271
    %6116 = vmatprep.subr.mxu0 0.0
    %6117 = vmatpush1.msra.mxu0 %v3272
    %6118 = vmatprep.subr.mxu0 0.0
    %6119 = vmatpush1.msra.mxu0 %v3273
    %6120 = vmatprep.subr.mxu0 0.0
    %6121 = vmatpush1.msra.mxu0 %v3274
    %6122 = vmatprep.subr.mxu0 0.0
    %6123 = vmatpush1.msra.mxu0 %v3275
    %6124 = vmatprep.subr.mxu0 0.0
    %6125 = vmatpush1.msra.mxu0 %v3276
    %6126 = vmatprep.subr.mxu0 0.0
    %6127 = vmatpush1.msra.mxu0 %v3277
    %6128 = vmatprep.subr.mxu0 0.0
    %6129 = vmatpush1.msra.mxu0 0.0
    %6130 = vmatprep.subr.mxu0 0.0
    %6131 = vmatpush1.msra.mxu0 0.0
    %6132 = vmatprep.subr.mxu0 0.0
    %6133 = vmatpush1.msra.mxu0 0.0
    %6134 = vmatprep.subr.mxu0 0.0
    %6135 = vmatpush1.msra.mxu0 0.0
    %6136 = vmatprep.subr.mxu0 0.0
    %6137 = vmatpush1.msra.mxu0 0.0
    %6138 = vmatprep.subr.mxu0 0.0
    %6139 = vmatpush1.msra.mxu0 0.0
    %6140 = vmatprep.subr.mxu0 0.0
    %6141 = vmatpush1.msra.mxu0 0.0
    %6142 = vmatprep.subr.mxu0 0.0
    %6143 = vmatpush1.msra.mxu0 0.0
    %6144 = vmatprep.subr.mxu0 0.0
    %6145 = vmatpush1.msra.mxu0 0.0
    %6146 = vmatprep.subr.mxu0 0.0
    %6147 = vmatpush1.msra.mxu0 0.0
    %6148 = vmatprep.subr.mxu0 0.0
    %6149 = vmatpush1.msra.mxu0 0.0
    %6150 = vmatprep.subr.mxu0 0.0
    %6151 = vmatpush1.msra.mxu0 0.0
    %6152 = vmatprep.subr.mxu0 0.0
    %6153 = vmatpush1.msra.mxu0 0.0
    %6154 = vmatprep.subr.mxu0 0.0
    %6155 = vmatpush1.msra.mxu0 0.0
    %6156 = vmatprep.subr.mxu0 0.0
    %6157 = vmatpush1.msra.mxu0 0.0
    %6158 = vmatprep.subr.mxu0 0.0
    %6159 = vmatpush1.msra.mxu0 0.0
    %6160 = vmatprep.mubr.f32.mxu0 0.0
    %6161 = vmatmul.mubr.f32.gmra.mrb[0].mxu0 %v6095
    %v6162 = vpop.f32.mrb[0].mxu0
    %v6163 = vadd.f32 %v3283, %v6162
    %v6164 = vpop.f32.mrb[0].mxu0
    %6165 = vdwg.mxu0
    %v6168 = vunpack.c.l.s4 1966171168
    %v6169 = vunpack.c.0.s8 %v6168
    %v6170 = vlaneseq
    %v6171 = vshrl.u32 %v6170, 7
    %v6172 = vsub.s32 %v6169, %v6171
    %v6173 = vrot.slane %v6163, %v6172
    %v6174 = vcombine.high %v6173, %v6173
    %v6176 = vunpack.c.l.s4 1966171168
    %v6177 = vunpack.c.0.s8 %v6176
    %v6178 = vlaneseq
    %v6179 = vshrl.u32 %v6178, 7
    %v6180 = vsub.s32 %v6177, %v6179
    %v6181 = vrot.slane %v6173, %v6180
    %v6183 = vunpack.c.l.s4 1966171168
    %v6184 = vunpack.c.0.s8 %v6183
    %v6185 = vlaneseq
    %v6186 = vshrl.u32 %v6185, 7
    %v6187 = vsub.s32 %v6184, %v6186
    %v6188 = vrot.slane %v6174, %v6187
    %6191 = vst [vmem:[%s71 + $0x6] sm:$0x1] %v6181
    %6192 = vst [vmem:[%s71 + $0xe] sm:$0x1] %v6188
    %v6193 = vld [vmem:[%s2507] sm:$0x3]
    %v6195 = vsel %vm241, %v6193, 0
    %6197 = vmatprep.subr.mxu0 %v3025
    %6198 = vmatpush1.msra.mxu0 %v3024
    %6199 = vmatprep.subr.mxu0 %v3028
    %6200 = vmatpush1.msra.mxu0 %v3027
    %6201 = vmatprep.subr.mxu0 0.0
    %6202 = vmatpush1.msra.mxu0 0.0
    %6203 = vmatprep.subr.mxu0 0.0
    %6204 = vmatpush1.msra.mxu0 0.0
    %6205 = vmatprep.subr.mxu0 0.0
    %6206 = vmatpush1.msra.mxu0 0.0
    %6207 = vmatprep.subr.mxu0 0.0
    %6208 = vmatpush1.msra.mxu0 0.0
    %6209 = vmatprep.subr.mxu0 0.0
    %6210 = vmatpush1.msra.mxu0 0.0
    %6211 = vmatprep.subr.mxu0 0.0
    %6212 = vmatpush1.msra.mxu0 0.0
    %6213 = vmatprep.subr.mxu0 0.0
    %6214 = vmatpush1.msra.mxu0 0.0
    %6215 = vmatprep.subr.mxu0 0.0
    %6216 = vmatpush1.msra.mxu0 0.0
    %6217 = vmatprep.subr.mxu0 0.0
    %6218 = vmatpush1.msra.mxu0 0.0
    %6219 = vmatprep.subr.mxu0 0.0
    %6220 = vmatpush1.msra.mxu0 0.0
    %6221 = vmatprep.subr.mxu0 0.0
    %6222 = vmatpush1.msra.mxu0 0.0
    %6223 = vmatprep.subr.mxu0 0.0
    %6224 = vmatpush1.msra.mxu0 0.0
    %6225 = vmatprep.subr.mxu0 0.0
    %6226 = vmatpush1.msra.mxu0 0.0
    %6227 = vmatprep.subr.mxu0 0.0
    %6228 = vmatpush1.msra.mxu0 0.0
    %6229 = vmatprep.subr.mxu0 0.0
    %6230 = vmatpush1.msra.mxu0 0.0
    %6231 = vmatprep.subr.mxu0 0.0
    %6232 = vmatpush1.msra.mxu0 0.0
    %6233 = vmatprep.subr.mxu0 0.0
    %6234 = vmatpush1.msra.mxu0 0.0
    %6235 = vmatprep.subr.mxu0 0.0
    %6236 = vmatpush1.msra.mxu0 0.0
    %6237 = vmatprep.subr.mxu0 0.0
    %6238 = vmatpush1.msra.mxu0 0.0
    %6239 = vmatprep.subr.mxu0 0.0
    %6240 = vmatpush1.msra.mxu0 0.0
    %6241 = vmatprep.subr.mxu0 0.0
    %6242 = vmatpush1.msra.mxu0 0.0
    %6243 = vmatprep.subr.mxu0 0.0
    %6244 = vmatpush1.msra.mxu0 0.0
    %6245 = vmatprep.subr.mxu0 0.0
    %6246 = vmatpush1.msra.mxu0 0.0
    %6247 = vmatprep.subr.mxu0 0.0
    %6248 = vmatpush1.msra.mxu0 0.0
    %6249 = vmatprep.subr.mxu0 0.0
    %6250 = vmatpush1.msra.mxu0 0.0
    %6251 = vmatprep.subr.mxu0 0.0
    %6252 = vmatpush1.msra.mxu0 0.0
    %6253 = vmatprep.subr.mxu0 0.0
    %6254 = vmatpush1.msra.mxu0 0.0
    %6255 = vmatprep.subr.mxu0 0.0
    %6256 = vmatpush1.msra.mxu0 0.0
    %6257 = vmatprep.subr.mxu0 0.0
    %6258 = vmatpush1.msra.mxu0 0.0
    %6259 = vmatprep.subr.mxu0 0.0
    %6260 = vmatpush1.msra.mxu0 0.0
    %6261 = vmatprep.mubr.f32.mxu0 0.0
    %6262 = vmatmul.mubr.f32.gmra.mrb[0].mxu0 %v6195
    %v6263 = vpop.f32.mrb[0].mxu0
    %v6264 = vadd.f32 %v3188, %v6263
    %v6265 = vpop.f32.mrb[0].mxu0
    %v6266 = vadd.f32 %v3190, %v6265
    %6267 = vdwg.mxu0
    %6268 = vmatprep.subr.mxu0 0.0
    %6269 = vmatpush1.msra.mxu0 %v3026
    %6270 = vmatprep.subr.mxu0 0.0
    %6271 = vmatpush1.msra.mxu0 %v3029
    %6272 = vmatprep.subr.mxu0 0.0
    %6273 = vmatpush1.msra.mxu0 0.0
    %6274 = vmatprep.subr.mxu0 0.0
    %6275 = vmatpush1.msra.mxu0 0.0
    %6276 = vmatprep.subr.mxu0 0.0
    %6277 = vmatpush1.msra.mxu0 0.0
    %6278 = vmatprep.subr.mxu0 0.0
    %6279 = vmatpush1.msra.mxu0 0.0
    %6280 = vmatprep.subr.mxu0 0.0
    %6281 = vmatpush1.msra.mxu0 0.0
    %6282 = vmatprep.subr.mxu0 0.0
    %6283 = vmatpush1.msra.mxu0 0.0
    %6284 = vmatprep.subr.mxu0 0.0
    %6285 = vmatpush1.msra.mxu0 0.0
    %6286 = vmatprep.subr.mxu0 0.0
    %6287 = vmatpush1.msra.mxu0 0.0
    %6288 = vmatprep.subr.mxu0 0.0
    %6289 = vmatpush1.msra.mxu0 0.0
    %6290 = vmatprep.subr.mxu0 0.0
    %6291 = vmatpush1.msra.mxu0 0.0
    %6292 = vmatprep.subr.mxu0 0.0
    %6293 = vmatpush1.msra.mxu0 0.0
    %6294 = vmatprep.subr.mxu0 0.0
    %6295 = vmatpush1.msra.mxu0 0.0
    %6296 = vmatprep.subr.mxu0 0.0
    %6297 = vmatpush1.msra.mxu0 0.0
    %6298 = vmatprep.subr.mxu0 0.0
    %6299 = vmatpush1.msra.mxu0 0.0
    %6300 = vmatprep.subr.mxu0 0.0
    %6301 = vmatpush1.msra.mxu0 0.0
    %6302 = vmatprep.subr.mxu0 0.0
    %6303 = vmatpush1.msra.mxu0 0.0
    %6304 = vmatprep.subr.mxu0 0.0
    %6305 = vmatpush1.msra.mxu0 0.0
    %6306 = vmatprep.subr.mxu0 0.0
    %6307 = vmatpush1.msra.mxu0 0.0
    %6308 = vmatprep.subr.mxu0 0.0
    %6309 = vmatpush1.msra.mxu0 0.0
    %6310 = vmatprep.subr.mxu0 0.0
    %6311 = vmatpush1.msra.mxu0 0.0
    %6312 = vmatprep.subr.mxu0 0.0
    %6313 = vmatpush1.msra.mxu0 0.0
    %6314 = vmatprep.subr.mxu0 0.0
    %6315 = vmatpush1.msra.mxu0 0.0
    %6316 = vmatprep.subr.mxu0 0.0
    %6317 = vmatpush1.msra.mxu0 0.0
    %6318 = vmatprep.subr.mxu0 0.0
    %6319 = vmatpush1.msra.mxu0 0.0
    %6320 = vmatprep.subr.mxu0 0.0
    %6321 = vmatpush1.msra.mxu0 0.0
    %6322 = vmatprep.subr.mxu0 0.0
    %6323 = vmatpush1.msra.mxu0 0.0
    %6324 = vmatprep.subr.mxu0 0.0
    %6325 = vmatpush1.msra.mxu0 0.0
    %6326 = vmatprep.subr.mxu0 0.0
    %6327 = vmatpush1.msra.mxu0 0.0
    %6328 = vmatprep.subr.mxu0 0.0
    %6329 = vmatpush1.msra.mxu0 0.0
    %6330 = vmatprep.subr.mxu0 0.0
    %6331 = vmatpush1.msra.mxu0 0.0
    %6332 = vmatprep.mubr.f32.mxu0 0.0
    %6333 = vmatmul.mubr.f32.gmra.mrb[0].mxu0 %v6195
    %v6334 = vpop.f32.mrb[0].mxu0
    %v6335 = vadd.f32 %v3259, %v6334
    %v6336 = vpop.f32.mrb[0].mxu0
    %6337 = vdwg.mxu0
    %6338 = vmatprep.subr.mxu0 %v3031
    %6339 = vmatpush1.msra.mxu0 %v3030
    %6340 = vmatprep.subr.mxu0 %v3034
    %6341 = vmatpush1.msra.mxu0 %v3033
    %6342 = vmatprep.subr.mxu0 %v3037
    %6343 = vmatpush1.msra.mxu0 %v3036
    %6344 = vmatprep.subr.mxu0 %v3040
    %6345 = vmatpush1.msra.mxu0 %v3039
    %6346 = vmatprep.subr.mxu0 %v3043
    %6347 = vmatpush1.msra.mxu0 %v3042
    %6348 = vmatprep.subr.mxu0 %v3046
    %6349 = vmatpush1.msra.mxu0 %v3045
    %6350 = vmatprep.subr.mxu0 %v3049
    %6351 = vmatpush1.msra.mxu0 %v3048
    %6352 = vmatprep.subr.mxu0 %v3052
    %6353 = vmatpush1.msra.mxu0 %v3051
    %6354 = vmatprep.subr.mxu0 %v3055
    %6355 = vmatpush1.msra.mxu0 %v3054
    %6356 = vmatprep.subr.mxu0 %v3058
    %6357 = vmatpush1.msra.mxu0 %v3057
    %6358 = vmatprep.subr.mxu0 %v3061
    %6359 = vmatpush1.msra.mxu0 %v3060
    %6360 = vmatprep.subr.mxu0 %v3064
    %6361 = vmatpush1.msra.mxu0 %v3063
    %6362 = vmatprep.subr.mxu0 %v3067
    %6363 = vmatpush1.msra.mxu0 %v3066
    %6364 = vmatprep.subr.mxu0 %v3070
    %6365 = vmatpush1.msra.mxu0 %v3069
    %6366 = vmatprep.subr.mxu0 %v3073
    %6367 = vmatpush1.msra.mxu0 %v3072
    %6368 = vmatprep.subr.mxu0 %v3076
    %6369 = vmatpush1.msra.mxu0 %v3075
    %6370 = vmatprep.subr.mxu0 0.0
    %6371 = vmatpush1.msra.mxu0 0.0
    %6372 = vmatprep.subr.mxu0 0.0
    %6373 = vmatpush1.msra.mxu0 0.0
    %6374 = vmatprep.subr.mxu0 0.0
    %6375 = vmatpush1.msra.mxu0 0.0
    %6376 = vmatprep.subr.mxu0 0.0
    %6377 = vmatpush1.msra.mxu0 0.0
    %6378 = vmatprep.subr.mxu0 0.0
    %6379 = vmatpush1.msra.mxu0 0.0
    %6380 = vmatprep.subr.mxu0 0.0
    %6381 = vmatpush1.msra.mxu0 0.0
    %6382 = vmatprep.subr.mxu0 0.0
    %6383 = vmatpush1.msra.mxu0 0.0
    %6384 = vmatprep.subr.mxu0 0.0
    %6385 = vmatpush1.msra.mxu0 0.0
    %6386 = vmatprep.subr.mxu0 0.0
    %6387 = vmatpush1.msra.mxu0 0.0
    %6388 = vmatprep.subr.mxu0 0.0
    %6389 = vmatpush1.msra.mxu0 0.0
    %6390 = vmatprep.subr.mxu0 0.0
    %6391 = vmatpush1.msra.mxu0 0.0
    %6392 = vmatprep.subr.mxu0 0.0
    %6393 = vmatpush1.msra.mxu0 0.0
    %6394 = vmatprep.subr.mxu0 0.0
    %6395 = vmatpush1.msra.mxu0 0.0
    %6396 = vmatprep.subr.mxu0 0.0
    %6397 = vmatpush1.msra.mxu0 0.0
    %6398 = vmatprep.subr.mxu0 0.0
    %6399 = vmatpush1.msra.mxu0 0.0
    %6400 = vmatprep.subr.mxu0 0.0
    %6401 = vmatpush1.msra.mxu0 0.0
    %6402 = vmatprep.mubr.f32.mxu0 0.0
    %6403 = vmatmul.mubr.f32.gmra.mrb[0].mxu0 %v6095
    %v6404 = vpop.f32.mrb[0].mxu0
    %v6405 = vadd.f32 %v3083, %v6404
    %v6406 = vpop.f32.mrb[0].mxu0
    %v6407 = vadd.f32 %v3087, %v6406
    %6408 = vdwg.mxu0
    %6409 = vmatprep.subr.mxu0 0.0
    %6410 = vmatpush1.msra.mxu0 %v3032
    %6411 = vmatprep.subr.mxu0 0.0
    %6412 = vmatpush1.msra.mxu0 %v3035
    %6413 = vmatprep.subr.mxu0 0.0
    %6414 = vmatpush1.msra.mxu0 %v3038
    %6415 = vmatprep.subr.mxu0 0.0
    %6416 = vmatpush1.msra.mxu0 %v3041
    %6417 = vmatprep.subr.mxu0 0.0
    %6418 = vmatpush1.msra.mxu0 %v3044
    %6419 = vmatprep.subr.mxu0 0.0
    %6420 = vmatpush1.msra.mxu0 %v3047
    %6421 = vmatprep.subr.mxu0 0.0
    %6422 = vmatpush1.msra.mxu0 %v3050
    %6423 = vmatprep.subr.mxu0 0.0
    %6424 = vmatpush1.msra.mxu0 %v3053
    %6425 = vmatprep.subr.mxu0 0.0
    %6426 = vmatpush1.msra.mxu0 %v3056
    %6427 = vmatprep.subr.mxu0 0.0
    %6428 = vmatpush1.msra.mxu0 %v3059
    %6429 = vmatprep.subr.mxu0 0.0
    %6430 = vmatpush1.msra.mxu0 %v3062
    %6431 = vmatprep.subr.mxu0 0.0
    %6432 = vmatpush1.msra.mxu0 %v3065
    %6433 = vmatprep.subr.mxu0 0.0
    %6434 = vmatpush1.msra.mxu0 %v3068
    %6435 = vmatprep.subr.mxu0 0.0
    %6436 = vmatpush1.msra.mxu0 %v3071
    %6437 = vmatprep.subr.mxu0 0.0
    %6438 = vmatpush1.msra.mxu0 %v3074
    %6439 = vmatprep.subr.mxu0 0.0
    %6440 = vmatpush1.msra.mxu0 %v3077
    %6441 = vmatprep.subr.mxu0 0.0
    %6442 = vmatpush1.msra.mxu0 0.0
    %6443 = vmatprep.subr.mxu0 0.0
    %6444 = vmatpush1.msra.mxu0 0.0
    %6445 = vmatprep.subr.mxu0 0.0
    %6446 = vmatpush1.msra.mxu0 0.0
    %6447 = vmatprep.subr.mxu0 0.0
    %6448 = vmatpush1.msra.mxu0 0.0
    %6449 = vmatprep.subr.mxu0 0.0
    %6450 = vmatpush1.msra.mxu0 0.0
    %6451 = vmatprep.subr.mxu0 0.0
    %6452 = vmatpush1.msra.mxu0 0.0
    %6453 = vmatprep.subr.mxu0 0.0
    %6454 = vmatpush1.msra.mxu0 0.0
    %6455 = vmatprep.subr.mxu0 0.0
    %6456 = vmatpush1.msra.mxu0 0.0
    %6457 = vmatprep.subr.mxu0 0.0
    %6458 = vmatpush1.msra.mxu0 0.0
    %6459 = vmatprep.subr.mxu0 0.0
    %6460 = vmatpush1.msra.mxu0 0.0
    %6461 = vmatprep.subr.mxu0 0.0
    %6462 = vmatpush1.msra.mxu0 0.0
    %6463 = vmatprep.subr.mxu0 0.0
    %6464 = vmatpush1.msra.mxu0 0.0
    %6465 = vmatprep.subr.mxu0 0.0
    %6466 = vmatpush1.msra.mxu0 0.0
    %6467 = vmatprep.subr.mxu0 0.0
    %6468 = vmatpush1.msra.mxu0 0.0
    %6469 = vmatprep.subr.mxu0 0.0
    %6470 = vmatpush1.msra.mxu0 0.0
    %6471 = vmatprep.subr.mxu0 0.0
    %6472 = vmatpush1.msra.mxu0 0.0
    %6473 = vmatprep.mubr.f32.mxu0 0.0
    %6474 = vmatmul.mubr.f32.gmra.mrb[0].mxu0 %v6095
    %v6475 = vpop.f32.mrb[0].mxu0
    %v6476 = vadd.f32 %v3091, %v6475
    %v6477 = vpop.f32.mrb[0].mxu0
    %6478 = vdwg.mxu0
    %v6479 = vadd.f32 %v6264, %v6405
    %v6480 = vxor.u32 %v6479, 2147483648
    %v6481 = vmul.f32 %v6480, 1.442695
    %v6482 = vpow.pop %v6481
    %v6483 = vadd.f32 %v6482, 1.0
    %v6484 = vrcp.pop %v6483
    %v6485 = vmul.f32 1.0, %v6484
    %v6486 = vadd.f32 %v6266, %v6407
    %v6487 = vxor.u32 %v6486, 2147483648
    %v6488 = vmul.f32 %v6487, 1.442695
    %v6489 = vpow.pop %v6488
    %v6490 = vadd.f32 %v6489, 1.0
    %v6491 = vrcp.pop %v6490
    %v6492 = vmul.f32 1.0, %v6491
    %v6493 = vmul.f32 %v6485, %v6476
    %v6494 = vadd.f32 %v6335, %v6493
    %v6495 = vtanh.pop %v6494
    %v6496 = vsub.f32 1.0, %v6492
    %v6497 = vmul.f32 %v6496, %v6495
    %v6498 = vmul.f32 %v6492, %v6095
    %v6499 = vadd.f32 %v6497, %v6498
    %6500 = vmatprep.subr.mxu0 0.0
    %6501 = vmatpush1.msra.mxu0 %v3262
    %6502 = vmatprep.subr.mxu0 0.0
    %6503 = vmatpush1.msra.mxu0 %v3263
    %6504 = vmatprep.subr.mxu0 0.0
    %6505 = vmatpush1.msra.mxu0 %v3264
    %6506 = vmatprep.subr.mxu0 0.0
    %6507 = vmatpush1.msra.mxu0 %v3265
    %6508 = vmatprep.subr.mxu0 0.0
    %6509 = vmatpush1.msra.mxu0 %v3266
    %6510 = vmatprep.subr.mxu0 0.0
    %6511 = vmatpush1.msra.mxu0 %v3267
    %6512 = vmatprep.subr.mxu0 0.0
    %6513 = vmatpush1.msra.mxu0 %v3268
    %6514 = vmatprep.subr.mxu0 0.0
    %6515 = vmatpush1.msra.mxu0 %v3269
    %6516 = vmatprep.subr.mxu0 0.0
    %6517 = vmatpush1.msra.mxu0 %v3270
    %6518 = vmatprep.subr.mxu0 0.0
    %6519 = vmatpush1.msra.mxu0 %v3271
    %6520 = vmatprep.subr.mxu0 0.0
    %6521 = vmatpush1.msra.mxu0 %v3272
    %6522 = vmatprep.subr.mxu0 0.0
    %6523 = vmatpush1.msra.mxu0 %v3273
    %6524 = vmatprep.subr.mxu0 0.0
    %6525 = vmatpush1.msra.mxu0 %v3274
    %6526 = vmatprep.subr.mxu0 0.0
    %6527 = vmatpush1.msra.mxu0 %v3275
    %6528 = vmatprep.subr.mxu0 0.0
    %6529 = vmatpush1.msra.mxu0 %v3276
    %6530 = vmatprep.subr.mxu0 0.0
    %6531 = vmatpush1.msra.mxu0 %v3277
    %6532 = vmatprep.subr.mxu0 0.0
    %6533 = vmatpush1.msra.mxu0 0.0
    %6534 = vmatprep.subr.mxu0 0.0
    %6535 = vmatpush1.msra.mxu0 0.0
    %6536 = vmatprep.subr.mxu0 0.0
    %6537 = vmatpush1.msra.mxu0 0.0
    %6538 = vmatprep.subr.mxu0 0.0
    %6539 = vmatpush1.msra.mxu0 0.0
    %6540 = vmatprep.subr.mxu0 0.0
    %6541 = vmatpush1.msra.mxu0 0.0
    %6542 = vmatprep.subr.mxu0 0.0
    %6543 = vmatpush1.msra.mxu0 0.0
    %6544 = vmatprep.subr.mxu0 0.0
    %6545 = vmatpush1.msra.mxu0 0.0
    %6546 = vmatprep.subr.mxu0 0.0
    %6547 = vmatpush1.msra.mxu0 0.0
    %6548 = vmatprep.subr.mxu0 0.0
    %6549 = vmatpush1.msra.mxu0 0.0
    %6550 = vmatprep.subr.mxu0 0.0
    %6551 = vmatpush1.msra.mxu0 0.0
    %6552 = vmatprep.subr.mxu0 0.0
    %6553 = vmatpush1.msra.mxu0 0.0
    %6554 = vmatprep.subr.mxu0 0.0
    %6555 = vmatpush1.msra.mxu0 0.0
    %6556 = vmatprep.subr.mxu0 0.0
    %6557 = vmatpush1.msra.mxu0 0.0
    %6558 = vmatprep.subr.mxu0 0.0
    %6559 = vmatpush1.msra.mxu0 0.0
    %6560 = vmatprep.subr.mxu0 0.0
    %6561 = vmatpush1.msra.mxu0 0.0
    %6562 = vmatprep.subr.mxu0 0.0
    %6563 = vmatpush1.msra.mxu0 0.0
    %6564 = vmatprep.mubr.f32.mxu0 0.0
    %6565 = vmatmul.mubr.f32.gmra.mrb[0].mxu0 %v6499
    %v6566 = vpop.f32.mrb[0].mxu0
    %v6567 = vadd.f32 %v3283, %v6566
    %v6568 = vpop.f32.mrb[0].mxu0
    %6569 = vdwg.mxu0
    %v6572 = vunpack.c.l.s4 1966171168
    %v6573 = vunpack.c.0.s8 %v6572
    %v6574 = vlaneseq
    %v6575 = vshrl.u32 %v6574, 7
    %v6576 = vsub.s32 %v6573, %v6575
    %v6577 = vrot.slane %v6567, %v6576
    %v6578 = vcombine.high %v6577, %v6577
    %v6580 = vunpack.c.l.s4 1966171168
    %v6581 = vunpack.c.0.s8 %v6580
    %v6582 = vlaneseq
    %v6583 = vshrl.u32 %v6582, 7
    %v6584 = vsub.s32 %v6581, %v6583
    %v6585 = vrot.slane %v6577, %v6584
    %v6587 = vunpack.c.l.s4 1966171168
    %v6588 = vunpack.c.0.s8 %v6587
    %v6589 = vlaneseq
    %v6590 = vshrl.u32 %v6589, 7
    %v6591 = vsub.s32 %v6588, %v6590
    %v6592 = vrot.slane %v6578, %v6591
    %6595 = vst [vmem:[%s71 + $0x7] sm:$0x1] %v6585
    %6596 = vst [vmem:[%s71 + $0xf] sm:$0x1] %v6592
    %v6597 = vld [vmem:[%s7] sm:$0xf]
    %vm6598 = vcmask 15360
    %v6600 = vsel %vm6598, %v6597, 0
    %vm6602 = vcmask 1041408
    %v6603 = vsel %vm6602, %v3021, 0
    %6605 = vmatprep.subr.mxu0 0.0
    %6606 = vmatpush1.msra.mxu0 %v6603
    %6607 = vmatprep.subr.mxu0 0.0
    %6608 = vmatpush1.msra.mxu0 0.0
    %6609 = vmatprep.subr.mxu0 0.0
    %6610 = vmatpush1.msra.mxu0 0.0
    %6611 = vmatprep.subr.mxu0 0.0
    %6612 = vmatpush1.msra.mxu0 0.0
    %6613 = vmatprep.subr.mxu0 0.0
    %6614 = vmatpush1.msra.mxu0 0.0
    %6615 = vmatprep.subr.mxu0 0.0
    %6616 = vmatpush1.msra.mxu0 0.0
    %6617 = vmatprep.subr.mxu0 0.0
    %6618 = vmatpush1.msra.mxu0 0.0
    %6619 = vmatprep.subr.mxu0 0.0
    %6620 = vmatpush1.msra.mxu0 0.0
    %6621 = vmatprep.subr.mxu0 0.0
    %6622 = vmatpush1.msra.mxu0 0.0
    %6623 = vmatprep.subr.mxu0 0.0
    %6624 = vmatpush1.msra.mxu0 0.0
    %6625 = vmatprep.subr.mxu0 0.0
    %6626 = vmatpush1.msra.mxu0 0.0
    %6627 = vmatprep.subr.mxu0 0.0
    %6628 = vmatpush1.msra.mxu0 0.0
    %6629 = vmatprep.subr.mxu0 0.0
    %6630 = vmatpush1.msra.mxu0 0.0
    %6631 = vmatprep.subr.mxu0 0.0
    %6632 = vmatpush1.msra.mxu0 0.0
    %6633 = vmatprep.subr.mxu0 0.0
    %6634 = vmatpush1.msra.mxu0 0.0
    %6635 = vmatprep.subr.mxu0 0.0
    %6636 = vmatpush1.msra.mxu0 0.0
    %6637 = vmatprep.subr.mxu0 0.0
    %6638 = vmatpush1.msra.mxu0 0.0
    %6639 = vmatprep.subr.mxu0 0.0
    %6640 = vmatpush1.msra.mxu0 0.0
    %6641 = vmatprep.subr.mxu0 0.0
    %6642 = vmatpush1.msra.mxu0 0.0
    %6643 = vmatprep.subr.mxu0 0.0
    %6644 = vmatpush1.msra.mxu0 0.0
    %6645 = vmatprep.subr.mxu0 0.0
    %6646 = vmatpush1.msra.mxu0 0.0
    %6647 = vmatprep.subr.mxu0 0.0
    %6648 = vmatpush1.msra.mxu0 0.0
    %6649 = vmatprep.subr.mxu0 0.0
    %6650 = vmatpush1.msra.mxu0 0.0
    %6651 = vmatprep.subr.mxu0 0.0
    %6652 = vmatpush1.msra.mxu0 0.0
    %6653 = vmatprep.subr.mxu0 0.0
    %6654 = vmatpush1.msra.mxu0 0.0
    %6655 = vmatprep.subr.mxu0 0.0
    %6656 = vmatpush1.msra.mxu0 0.0
    %6657 = vmatprep.subr.mxu0 0.0
    %6658 = vmatpush1.msra.mxu0 0.0
    %6659 = vmatprep.subr.mxu0 0.0
    %6660 = vmatpush1.msra.mxu0 0.0
    %6661 = vmatprep.subr.mxu0 0.0
    %6662 = vmatpush1.msra.mxu0 0.0
    %6663 = vmatprep.subr.mxu0 0.0
    %6664 = vmatpush1.msra.mxu0 0.0
    %6665 = vmatprep.subr.mxu0 0.0
    %6666 = vmatpush1.msra.mxu0 0.0
    %6667 = vmatprep.subr.mxu0 0.0
    %6668 = vmatpush1.msra.mxu0 0.0
    %6669 = vmatprep.mubr.f32.mxu0 0.0
    %6670 = vmatmul.mubr.f32.gmra.mrb[0].mxu0 %v6600
    %v6671 = vpop.f32.mrb[0].mxu0
    %v6672 = vadd.f32 0.0, %v6671
    %v6673 = vpop.f32.mrb[0].mxu0
    %6674 = vdwg.mxu0
    %v6675 = vld [vmem:[%s9] sm:$0xff]
    %v6676 = vld [vmem:[%s9 + $0x8] sm:$0xff]
    %v6677 = vld [vmem:[%s47] sm:$0xff]
    %v6678 = vld [vmem:[%s47 + $0x8] sm:$0xff]
    %v6679 = vld [vmem:[%s47 + $0x10] sm:$0xff]
    %v6680 = vld [vmem:[%s47 + $0x18] sm:$0xff]
    %v6681 = vld [vmem:[%s47 + $0x20] sm:$0xff]
    %v6682 = vld [vmem:[%s47 + $0x28] sm:$0xff]
    %v6683 = vld [vmem:[%s47 + $0x30] sm:$0xff]
    %v6684 = vld [vmem:[%s47 + $0x38] sm:$0xff]
    %v6685 = vld [vmem:[%s47 + $0x40] sm:$0xff]
    %v6686 = vld [vmem:[%s47 + $0x48] sm:$0xff]
    %v6687 = vld [vmem:[%s47 + $0x50] sm:$0xff]
    %v6688 = vld [vmem:[%s47 + $0x58] sm:$0xff]
    %v6689 = vld [vmem:[%s47 + $0x60] sm:$0xff]
    %v6690 = vld [vmem:[%s47 + $0x68] sm:$0xff]
    %v6691 = vld [vmem:[%s47 + $0x70] sm:$0xff]
    %v6692 = vld [vmem:[%s47 + $0x78] sm:$0xff]
    %v6693 = vld [vmem:[%s47 + $0x80] sm:$0xff]
    %v6694 = vld [vmem:[%s47 + $0x88] sm:$0xff]
    %v6695 = vld [vmem:[%s47 + $0x90] sm:$0xff]
    %v6696 = vld [vmem:[%s47 + $0x98] sm:$0xff]
    %v6697 = vld [vmem:[%s47 + $0xa0] sm:$0xff]
    %v6698 = vld [vmem:[%s47 + $0xa8] sm:$0xff]
    %v6699 = vld [vmem:[%s47 + $0xb0] sm:$0xff]
    %v6700 = vld [vmem:[%s47 + $0xb8] sm:$0xff]
    %v6701 = vld [vmem:[%s47 + $0xc0] sm:$0xff]
    %v6702 = vld [vmem:[%s47 + $0xc8] sm:$0xff]
    %v6703 = vld [vmem:[%s47 + $0xd0] sm:$0xff]
    %v6704 = vld [vmem:[%s47 + $0xd8] sm:$0xff]
    %v6705 = vld [vmem:[%s47 + $0xe0] sm:$0xff]
    %v6706 = vld [vmem:[%s47 + $0xe8] sm:$0xff]
    %v6707 = vld [vmem:[%s47 + $0xf0] sm:$0xff]
    %v6708 = vld [vmem:[%s47 + $0xf8] sm:$0xff]
    %v6709 = vld [vmem:[%s47 + $0x100] sm:$0xff]
    %v6710 = vld [vmem:[%s47 + $0x108] sm:$0xff]
    %v6711 = vld [vmem:[%s47 + $0x110] sm:$0xff]
    %v6712 = vld [vmem:[%s47 + $0x118] sm:$0xff]
    %v6713 = vld [vmem:[%s47 + $0x120] sm:$0xff]
    %v6714 = vld [vmem:[%s47 + $0x128] sm:$0xff]
    %v6715 = vld [vmem:[%s47 + $0x130] sm:$0xff]
    %v6716 = vld [vmem:[%s47 + $0x138] sm:$0xff]
    %v6717 = vld [vmem:[%s47 + $0x140] sm:$0xff]
    %v6718 = vld [vmem:[%s47 + $0x148] sm:$0xff]
    %v6719 = vld [vmem:[%s47 + $0x150] sm:$0xff]
    %v6720 = vld [vmem:[%s47 + $0x158] sm:$0xff]
    %v6721 = vld [vmem:[%s47 + $0x160] sm:$0xff]
    %v6722 = vld [vmem:[%s47 + $0x168] sm:$0xff]
    %v6723 = vld [vmem:[%s47 + $0x170] sm:$0xff]
    %v6724 = vld [vmem:[%s47 + $0x178] sm:$0xff]
    %v6725 = vld [vmem:[%s47 + $0x180] sm:$0xff]
    %v6726 = vld [vmem:[%s47 + $0x188] sm:$0xff]
    %v6727 = vld [vmem:[%s47 + $0x190] sm:$0xff]
    %v6728 = vld [vmem:[%s47 + $0x198] sm:$0xff]
    %v6729 = vld [vmem:[%s47 + $0x1a0] sm:$0xff]
    %v6730 = vld [vmem:[%s47 + $0x1a8] sm:$0xff]
    %v6731 = vld [vmem:[%s47 + $0x1b0] sm:$0xff]
    %v6732 = vld [vmem:[%s47 + $0x1b8] sm:$0xff]
    %v6733 = vld [vmem:[%s47 + $0x1c0] sm:$0xff]
    %v6734 = vld [vmem:[%s47 + $0x1c8] sm:$0xff]
    %v6735 = vld [vmem:[%s47 + $0x1d0] sm:$0xff]
    %v6736 = vld [vmem:[%s47 + $0x1d8] sm:$0xff]
    %v6737 = vld [vmem:[%s47 + $0x1e0] sm:$0xff]
    %v6738 = vld [vmem:[%s47 + $0x1e8] sm:$0xff]
    %v6739 = vld [vmem:[%s47 + $0x1f0] sm:$0xff]
    %v6740 = vld [vmem:[%s47 + $0x1f8] sm:$0xff]
    %v6741 = vld [vmem:[%s49] sm:$0x1]
    %v6743 = vlaneseq
    %v6744 = vshrl.u32 %v6743, 7
    %v6745 = vsub.s32 0, %v6744
    %v6746 = vrot.slane %v6741, %v6745
    %v6750 = vcombine.high %v6675, %v6675
    %v6751 = vcombine.high %v6676, %v6676
    %6754 = vmatprep.subr.mxu0 0.0
    %6755 = vmatpush1.msra.mxu0 %v6677
    %6756 = vmatprep.subr.mxu0 0.0
    %6757 = vmatpush1.msra.mxu0 %v6678
    %6758 = vmatprep.subr.mxu0 0.0
    %6759 = vmatpush1.msra.mxu0 %v6679
    %6760 = vmatprep.subr.mxu0 0.0
    %6761 = vmatpush1.msra.mxu0 %v6680
    %6762 = vmatprep.subr.mxu0 0.0
    %6763 = vmatpush1.msra.mxu0 %v6681
    %6764 = vmatprep.subr.mxu0 0.0
    %6765 = vmatpush1.msra.mxu0 %v6682
    %6766 = vmatprep.subr.mxu0 0.0
    %6767 = vmatpush1.msra.mxu0 %v6683
    %6768 = vmatprep.subr.mxu0 0.0
    %6769 = vmatpush1.msra.mxu0 %v6684
    %6770 = vmatprep.subr.mxu0 0.0
    %6771 = vmatpush1.msra.mxu0 %v6685
    %6772 = vmatprep.subr.mxu0 0.0
    %6773 = vmatpush1.msra.mxu0 %v6686
    %6774 = vmatprep.subr.mxu0 0.0
    %6775 = vmatpush1.msra.mxu0 %v6687
    %6776 = vmatprep.subr.mxu0 0.0
    %6777 = vmatpush1.msra.mxu0 %v6688
    %6778 = vmatprep.subr.mxu0 0.0
    %6779 = vmatpush1.msra.mxu0 %v6689
    %6780 = vmatprep.subr.mxu0 0.0
    %6781 = vmatpush1.msra.mxu0 %v6690
    %6782 = vmatprep.subr.mxu0 0.0
    %6783 = vmatpush1.msra.mxu0 %v6691
    %6784 = vmatprep.subr.mxu0 0.0
    %6785 = vmatpush1.msra.mxu0 %v6692
    %6786 = vmatprep.subr.mxu0 0.0
    %6787 = vmatpush1.msra.mxu0 %v6693
    %6788 = vmatprep.subr.mxu0 0.0
    %6789 = vmatpush1.msra.mxu0 %v6694
    %6790 = vmatprep.subr.mxu0 0.0
    %6791 = vmatpush1.msra.mxu0 %v6695
    %6792 = vmatprep.subr.mxu0 0.0
    %6793 = vmatpush1.msra.mxu0 %v6696
    %6794 = vmatprep.subr.mxu0 0.0
    %6795 = vmatpush1.msra.mxu0 %v6697
    %6796 = vmatprep.subr.mxu0 0.0
    %6797 = vmatpush1.msra.mxu0 %v6698
    %6798 = vmatprep.subr.mxu0 0.0
    %6799 = vmatpush1.msra.mxu0 %v6699
    %6800 = vmatprep.subr.mxu0 0.0
    %6801 = vmatpush1.msra.mxu0 %v6700
    %6802 = vmatprep.subr.mxu0 0.0
    %6803 = vmatpush1.msra.mxu0 %v6701
    %6804 = vmatprep.subr.mxu0 0.0
    %6805 = vmatpush1.msra.mxu0 %v6702
    %6806 = vmatprep.subr.mxu0 0.0
    %6807 = vmatpush1.msra.mxu0 %v6703
    %6808 = vmatprep.subr.mxu0 0.0
    %6809 = vmatpush1.msra.mxu0 %v6704
    %6810 = vmatprep.subr.mxu0 0.0
    %6811 = vmatpush1.msra.mxu0 %v6705
    %6812 = vmatprep.subr.mxu0 0.0
    %6813 = vmatpush1.msra.mxu0 %v6706
    %6814 = vmatprep.subr.mxu0 0.0
    %6815 = vmatpush1.msra.mxu0 %v6707
    %6816 = vmatprep.subr.mxu0 0.0
    %6817 = vmatpush1.msra.mxu0 %v6708
    %6818 = vmatprep.mubr.f32.mxu0 %v6750
    %6819 = vmatmul.mubr.f32.gmra.mrb[0].mxu0 %v6675
    %v6820 = vpop.f32.mrb[0].mxu0
    %v6821 = vadd.f32 %v6746, %v6820
    %v6822 = vpop.f32.mrb[0].mxu0
    %6823 = vdwg.mxu0
    %6824 = vmatprep.subr.mxu0 0.0
    %6825 = vmatpush1.msra.mxu0 %v6709
    %6826 = vmatprep.subr.mxu0 0.0
    %6827 = vmatpush1.msra.mxu0 %v6710
    %6828 = vmatprep.subr.mxu0 0.0
    %6829 = vmatpush1.msra.mxu0 %v6711
    %6830 = vmatprep.subr.mxu0 0.0
    %6831 = vmatpush1.msra.mxu0 %v6712
    %6832 = vmatprep.subr.mxu0 0.0
    %6833 = vmatpush1.msra.mxu0 %v6713
    %6834 = vmatprep.subr.mxu0 0.0
    %6835 = vmatpush1.msra.mxu0 %v6714
    %6836 = vmatprep.subr.mxu0 0.0
    %6837 = vmatpush1.msra.mxu0 %v6715
    %6838 = vmatprep.subr.mxu0 0.0
    %6839 = vmatpush1.msra.mxu0 %v6716
    %6840 = vmatprep.subr.mxu0 0.0
    %6841 = vmatpush1.msra.mxu0 %v6717
    %6842 = vmatprep.subr.mxu0 0.0
    %6843 = vmatpush1.msra.mxu0 %v6718
    %6844 = vmatprep.subr.mxu0 0.0
    %6845 = vmatpush1.msra.mxu0 %v6719
    %6846 = vmatprep.subr.mxu0 0.0
    %6847 = vmatpush1.msra.mxu0 %v6720
    %6848 = vmatprep.subr.mxu0 0.0
    %6849 = vmatpush1.msra.mxu0 %v6721
    %6850 = vmatprep.subr.mxu0 0.0
    %6851 = vmatpush1.msra.mxu0 %v6722
    %6852 = vmatprep.subr.mxu0 0.0
    %6853 = vmatpush1.msra.mxu0 %v6723
    %6854 = vmatprep.subr.mxu0 0.0
    %6855 = vmatpush1.msra.mxu0 %v6724
    %6856 = vmatprep.subr.mxu0 0.0
    %6857 = vmatpush1.msra.mxu0 %v6725
    %6858 = vmatprep.subr.mxu0 0.0
    %6859 = vmatpush1.msra.mxu0 %v6726
    %6860 = vmatprep.subr.mxu0 0.0
    %6861 = vmatpush1.msra.mxu0 %v6727
    %6862 = vmatprep.subr.mxu0 0.0
    %6863 = vmatpush1.msra.mxu0 %v6728
    %6864 = vmatprep.subr.mxu0 0.0
    %6865 = vmatpush1.msra.mxu0 %v6729
    %6866 = vmatprep.subr.mxu0 0.0
    %6867 = vmatpush1.msra.mxu0 %v6730
    %6868 = vmatprep.subr.mxu0 0.0
    %6869 = vmatpush1.msra.mxu0 %v6731
    %6870 = vmatprep.subr.mxu0 0.0
    %6871 = vmatpush1.msra.mxu0 %v6732
    %6872 = vmatprep.subr.mxu0 0.0
    %6873 = vmatpush1.msra.mxu0 %v6733
    %6874 = vmatprep.subr.mxu0 0.0
    %6875 = vmatpush1.msra.mxu0 %v6734
    %6876 = vmatprep.subr.mxu0 0.0
    %6877 = vmatpush1.msra.mxu0 %v6735
    %6878 = vmatprep.subr.mxu0 0.0
    %6879 = vmatpush1.msra.mxu0 %v6736
    %6880 = vmatprep.subr.mxu0 0.0
    %6881 = vmatpush1.msra.mxu0 %v6737
    %6882 = vmatprep.subr.mxu0 0.0
    %6883 = vmatpush1.msra.mxu0 %v6738
    %6884 = vmatprep.subr.mxu0 0.0
    %6885 = vmatpush1.msra.mxu0 %v6739
    %6886 = vmatprep.subr.mxu0 0.0
    %6887 = vmatpush1.msra.mxu0 %v6740
    %6888 = vmatprep.mubr.f32.mxu0 %v6751
    %6889 = vmatmul.mubr.f32.gmra.mrb[0].mxu0 %v6676
    %v6890 = vpop.f32.mrb[0].mxu0
    %v6891 = vadd.f32 %v6821, %v6890
    %v6892 = vpop.f32.mrb[0].mxu0
    %6893 = vdwg.mxu0
    %v6894 = vtanh.pop %v6891
    %v6895 = vld [vmem:[%s51] sm:$0x3f]
    %v6896 = vld [vmem:[%s51 + $0x8] sm:$0x3f]
    %v6897 = vld [vmem:[%s51 + $0x10] sm:$0x3f]
    %v6898 = vld [vmem:[%s57] sm:$0xff]
    %v6899 = vld [vmem:[%s57 + $0x8] sm:$0xff]
    %v6900 = vld [vmem:[%s57 + $0x10] sm:$0xff]
    %v6901 = vld [vmem:[%s57 + $0x18] sm:$0xff]
    %v6902 = vld [vmem:[%s57 + $0x20] sm:$0xff]
    %v6903 = vld [vmem:[%s57 + $0x28] sm:$0xff]
    %v6904 = vld [vmem:[%s57 + $0x30] sm:$0xff]
    %v6905 = vld [vmem:[%s57 + $0x38] sm:$0xff]
    %v6906 = vld [vmem:[%s57 + $0x40] sm:$0xff]
    %v6907 = vld [vmem:[%s57 + $0x48] sm:$0xff]
    %v6908 = vld [vmem:[%s57 + $0x50] sm:$0xff]
    %v6909 = vld [vmem:[%s57 + $0x58] sm:$0xff]
    %v6910 = vld [vmem:[%s57 + $0x60] sm:$0xff]
    %v6911 = vld [vmem:[%s57 + $0x68] sm:$0xff]
    %v6912 = vld [vmem:[%s57 + $0x70] sm:$0xff]
    %v6913 = vld [vmem:[%s57 + $0x78] sm:$0xff]
    %v6914 = vld [vmem:[%s57 + $0x80] sm:$0xff]
    %v6915 = vld [vmem:[%s57 + $0x88] sm:$0xff]
    %v6916 = vld [vmem:[%s57 + $0x90] sm:$0xff]
    %v6917 = vld [vmem:[%s57 + $0x98] sm:$0xff]
    %v6918 = vld [vmem:[%s57 + $0xa0] sm:$0xff]
    %v6919 = vld [vmem:[%s57 + $0xa8] sm:$0xff]
    %v6920 = vld [vmem:[%s57 + $0xb0] sm:$0xff]
    %v6921 = vld [vmem:[%s57 + $0xb8] sm:$0xff]
    %v6922 = vld [vmem:[%s57 + $0xc0] sm:$0xff]
    %v6923 = vld [vmem:[%s57 + $0xc8] sm:$0xff]
    %v6924 = vld [vmem:[%s57 + $0xd0] sm:$0xff]
    %v6925 = vld [vmem:[%s57 + $0xd8] sm:$0xff]
    %v6926 = vld [vmem:[%s57 + $0xe0] sm:$0xff]
    %v6927 = vld [vmem:[%s57 + $0xe8] sm:$0xff]
    %v6928 = vld [vmem:[%s57 + $0xf0] sm:$0xff]
    %v6929 = vld [vmem:[%s57 + $0xf8] sm:$0xff]
    %v6930 = vld [vmem:[%s57 + $0x100] sm:$0xff]
    %v6931 = vld [vmem:[%s57 + $0x108] sm:$0xff]
    %v6932 = vld [vmem:[%s57 + $0x110] sm:$0xff]
    %v6933 = vld [vmem:[%s57 + $0x118] sm:$0xff]
    %v6934 = vld [vmem:[%s57 + $0x120] sm:$0xff]
    %v6935 = vld [vmem:[%s57 + $0x128] sm:$0xff]
    %v6936 = vld [vmem:[%s57 + $0x130] sm:$0xff]
    %v6937 = vld [vmem:[%s57 + $0x138] sm:$0xff]
    %v6938 = vld [vmem:[%s57 + $0x140] sm:$0xff]
    %v6939 = vld [vmem:[%s57 + $0x148] sm:$0xff]
    %v6940 = vld [vmem:[%s57 + $0x150] sm:$0xff]
    %v6941 = vld [vmem:[%s57 + $0x158] sm:$0xff]
    %v6942 = vld [vmem:[%s57 + $0x160] sm:$0xff]
    %v6943 = vld [vmem:[%s57 + $0x168] sm:$0xff]
    %v6944 = vld [vmem:[%s57 + $0x170] sm:$0xff]
    %v6945 = vld [vmem:[%s57 + $0x178] sm:$0xff]
    %v6946 = vld [vmem:[%s61] sm:$0x7]
    %v6948 = vlaneseq
    %v6949 = vshrl.u32 %v6948, 7
    %v6950 = vsub.s32 0, %v6949
    %v6951 = vrot.slane %v6946, %v6950
    %v6952 = vlaneseq
    %v6953 = vshrl.u32 %v6952, 7
    %v6954 = vsub.s32 1, %v6953
    %v6955 = vrot.slane %v6946, %v6954
    %v6956 = vlaneseq
    %v6957 = vshrl.u32 %v6956, 7
    %v6958 = vsub.s32 2, %v6957
    %v6959 = vrot.slane %v6946, %v6958
    %v6963 = vld [vmem:[%s53] sm:$0xff]
    %v6964 = vld [vmem:[%s53 + $0x8] sm:$0xff]
    %v6965 = vld [vmem:[%s53 + $0x10] sm:$0xff]
    %v6966 = vld [vmem:[%s53 + $0x18] sm:$0xff]
    %v6967 = vld [vmem:[%s53 + $0x20] sm:$0xff]
    %v6968 = vld [vmem:[%s53 + $0x28] sm:$0xff]
    %v6969 = vld [vmem:[%s53 + $0x30] sm:$0xff]
    %v6970 = vld [vmem:[%s53 + $0x38] sm:$0xff]
    %v6971 = vld [vmem:[%s53 + $0x40] sm:$0xff]
    %v6972 = vld [vmem:[%s53 + $0x48] sm:$0xff]
    %v6973 = vld [vmem:[%s53 + $0x50] sm:$0xff]
    %v6974 = vld [vmem:[%s53 + $0x58] sm:$0xff]
    %v6975 = vld [vmem:[%s55] sm:$0xff]
    %v6976 = vld [vmem:[%s55 + $0x8] sm:$0xff]
    %v6977 = vld [vmem:[%s55 + $0x10] sm:$0xff]
    %v6978 = vld [vmem:[%s55 + $0x18] sm:$0xff]
    %v6979 = vld [vmem:[%s55 + $0x20] sm:$0xff]
    %v6980 = vld [vmem:[%s55 + $0x28] sm:$0xff]
    %v6982 = vsel %vm241, %v6672, 0
    %6984 = vmatprep.subr.mxu0 %v6976
    %6985 = vmatpush1.msra.mxu0 %v6975
    %6986 = vmatprep.subr.mxu0 %v6979
    %6987 = vmatpush1.msra.mxu0 %v6978
    %6988 = vmatprep.subr.mxu0 0.0
    %6989 = vmatpush1.msra.mxu0 0.0
    %6990 = vmatprep.subr.mxu0 0.0
    %6991 = vmatpush1.msra.mxu0 0.0
    %6992 = vmatprep.subr.mxu0 0.0
    %6993 = vmatpush1.msra.mxu0 0.0
    %6994 = vmatprep.subr.mxu0 0.0
    %6995 = vmatpush1.msra.mxu0 0.0
    %6996 = vmatprep.subr.mxu0 0.0
    %6997 = vmatpush1.msra.mxu0 0.0
    %6998 = vmatprep.subr.mxu0 0.0
    %6999 = vmatpush1.msra.mxu0 0.0
    %7000 = vmatprep.subr.mxu0 0.0
    %7001 = vmatpush1.msra.mxu0 0.0
    %7002 = vmatprep.subr.mxu0 0.0
    %7003 = vmatpush1.msra.mxu0 0.0
    %7004 = vmatprep.subr.mxu0 0.0
    %7005 = vmatpush1.msra.mxu0 0.0
    %7006 = vmatprep.subr.mxu0 0.0
    %7007 = vmatpush1.msra.mxu0 0.0
    %7008 = vmatprep.subr.mxu0 0.0
    %7009 = vmatpush1.msra.mxu0 0.0
    %7010 = vmatprep.subr.mxu0 0.0
    %7011 = vmatpush1.msra.mxu0 0.0
    %7012 = vmatprep.subr.mxu0 0.0
    %7013 = vmatpush1.msra.mxu0 0.0
    %7014 = vmatprep.subr.mxu0 0.0
    %7015 = vmatpush1.msra.mxu0 0.0
    %7016 = vmatprep.subr.mxu0 0.0
    %7017 = vmatpush1.msra.mxu0 0.0
    %7018 = vmatprep.subr.mxu0 0.0
    %7019 = vmatpush1.msra.mxu0 0.0
    %7020 = vmatprep.subr.mxu0 0.0
    %7021 = vmatpush1.msra.mxu0 0.0
    %7022 = vmatprep.subr.mxu0 0.0
    %7023 = vmatpush1.msra.mxu0 0.0
    %7024 = vmatprep.subr.mxu0 0.0
    %7025 = vmatpush1.msra.mxu0 0.0
    %7026 = vmatprep.subr.mxu0 0.0
    %7027 = vmatpush1.msra.mxu0 0.0
    %7028 = vmatprep.subr.mxu0 0.0
    %7029 = vmatpush1.msra.mxu0 0.0
    %7030 = vmatprep.subr.mxu0 0.0
    %7031 = vmatpush1.msra.mxu0 0.0
    %7032 = vmatprep.subr.mxu0 0.0
    %7033 = vmatpush1.msra.mxu0 0.0
    %7034 = vmatprep.subr.mxu0 0.0
    %7035 = vmatpush1.msra.mxu0 0.0
    %7036 = vmatprep.subr.mxu0 0.0
    %7037 = vmatpush1.msra.mxu0 0.0
    %7038 = vmatprep.subr.mxu0 0.0
    %7039 = vmatpush1.msra.mxu0 0.0
    %7040 = vmatprep.subr.mxu0 0.0
    %7041 = vmatpush1.msra.mxu0 0.0
    %7042 = vmatprep.subr.mxu0 0.0
    %7043 = vmatpush1.msra.mxu0 0.0
    %7044 = vmatprep.subr.mxu0 0.0
    %7045 = vmatpush1.msra.mxu0 0.0
    %7046 = vmatprep.subr.mxu0 0.0
    %7047 = vmatpush1.msra.mxu0 0.0
    %7048 = vmatprep.mubr.f32.mxu0 0.0
    %7049 = vmatmul.mubr.f32.gmra.mrb[0].mxu0 %v6982
    %v7050 = vpop.f32.mrb[0].mxu0
    %v7051 = vadd.f32 0.0, %v7050
    %v7052 = vpop.f32.mrb[0].mxu0
    %v7053 = vadd.f32 0.0, %v7052
    %7054 = vdwg.mxu0
    %7055 = vmatprep.subr.mxu0 0.0
    %7056 = vmatpush1.msra.mxu0 %v6977
    %7057 = vmatprep.subr.mxu0 0.0
    %7058 = vmatpush1.msra.mxu0 %v6980
    %7059 = vmatprep.subr.mxu0 0.0
    %7060 = vmatpush1.msra.mxu0 0.0
    %7061 = vmatprep.subr.mxu0 0.0
    %7062 = vmatpush1.msra.mxu0 0.0
    %7063 = vmatprep.subr.mxu0 0.0
    %7064 = vmatpush1.msra.mxu0 0.0
    %7065 = vmatprep.subr.mxu0 0.0
    %7066 = vmatpush1.msra.mxu0 0.0
    %7067 = vmatprep.subr.mxu0 0.0
    %7068 = vmatpush1.msra.mxu0 0.0
    %7069 = vmatprep.subr.mxu0 0.0
    %7070 = vmatpush1.msra.mxu0 0.0
    %7071 = vmatprep.subr.mxu0 0.0
    %7072 = vmatpush1.msra.mxu0 0.0
    %7073 = vmatprep.subr.mxu0 0.0
    %7074 = vmatpush1.msra.mxu0 0.0
    %7075 = vmatprep.subr.mxu0 0.0
    %7076 = vmatpush1.msra.mxu0 0.0
    %7077 = vmatprep.subr.mxu0 0.0
    %7078 = vmatpush1.msra.mxu0 0.0
    %7079 = vmatprep.subr.mxu0 0.0
    %7080 = vmatpush1.msra.mxu0 0.0
    %7081 = vmatprep.subr.mxu0 0.0
    %7082 = vmatpush1.msra.mxu0 0.0
    %7083 = vmatprep.subr.mxu0 0.0
    %7084 = vmatpush1.msra.mxu0 0.0
    %7085 = vmatprep.subr.mxu0 0.0
    %7086 = vmatpush1.msra.mxu0 0.0
    %7087 = vmatprep.subr.mxu0 0.0
    %7088 = vmatpush1.msra.mxu0 0.0
    %7089 = vmatprep.subr.mxu0 0.0
    %7090 = vmatpush1.msra.mxu0 0.0
    %7091 = vmatprep.subr.mxu0 0.0
    %7092 = vmatpush1.msra.mxu0 0.0
    %7093 = vmatprep.subr.mxu0 0.0
    %7094 = vmatpush1.msra.mxu0 0.0
    %7095 = vmatprep.subr.mxu0 0.0
    %7096 = vmatpush1.msra.mxu0 0.0
    %7097 = vmatprep.subr.mxu0 0.0
    %7098 = vmatpush1.msra.mxu0 0.0
    %7099 = vmatprep.subr.mxu0 0.0
    %7100 = vmatpush1.msra.mxu0 0.0
    %7101 = vmatprep.subr.mxu0 0.0
    %7102 = vmatpush1.msra.mxu0 0.0
    %7103 = vmatprep.subr.mxu0 0.0
    %7104 = vmatpush1.msra.mxu0 0.0
    %7105 = vmatprep.subr.mxu0 0.0
    %7106 = vmatpush1.msra.mxu0 0.0
    %7107 = vmatprep.subr.mxu0 0.0
    %7108 = vmatpush1.msra.mxu0 0.0
    %7109 = vmatprep.subr.mxu0 0.0
    %7110 = vmatpush1.msra.mxu0 0.0
    %7111 = vmatprep.subr.mxu0 0.0
    %7112 = vmatpush1.msra.mxu0 0.0
    %7113 = vmatprep.subr.mxu0 0.0
    %7114 = vmatpush1.msra.mxu0 0.0
    %7115 = vmatprep.subr.mxu0 0.0
    %7116 = vmatpush1.msra.mxu0 0.0
    %7117 = vmatprep.subr.mxu0 0.0
    %7118 = vmatpush1.msra.mxu0 0.0
    %7119 = vmatprep.mubr.f32.mxu0 0.0
    %7120 = vmatmul.mubr.f32.gmra.mrb[0].mxu0 %v6982
    %v7121 = vpop.f32.mrb[0].mxu0
    %v7122 = vadd.f32 0.0, %v7121
    %v7123 = vpop.f32.mrb[0].mxu0
    %7124 = vdwg.mxu0
    %vm7125 = vcmask 261120
    %v7127 = vsel %vm7125, %v6894, 0
    %7129 = vmatprep.subr.mxu0 %v6964
    %7130 = vmatpush1.msra.mxu0 %v6963
    %7131 = vmatprep.subr.mxu0 %v6967
    %7132 = vmatpush1.msra.mxu0 %v6966
    %7133 = vmatprep.subr.mxu0 %v6970
    %7134 = vmatpush1.msra.mxu0 %v6969
    %7135 = vmatprep.subr.mxu0 %v6973
    %7136 = vmatpush1.msra.mxu0 %v6972
    %7137 = vmatprep.subr.mxu0 0.0
    %7138 = vmatpush1.msra.mxu0 0.0
    %7139 = vmatprep.subr.mxu0 0.0
    %7140 = vmatpush1.msra.mxu0 0.0
    %7141 = vmatprep.subr.mxu0 0.0
    %7142 = vmatpush1.msra.mxu0 0.0
    %7143 = vmatprep.subr.mxu0 0.0
    %7144 = vmatpush1.msra.mxu0 0.0
    %7145 = vmatprep.subr.mxu0 0.0
    %7146 = vmatpush1.msra.mxu0 0.0
    %7147 = vmatprep.subr.mxu0 0.0
    %7148 = vmatpush1.msra.mxu0 0.0
    %7149 = vmatprep.subr.mxu0 0.0
    %7150 = vmatpush1.msra.mxu0 0.0
    %7151 = vmatprep.subr.mxu0 0.0
    %7152 = vmatpush1.msra.mxu0 0.0
    %7153 = vmatprep.subr.mxu0 0.0
    %7154 = vmatpush1.msra.mxu0 0.0
    %7155 = vmatprep.subr.mxu0 0.0
    %7156 = vmatpush1.msra.mxu0 0.0
    %7157 = vmatprep.subr.mxu0 0.0
    %7158 = vmatpush1.msra.mxu0 0.0
    %7159 = vmatprep.subr.mxu0 0.0
    %7160 = vmatpush1.msra.mxu0 0.0
    %7161 = vmatprep.subr.mxu0 0.0
    %7162 = vmatpush1.msra.mxu0 0.0
    %7163 = vmatprep.subr.mxu0 0.0
    %7164 = vmatpush1.msra.mxu0 0.0
    %7165 = vmatprep.subr.mxu0 0.0
    %7166 = vmatpush1.msra.mxu0 0.0
    %7167 = vmatprep.subr.mxu0 0.0
    %7168 = vmatpush1.msra.mxu0 0.0
    %7169 = vmatprep.subr.mxu0 0.0
    %7170 = vmatpush1.msra.mxu0 0.0
    %7171 = vmatprep.subr.mxu0 0.0
    %7172 = vmatpush1.msra.mxu0 0.0
    %7173 = vmatprep.subr.mxu0 0.0
    %7174 = vmatpush1.msra.mxu0 0.0
    %7175 = vmatprep.subr.mxu0 0.0
    %7176 = vmatpush1.msra.mxu0 0.0
    %7177 = vmatprep.subr.mxu0 0.0
    %7178 = vmatpush1.msra.mxu0 0.0
    %7179 = vmatprep.subr.mxu0 0.0
    %7180 = vmatpush1.msra.mxu0 0.0
    %7181 = vmatprep.subr.mxu0 0.0
    %7182 = vmatpush1.msra.mxu0 0.0
    %7183 = vmatprep.subr.mxu0 0.0
    %7184 = vmatpush1.msra.mxu0 0.0
    %7185 = vmatprep.subr.mxu0 0.0
    %7186 = vmatpush1.msra.mxu0 0.0
    %7187 = vmatprep.subr.mxu0 0.0
    %7188 = vmatpush1.msra.mxu0 0.0
    %7189 = vmatprep.subr.mxu0 0.0
    %7190 = vmatpush1.msra.mxu0 0.0
    %7191 = vmatprep.subr.mxu0 0.0
    %7192 = vmatpush1.msra.mxu0 0.0
    %7193 = vmatprep.mubr.f32.mxu0 0.0
    %7194 = vmatmul.mubr.f32.gmra.mrb[0].mxu0 %v7127
    %v7195 = vpop.f32.mrb[0].mxu0
    %v7196 = vadd.f32 %v7051, %v7195
    %v7197 = vpop.f32.mrb[0].mxu0
    %v7198 = vadd.f32 %v7053, %v7197
    %7199 = vdwg.mxu0
    %7200 = vmatprep.subr.mxu0 0.0
    %7201 = vmatpush1.msra.mxu0 %v6965
    %7202 = vmatprep.subr.mxu0 0.0
    %7203 = vmatpush1.msra.mxu0 %v6968
    %7204 = vmatprep.subr.mxu0 0.0
    %7205 = vmatpush1.msra.mxu0 %v6971
    %7206 = vmatprep.subr.mxu0 0.0
    %7207 = vmatpush1.msra.mxu0 %v6974
    %7208 = vmatprep.subr.mxu0 0.0
    %7209 = vmatpush1.msra.mxu0 0.0
    %7210 = vmatprep.subr.mxu0 0.0
    %7211 = vmatpush1.msra.mxu0 0.0
    %7212 = vmatprep.subr.mxu0 0.0
    %7213 = vmatpush1.msra.mxu0 0.0
    %7214 = vmatprep.subr.mxu0 0.0
    %7215 = vmatpush1.msra.mxu0 0.0
    %7216 = vmatprep.subr.mxu0 0.0
    %7217 = vmatpush1.msra.mxu0 0.0
    %7218 = vmatprep.subr.mxu0 0.0
    %7219 = vmatpush1.msra.mxu0 0.0
    %7220 = vmatprep.subr.mxu0 0.0
    %7221 = vmatpush1.msra.mxu0 0.0
    %7222 = vmatprep.subr.mxu0 0.0
    %7223 = vmatpush1.msra.mxu0 0.0
    %7224 = vmatprep.subr.mxu0 0.0
    %7225 = vmatpush1.msra.mxu0 0.0
    %7226 = vmatprep.subr.mxu0 0.0
    %7227 = vmatpush1.msra.mxu0 0.0
    %7228 = vmatprep.subr.mxu0 0.0
    %7229 = vmatpush1.msra.mxu0 0.0
    %7230 = vmatprep.subr.mxu0 0.0
    %7231 = vmatpush1.msra.mxu0 0.0
    %7232 = vmatprep.subr.mxu0 0.0
    %7233 = vmatpush1.msra.mxu0 0.0
    %7234 = vmatprep.subr.mxu0 0.0
    %7235 = vmatpush1.msra.mxu0 0.0
    %7236 = vmatprep.subr.mxu0 0.0
    %7237 = vmatpush1.msra.mxu0 0.0
    %7238 = vmatprep.subr.mxu0 0.0
    %7239 = vmatpush1.msra.mxu0 0.0
    %7240 = vmatprep.subr.mxu0 0.0
    %7241 = vmatpush1.msra.mxu0 0.0
    %7242 = vmatprep.subr.mxu0 0.0
    %7243 = vmatpush1.msra.mxu0 0.0
    %7244 = vmatprep.subr.mxu0 0.0
    %7245 = vmatpush1.msra.mxu0 0.0
    %7246 = vmatprep.subr.mxu0 0.0
    %7247 = vmatpush1.msra.mxu0 0.0
    %7248 = vmatprep.subr.mxu0 0.0
    %7249 = vmatpush1.msra.mxu0 0.0
    %7250 = vmatprep.subr.mxu0 0.0
    %7251 = vmatpush1.msra.mxu0 0.0
    %7252 = vmatprep.subr.mxu0 0.0
    %7253 = vmatpush1.msra.mxu0 0.0
    %7254 = vmatprep.subr.mxu0 0.0
    %7255 = vmatpush1.msra.mxu0 0.0
    %7256 = vmatprep.subr.mxu0 0.0
    %7257 = vmatpush1.msra.mxu0 0.0
    %7258 = vmatprep.subr.mxu0 0.0
    %7259 = vmatpush1.msra.mxu0 0.0
    %7260 = vmatprep.subr.mxu0 0.0
    %7261 = vmatpush1.msra.mxu0 0.0
    %7262 = vmatprep.subr.mxu0 0.0
    %7263 = vmatpush1.msra.mxu0 0.0
    %7264 = vmatprep.mubr.f32.mxu0 0.0
    %7265 = vmatmul.mubr.f32.gmra.mrb[0].mxu0 %v7127
    %v7266 = vpop.f32.mrb[0].mxu0
    %v7267 = vadd.f32 %v7122, %v7266
    %v7268 = vpop.f32.mrb[0].mxu0
    %7269 = vdwg.mxu0
    %v7270 = vld [vmem:[%s59] sm:$0x7]
    %v7272 = vlaneseq
    %v7273 = vshrl.u32 %v7272, 7
    %v7274 = vsub.s32 0, %v7273
    %v7275 = vrot.slane %v7270, %v7274
    %v7276 = vlaneseq
    %v7277 = vshrl.u32 %v7276, 7
    %v7278 = vsub.s32 1, %v7277
    %v7279 = vrot.slane %v7270, %v7278
    %v7280 = vlaneseq
    %v7281 = vshrl.u32 %v7280, 7
    %v7282 = vsub.s32 2, %v7281
    %v7283 = vrot.slane %v7270, %v7282
    %v7287 = vadd.f32 %v7196, %v7275
    %v7288 = vadd.f32 %v7198, %v7279
    %v7289 = vadd.f32 %v7267, %v7283
    %v7290 = vld [vmem:[%s67] sm:$0xff]
    %v7291 = vld [vmem:[%s67 + $0x8] sm:$0xff]
    %v7292 = vld [vmem:[%s67 + $0x10] sm:$0xff]
    %v7293 = vld [vmem:[%s67 + $0x18] sm:$0xff]
    %v7294 = vld [vmem:[%s67 + $0x20] sm:$0xff]
    %v7295 = vld [vmem:[%s67 + $0x28] sm:$0xff]
    %v7296 = vld [vmem:[%s67 + $0x30] sm:$0xff]
    %v7297 = vld [vmem:[%s67 + $0x38] sm:$0xff]
    %v7298 = vld [vmem:[%s67 + $0x40] sm:$0xff]
    %v7299 = vld [vmem:[%s67 + $0x48] sm:$0xff]
    %v7300 = vld [vmem:[%s67 + $0x50] sm:$0xff]
    %v7301 = vld [vmem:[%s67 + $0x58] sm:$0xff]
    %v7302 = vld [vmem:[%s67 + $0x60] sm:$0xff]
    %v7303 = vld [vmem:[%s67 + $0x68] sm:$0xff]
    %v7304 = vld [vmem:[%s67 + $0x70] sm:$0xff]
    %v7305 = vld [vmem:[%s67 + $0x78] sm:$0xff]
    %v7306 = vld [vmem:[%s69] sm:$0x1]
    %v7308 = vlaneseq
    %v7309 = vshrl.u32 %v7308, 7
    %v7310 = vsub.s32 0, %v7309
    %v7311 = vrot.slane %v7306, %v7310
    %v7313 = vld [vmem:[%s63] sm:$0xff]
    %v7314 = vld [vmem:[%s63 + $0x8] sm:$0xff]
    %v7315 = vld [vmem:[%s65] sm:$0x1]
    %v7317 = vlaneseq
    %v7318 = vshrl.u32 %v7317, 7
    %v7319 = vsub.s32 0, %v7318
    %v7320 = vrot.slane %v7315, %v7319
    %7322 = vmatprep.subr.mxu0 0.0
    %7323 = vmatpush1.msra.mxu0 %v7313
    %7324 = vmatprep.subr.mxu0 0.0
    %7325 = vmatpush1.msra.mxu0 %v7314
    %7326 = vmatprep.subr.mxu0 0.0
    %7327 = vmatpush1.msra.mxu0 0.0
    %7328 = vmatprep.subr.mxu0 0.0
    %7329 = vmatpush1.msra.mxu0 0.0
    %7330 = vmatprep.subr.mxu0 0.0
    %7331 = vmatpush1.msra.mxu0 0.0
    %7332 = vmatprep.subr.mxu0 0.0
    %7333 = vmatpush1.msra.mxu0 0.0
    %7334 = vmatprep.subr.mxu0 0.0
    %7335 = vmatpush1.msra.mxu0 0.0
    %7336 = vmatprep.subr.mxu0 0.0
    %7337 = vmatpush1.msra.mxu0 0.0
    %7338 = vmatprep.subr.mxu0 0.0
    %7339 = vmatpush1.msra.mxu0 0.0
    %7340 = vmatprep.subr.mxu0 0.0
    %7341 = vmatpush1.msra.mxu0 0.0
    %7342 = vmatprep.subr.mxu0 0.0
    %7343 = vmatpush1.msra.mxu0 0.0
    %7344 = vmatprep.subr.mxu0 0.0
    %7345 = vmatpush1.msra.mxu0 0.0
    %7346 = vmatprep.subr.mxu0 0.0
    %7347 = vmatpush1.msra.mxu0 0.0
    %7348 = vmatprep.subr.mxu0 0.0
    %7349 = vmatpush1.msra.mxu0 0.0
    %7350 = vmatprep.subr.mxu0 0.0
    %7351 = vmatpush1.msra.mxu0 0.0
    %7352 = vmatprep.subr.mxu0 0.0
    %7353 = vmatpush1.msra.mxu0 0.0
    %7354 = vmatprep.subr.mxu0 0.0
    %7355 = vmatpush1.msra.mxu0 0.0
    %7356 = vmatprep.subr.mxu0 0.0
    %7357 = vmatpush1.msra.mxu0 0.0
    %7358 = vmatprep.subr.mxu0 0.0
    %7359 = vmatpush1.msra.mxu0 0.0
    %7360 = vmatprep.subr.mxu0 0.0
    %7361 = vmatpush1.msra.mxu0 0.0
    %7362 = vmatprep.subr.mxu0 0.0
    %7363 = vmatpush1.msra.mxu0 0.0
    %7364 = vmatprep.subr.mxu0 0.0
    %7365 = vmatpush1.msra.mxu0 0.0
    %7366 = vmatprep.subr.mxu0 0.0
    %7367 = vmatpush1.msra.mxu0 0.0
    %7368 = vmatprep.subr.mxu0 0.0
    %7369 = vmatpush1.msra.mxu0 0.0
    %7370 = vmatprep.subr.mxu0 0.0
    %7371 = vmatpush1.msra.mxu0 0.0
    %7372 = vmatprep.subr.mxu0 0.0
    %7373 = vmatpush1.msra.mxu0 0.0
    %7374 = vmatprep.subr.mxu0 0.0
    %7375 = vmatpush1.msra.mxu0 0.0
    %7376 = vmatprep.subr.mxu0 0.0
    %7377 = vmatpush1.msra.mxu0 0.0
    %7378 = vmatprep.subr.mxu0 0.0
    %7379 = vmatpush1.msra.mxu0 0.0
    %7380 = vmatprep.subr.mxu0 0.0
    %7381 = vmatpush1.msra.mxu0 0.0
    %7382 = vmatprep.subr.mxu0 0.0
    %7383 = vmatpush1.msra.mxu0 0.0
    %7384 = vmatprep.subr.mxu0 0.0
    %7385 = vmatpush1.msra.mxu0 0.0
    %7386 = vmatprep.mubr.f32.mxu0 0.0
    %7387 = vmatmul.mubr.f32.gmra.mrb[0].mxu0 %v6982
    %v7388 = vpop.f32.mrb[0].mxu0
    %v7389 = vadd.f32 %v7320, %v7388
    %v7390 = vpop.f32.mrb[0].mxu0
    %7391 = vdwg.mxu0
    %v7392 = vtanh.pop %v7389
    %v7393 = vld [vmem:[%s11] sm:$0xf]
    %vm7394 = vcmask 48128
    %v7396 = vsel %vm7394, %v7393, 0
    %vm7398 = vcmask 1045504
    %v7400 = vsel %vm7398, %v6895, 0
    %v7403 = vsel %vm7398, %v6896, 0
    %v7406 = vsel %vm7398, %v6897, 0
    %7408 = vmatprep.subr.mxu0 %v7403
    %7409 = vmatpush1.msra.mxu0 %v7400
    %7410 = vmatprep.subr.mxu0 0.0
    %7411 = vmatpush1.msra.mxu0 0.0
    %7412 = vmatprep.subr.mxu0 0.0
    %7413 = vmatpush1.msra.mxu0 0.0
    %7414 = vmatprep.subr.mxu0 0.0
    %7415 = vmatpush1.msra.mxu0 0.0
    %7416 = vmatprep.subr.mxu0 0.0
    %7417 = vmatpush1.msra.mxu0 0.0
    %7418 = vmatprep.subr.mxu0 0.0
    %7419 = vmatpush1.msra.mxu0 0.0
    %7420 = vmatprep.subr.mxu0 0.0
    %7421 = vmatpush1.msra.mxu0 0.0
    %7422 = vmatprep.subr.mxu0 0.0
    %7423 = vmatpush1.msra.mxu0 0.0
    %7424 = vmatprep.subr.mxu0 0.0
    %7425 = vmatpush1.msra.mxu0 0.0
    %7426 = vmatprep.subr.mxu0 0.0
    %7427 = vmatpush1.msra.mxu0 0.0
    %7428 = vmatprep.subr.mxu0 0.0
    %7429 = vmatpush1.msra.mxu0 0.0
    %7430 = vmatprep.subr.mxu0 0.0
    %7431 = vmatpush1.msra.mxu0 0.0
    %7432 = vmatprep.subr.mxu0 0.0
    %7433 = vmatpush1.msra.mxu0 0.0
    %7434 = vmatprep.subr.mxu0 0.0
    %7435 = vmatpush1.msra.mxu0 0.0
    %7436 = vmatprep.subr.mxu0 0.0
    %7437 = vmatpush1.msra.mxu0 0.0
    %7438 = vmatprep.subr.mxu0 0.0
    %7439 = vmatpush1.msra.mxu0 0.0
    %7440 = vmatprep.subr.mxu0 0.0
    %7441 = vmatpush1.msra.mxu0 0.0
    %7442 = vmatprep.subr.mxu0 0.0
    %7443 = vmatpush1.msra.mxu0 0.0
    %7444 = vmatprep.subr.mxu0 0.0
    %7445 = vmatpush1.msra.mxu0 0.0
    %7446 = vmatprep.subr.mxu0 0.0
    %7447 = vmatpush1.msra.mxu0 0.0
    %7448 = vmatprep.subr.mxu0 0.0
    %7449 = vmatpush1.msra.mxu0 0.0
    %7450 = vmatprep.subr.mxu0 0.0
    %7451 = vmatpush1.msra.mxu0 0.0
    %7452 = vmatprep.subr.mxu0 0.0
    %7453 = vmatpush1.msra.mxu0 0.0
    %7454 = vmatprep.subr.mxu0 0.0
    %7455 = vmatpush1.msra.mxu0 0.0
    %7456 = vmatprep.subr.mxu0 0.0
    %7457 = vmatpush1.msra.mxu0 0.0
    %7458 = vmatprep.subr.mxu0 0.0
    %7459 = vmatpush1.msra.mxu0 0.0
    %7460 = vmatprep.subr.mxu0 0.0
    %7461 = vmatpush1.msra.mxu0 0.0
    %7462 = vmatprep.subr.mxu0 0.0
    %7463 = vmatpush1.msra.mxu0 0.0
    %7464 = vmatprep.subr.mxu0 0.0
    %7465 = vmatpush1.msra.mxu0 0.0
    %7466 = vmatprep.subr.mxu0 0.0
    %7467 = vmatpush1.msra.mxu0 0.0
    %7468 = vmatprep.subr.mxu0 0.0
    %7469 = vmatpush1.msra.mxu0 0.0
    %7470 = vmatprep.subr.mxu0 0.0
    %7471 = vmatpush1.msra.mxu0 0.0
    %7472 = vmatprep.mubr.f32.mxu0 0.0
    %7473 = vmatmul.mubr.f32.gmra.mrb[0].mxu0 %v7396
    %v7474 = vpop.f32.mrb[0].mxu0
    %v7475 = vadd.f32 %v7287, %v7474
    %v7476 = vpop.f32.mrb[0].mxu0
    %v7477 = vadd.f32 %v7288, %v7476
    %7478 = vdwg.mxu0
    %7479 = vmatprep.subr.mxu0 0.0
    %7480 = vmatpush1.msra.mxu0 %v7406
    %7481 = vmatprep.subr.mxu0 0.0
    %7482 = vmatpush1.msra.mxu0 0.0
    %7483 = vmatprep.subr.mxu0 0.0
    %7484 = vmatpush1.msra.mxu0 0.0
    %7485 = vmatprep.subr.mxu0 0.0
    %7486 = vmatpush1.msra.mxu0 0.0
    %7487 = vmatprep.subr.mxu0 0.0
    %7488 = vmatpush1.msra.mxu0 0.0
    %7489 = vmatprep.subr.mxu0 0.0
    %7490 = vmatpush1.msra.mxu0 0.0
    %7491 = vmatprep.subr.mxu0 0.0
    %7492 = vmatpush1.msra.mxu0 0.0
    %7493 = vmatprep.subr.mxu0 0.0
    %7494 = vmatpush1.msra.mxu0 0.0
    %7495 = vmatprep.subr.mxu0 0.0
    %7496 = vmatpush1.msra.mxu0 0.0
    %7497 = vmatprep.subr.mxu0 0.0
    %7498 = vmatpush1.msra.mxu0 0.0
    %7499 = vmatprep.subr.mxu0 0.0
    %7500 = vmatpush1.msra.mxu0 0.0
    %7501 = vmatprep.subr.mxu0 0.0
    %7502 = vmatpush1.msra.mxu0 0.0
    %7503 = vmatprep.subr.mxu0 0.0
    %7504 = vmatpush1.msra.mxu0 0.0
    %7505 = vmatprep.subr.mxu0 0.0
    %7506 = vmatpush1.msra.mxu0 0.0
    %7507 = vmatprep.subr.mxu0 0.0
    %7508 = vmatpush1.msra.mxu0 0.0
    %7509 = vmatprep.subr.mxu0 0.0
    %7510 = vmatpush1.msra.mxu0 0.0
    %7511 = vmatprep.subr.mxu0 0.0
    %7512 = vmatpush1.msra.mxu0 0.0
    %7513 = vmatprep.subr.mxu0 0.0
    %7514 = vmatpush1.msra.mxu0 0.0
    %7515 = vmatprep.subr.mxu0 0.0
    %7516 = vmatpush1.msra.mxu0 0.0
    %7517 = vmatprep.subr.mxu0 0.0
    %7518 = vmatpush1.msra.mxu0 0.0
    %7519 = vmatprep.subr.mxu0 0.0
    %7520 = vmatpush1.msra.mxu0 0.0
    %7521 = vmatprep.subr.mxu0 0.0
    %7522 = vmatpush1.msra.mxu0 0.0
    %7523 = vmatprep.subr.mxu0 0.0
    %7524 = vmatpush1.msra.mxu0 0.0
    %7525 = vmatprep.subr.mxu0 0.0
    %7526 = vmatpush1.msra.mxu0 0.0
    %7527 = vmatprep.subr.mxu0 0.0
    %7528 = vmatpush1.msra.mxu0 0.0
    %7529 = vmatprep.subr.mxu0 0.0
    %7530 = vmatpush1.msra.mxu0 0.0
    %7531 = vmatprep.subr.mxu0 0.0
    %7532 = vmatpush1.msra.mxu0 0.0
    %7533 = vmatprep.subr.mxu0 0.0
    %7534 = vmatpush1.msra.mxu0 0.0
    %7535 = vmatprep.subr.mxu0 0.0
    %7536 = vmatpush1.msra.mxu0 0.0
    %7537 = vmatprep.subr.mxu0 0.0
    %7538 = vmatpush1.msra.mxu0 0.0
    %7539 = vmatprep.subr.mxu0 0.0
    %7540 = vmatpush1.msra.mxu0 0.0
    %7541 = vmatprep.subr.mxu0 0.0
    %7542 = vmatpush1.msra.mxu0 0.0
    %7543 = vmatprep.mubr.f32.mxu0 0.0
    %7544 = vmatmul.mubr.f32.gmra.mrb[0].mxu0 %v7396
    %v7545 = vpop.f32.mrb[0].mxu0
    %v7546 = vadd.f32 %v7289, %v7545
    %v7547 = vpop.f32.mrb[0].mxu0
    %7548 = vdwg.mxu0
    %7549 = vmatprep.subr.mxu0 %v6899
    %7550 = vmatpush1.msra.mxu0 %v6898
    %7551 = vmatprep.subr.mxu0 %v6902
    %7552 = vmatpush1.msra.mxu0 %v6901
    %7553 = vmatprep.subr.mxu0 %v6905
    %7554 = vmatpush1.msra.mxu0 %v6904
    %7555 = vmatprep.subr.mxu0 %v6908
    %7556 = vmatpush1.msra.mxu0 %v6907
    %7557 = vmatprep.subr.mxu0 %v6911
    %7558 = vmatpush1.msra.mxu0 %v6910
    %7559 = vmatprep.subr.mxu0 %v6914
    %7560 = vmatpush1.msra.mxu0 %v6913
    %7561 = vmatprep.subr.mxu0 %v6917
    %7562 = vmatpush1.msra.mxu0 %v6916
    %7563 = vmatprep.subr.mxu0 %v6920
    %7564 = vmatpush1.msra.mxu0 %v6919
    %7565 = vmatprep.subr.mxu0 %v6923
    %7566 = vmatpush1.msra.mxu0 %v6922
    %7567 = vmatprep.subr.mxu0 %v6926
    %7568 = vmatpush1.msra.mxu0 %v6925
    %7569 = vmatprep.subr.mxu0 %v6929
    %7570 = vmatpush1.msra.mxu0 %v6928
    %7571 = vmatprep.subr.mxu0 %v6932
    %7572 = vmatpush1.msra.mxu0 %v6931
    %7573 = vmatprep.subr.mxu0 %v6935
    %7574 = vmatpush1.msra.mxu0 %v6934
    %7575 = vmatprep.subr.mxu0 %v6938
    %7576 = vmatpush1.msra.mxu0 %v6937
    %7577 = vmatprep.subr.mxu0 %v6941
    %7578 = vmatpush1.msra.mxu0 %v6940
    %7579 = vmatprep.subr.mxu0 %v6944
    %7580 = vmatpush1.msra.mxu0 %v6943
    %7581 = vmatprep.subr.mxu0 0.0
    %7582 = vmatpush1.msra.mxu0 0.0
    %7583 = vmatprep.subr.mxu0 0.0
    %7584 = vmatpush1.msra.mxu0 0.0
    %7585 = vmatprep.subr.mxu0 0.0
    %7586 = vmatpush1.msra.mxu0 0.0
    %7587 = vmatprep.subr.mxu0 0.0
    %7588 = vmatpush1.msra.mxu0 0.0
    %7589 = vmatprep.subr.mxu0 0.0
    %7590 = vmatpush1.msra.mxu0 0.0
    %7591 = vmatprep.subr.mxu0 0.0
    %7592 = vmatpush1.msra.mxu0 0.0
    %7593 = vmatprep.subr.mxu0 0.0
    %7594 = vmatpush1.msra.mxu0 0.0
    %7595 = vmatprep.subr.mxu0 0.0
    %7596 = vmatpush1.msra.mxu0 0.0
    %7597 = vmatprep.subr.mxu0 0.0
    %7598 = vmatpush1.msra.mxu0 0.0
    %7599 = vmatprep.subr.mxu0 0.0
    %7600 = vmatpush1.msra.mxu0 0.0
    %7601 = vmatprep.subr.mxu0 0.0
    %7602 = vmatpush1.msra.mxu0 0.0
    %7603 = vmatprep.subr.mxu0 0.0
    %7604 = vmatpush1.msra.mxu0 0.0
    %7605 = vmatprep.subr.mxu0 0.0
    %7606 = vmatpush1.msra.mxu0 0.0
    %7607 = vmatprep.subr.mxu0 0.0
    %7608 = vmatpush1.msra.mxu0 0.0
    %7609 = vmatprep.subr.mxu0 0.0
    %7610 = vmatpush1.msra.mxu0 0.0
    %7611 = vmatprep.subr.mxu0 0.0
    %7612 = vmatpush1.msra.mxu0 0.0
    %7613 = vmatprep.mubr.f32.mxu0 0.0
    %7614 = vmatmul.mubr.f32.gmra.mrb[0].mxu0 %v7392
    %v7615 = vpop.f32.mrb[0].mxu0
    %v7616 = vadd.f32 %v6951, %v7615
    %v7617 = vpop.f32.mrb[0].mxu0
    %v7618 = vadd.f32 %v6955, %v7617
    %7619 = vdwg.mxu0
    %7620 = vmatprep.subr.mxu0 0.0
    %7621 = vmatpush1.msra.mxu0 %v6900
    %7622 = vmatprep.subr.mxu0 0.0
    %7623 = vmatpush1.msra.mxu0 %v6903
    %7624 = vmatprep.subr.mxu0 0.0
    %7625 = vmatpush1.msra.mxu0 %v6906
    %7626 = vmatprep.subr.mxu0 0.0
    %7627 = vmatpush1.msra.mxu0 %v6909
    %7628 = vmatprep.subr.mxu0 0.0
    %7629 = vmatpush1.msra.mxu0 %v6912
    %7630 = vmatprep.subr.mxu0 0.0
    %7631 = vmatpush1.msra.mxu0 %v6915
    %7632 = vmatprep.subr.mxu0 0.0
    %7633 = vmatpush1.msra.mxu0 %v6918
    %7634 = vmatprep.subr.mxu0 0.0
    %7635 = vmatpush1.msra.mxu0 %v6921
    %7636 = vmatprep.subr.mxu0 0.0
    %7637 = vmatpush1.msra.mxu0 %v6924
    %7638 = vmatprep.subr.mxu0 0.0
    %7639 = vmatpush1.msra.mxu0 %v6927
    %7640 = vmatprep.subr.mxu0 0.0
    %7641 = vmatpush1.msra.mxu0 %v6930
    %7642 = vmatprep.subr.mxu0 0.0
    %7643 = vmatpush1.msra.mxu0 %v6933
    %7644 = vmatprep.subr.mxu0 0.0
    %7645 = vmatpush1.msra.mxu0 %v6936
    %7646 = vmatprep.subr.mxu0 0.0
    %7647 = vmatpush1.msra.mxu0 %v6939
    %7648 = vmatprep.subr.mxu0 0.0
    %7649 = vmatpush1.msra.mxu0 %v6942
    %7650 = vmatprep.subr.mxu0 0.0
    %7651 = vmatpush1.msra.mxu0 %v6945
    %7652 = vmatprep.subr.mxu0 0.0
    %7653 = vmatpush1.msra.mxu0 0.0
    %7654 = vmatprep.subr.mxu0 0.0
    %7655 = vmatpush1.msra.mxu0 0.0
    %7656 = vmatprep.subr.mxu0 0.0
    %7657 = vmatpush1.msra.mxu0 0.0
    %7658 = vmatprep.subr.mxu0 0.0
    %7659 = vmatpush1.msra.mxu0 0.0
    %7660 = vmatprep.subr.mxu0 0.0
    %7661 = vmatpush1.msra.mxu0 0.0
    %7662 = vmatprep.subr.mxu0 0.0
    %7663 = vmatpush1.msra.mxu0 0.0
    %7664 = vmatprep.subr.mxu0 0.0
    %7665 = vmatpush1.msra.mxu0 0.0
    %7666 = vmatprep.subr.mxu0 0.0
    %7667 = vmatpush1.msra.mxu0 0.0
    %7668 = vmatprep.subr.mxu0 0.0
    %7669 = vmatpush1.msra.mxu0 0.0
    %7670 = vmatprep.subr.mxu0 0.0
    %7671 = vmatpush1.msra.mxu0 0.0
    %7672 = vmatprep.subr.mxu0 0.0
    %7673 = vmatpush1.msra.mxu0 0.0
    %7674 = vmatprep.subr.mxu0 0.0
    %7675 = vmatpush1.msra.mxu0 0.0
    %7676 = vmatprep.subr.mxu0 0.0
    %7677 = vmatpush1.msra.mxu0 0.0
    %7678 = vmatprep.subr.mxu0 0.0
    %7679 = vmatpush1.msra.mxu0 0.0
    %7680 = vmatprep.subr.mxu0 0.0
    %7681 = vmatpush1.msra.mxu0 0.0
    %7682 = vmatprep.subr.mxu0 0.0
    %7683 = vmatpush1.msra.mxu0 0.0
    %7684 = vmatprep.mubr.f32.mxu0 0.0
    %7685 = vmatmul.mubr.f32.gmra.mrb[0].mxu0 %v7392
    %v7686 = vpop.f32.mrb[0].mxu0
    %v7687 = vadd.f32 %v6959, %v7686
    %v7688 = vpop.f32.mrb[0].mxu0
    %7689 = vdwg.mxu0
    %v7690 = vadd.f32 %v7475, %v7616
    %v7691 = vxor.u32 %v7690, 2147483648
    %v7692 = vmul.f32 %v7691, 1.442695
    %v7693 = vpow.pop %v7692
    %v7694 = vadd.f32 %v7693, 1.0
    %v7695 = vrcp.pop %v7694
    %v7696 = vmul.f32 1.0, %v7695
    %v7697 = vadd.f32 %v7477, %v7618
    %v7698 = vxor.u32 %v7697, 2147483648
    %v7699 = vmul.f32 %v7698, 1.442695
    %v7700 = vpow.pop %v7699
    %v7701 = vadd.f32 %v7700, 1.0
    %v7702 = vrcp.pop %v7701
    %v7703 = vmul.f32 1.0, %v7702
    %v7704 = vmul.f32 %v7696, %v7687
    %v7705 = vadd.f32 %v7546, %v7704
    %v7706 = vtanh.pop %v7705
    %v7707 = vsub.f32 1.0, %v7703
    %v7708 = vmul.f32 %v7707, %v7706
    %v7709 = vmul.f32 %v7703, %v7392
    %v7710 = vadd.f32 %v7708, %v7709
    %7711 = vmatprep.subr.mxu0 0.0
    %7712 = vmatpush1.msra.mxu0 %v7290
    %7713 = vmatprep.subr.mxu0 0.0
    %7714 = vmatpush1.msra.mxu0 %v7291
    %7715 = vmatprep.subr.mxu0 0.0
    %7716 = vmatpush1.msra.mxu0 %v7292
    %7717 = vmatprep.subr.mxu0 0.0
    %7718 = vmatpush1.msra.mxu0 %v7293
    %7719 = vmatprep.subr.mxu0 0.0
    %7720 = vmatpush1.msra.mxu0 %v7294
    %7721 = vmatprep.subr.mxu0 0.0
    %7722 = vmatpush1.msra.mxu0 %v7295
    %7723 = vmatprep.subr.mxu0 0.0
    %7724 = vmatpush1.msra.mxu0 %v7296
    %7725 = vmatprep.subr.mxu0 0.0
    %7726 = vmatpush1.msra.mxu0 %v7297
    %7727 = vmatprep.subr.mxu0 0.0
    %7728 = vmatpush1.msra.mxu0 %v7298
    %7729 = vmatprep.subr.mxu0 0.0
    %7730 = vmatpush1.msra.mxu0 %v7299
    %7731 = vmatprep.subr.mxu0 0.0
    %7732 = vmatpush1.msra.mxu0 %v7300
    %7733 = vmatprep.subr.mxu0 0.0
    %7734 = vmatpush1.msra.mxu0 %v7301
    %7735 = vmatprep.subr.mxu0 0.0
    %7736 = vmatpush1.msra.mxu0 %v7302
    %7737 = vmatprep.subr.mxu0 0.0
    %7738 = vmatpush1.msra.mxu0 %v7303
    %7739 = vmatprep.subr.mxu0 0.0
    %7740 = vmatpush1.msra.mxu0 %v7304
    %7741 = vmatprep.subr.mxu0 0.0
    %7742 = vmatpush1.msra.mxu0 %v7305
    %7743 = vmatprep.subr.mxu0 0.0
    %7744 = vmatpush1.msra.mxu0 0.0
    %7745 = vmatprep.subr.mxu0 0.0
    %7746 = vmatpush1.msra.mxu0 0.0
    %7747 = vmatprep.subr.mxu0 0.0
    %7748 = vmatpush1.msra.mxu0 0.0
    %7749 = vmatprep.subr.mxu0 0.0
    %7750 = vmatpush1.msra.mxu0 0.0
    %7751 = vmatprep.subr.mxu0 0.0
    %7752 = vmatpush1.msra.mxu0 0.0
    %7753 = vmatprep.subr.mxu0 0.0
    %7754 = vmatpush1.msra.mxu0 0.0
    %7755 = vmatprep.subr.mxu0 0.0
    %7756 = vmatpush1.msra.mxu0 0.0
    %7757 = vmatprep.subr.mxu0 0.0
    %7758 = vmatpush1.msra.mxu0 0.0
    %7759 = vmatprep.subr.mxu0 0.0
    %7760 = vmatpush1.msra.mxu0 0.0
    %7761 = vmatprep.subr.mxu0 0.0
    %7762 = vmatpush1.msra.mxu0 0.0
    %7763 = vmatprep.subr.mxu0 0.0
    %7764 = vmatpush1.msra.mxu0 0.0
    %7765 = vmatprep.subr.mxu0 0.0
    %7766 = vmatpush1.msra.mxu0 0.0
    %7767 = vmatprep.subr.mxu0 0.0
    %7768 = vmatpush1.msra.mxu0 0.0
    %7769 = vmatprep.subr.mxu0 0.0
    %7770 = vmatpush1.msra.mxu0 0.0
    %7771 = vmatprep.subr.mxu0 0.0
    %7772 = vmatpush1.msra.mxu0 0.0
    %7773 = vmatprep.subr.mxu0 0.0
    %7774 = vmatpush1.msra.mxu0 0.0
    %7775 = vmatprep.mubr.f32.mxu0 0.0
    %7776 = vmatmul.mubr.f32.gmra.mrb[0].mxu0 %v7710
    %v7777 = vpop.f32.mrb[0].mxu0
    %v7778 = vadd.f32 %v7311, %v7777
    %v7779 = vpop.f32.mrb[0].mxu0
    %7780 = vdwg.mxu0
    %v7783 = vunpack.c.l.s4 1966171168
    %v7784 = vunpack.c.0.s8 %v7783
    %v7785 = vlaneseq
    %v7786 = vshrl.u32 %v7785, 7
    %v7787 = vsub.s32 %v7784, %v7786
    %v7788 = vrot.slane %v7778, %v7787
    %v7789 = vcombine.high %v7788, %v7788
    %v7791 = vunpack.c.l.s4 1966171168
    %v7792 = vunpack.c.0.s8 %v7791
    %v7793 = vlaneseq
    %v7794 = vshrl.u32 %v7793, 7
    %v7795 = vsub.s32 %v7792, %v7794
    %v7796 = vrot.slane %v7788, %v7795
    %v7798 = vunpack.c.l.s4 1966171168
    %v7799 = vunpack.c.0.s8 %v7798
    %v7800 = vlaneseq
    %v7801 = vshrl.u32 %v7800, 7
    %v7802 = vsub.s32 %v7799, %v7801
    %v7803 = vrot.slane %v7789, %v7802
    %v7804 = vcombine.high %v7796, %v7796
    %v7805 = vcombine.high %v7803, %v7803
    %7810 = vst [vmem:[%s73] sm:$0x1] %v7796
    %7811 = vst [vmem:[%s73 + $0x8] sm:$0x1] %v7803
    %7812 = vst [vmem:[%s73 + $0x10] sm:$0x1] %v7804
    %7813 = vst [vmem:[%s73 + $0x18] sm:$0x1] %v7805
    %s7814 = scalar_lea.vmem %s11, 4
    %v7815 = vld [vmem:[%s7814] sm:$0xf]
    %v7817 = vsel %vm7394, %v7815, 0
    %7819 = vmatprep.subr.mxu0 %v7403
    %7820 = vmatpush1.msra.mxu0 %v7400
    %7821 = vmatprep.subr.mxu0 0.0
    %7822 = vmatpush1.msra.mxu0 0.0
    %7823 = vmatprep.subr.mxu0 0.0
    %7824 = vmatpush1.msra.mxu0 0.0
    %7825 = vmatprep.subr.mxu0 0.0
    %7826 = vmatpush1.msra.mxu0 0.0
    %7827 = vmatprep.subr.mxu0 0.0
    %7828 = vmatpush1.msra.mxu0 0.0
    %7829 = vmatprep.subr.mxu0 0.0
    %7830 = vmatpush1.msra.mxu0 0.0
    %7831 = vmatprep.subr.mxu0 0.0
    %7832 = vmatpush1.msra.mxu0 0.0
    %7833 = vmatprep.subr.mxu0 0.0
    %7834 = vmatpush1.msra.mxu0 0.0
    %7835 = vmatprep.subr.mxu0 0.0
    %7836 = vmatpush1.msra.mxu0 0.0
    %7837 = vmatprep.subr.mxu0 0.0
    %7838 = vmatpush1.msra.mxu0 0.0
    %7839 = vmatprep.subr.mxu0 0.0
    %7840 = vmatpush1.msra.mxu0 0.0
    %7841 = vmatprep.subr.mxu0 0.0
    %7842 = vmatpush1.msra.mxu0 0.0
    %7843 = vmatprep.subr.mxu0 0.0
    %7844 = vmatpush1.msra.mxu0 0.0
    %7845 = vmatprep.subr.mxu0 0.0
    %7846 = vmatpush1.msra.mxu0 0.0
    %7847 = vmatprep.subr.mxu0 0.0
    %7848 = vmatpush1.msra.mxu0 0.0
    %7849 = vmatprep.subr.mxu0 0.0
    %7850 = vmatpush1.msra.mxu0 0.0
    %7851 = vmatprep.subr.mxu0 0.0
    %7852 = vmatpush1.msra.mxu0 0.0
    %7853 = vmatprep.subr.mxu0 0.0
    %7854 = vmatpush1.msra.mxu0 0.0
    %7855 = vmatprep.subr.mxu0 0.0
    %7856 = vmatpush1.msra.mxu0 0.0
    %7857 = vmatprep.subr.mxu0 0.0
    %7858 = vmatpush1.msra.mxu0 0.0
    %7859 = vmatprep.subr.mxu0 0.0
    %7860 = vmatpush1.msra.mxu0 0.0
    %7861 = vmatprep.subr.mxu0 0.0
    %7862 = vmatpush1.msra.mxu0 0.0
    %7863 = vmatprep.subr.mxu0 0.0
    %7864 = vmatpush1.msra.mxu0 0.0
    %7865 = vmatprep.subr.mxu0 0.0
    %7866 = vmatpush1.msra.mxu0 0.0
    %7867 = vmatprep.subr.mxu0 0.0
    %7868 = vmatpush1.msra.mxu0 0.0
    %7869 = vmatprep.subr.mxu0 0.0
    %7870 = vmatpush1.msra.mxu0 0.0
    %7871 = vmatprep.subr.mxu0 0.0
    %7872 = vmatpush1.msra.mxu0 0.0
    %7873 = vmatprep.subr.mxu0 0.0
    %7874 = vmatpush1.msra.mxu0 0.0
    %7875 = vmatprep.subr.mxu0 0.0
    %7876 = vmatpush1.msra.mxu0 0.0
    %7877 = vmatprep.subr.mxu0 0.0
    %7878 = vmatpush1.msra.mxu0 0.0
    %7879 = vmatprep.subr.mxu0 0.0
    %7880 = vmatpush1.msra.mxu0 0.0
    %7881 = vmatprep.subr.mxu0 0.0
    %7882 = vmatpush1.msra.mxu0 0.0
    %7883 = vmatprep.mubr.f32.mxu0 0.0
    %7884 = vmatmul.mubr.f32.gmra.mrb[0].mxu0 %v7817
    %v7885 = vpop.f32.mrb[0].mxu0
    %v7886 = vadd.f32 %v7287, %v7885
    %v7887 = vpop.f32.mrb[0].mxu0
    %v7888 = vadd.f32 %v7288, %v7887
    %7889 = vdwg.mxu0
    %7890 = vmatprep.subr.mxu0 0.0
    %7891 = vmatpush1.msra.mxu0 %v7406
    %7892 = vmatprep.subr.mxu0 0.0
    %7893 = vmatpush1.msra.mxu0 0.0
    %7894 = vmatprep.subr.mxu0 0.0
    %7895 = vmatpush1.msra.mxu0 0.0
    %7896 = vmatprep.subr.mxu0 0.0
    %7897 = vmatpush1.msra.mxu0 0.0
    %7898 = vmatprep.subr.mxu0 0.0
    %7899 = vmatpush1.msra.mxu0 0.0
    %7900 = vmatprep.subr.mxu0 0.0
    %7901 = vmatpush1.msra.mxu0 0.0
    %7902 = vmatprep.subr.mxu0 0.0
    %7903 = vmatpush1.msra.mxu0 0.0
    %7904 = vmatprep.subr.mxu0 0.0
    %7905 = vmatpush1.msra.mxu0 0.0
    %7906 = vmatprep.subr.mxu0 0.0
    %7907 = vmatpush1.msra.mxu0 0.0
    %7908 = vmatprep.subr.mxu0 0.0
    %7909 = vmatpush1.msra.mxu0 0.0
    %7910 = vmatprep.subr.mxu0 0.0
    %7911 = vmatpush1.msra.mxu0 0.0
    %7912 = vmatprep.subr.mxu0 0.0
    %7913 = vmatpush1.msra.mxu0 0.0
    %7914 = vmatprep.subr.mxu0 0.0
    %7915 = vmatpush1.msra.mxu0 0.0
    %7916 = vmatprep.subr.mxu0 0.0
    %7917 = vmatpush1.msra.mxu0 0.0
    %7918 = vmatprep.subr.mxu0 0.0
    %7919 = vmatpush1.msra.mxu0 0.0
    %7920 = vmatprep.subr.mxu0 0.0
    %7921 = vmatpush1.msra.mxu0 0.0
    %7922 = vmatprep.subr.mxu0 0.0
    %7923 = vmatpush1.msra.mxu0 0.0
    %7924 = vmatprep.subr.mxu0 0.0
    %7925 = vmatpush1.msra.mxu0 0.0
    %7926 = vmatprep.subr.mxu0 0.0
    %7927 = vmatpush1.msra.mxu0 0.0
    %7928 = vmatprep.subr.mxu0 0.0
    %7929 = vmatpush1.msra.mxu0 0.0
    %7930 = vmatprep.subr.mxu0 0.0
    %7931 = vmatpush1.msra.mxu0 0.0
    %7932 = vmatprep.subr.mxu0 0.0
    %7933 = vmatpush1.msra.mxu0 0.0
    %7934 = vmatprep.subr.mxu0 0.0
    %7935 = vmatpush1.msra.mxu0 0.0
    %7936 = vmatprep.subr.mxu0 0.0
    %7937 = vmatpush1.msra.mxu0 0.0
    %7938 = vmatprep.subr.mxu0 0.0
    %7939 = vmatpush1.msra.mxu0 0.0
    %7940 = vmatprep.subr.mxu0 0.0
    %7941 = vmatpush1.msra.mxu0 0.0
    %7942 = vmatprep.subr.mxu0 0.0
    %7943 = vmatpush1.msra.mxu0 0.0
    %7944 = vmatprep.subr.mxu0 0.0
    %7945 = vmatpush1.msra.mxu0 0.0
    %7946 = vmatprep.subr.mxu0 0.0
    %7947 = vmatpush1.msra.mxu0 0.0
    %7948 = vmatprep.subr.mxu0 0.0
    %7949 = vmatpush1.msra.mxu0 0.0
    %7950 = vmatprep.subr.mxu0 0.0
    %7951 = vmatpush1.msra.mxu0 0.0
    %7952 = vmatprep.subr.mxu0 0.0
    %7953 = vmatpush1.msra.mxu0 0.0
    %7954 = vmatprep.mubr.f32.mxu0 0.0
    %7955 = vmatmul.mubr.f32.gmra.mrb[0].mxu0 %v7817
    %v7956 = vpop.f32.mrb[0].mxu0
    %v7957 = vadd.f32 %v7289, %v7956
    %v7958 = vpop.f32.mrb[0].mxu0
    %7959 = vdwg.mxu0
    %7960 = vmatprep.subr.mxu0 %v6899
    %7961 = vmatpush1.msra.mxu0 %v6898
    %7962 = vmatprep.subr.mxu0 %v6902
    %7963 = vmatpush1.msra.mxu0 %v6901
    %7964 = vmatprep.subr.mxu0 %v6905
    %7965 = vmatpush1.msra.mxu0 %v6904
    %7966 = vmatprep.subr.mxu0 %v6908
    %7967 = vmatpush1.msra.mxu0 %v6907
    %7968 = vmatprep.subr.mxu0 %v6911
    %7969 = vmatpush1.msra.mxu0 %v6910
    %7970 = vmatprep.subr.mxu0 %v6914
    %7971 = vmatpush1.msra.mxu0 %v6913
    %7972 = vmatprep.subr.mxu0 %v6917
    %7973 = vmatpush1.msra.mxu0 %v6916
    %7974 = vmatprep.subr.mxu0 %v6920
    %7975 = vmatpush1.msra.mxu0 %v6919
    %7976 = vmatprep.subr.mxu0 %v6923
    %7977 = vmatpush1.msra.mxu0 %v6922
    %7978 = vmatprep.subr.mxu0 %v6926
    %7979 = vmatpush1.msra.mxu0 %v6925
    %7980 = vmatprep.subr.mxu0 %v6929
    %7981 = vmatpush1.msra.mxu0 %v6928
    %7982 = vmatprep.subr.mxu0 %v6932
    %7983 = vmatpush1.msra.mxu0 %v6931
    %7984 = vmatprep.subr.mxu0 %v6935
    %7985 = vmatpush1.msra.mxu0 %v6934
    %7986 = vmatprep.subr.mxu0 %v6938
    %7987 = vmatpush1.msra.mxu0 %v6937
    %7988 = vmatprep.subr.mxu0 %v6941
    %7989 = vmatpush1.msra.mxu0 %v6940
    %7990 = vmatprep.subr.mxu0 %v6944
    %7991 = vmatpush1.msra.mxu0 %v6943
    %7992 = vmatprep.subr.mxu0 0.0
    %7993 = vmatpush1.msra.mxu0 0.0
    %7994 = vmatprep.subr.mxu0 0.0
    %7995 = vmatpush1.msra.mxu0 0.0
    %7996 = vmatprep.subr.mxu0 0.0
    %7997 = vmatpush1.msra.mxu0 0.0
    %7998 = vmatprep.subr.mxu0 0.0
    %7999 = vmatpush1.msra.mxu0 0.0
    %8000 = vmatprep.subr.mxu0 0.0
    %8001 = vmatpush1.msra.mxu0 0.0
    %8002 = vmatprep.subr.mxu0 0.0
    %8003 = vmatpush1.msra.mxu0 0.0
    %8004 = vmatprep.subr.mxu0 0.0
    %8005 = vmatpush1.msra.mxu0 0.0
    %8006 = vmatprep.subr.mxu0 0.0
    %8007 = vmatpush1.msra.mxu0 0.0
    %8008 = vmatprep.subr.mxu0 0.0
    %8009 = vmatpush1.msra.mxu0 0.0
    %8010 = vmatprep.subr.mxu0 0.0
    %8011 = vmatpush1.msra.mxu0 0.0
    %8012 = vmatprep.subr.mxu0 0.0
    %8013 = vmatpush1.msra.mxu0 0.0
    %8014 = vmatprep.subr.mxu0 0.0
    %8015 = vmatpush1.msra.mxu0 0.0
    %8016 = vmatprep.subr.mxu0 0.0
    %8017 = vmatpush1.msra.mxu0 0.0
    %8018 = vmatprep.subr.mxu0 0.0
    %8019 = vmatpush1.msra.mxu0 0.0
    %8020 = vmatprep.subr.mxu0 0.0
    %8021 = vmatpush1.msra.mxu0 0.0
    %8022 = vmatprep.subr.mxu0 0.0
    %8023 = vmatpush1.msra.mxu0 0.0
    %8024 = vmatprep.mubr.f32.mxu0 0.0
    %8025 = vmatmul.mubr.f32.gmra.mrb[0].mxu0 %v7710
    %v8026 = vpop.f32.mrb[0].mxu0
    %v8027 = vadd.f32 %v6951, %v8026
    %v8028 = vpop.f32.mrb[0].mxu0
    %v8029 = vadd.f32 %v6955, %v8028
    %8030 = vdwg.mxu0
    %8031 = vmatprep.subr.mxu0 0.0
    %8032 = vmatpush1.msra.mxu0 %v6900
    %8033 = vmatprep.subr.mxu0 0.0
    %8034 = vmatpush1.msra.mxu0 %v6903
    %8035 = vmatprep.subr.mxu0 0.0
    %8036 = vmatpush1.msra.mxu0 %v6906
    %8037 = vmatprep.subr.mxu0 0.0
    %8038 = vmatpush1.msra.mxu0 %v6909
    %8039 = vmatprep.subr.mxu0 0.0
    %8040 = vmatpush1.msra.mxu0 %v6912
    %8041 = vmatprep.subr.mxu0 0.0
    %8042 = vmatpush1.msra.mxu0 %v6915
    %8043 = vmatprep.subr.mxu0 0.0
    %8044 = vmatpush1.msra.mxu0 %v6918
    %8045 = vmatprep.subr.mxu0 0.0
    %8046 = vmatpush1.msra.mxu0 %v6921
    %8047 = vmatprep.subr.mxu0 0.0
    %8048 = vmatpush1.msra.mxu0 %v6924
    %8049 = vmatprep.subr.mxu0 0.0
    %8050 = vmatpush1.msra.mxu0 %v6927
    %8051 = vmatprep.subr.mxu0 0.0
    %8052 = vmatpush1.msra.mxu0 %v6930
    %8053 = vmatprep.subr.mxu0 0.0
    %8054 = vmatpush1.msra.mxu0 %v6933
    %8055 = vmatprep.subr.mxu0 0.0
    %8056 = vmatpush1.msra.mxu0 %v6936
    %8057 = vmatprep.subr.mxu0 0.0
    %8058 = vmatpush1.msra.mxu0 %v6939
    %8059 = vmatprep.subr.mxu0 0.0
    %8060 = vmatpush1.msra.mxu0 %v6942
    %8061 = vmatprep.subr.mxu0 0.0
    %8062 = vmatpush1.msra.mxu0 %v6945
    %8063 = vmatprep.subr.mxu0 0.0
    %8064 = vmatpush1.msra.mxu0 0.0
    %8065 = vmatprep.subr.mxu0 0.0
    %8066 = vmatpush1.msra.mxu0 0.0
    %8067 = vmatprep.subr.mxu0 0.0
    %8068 = vmatpush1.msra.mxu0 0.0
    %8069 = vmatprep.subr.mxu0 0.0
    %8070 = vmatpush1.msra.mxu0 0.0
    %8071 = vmatprep.subr.mxu0 0.0
    %8072 = vmatpush1.msra.mxu0 0.0
    %8073 = vmatprep.subr.mxu0 0.0
    %8074 = vmatpush1.msra.mxu0 0.0
    %8075 = vmatprep.subr.mxu0 0.0
    %8076 = vmatpush1.msra.mxu0 0.0
    %8077 = vmatprep.subr.mxu0 0.0
    %8078 = vmatpush1.msra.mxu0 0.0
    %8079 = vmatprep.subr.mxu0 0.0
    %8080 = vmatpush1.msra.mxu0 0.0
    %8081 = vmatprep.subr.mxu0 0.0
    %8082 = vmatpush1.msra.mxu0 0.0
    %8083 = vmatprep.subr.mxu0 0.0
    %8084 = vmatpush1.msra.mxu0 0.0
    %8085 = vmatprep.subr.mxu0 0.0
    %8086 = vmatpush1.msra.mxu0 0.0
    %8087 = vmatprep.subr.mxu0 0.0
    %8088 = vmatpush1.msra.mxu0 0.0
    %8089 = vmatprep.subr.mxu0 0.0
    %8090 = vmatpush1.msra.mxu0 0.0
    %8091 = vmatprep.subr.mxu0 0.0
    %8092 = vmatpush1.msra.mxu0 0.0
    %8093 = vmatprep.subr.mxu0 0.0
    %8094 = vmatpush1.msra.mxu0 0.0
    %8095 = vmatprep.mubr.f32.mxu0 0.0
    %8096 = vmatmul.mubr.f32.gmra.mrb[0].mxu0 %v7710
    %v8097 = vpop.f32.mrb[0].mxu0
    %v8098 = vadd.f32 %v6959, %v8097
    %v8099 = vpop.f32.mrb[0].mxu0
    %8100 = vdwg.mxu0
    %v8101 = vadd.f32 %v7886, %v8027
    %v8102 = vxor.u32 %v8101, 2147483648
    %v8103 = vmul.f32 %v8102, 1.442695
    %v8104 = vpow.pop %v8103
    %v8105 = vadd.f32 %v8104, 1.0
    %v8106 = vrcp.pop %v8105
    %v8107 = vmul.f32 1.0, %v8106
    %v8108 = vadd.f32 %v7888, %v8029
    %v8109 = vxor.u32 %v8108, 2147483648
    %v8110 = vmul.f32 %v8109, 1.442695
    %v8111 = vpow.pop %v8110
    %v8112 = vadd.f32 %v8111, 1.0
    %v8113 = vrcp.pop %v8112
    %v8114 = vmul.f32 1.0, %v8113
    %v8115 = vmul.f32 %v8107, %v8098
    %v8116 = vadd.f32 %v7957, %v8115
    %v8117 = vtanh.pop %v8116
    %v8118 = vsub.f32 1.0, %v8114
    %v8119 = vmul.f32 %v8118, %v8117
    %v8120 = vmul.f32 %v8114, %v7710
    %v8121 = vadd.f32 %v8119, %v8120
    %8122 = vmatprep.subr.mxu0 0.0
    %8123 = vmatpush1.msra.mxu0 %v7290
    %8124 = vmatprep.subr.mxu0 0.0
    %8125 = vmatpush1.msra.mxu0 %v7291
    %8126 = vmatprep.subr.mxu0 0.0
    %8127 = vmatpush1.msra.mxu0 %v7292
    %8128 = vmatprep.subr.mxu0 0.0
    %8129 = vmatpush1.msra.mxu0 %v7293
    %8130 = vmatprep.subr.mxu0 0.0
    %8131 = vmatpush1.msra.mxu0 %v7294
    %8132 = vmatprep.subr.mxu0 0.0
    %8133 = vmatpush1.msra.mxu0 %v7295
    %8134 = vmatprep.subr.mxu0 0.0
    %8135 = vmatpush1.msra.mxu0 %v7296
    %8136 = vmatprep.subr.mxu0 0.0
    %8137 = vmatpush1.msra.mxu0 %v7297
    %8138 = vmatprep.subr.mxu0 0.0
    %8139 = vmatpush1.msra.mxu0 %v7298
    %8140 = vmatprep.subr.mxu0 0.0
    %8141 = vmatpush1.msra.mxu0 %v7299
    %8142 = vmatprep.subr.mxu0 0.0
    %8143 = vmatpush1.msra.mxu0 %v7300
    %8144 = vmatprep.subr.mxu0 0.0
    %8145 = vmatpush1.msra.mxu0 %v7301
    %8146 = vmatprep.subr.mxu0 0.0
    %8147 = vmatpush1.msra.mxu0 %v7302
    %8148 = vmatprep.subr.mxu0 0.0
    %8149 = vmatpush1.msra.mxu0 %v7303
    %8150 = vmatprep.subr.mxu0 0.0
    %8151 = vmatpush1.msra.mxu0 %v7304
    %8152 = vmatprep.subr.mxu0 0.0
    %8153 = vmatpush1.msra.mxu0 %v7305
    %8154 = vmatprep.subr.mxu0 0.0
    %8155 = vmatpush1.msra.mxu0 0.0
    %8156 = vmatprep.subr.mxu0 0.0
    %8157 = vmatpush1.msra.mxu0 0.0
    %8158 = vmatprep.subr.mxu0 0.0
    %8159 = vmatpush1.msra.mxu0 0.0
    %8160 = vmatprep.subr.mxu0 0.0
    %8161 = vmatpush1.msra.mxu0 0.0
    %8162 = vmatprep.subr.mxu0 0.0
    %8163 = vmatpush1.msra.mxu0 0.0
    %8164 = vmatprep.subr.mxu0 0.0
    %8165 = vmatpush1.msra.mxu0 0.0
    %8166 = vmatprep.subr.mxu0 0.0
    %8167 = vmatpush1.msra.mxu0 0.0
    %8168 = vmatprep.subr.mxu0 0.0
    %8169 = vmatpush1.msra.mxu0 0.0
    %8170 = vmatprep.subr.mxu0 0.0
    %8171 = vmatpush1.msra.mxu0 0.0
    %8172 = vmatprep.subr.mxu0 0.0
    %8173 = vmatpush1.msra.mxu0 0.0
    %8174 = vmatprep.subr.mxu0 0.0
    %8175 = vmatpush1.msra.mxu0 0.0
    %8176 = vmatprep.subr.mxu0 0.0
    %8177 = vmatpush1.msra.mxu0 0.0
    %8178 = vmatprep.subr.mxu0 0.0
    %8179 = vmatpush1.msra.mxu0 0.0
    %8180 = vmatprep.subr.mxu0 0.0
    %8181 = vmatpush1.msra.mxu0 0.0
    %8182 = vmatprep.subr.mxu0 0.0
    %8183 = vmatpush1.msra.mxu0 0.0
    %8184 = vmatprep.subr.mxu0 0.0
    %8185 = vmatpush1.msra.mxu0 0.0
    %8186 = vmatprep.mubr.f32.mxu0 0.0
    %8187 = vmatmul.mubr.f32.gmra.mrb[0].mxu0 %v8121
    %v8188 = vpop.f32.mrb[0].mxu0
    %v8189 = vadd.f32 %v7311, %v8188
    %v8190 = vpop.f32.mrb[0].mxu0
    %8191 = vdwg.mxu0
    %v8194 = vunpack.c.l.s4 1966171168
    %v8195 = vunpack.c.0.s8 %v8194
    %v8196 = vlaneseq
    %v8197 = vshrl.u32 %v8196, 7
    %v8198 = vsub.s32 %v8195, %v8197
    %v8199 = vrot.slane %v8189, %v8198
    %v8200 = vcombine.high %v8199, %v8199
    %v8202 = vunpack.c.l.s4 1966171168
    %v8203 = vunpack.c.0.s8 %v8202
    %v8204 = vlaneseq
    %v8205 = vshrl.u32 %v8204, 7
    %v8206 = vsub.s32 %v8203, %v8205
    %v8207 = vrot.slane %v8199, %v8206
    %v8209 = vunpack.c.l.s4 1966171168
    %v8210 = vunpack.c.0.s8 %v8209
    %v8211 = vlaneseq
    %v8212 = vshrl.u32 %v8211, 7
    %v8213 = vsub.s32 %v8210, %v8212
    %v8214 = vrot.slane %v8200, %v8213
    %v8215 = vcombine.high %v8207, %v8207
    %v8216 = vcombine.high %v8214, %v8214
    %8221 = vst [vmem:[%s73 + $0x1] sm:$0x1] %v8207
    %8222 = vst [vmem:[%s73 + $0x9] sm:$0x1] %v8214
    %8223 = vst [vmem:[%s73 + $0x11] sm:$0x1] %v8215
    %8224 = vst [vmem:[%s73 + $0x19] sm:$0x1] %v8216
    %s8225 = scalar_lea.vmem %s11, 8
    %v8226 = vld [vmem:[%s8225] sm:$0xf]
    %v8228 = vsel %vm7394, %v8226, 0
    %8230 = vmatprep.subr.mxu0 %v7403
    %8231 = vmatpush1.msra.mxu0 %v7400
    %8232 = vmatprep.subr.mxu0 0.0
    %8233 = vmatpush1.msra.mxu0 0.0
    %8234 = vmatprep.subr.mxu0 0.0
    %8235 = vmatpush1.msra.mxu0 0.0
    %8236 = vmatprep.subr.mxu0 0.0
    %8237 = vmatpush1.msra.mxu0 0.0
    %8238 = vmatprep.subr.mxu0 0.0
    %8239 = vmatpush1.msra.mxu0 0.0
    %8240 = vmatprep.subr.mxu0 0.0
    %8241 = vmatpush1.msra.mxu0 0.0
    %8242 = vmatprep.subr.mxu0 0.0
    %8243 = vmatpush1.msra.mxu0 0.0
    %8244 = vmatprep.subr.mxu0 0.0
    %8245 = vmatpush1.msra.mxu0 0.0
    %8246 = vmatprep.subr.mxu0 0.0
    %8247 = vmatpush1.msra.mxu0 0.0
    %8248 = vmatprep.subr.mxu0 0.0
    %8249 = vmatpush1.msra.mxu0 0.0
    %8250 = vmatprep.subr.mxu0 0.0
    %8251 = vmatpush1.msra.mxu0 0.0
    %8252 = vmatprep.subr.mxu0 0.0
    %8253 = vmatpush1.msra.mxu0 0.0
    %8254 = vmatprep.subr.mxu0 0.0
    %8255 = vmatpush1.msra.mxu0 0.0
    %8256 = vmatprep.subr.mxu0 0.0
    %8257 = vmatpush1.msra.mxu0 0.0
    %8258 = vmatprep.subr.mxu0 0.0
    %8259 = vmatpush1.msra.mxu0 0.0
    %8260 = vmatprep.subr.mxu0 0.0
    %8261 = vmatpush1.msra.mxu0 0.0
    %8262 = vmatprep.subr.mxu0 0.0
    %8263 = vmatpush1.msra.mxu0 0.0
    %8264 = vmatprep.subr.mxu0 0.0
    %8265 = vmatpush1.msra.mxu0 0.0
    %8266 = vmatprep.subr.mxu0 0.0
    %8267 = vmatpush1.msra.mxu0 0.0
    %8268 = vmatprep.subr.mxu0 0.0
    %8269 = vmatpush1.msra.mxu0 0.0
    %8270 = vmatprep.subr.mxu0 0.0
    %8271 = vmatpush1.msra.mxu0 0.0
    %8272 = vmatprep.subr.mxu0 0.0
    %8273 = vmatpush1.msra.mxu0 0.0
    %8274 = vmatprep.subr.mxu0 0.0
    %8275 = vmatpush1.msra.mxu0 0.0
    %8276 = vmatprep.subr.mxu0 0.0
    %8277 = vmatpush1.msra.mxu0 0.0
    %8278 = vmatprep.subr.mxu0 0.0
    %8279 = vmatpush1.msra.mxu0 0.0
    %8280 = vmatprep.subr.mxu0 0.0
    %8281 = vmatpush1.msra.mxu0 0.0
    %8282 = vmatprep.subr.mxu0 0.0
    %8283 = vmatpush1.msra.mxu0 0.0
    %8284 = vmatprep.subr.mxu0 0.0
    %8285 = vmatpush1.msra.mxu0 0.0
    %8286 = vmatprep.subr.mxu0 0.0
    %8287 = vmatpush1.msra.mxu0 0.0
    %8288 = vmatprep.subr.mxu0 0.0
    %8289 = vmatpush1.msra.mxu0 0.0
    %8290 = vmatprep.subr.mxu0 0.0
    %8291 = vmatpush1.msra.mxu0 0.0
    %8292 = vmatprep.subr.mxu0 0.0
    %8293 = vmatpush1.msra.mxu0 0.0
    %8294 = vmatprep.mubr.f32.mxu0 0.0
    %8295 = vmatmul.mubr.f32.gmra.mrb[0].mxu0 %v8228
    %v8296 = vpop.f32.mrb[0].mxu0
    %v8297 = vadd.f32 %v7287, %v8296
    %v8298 = vpop.f32.mrb[0].mxu0
    %v8299 = vadd.f32 %v7288, %v8298
    %8300 = vdwg.mxu0
    %8301 = vmatprep.subr.mxu0 0.0
    %8302 = vmatpush1.msra.mxu0 %v7406
    %8303 = vmatprep.subr.mxu0 0.0
    %8304 = vmatpush1.msra.mxu0 0.0
    %8305 = vmatprep.subr.mxu0 0.0
    %8306 = vmatpush1.msra.mxu0 0.0
    %8307 = vmatprep.subr.mxu0 0.0
    %8308 = vmatpush1.msra.mxu0 0.0
    %8309 = vmatprep.subr.mxu0 0.0
    %8310 = vmatpush1.msra.mxu0 0.0
    %8311 = vmatprep.subr.mxu0 0.0
    %8312 = vmatpush1.msra.mxu0 0.0
    %8313 = vmatprep.subr.mxu0 0.0
    %8314 = vmatpush1.msra.mxu0 0.0
    %8315 = vmatprep.subr.mxu0 0.0
    %8316 = vmatpush1.msra.mxu0 0.0
    %8317 = vmatprep.subr.mxu0 0.0
    %8318 = vmatpush1.msra.mxu0 0.0
    %8319 = vmatprep.subr.mxu0 0.0
    %8320 = vmatpush1.msra.mxu0 0.0
    %8321 = vmatprep.subr.mxu0 0.0
    %8322 = vmatpush1.msra.mxu0 0.0
    %8323 = vmatprep.subr.mxu0 0.0
    %8324 = vmatpush1.msra.mxu0 0.0
    %8325 = vmatprep.subr.mxu0 0.0
    %8326 = vmatpush1.msra.mxu0 0.0
    %8327 = vmatprep.subr.mxu0 0.0
    %8328 = vmatpush1.msra.mxu0 0.0
    %8329 = vmatprep.subr.mxu0 0.0
    %8330 = vmatpush1.msra.mxu0 0.0
    %8331 = vmatprep.subr.mxu0 0.0
    %8332 = vmatpush1.msra.mxu0 0.0
    %8333 = vmatprep.subr.mxu0 0.0
    %8334 = vmatpush1.msra.mxu0 0.0
    %8335 = vmatprep.subr.mxu0 0.0
    %8336 = vmatpush1.msra.mxu0 0.0
    %8337 = vmatprep.subr.mxu0 0.0
    %8338 = vmatpush1.msra.mxu0 0.0
    %8339 = vmatprep.subr.mxu0 0.0
    %8340 = vmatpush1.msra.mxu0 0.0
    %8341 = vmatprep.subr.mxu0 0.0
    %8342 = vmatpush1.msra.mxu0 0.0
    %8343 = vmatprep.subr.mxu0 0.0
    %8344 = vmatpush1.msra.mxu0 0.0
    %8345 = vmatprep.subr.mxu0 0.0
    %8346 = vmatpush1.msra.mxu0 0.0
    %8347 = vmatprep.subr.mxu0 0.0
    %8348 = vmatpush1.msra.mxu0 0.0
    %8349 = vmatprep.subr.mxu0 0.0
    %8350 = vmatpush1.msra.mxu0 0.0
    %8351 = vmatprep.subr.mxu0 0.0
    %8352 = vmatpush1.msra.mxu0 0.0
    %8353 = vmatprep.subr.mxu0 0.0
    %8354 = vmatpush1.msra.mxu0 0.0
    %8355 = vmatprep.subr.mxu0 0.0
    %8356 = vmatpush1.msra.mxu0 0.0
    %8357 = vmatprep.subr.mxu0 0.0
    %8358 = vmatpush1.msra.mxu0 0.0
    %8359 = vmatprep.subr.mxu0 0.0
    %8360 = vmatpush1.msra.mxu0 0.0
    %8361 = vmatprep.subr.mxu0 0.0
    %8362 = vmatpush1.msra.mxu0 0.0
    %8363 = vmatprep.subr.mxu0 0.0
    %8364 = vmatpush1.msra.mxu0 0.0
    %8365 = vmatprep.mubr.f32.mxu0 0.0
    %8366 = vmatmul.mubr.f32.gmra.mrb[0].mxu0 %v8228
    %v8367 = vpop.f32.mrb[0].mxu0
    %v8368 = vadd.f32 %v7289, %v8367
    %v8369 = vpop.f32.mrb[0].mxu0
    %8370 = vdwg.mxu0
    %8371 = vmatprep.subr.mxu0 %v6899
    %8372 = vmatpush1.msra.mxu0 %v6898
    %8373 = vmatprep.subr.mxu0 %v6902
    %8374 = vmatpush1.msra.mxu0 %v6901
    %8375 = vmatprep.subr.mxu0 %v6905
    %8376 = vmatpush1.msra.mxu0 %v6904
    %8377 = vmatprep.subr.mxu0 %v6908
    %8378 = vmatpush1.msra.mxu0 %v6907
    %8379 = vmatprep.subr.mxu0 %v6911
    %8380 = vmatpush1.msra.mxu0 %v6910
    %8381 = vmatprep.subr.mxu0 %v6914
    %8382 = vmatpush1.msra.mxu0 %v6913
    %8383 = vmatprep.subr.mxu0 %v6917
    %8384 = vmatpush1.msra.mxu0 %v6916
    %8385 = vmatprep.subr.mxu0 %v6920
    %8386 = vmatpush1.msra.mxu0 %v6919
    %8387 = vmatprep.subr.mxu0 %v6923
    %8388 = vmatpush1.msra.mxu0 %v6922
    %8389 = vmatprep.subr.mxu0 %v6926
    %8390 = vmatpush1.msra.mxu0 %v6925
    %8391 = vmatprep.subr.mxu0 %v6929
    %8392 = vmatpush1.msra.mxu0 %v6928
    %8393 = vmatprep.subr.mxu0 %v6932
    %8394 = vmatpush1.msra.mxu0 %v6931
    %8395 = vmatprep.subr.mxu0 %v6935
    %8396 = vmatpush1.msra.mxu0 %v6934
    %8397 = vmatprep.subr.mxu0 %v6938
    %8398 = vmatpush1.msra.mxu0 %v6937
    %8399 = vmatprep.subr.mxu0 %v6941
    %8400 = vmatpush1.msra.mxu0 %v6940
    %8401 = vmatprep.subr.mxu0 %v6944
    %8402 = vmatpush1.msra.mxu0 %v6943
    %8403 = vmatprep.subr.mxu0 0.0
    %8404 = vmatpush1.msra.mxu0 0.0
    %8405 = vmatprep.subr.mxu0 0.0
    %8406 = vmatpush1.msra.mxu0 0.0
    %8407 = vmatprep.subr.mxu0 0.0
    %8408 = vmatpush1.msra.mxu0 0.0
    %8409 = vmatprep.subr.mxu0 0.0
    %8410 = vmatpush1.msra.mxu0 0.0
    %8411 = vmatprep.subr.mxu0 0.0
    %8412 = vmatpush1.msra.mxu0 0.0
    %8413 = vmatprep.subr.mxu0 0.0
    %8414 = vmatpush1.msra.mxu0 0.0
    %8415 = vmatprep.subr.mxu0 0.0
    %8416 = vmatpush1.msra.mxu0 0.0
    %8417 = vmatprep.subr.mxu0 0.0
    %8418 = vmatpush1.msra.mxu0 0.0
    %8419 = vmatprep.subr.mxu0 0.0
    %8420 = vmatpush1.msra.mxu0 0.0
    %8421 = vmatprep.subr.mxu0 0.0
    %8422 = vmatpush1.msra.mxu0 0.0
    %8423 = vmatprep.subr.mxu0 0.0
    %8424 = vmatpush1.msra.mxu0 0.0
    %8425 = vmatprep.subr.mxu0 0.0
    %8426 = vmatpush1.msra.mxu0 0.0
    %8427 = vmatprep.subr.mxu0 0.0
    %8428 = vmatpush1.msra.mxu0 0.0
    %8429 = vmatprep.subr.mxu0 0.0
    %8430 = vmatpush1.msra.mxu0 0.0
    %8431 = vmatprep.subr.mxu0 0.0
    %8432 = vmatpush1.msra.mxu0 0.0
    %8433 = vmatprep.subr.mxu0 0.0
    %8434 = vmatpush1.msra.mxu0 0.0
    %8435 = vmatprep.mubr.f32.mxu0 0.0
    %8436 = vmatmul.mubr.f32.gmra.mrb[0].mxu0 %v8121
    %v8437 = vpop.f32.mrb[0].mxu0
    %v8438 = vadd.f32 %v6951, %v8437
    %v8439 = vpop.f32.mrb[0].mxu0
    %v8440 = vadd.f32 %v6955, %v8439
    %8441 = vdwg.mxu0
    %8442 = vmatprep.subr.mxu0 0.0
    %8443 = vmatpush1.msra.mxu0 %v6900
    %8444 = vmatprep.subr.mxu0 0.0
    %8445 = vmatpush1.msra.mxu0 %v6903
    %8446 = vmatprep.subr.mxu0 0.0
    %8447 = vmatpush1.msra.mxu0 %v6906
    %8448 = vmatprep.subr.mxu0 0.0
    %8449 = vmatpush1.msra.mxu0 %v6909
    %8450 = vmatprep.subr.mxu0 0.0
    %8451 = vmatpush1.msra.mxu0 %v6912
    %8452 = vmatprep.subr.mxu0 0.0
    %8453 = vmatpush1.msra.mxu0 %v6915
    %8454 = vmatprep.subr.mxu0 0.0
    %8455 = vmatpush1.msra.mxu0 %v6918
    %8456 = vmatprep.subr.mxu0 0.0
    %8457 = vmatpush1.msra.mxu0 %v6921
    %8458 = vmatprep.subr.mxu0 0.0
    %8459 = vmatpush1.msra.mxu0 %v6924
    %8460 = vmatprep.subr.mxu0 0.0
    %8461 = vmatpush1.msra.mxu0 %v6927
    %8462 = vmatprep.subr.mxu0 0.0
    %8463 = vmatpush1.msra.mxu0 %v6930
    %8464 = vmatprep.subr.mxu0 0.0
    %8465 = vmatpush1.msra.mxu0 %v6933
    %8466 = vmatprep.subr.mxu0 0.0
    %8467 = vmatpush1.msra.mxu0 %v6936
    %8468 = vmatprep.subr.mxu0 0.0
    %8469 = vmatpush1.msra.mxu0 %v6939
    %8470 = vmatprep.subr.mxu0 0.0
    %8471 = vmatpush1.msra.mxu0 %v6942
    %8472 = vmatprep.subr.mxu0 0.0
    %8473 = vmatpush1.msra.mxu0 %v6945
    %8474 = vmatprep.subr.mxu0 0.0
    %8475 = vmatpush1.msra.mxu0 0.0
    %8476 = vmatprep.subr.mxu0 0.0
    %8477 = vmatpush1.msra.mxu0 0.0
    %8478 = vmatprep.subr.mxu0 0.0
    %8479 = vmatpush1.msra.mxu0 0.0
    %8480 = vmatprep.subr.mxu0 0.0
    %8481 = vmatpush1.msra.mxu0 0.0
    %8482 = vmatprep.subr.mxu0 0.0
    %8483 = vmatpush1.msra.mxu0 0.0
    %8484 = vmatprep.subr.mxu0 0.0
    %8485 = vmatpush1.msra.mxu0 0.0
    %8486 = vmatprep.subr.mxu0 0.0
    %8487 = vmatpush1.msra.mxu0 0.0
    %8488 = vmatprep.subr.mxu0 0.0
    %8489 = vmatpush1.msra.mxu0 0.0
    %8490 = vmatprep.subr.mxu0 0.0
    %8491 = vmatpush1.msra.mxu0 0.0
    %8492 = vmatprep.subr.mxu0 0.0
    %8493 = vmatpush1.msra.mxu0 0.0
    %8494 = vmatprep.subr.mxu0 0.0
    %8495 = vmatpush1.msra.mxu0 0.0
    %8496 = vmatprep.subr.mxu0 0.0
    %8497 = vmatpush1.msra.mxu0 0.0
    %8498 = vmatprep.subr.mxu0 0.0
    %8499 = vmatpush1.msra.mxu0 0.0
    %8500 = vmatprep.subr.mxu0 0.0
    %8501 = vmatpush1.msra.mxu0 0.0
    %8502 = vmatprep.subr.mxu0 0.0
    %8503 = vmatpush1.msra.mxu0 0.0
    %8504 = vmatprep.subr.mxu0 0.0
    %8505 = vmatpush1.msra.mxu0 0.0
    %8506 = vmatprep.mubr.f32.mxu0 0.0
    %8507 = vmatmul.mubr.f32.gmra.mrb[0].mxu0 %v8121
    %v8508 = vpop.f32.mrb[0].mxu0
    %v8509 = vadd.f32 %v6959, %v8508
    %v8510 = vpop.f32.mrb[0].mxu0
    %8511 = vdwg.mxu0
    %v8512 = vadd.f32 %v8297, %v8438
    %v8513 = vxor.u32 %v8512, 2147483648
    %v8514 = vmul.f32 %v8513, 1.442695
    %v8515 = vpow.pop %v8514
    %v8516 = vadd.f32 %v8515, 1.0
    %v8517 = vrcp.pop %v8516
    %v8518 = vmul.f32 1.0, %v8517
    %v8519 = vadd.f32 %v8299, %v8440
    %v8520 = vxor.u32 %v8519, 2147483648
    %v8521 = vmul.f32 %v8520, 1.442695
    %v8522 = vpow.pop %v8521
    %v8523 = vadd.f32 %v8522, 1.0
    %v8524 = vrcp.pop %v8523
    %v8525 = vmul.f32 1.0, %v8524
    %v8526 = vmul.f32 %v8518, %v8509
    %v8527 = vadd.f32 %v8368, %v8526
    %v8528 = vtanh.pop %v8527
    %v8529 = vsub.f32 1.0, %v8525
    %v8530 = vmul.f32 %v8529, %v8528
    %v8531 = vmul.f32 %v8525, %v8121
    %v8532 = vadd.f32 %v8530, %v8531
    %8533 = vmatprep.subr.mxu0 0.0
    %8534 = vmatpush1.msra.mxu0 %v7290
    %8535 = vmatprep.subr.mxu0 0.0
    %8536 = vmatpush1.msra.mxu0 %v7291
    %8537 = vmatprep.subr.mxu0 0.0
    %8538 = vmatpush1.msra.mxu0 %v7292
    %8539 = vmatprep.subr.mxu0 0.0
    %8540 = vmatpush1.msra.mxu0 %v7293
    %8541 = vmatprep.subr.mxu0 0.0
    %8542 = vmatpush1.msra.mxu0 %v7294
    %8543 = vmatprep.subr.mxu0 0.0
    %8544 = vmatpush1.msra.mxu0 %v7295
    %8545 = vmatprep.subr.mxu0 0.0
    %8546 = vmatpush1.msra.mxu0 %v7296
    %8547 = vmatprep.subr.mxu0 0.0
    %8548 = vmatpush1.msra.mxu0 %v7297
    %8549 = vmatprep.subr.mxu0 0.0
    %8550 = vmatpush1.msra.mxu0 %v7298
    %8551 = vmatprep.subr.mxu0 0.0
    %8552 = vmatpush1.msra.mxu0 %v7299
    %8553 = vmatprep.subr.mxu0 0.0
    %8554 = vmatpush1.msra.mxu0 %v7300
    %8555 = vmatprep.subr.mxu0 0.0
    %8556 = vmatpush1.msra.mxu0 %v7301
    %8557 = vmatprep.subr.mxu0 0.0
    %8558 = vmatpush1.msra.mxu0 %v7302
    %8559 = vmatprep.subr.mxu0 0.0
    %8560 = vmatpush1.msra.mxu0 %v7303
    %8561 = vmatprep.subr.mxu0 0.0
    %8562 = vmatpush1.msra.mxu0 %v7304
    %8563 = vmatprep.subr.mxu0 0.0
    %8564 = vmatpush1.msra.mxu0 %v7305
    %8565 = vmatprep.subr.mxu0 0.0
    %8566 = vmatpush1.msra.mxu0 0.0
    %8567 = vmatprep.subr.mxu0 0.0
    %8568 = vmatpush1.msra.mxu0 0.0
    %8569 = vmatprep.subr.mxu0 0.0
    %8570 = vmatpush1.msra.mxu0 0.0
    %8571 = vmatprep.subr.mxu0 0.0
    %8572 = vmatpush1.msra.mxu0 0.0
    %8573 = vmatprep.subr.mxu0 0.0
    %8574 = vmatpush1.msra.mxu0 0.0
    %8575 = vmatprep.subr.mxu0 0.0
    %8576 = vmatpush1.msra.mxu0 0.0
    %8577 = vmatprep.subr.mxu0 0.0
    %8578 = vmatpush1.msra.mxu0 0.0
    %8579 = vmatprep.subr.mxu0 0.0
    %8580 = vmatpush1.msra.mxu0 0.0
    %8581 = vmatprep.subr.mxu0 0.0
    %8582 = vmatpush1.msra.mxu0 0.0
    %8583 = vmatprep.subr.mxu0 0.0
    %8584 = vmatpush1.msra.mxu0 0.0
    %8585 = vmatprep.subr.mxu0 0.0
    %8586 = vmatpush1.msra.mxu0 0.0
    %8587 = vmatprep.subr.mxu0 0.0
    %8588 = vmatpush1.msra.mxu0 0.0
    %8589 = vmatprep.subr.mxu0 0.0
    %8590 = vmatpush1.msra.mxu0 0.0
    %8591 = vmatprep.subr.mxu0 0.0
    %8592 = vmatpush1.msra.mxu0 0.0
    %8593 = vmatprep.subr.mxu0 0.0
    %8594 = vmatpush1.msra.mxu0 0.0
    %8595 = vmatprep.subr.mxu0 0.0
    %8596 = vmatpush1.msra.mxu0 0.0
    %8597 = vmatprep.mubr.f32.mxu0 0.0
    %8598 = vmatmul.mubr.f32.gmra.mrb[0].mxu0 %v8532
    %v8599 = vpop.f32.mrb[0].mxu0
    %v8600 = vadd.f32 %v7311, %v8599
    %v8601 = vpop.f32.mrb[0].mxu0
    %8602 = vdwg.mxu0
    %v8605 = vunpack.c.l.s4 1966171168
    %v8606 = vunpack.c.0.s8 %v8605
    %v8607 = vlaneseq
    %v8608 = vshrl.u32 %v8607, 7
    %v8609 = vsub.s32 %v8606, %v8608
    %v8610 = vrot.slane %v8600, %v8609
    %v8611 = vcombine.high %v8610, %v8610
    %v8613 = vunpack.c.l.s4 1966171168
    %v8614 = vunpack.c.0.s8 %v8613
    %v8615 = vlaneseq
    %v8616 = vshrl.u32 %v8615, 7
    %v8617 = vsub.s32 %v8614, %v8616
    %v8618 = vrot.slane %v8610, %v8617
    %v8620 = vunpack.c.l.s4 1966171168
    %v8621 = vunpack.c.0.s8 %v8620
    %v8622 = vlaneseq
    %v8623 = vshrl.u32 %v8622, 7
    %v8624 = vsub.s32 %v8621, %v8623
    %v8625 = vrot.slane %v8611, %v8624
    %v8626 = vcombine.high %v8618, %v8618
    %v8627 = vcombine.high %v8625, %v8625
    %8632 = vst [vmem:[%s73 + $0x2] sm:$0x1] %v8618
    %8633 = vst [vmem:[%s73 + $0xa] sm:$0x1] %v8625
    %8634 = vst [vmem:[%s73 + $0x12] sm:$0x1] %v8626
    %8635 = vst [vmem:[%s73 + $0x1a] sm:$0x1] %v8627
    %s8636 = scalar_lea.vmem %s11, 12
    %v8637 = vld [vmem:[%s8636] sm:$0xf]
    %v8639 = vsel %vm7394, %v8637, 0
    %8641 = vmatprep.subr.mxu0 %v7403
    %8642 = vmatpush1.msra.mxu0 %v7400
    %8643 = vmatprep.subr.mxu0 0.0
    %8644 = vmatpush1.msra.mxu0 0.0
    %8645 = vmatprep.subr.mxu0 0.0
    %8646 = vmatpush1.msra.mxu0 0.0
    %8647 = vmatprep.subr.mxu0 0.0
    %8648 = vmatpush1.msra.mxu0 0.0
    %8649 = vmatprep.subr.mxu0 0.0
    %8650 = vmatpush1.msra.mxu0 0.0
    %8651 = vmatprep.subr.mxu0 0.0
    %8652 = vmatpush1.msra.mxu0 0.0
    %8653 = vmatprep.subr.mxu0 0.0
    %8654 = vmatpush1.msra.mxu0 0.0
    %8655 = vmatprep.subr.mxu0 0.0
    %8656 = vmatpush1.msra.mxu0 0.0
    %8657 = vmatprep.subr.mxu0 0.0
    %8658 = vmatpush1.msra.mxu0 0.0
    %8659 = vmatprep.subr.mxu0 0.0
    %8660 = vmatpush1.msra.mxu0 0.0
    %8661 = vmatprep.subr.mxu0 0.0
    %8662 = vmatpush1.msra.mxu0 0.0
    %8663 = vmatprep.subr.mxu0 0.0
    %8664 = vmatpush1.msra.mxu0 0.0
    %8665 = vmatprep.subr.mxu0 0.0
    %8666 = vmatpush1.msra.mxu0 0.0
    %8667 = vmatprep.subr.mxu0 0.0
    %8668 = vmatpush1.msra.mxu0 0.0
    %8669 = vmatprep.subr.mxu0 0.0
    %8670 = vmatpush1.msra.mxu0 0.0
    %8671 = vmatprep.subr.mxu0 0.0
    %8672 = vmatpush1.msra.mxu0 0.0
    %8673 = vmatprep.subr.mxu0 0.0
    %8674 = vmatpush1.msra.mxu0 0.0
    %8675 = vmatprep.subr.mxu0 0.0
    %8676 = vmatpush1.msra.mxu0 0.0
    %8677 = vmatprep.subr.mxu0 0.0
    %8678 = vmatpush1.msra.mxu0 0.0
    %8679 = vmatprep.subr.mxu0 0.0
    %8680 = vmatpush1.msra.mxu0 0.0
    %8681 = vmatprep.subr.mxu0 0.0
    %8682 = vmatpush1.msra.mxu0 0.0
    %8683 = vmatprep.subr.mxu0 0.0
    %8684 = vmatpush1.msra.mxu0 0.0
    %8685 = vmatprep.subr.mxu0 0.0
    %8686 = vmatpush1.msra.mxu0 0.0
    %8687 = vmatprep.subr.mxu0 0.0
    %8688 = vmatpush1.msra.mxu0 0.0
    %8689 = vmatprep.subr.mxu0 0.0
    %8690 = vmatpush1.msra.mxu0 0.0
    %8691 = vmatprep.subr.mxu0 0.0
    %8692 = vmatpush1.msra.mxu0 0.0
    %8693 = vmatprep.subr.mxu0 0.0
    %8694 = vmatpush1.msra.mxu0 0.0
    %8695 = vmatprep.subr.mxu0 0.0
    %8696 = vmatpush1.msra.mxu0 0.0
    %8697 = vmatprep.subr.mxu0 0.0
    %8698 = vmatpush1.msra.mxu0 0.0
    %8699 = vmatprep.subr.mxu0 0.0
    %8700 = vmatpush1.msra.mxu0 0.0
    %8701 = vmatprep.subr.mxu0 0.0
    %8702 = vmatpush1.msra.mxu0 0.0
    %8703 = vmatprep.subr.mxu0 0.0
    %8704 = vmatpush1.msra.mxu0 0.0
    %8705 = vmatprep.mubr.f32.mxu0 0.0
    %8706 = vmatmul.mubr.f32.gmra.mrb[0].mxu0 %v8639
    %v8707 = vpop.f32.mrb[0].mxu0
    %v8708 = vadd.f32 %v7287, %v8707
    %v8709 = vpop.f32.mrb[0].mxu0
    %v8710 = vadd.f32 %v7288, %v8709
    %8711 = vdwg.mxu0
    %8712 = vmatprep.subr.mxu0 0.0
    %8713 = vmatpush1.msra.mxu0 %v7406
    %8714 = vmatprep.subr.mxu0 0.0
    %8715 = vmatpush1.msra.mxu0 0.0
    %8716 = vmatprep.subr.mxu0 0.0
    %8717 = vmatpush1.msra.mxu0 0.0
    %8718 = vmatprep.subr.mxu0 0.0
    %8719 = vmatpush1.msra.mxu0 0.0
    %8720 = vmatprep.subr.mxu0 0.0
    %8721 = vmatpush1.msra.mxu0 0.0
    %8722 = vmatprep.subr.mxu0 0.0
    %8723 = vmatpush1.msra.mxu0 0.0
    %8724 = vmatprep.subr.mxu0 0.0
    %8725 = vmatpush1.msra.mxu0 0.0
    %8726 = vmatprep.subr.mxu0 0.0
    %8727 = vmatpush1.msra.mxu0 0.0
    %8728 = vmatprep.subr.mxu0 0.0
    %8729 = vmatpush1.msra.mxu0 0.0
    %8730 = vmatprep.subr.mxu0 0.0
    %8731 = vmatpush1.msra.mxu0 0.0
    %8732 = vmatprep.subr.mxu0 0.0
    %8733 = vmatpush1.msra.mxu0 0.0
    %8734 = vmatprep.subr.mxu0 0.0
    %8735 = vmatpush1.msra.mxu0 0.0
    %8736 = vmatprep.subr.mxu0 0.0
    %8737 = vmatpush1.msra.mxu0 0.0
    %8738 = vmatprep.subr.mxu0 0.0
    %8739 = vmatpush1.msra.mxu0 0.0
    %8740 = vmatprep.subr.mxu0 0.0
    %8741 = vmatpush1.msra.mxu0 0.0
    %8742 = vmatprep.subr.mxu0 0.0
    %8743 = vmatpush1.msra.mxu0 0.0
    %8744 = vmatprep.subr.mxu0 0.0
    %8745 = vmatpush1.msra.mxu0 0.0
    %8746 = vmatprep.subr.mxu0 0.0
    %8747 = vmatpush1.msra.mxu0 0.0
    %8748 = vmatprep.subr.mxu0 0.0
    %8749 = vmatpush1.msra.mxu0 0.0
    %8750 = vmatprep.subr.mxu0 0.0
    %8751 = vmatpush1.msra.mxu0 0.0
    %8752 = vmatprep.subr.mxu0 0.0
    %8753 = vmatpush1.msra.mxu0 0.0
    %8754 = vmatprep.subr.mxu0 0.0
    %8755 = vmatpush1.msra.mxu0 0.0
    %8756 = vmatprep.subr.mxu0 0.0
    %8757 = vmatpush1.msra.mxu0 0.0
    %8758 = vmatprep.subr.mxu0 0.0
    %8759 = vmatpush1.msra.mxu0 0.0
    %8760 = vmatprep.subr.mxu0 0.0
    %8761 = vmatpush1.msra.mxu0 0.0
    %8762 = vmatprep.subr.mxu0 0.0
    %8763 = vmatpush1.msra.mxu0 0.0
    %8764 = vmatprep.subr.mxu0 0.0
    %8765 = vmatpush1.msra.mxu0 0.0
    %8766 = vmatprep.subr.mxu0 0.0
    %8767 = vmatpush1.msra.mxu0 0.0
    %8768 = vmatprep.subr.mxu0 0.0
    %8769 = vmatpush1.msra.mxu0 0.0
    %8770 = vmatprep.subr.mxu0 0.0
    %8771 = vmatpush1.msra.mxu0 0.0
    %8772 = vmatprep.subr.mxu0 0.0
    %8773 = vmatpush1.msra.mxu0 0.0
    %8774 = vmatprep.subr.mxu0 0.0
    %8775 = vmatpush1.msra.mxu0 0.0
    %8776 = vmatprep.mubr.f32.mxu0 0.0
    %8777 = vmatmul.mubr.f32.gmra.mrb[0].mxu0 %v8639
    %v8778 = vpop.f32.mrb[0].mxu0
    %v8779 = vadd.f32 %v7289, %v8778
    %v8780 = vpop.f32.mrb[0].mxu0
    %8781 = vdwg.mxu0
    %8782 = vmatprep.subr.mxu0 %v6899
    %8783 = vmatpush1.msra.mxu0 %v6898
    %8784 = vmatprep.subr.mxu0 %v6902
    %8785 = vmatpush1.msra.mxu0 %v6901
    %8786 = vmatprep.subr.mxu0 %v6905
    %8787 = vmatpush1.msra.mxu0 %v6904
    %8788 = vmatprep.subr.mxu0 %v6908
    %8789 = vmatpush1.msra.mxu0 %v6907
    %8790 = vmatprep.subr.mxu0 %v6911
    %8791 = vmatpush1.msra.mxu0 %v6910
    %8792 = vmatprep.subr.mxu0 %v6914
    %8793 = vmatpush1.msra.mxu0 %v6913
    %8794 = vmatprep.subr.mxu0 %v6917
    %8795 = vmatpush1.msra.mxu0 %v6916
    %8796 = vmatprep.subr.mxu0 %v6920
    %8797 = vmatpush1.msra.mxu0 %v6919
    %8798 = vmatprep.subr.mxu0 %v6923
    %8799 = vmatpush1.msra.mxu0 %v6922
    %8800 = vmatprep.subr.mxu0 %v6926
    %8801 = vmatpush1.msra.mxu0 %v6925
    %8802 = vmatprep.subr.mxu0 %v6929
    %8803 = vmatpush1.msra.mxu0 %v6928
    %8804 = vmatprep.subr.mxu0 %v6932
    %8805 = vmatpush1.msra.mxu0 %v6931
    %8806 = vmatprep.subr.mxu0 %v6935
    %8807 = vmatpush1.msra.mxu0 %v6934
    %8808 = vmatprep.subr.mxu0 %v6938
    %8809 = vmatpush1.msra.mxu0 %v6937
    %8810 = vmatprep.subr.mxu0 %v6941
    %8811 = vmatpush1.msra.mxu0 %v6940
    %8812 = vmatprep.subr.mxu0 %v6944
    %8813 = vmatpush1.msra.mxu0 %v6943
    %8814 = vmatprep.subr.mxu0 0.0
    %8815 = vmatpush1.msra.mxu0 0.0
    %8816 = vmatprep.subr.mxu0 0.0
    %8817 = vmatpush1.msra.mxu0 0.0
    %8818 = vmatprep.subr.mxu0 0.0
    %8819 = vmatpush1.msra.mxu0 0.0
    %8820 = vmatprep.subr.mxu0 0.0
    %8821 = vmatpush1.msra.mxu0 0.0
    %8822 = vmatprep.subr.mxu0 0.0
    %8823 = vmatpush1.msra.mxu0 0.0
    %8824 = vmatprep.subr.mxu0 0.0
    %8825 = vmatpush1.msra.mxu0 0.0
    %8826 = vmatprep.subr.mxu0 0.0
    %8827 = vmatpush1.msra.mxu0 0.0
    %8828 = vmatprep.subr.mxu0 0.0
    %8829 = vmatpush1.msra.mxu0 0.0
    %8830 = vmatprep.subr.mxu0 0.0
    %8831 = vmatpush1.msra.mxu0 0.0
    %8832 = vmatprep.subr.mxu0 0.0
    %8833 = vmatpush1.msra.mxu0 0.0
    %8834 = vmatprep.subr.mxu0 0.0
    %8835 = vmatpush1.msra.mxu0 0.0
    %8836 = vmatprep.subr.mxu0 0.0
    %8837 = vmatpush1.msra.mxu0 0.0
    %8838 = vmatprep.subr.mxu0 0.0
    %8839 = vmatpush1.msra.mxu0 0.0
    %8840 = vmatprep.subr.mxu0 0.0
    %8841 = vmatpush1.msra.mxu0 0.0
    %8842 = vmatprep.subr.mxu0 0.0
    %8843 = vmatpush1.msra.mxu0 0.0
    %8844 = vmatprep.subr.mxu0 0.0
    %8845 = vmatpush1.msra.mxu0 0.0
    %8846 = vmatprep.mubr.f32.mxu0 0.0
    %8847 = vmatmul.mubr.f32.gmra.mrb[0].mxu0 %v8532
    %v8848 = vpop.f32.mrb[0].mxu0
    %v8849 = vadd.f32 %v6951, %v8848
    %v8850 = vpop.f32.mrb[0].mxu0
    %v8851 = vadd.f32 %v6955, %v8850
    %8852 = vdwg.mxu0
    %8853 = vmatprep.subr.mxu0 0.0
    %8854 = vmatpush1.msra.mxu0 %v6900
    %8855 = vmatprep.subr.mxu0 0.0
    %8856 = vmatpush1.msra.mxu0 %v6903
    %8857 = vmatprep.subr.mxu0 0.0
    %8858 = vmatpush1.msra.mxu0 %v6906
    %8859 = vmatprep.subr.mxu0 0.0
    %8860 = vmatpush1.msra.mxu0 %v6909
    %8861 = vmatprep.subr.mxu0 0.0
    %8862 = vmatpush1.msra.mxu0 %v6912
    %8863 = vmatprep.subr.mxu0 0.0
    %8864 = vmatpush1.msra.mxu0 %v6915
    %8865 = vmatprep.subr.mxu0 0.0
    %8866 = vmatpush1.msra.mxu0 %v6918
    %8867 = vmatprep.subr.mxu0 0.0
    %8868 = vmatpush1.msra.mxu0 %v6921
    %8869 = vmatprep.subr.mxu0 0.0
    %8870 = vmatpush1.msra.mxu0 %v6924
    %8871 = vmatprep.subr.mxu0 0.0
    %8872 = vmatpush1.msra.mxu0 %v6927
    %8873 = vmatprep.subr.mxu0 0.0
    %8874 = vmatpush1.msra.mxu0 %v6930
    %8875 = vmatprep.subr.mxu0 0.0
    %8876 = vmatpush1.msra.mxu0 %v6933
    %8877 = vmatprep.subr.mxu0 0.0
    %8878 = vmatpush1.msra.mxu0 %v6936
    %8879 = vmatprep.subr.mxu0 0.0
    %8880 = vmatpush1.msra.mxu0 %v6939
    %8881 = vmatprep.subr.mxu0 0.0
    %8882 = vmatpush1.msra.mxu0 %v6942
    %8883 = vmatprep.subr.mxu0 0.0
    %8884 = vmatpush1.msra.mxu0 %v6945
    %8885 = vmatprep.subr.mxu0 0.0
    %8886 = vmatpush1.msra.mxu0 0.0
    %8887 = vmatprep.subr.mxu0 0.0
    %8888 = vmatpush1.msra.mxu0 0.0
    %8889 = vmatprep.subr.mxu0 0.0
    %8890 = vmatpush1.msra.mxu0 0.0
    %8891 = vmatprep.subr.mxu0 0.0
    %8892 = vmatpush1.msra.mxu0 0.0
    %8893 = vmatprep.subr.mxu0 0.0
    %8894 = vmatpush1.msra.mxu0 0.0
    %8895 = vmatprep.subr.mxu0 0.0
    %8896 = vmatpush1.msra.mxu0 0.0
    %8897 = vmatprep.subr.mxu0 0.0
    %8898 = vmatpush1.msra.mxu0 0.0
    %8899 = vmatprep.subr.mxu0 0.0
    %8900 = vmatpush1.msra.mxu0 0.0
    %8901 = vmatprep.subr.mxu0 0.0
    %8902 = vmatpush1.msra.mxu0 0.0
    %8903 = vmatprep.subr.mxu0 0.0
    %8904 = vmatpush1.msra.mxu0 0.0
    %8905 = vmatprep.subr.mxu0 0.0
    %8906 = vmatpush1.msra.mxu0 0.0
    %8907 = vmatprep.subr.mxu0 0.0
    %8908 = vmatpush1.msra.mxu0 0.0
    %8909 = vmatprep.subr.mxu0 0.0
    %8910 = vmatpush1.msra.mxu0 0.0
    %8911 = vmatprep.subr.mxu0 0.0
    %8912 = vmatpush1.msra.mxu0 0.0
    %8913 = vmatprep.subr.mxu0 0.0
    %8914 = vmatpush1.msra.mxu0 0.0
    %8915 = vmatprep.subr.mxu0 0.0
    %8916 = vmatpush1.msra.mxu0 0.0
    %8917 = vmatprep.mubr.f32.mxu0 0.0
    %8918 = vmatmul.mubr.f32.gmra.mrb[0].mxu0 %v8532
    %v8919 = vpop.f32.mrb[0].mxu0
    %v8920 = vadd.f32 %v6959, %v8919
    %v8921 = vpop.f32.mrb[0].mxu0
    %8922 = vdwg.mxu0
    %v8923 = vadd.f32 %v8708, %v8849
    %v8924 = vxor.u32 %v8923, 2147483648
    %v8925 = vmul.f32 %v8924, 1.442695
    %v8926 = vpow.pop %v8925
    %v8927 = vadd.f32 %v8926, 1.0
    %v8928 = vrcp.pop %v8927
    %v8929 = vmul.f32 1.0, %v8928
    %v8930 = vadd.f32 %v8710, %v8851
    %v8931 = vxor.u32 %v8930, 2147483648
    %v8932 = vmul.f32 %v8931, 1.442695
    %v8933 = vpow.pop %v8932
    %v8934 = vadd.f32 %v8933, 1.0
    %v8935 = vrcp.pop %v8934
    %v8936 = vmul.f32 1.0, %v8935
    %v8937 = vmul.f32 %v8929, %v8920
    %v8938 = vadd.f32 %v8779, %v8937
    %v8939 = vtanh.pop %v8938
    %v8940 = vsub.f32 1.0, %v8936
    %v8941 = vmul.f32 %v8940, %v8939
    %v8942 = vmul.f32 %v8936, %v8532
    %v8943 = vadd.f32 %v8941, %v8942
    %8944 = vmatprep.subr.mxu0 0.0
    %8945 = vmatpush1.msra.mxu0 %v7290
    %8946 = vmatprep.subr.mxu0 0.0
    %8947 = vmatpush1.msra.mxu0 %v7291
    %8948 = vmatprep.subr.mxu0 0.0
    %8949 = vmatpush1.msra.mxu0 %v7292
    %8950 = vmatprep.subr.mxu0 0.0
    %8951 = vmatpush1.msra.mxu0 %v7293
    %8952 = vmatprep.subr.mxu0 0.0
    %8953 = vmatpush1.msra.mxu0 %v7294
    %8954 = vmatprep.subr.mxu0 0.0
    %8955 = vmatpush1.msra.mxu0 %v7295
    %8956 = vmatprep.subr.mxu0 0.0
    %8957 = vmatpush1.msra.mxu0 %v7296
    %8958 = vmatprep.subr.mxu0 0.0
    %8959 = vmatpush1.msra.mxu0 %v7297
    %8960 = vmatprep.subr.mxu0 0.0
    %8961 = vmatpush1.msra.mxu0 %v7298
    %8962 = vmatprep.subr.mxu0 0.0
    %8963 = vmatpush1.msra.mxu0 %v7299
    %8964 = vmatprep.subr.mxu0 0.0
    %8965 = vmatpush1.msra.mxu0 %v7300
    %8966 = vmatprep.subr.mxu0 0.0
    %8967 = vmatpush1.msra.mxu0 %v7301
    %8968 = vmatprep.subr.mxu0 0.0
    %8969 = vmatpush1.msra.mxu0 %v7302
    %8970 = vmatprep.subr.mxu0 0.0
    %8971 = vmatpush1.msra.mxu0 %v7303
    %8972 = vmatprep.subr.mxu0 0.0
    %8973 = vmatpush1.msra.mxu0 %v7304
    %8974 = vmatprep.subr.mxu0 0.0
    %8975 = vmatpush1.msra.mxu0 %v7305
    %8976 = vmatprep.subr.mxu0 0.0
    %8977 = vmatpush1.msra.mxu0 0.0
    %8978 = vmatprep.subr.mxu0 0.0
    %8979 = vmatpush1.msra.mxu0 0.0
    %8980 = vmatprep.subr.mxu0 0.0
    %8981 = vmatpush1.msra.mxu0 0.0
    %8982 = vmatprep.subr.mxu0 0.0
    %8983 = vmatpush1.msra.mxu0 0.0
    %8984 = vmatprep.subr.mxu0 0.0
    %8985 = vmatpush1.msra.mxu0 0.0
    %8986 = vmatprep.subr.mxu0 0.0
    %8987 = vmatpush1.msra.mxu0 0.0
    %8988 = vmatprep.subr.mxu0 0.0
    %8989 = vmatpush1.msra.mxu0 0.0
    %8990 = vmatprep.subr.mxu0 0.0
    %8991 = vmatpush1.msra.mxu0 0.0
    %8992 = vmatprep.subr.mxu0 0.0
    %8993 = vmatpush1.msra.mxu0 0.0
    %8994 = vmatprep.subr.mxu0 0.0
    %8995 = vmatpush1.msra.mxu0 0.0
    %8996 = vmatprep.subr.mxu0 0.0
    %8997 = vmatpush1.msra.mxu0 0.0
    %8998 = vmatprep.subr.mxu0 0.0
    %8999 = vmatpush1.msra.mxu0 0.0
    %9000 = vmatprep.subr.mxu0 0.0
    %9001 = vmatpush1.msra.mxu0 0.0
    %9002 = vmatprep.subr.mxu0 0.0
    %9003 = vmatpush1.msra.mxu0 0.0
    %9004 = vmatprep.subr.mxu0 0.0
    %9005 = vmatpush1.msra.mxu0 0.0
    %9006 = vmatprep.subr.mxu0 0.0
    %9007 = vmatpush1.msra.mxu0 0.0
    %9008 = vmatprep.mubr.f32.mxu0 0.0
    %9009 = vmatmul.mubr.f32.gmra.mrb[0].mxu0 %v8943
    %v9010 = vpop.f32.mrb[0].mxu0
    %v9011 = vadd.f32 %v7311, %v9010
    %v9012 = vpop.f32.mrb[0].mxu0
    %9013 = vdwg.mxu0
    %v9016 = vunpack.c.l.s4 1966171168
    %v9017 = vunpack.c.0.s8 %v9016
    %v9018 = vlaneseq
    %v9019 = vshrl.u32 %v9018, 7
    %v9020 = vsub.s32 %v9017, %v9019
    %v9021 = vrot.slane %v9011, %v9020
    %v9022 = vcombine.high %v9021, %v9021
    %v9024 = vunpack.c.l.s4 1966171168
    %v9025 = vunpack.c.0.s8 %v9024
    %v9026 = vlaneseq
    %v9027 = vshrl.u32 %v9026, 7
    %v9028 = vsub.s32 %v9025, %v9027
    %v9029 = vrot.slane %v9021, %v9028
    %v9031 = vunpack.c.l.s4 1966171168
    %v9032 = vunpack.c.0.s8 %v9031
    %v9033 = vlaneseq
    %v9034 = vshrl.u32 %v9033, 7
    %v9035 = vsub.s32 %v9032, %v9034
    %v9036 = vrot.slane %v9022, %v9035
    %v9037 = vcombine.high %v9029, %v9029
    %v9038 = vcombine.high %v9036, %v9036
    %9043 = vst [vmem:[%s73 + $0x3] sm:$0x1] %v9029
    %9044 = vst [vmem:[%s73 + $0xb] sm:$0x1] %v9036
    %9045 = vst [vmem:[%s73 + $0x13] sm:$0x1] %v9037
    %9046 = vst [vmem:[%s73 + $0x1b] sm:$0x1] %v9038
    %s9047 = scalar_lea.vmem %s11, 16
    %v9048 = vld [vmem:[%s9047] sm:$0xf]
    %v9050 = vsel %vm7394, %v9048, 0
    %9052 = vmatprep.subr.mxu0 %v7403
    %9053 = vmatpush1.msra.mxu0 %v7400
    %9054 = vmatprep.subr.mxu0 0.0
    %9055 = vmatpush1.msra.mxu0 0.0
    %9056 = vmatprep.subr.mxu0 0.0
    %9057 = vmatpush1.msra.mxu0 0.0
    %9058 = vmatprep.subr.mxu0 0.0
    %9059 = vmatpush1.msra.mxu0 0.0
    %9060 = vmatprep.subr.mxu0 0.0
    %9061 = vmatpush1.msra.mxu0 0.0
    %9062 = vmatprep.subr.mxu0 0.0
    %9063 = vmatpush1.msra.mxu0 0.0
    %9064 = vmatprep.subr.mxu0 0.0
    %9065 = vmatpush1.msra.mxu0 0.0
    %9066 = vmatprep.subr.mxu0 0.0
    %9067 = vmatpush1.msra.mxu0 0.0
    %9068 = vmatprep.subr.mxu0 0.0
    %9069 = vmatpush1.msra.mxu0 0.0
    %9070 = vmatprep.subr.mxu0 0.0
    %9071 = vmatpush1.msra.mxu0 0.0
    %9072 = vmatprep.subr.mxu0 0.0
    %9073 = vmatpush1.msra.mxu0 0.0
    %9074 = vmatprep.subr.mxu0 0.0
    %9075 = vmatpush1.msra.mxu0 0.0
    %9076 = vmatprep.subr.mxu0 0.0
    %9077 = vmatpush1.msra.mxu0 0.0
    %9078 = vmatprep.subr.mxu0 0.0
    %9079 = vmatpush1.msra.mxu0 0.0
    %9080 = vmatprep.subr.mxu0 0.0
    %9081 = vmatpush1.msra.mxu0 0.0
    %9082 = vmatprep.subr.mxu0 0.0
    %9083 = vmatpush1.msra.mxu0 0.0
    %9084 = vmatprep.subr.mxu0 0.0
    %9085 = vmatpush1.msra.mxu0 0.0
    %9086 = vmatprep.subr.mxu0 0.0
    %9087 = vmatpush1.msra.mxu0 0.0
    %9088 = vmatprep.subr.mxu0 0.0
    %9089 = vmatpush1.msra.mxu0 0.0
    %9090 = vmatprep.subr.mxu0 0.0
    %9091 = vmatpush1.msra.mxu0 0.0
    %9092 = vmatprep.subr.mxu0 0.0
    %9093 = vmatpush1.msra.mxu0 0.0
    %9094 = vmatprep.subr.mxu0 0.0
    %9095 = vmatpush1.msra.mxu0 0.0
    %9096 = vmatprep.subr.mxu0 0.0
    %9097 = vmatpush1.msra.mxu0 0.0
    %9098 = vmatprep.subr.mxu0 0.0
    %9099 = vmatpush1.msra.mxu0 0.0
    %9100 = vmatprep.subr.mxu0 0.0
    %9101 = vmatpush1.msra.mxu0 0.0
    %9102 = vmatprep.subr.mxu0 0.0
    %9103 = vmatpush1.msra.mxu0 0.0
    %9104 = vmatprep.subr.mxu0 0.0
    %9105 = vmatpush1.msra.mxu0 0.0
    %9106 = vmatprep.subr.mxu0 0.0
    %9107 = vmatpush1.msra.mxu0 0.0
    %9108 = vmatprep.subr.mxu0 0.0
    %9109 = vmatpush1.msra.mxu0 0.0
    %9110 = vmatprep.subr.mxu0 0.0
    %9111 = vmatpush1.msra.mxu0 0.0
    %9112 = vmatprep.subr.mxu0 0.0
    %9113 = vmatpush1.msra.mxu0 0.0
    %9114 = vmatprep.subr.mxu0 0.0
    %9115 = vmatpush1.msra.mxu0 0.0
    %9116 = vmatprep.mubr.f32.mxu0 0.0
    %9117 = vmatmul.mubr.f32.gmra.mrb[0].mxu0 %v9050
    %v9118 = vpop.f32.mrb[0].mxu0
    %v9119 = vadd.f32 %v7287, %v9118
    %v9120 = vpop.f32.mrb[0].mxu0
    %v9121 = vadd.f32 %v7288, %v9120
    %9122 = vdwg.mxu0
    %9123 = vmatprep.subr.mxu0 0.0
    %9124 = vmatpush1.msra.mxu0 %v7406
    %9125 = vmatprep.subr.mxu0 0.0
    %9126 = vmatpush1.msra.mxu0 0.0
    %9127 = vmatprep.subr.mxu0 0.0
    %9128 = vmatpush1.msra.mxu0 0.0
    %9129 = vmatprep.subr.mxu0 0.0
    %9130 = vmatpush1.msra.mxu0 0.0
    %9131 = vmatprep.subr.mxu0 0.0
    %9132 = vmatpush1.msra.mxu0 0.0
    %9133 = vmatprep.subr.mxu0 0.0
    %9134 = vmatpush1.msra.mxu0 0.0
    %9135 = vmatprep.subr.mxu0 0.0
    %9136 = vmatpush1.msra.mxu0 0.0
    %9137 = vmatprep.subr.mxu0 0.0
    %9138 = vmatpush1.msra.mxu0 0.0
    %9139 = vmatprep.subr.mxu0 0.0
    %9140 = vmatpush1.msra.mxu0 0.0
    %9141 = vmatprep.subr.mxu0 0.0
    %9142 = vmatpush1.msra.mxu0 0.0
    %9143 = vmatprep.subr.mxu0 0.0
    %9144 = vmatpush1.msra.mxu0 0.0
    %9145 = vmatprep.subr.mxu0 0.0
    %9146 = vmatpush1.msra.mxu0 0.0
    %9147 = vmatprep.subr.mxu0 0.0
    %9148 = vmatpush1.msra.mxu0 0.0
    %9149 = vmatprep.subr.mxu0 0.0
    %9150 = vmatpush1.msra.mxu0 0.0
    %9151 = vmatprep.subr.mxu0 0.0
    %9152 = vmatpush1.msra.mxu0 0.0
    %9153 = vmatprep.subr.mxu0 0.0
    %9154 = vmatpush1.msra.mxu0 0.0
    %9155 = vmatprep.subr.mxu0 0.0
    %9156 = vmatpush1.msra.mxu0 0.0
    %9157 = vmatprep.subr.mxu0 0.0
    %9158 = vmatpush1.msra.mxu0 0.0
    %9159 = vmatprep.subr.mxu0 0.0
    %9160 = vmatpush1.msra.mxu0 0.0
    %9161 = vmatprep.subr.mxu0 0.0
    %9162 = vmatpush1.msra.mxu0 0.0
    %9163 = vmatprep.subr.mxu0 0.0
    %9164 = vmatpush1.msra.mxu0 0.0
    %9165 = vmatprep.subr.mxu0 0.0
    %9166 = vmatpush1.msra.mxu0 0.0
    %9167 = vmatprep.subr.mxu0 0.0
    %9168 = vmatpush1.msra.mxu0 0.0
    %9169 = vmatprep.subr.mxu0 0.0
    %9170 = vmatpush1.msra.mxu0 0.0
    %9171 = vmatprep.subr.mxu0 0.0
    %9172 = vmatpush1.msra.mxu0 0.0
    %9173 = vmatprep.subr.mxu0 0.0
    %9174 = vmatpush1.msra.mxu0 0.0
    %9175 = vmatprep.subr.mxu0 0.0
    %9176 = vmatpush1.msra.mxu0 0.0
    %9177 = vmatprep.subr.mxu0 0.0
    %9178 = vmatpush1.msra.mxu0 0.0
    %9179 = vmatprep.subr.mxu0 0.0
    %9180 = vmatpush1.msra.mxu0 0.0
    %9181 = vmatprep.subr.mxu0 0.0
    %9182 = vmatpush1.msra.mxu0 0.0
    %9183 = vmatprep.subr.mxu0 0.0
    %9184 = vmatpush1.msra.mxu0 0.0
    %9185 = vmatprep.subr.mxu0 0.0
    %9186 = vmatpush1.msra.mxu0 0.0
    %9187 = vmatprep.mubr.f32.mxu0 0.0
    %9188 = vmatmul.mubr.f32.gmra.mrb[0].mxu0 %v9050
    %v9189 = vpop.f32.mrb[0].mxu0
    %v9190 = vadd.f32 %v7289, %v9189
    %v9191 = vpop.f32.mrb[0].mxu0
    %9192 = vdwg.mxu0
    %9193 = vmatprep.subr.mxu0 %v6899
    %9194 = vmatpush1.msra.mxu0 %v6898
    %9195 = vmatprep.subr.mxu0 %v6902
    %9196 = vmatpush1.msra.mxu0 %v6901
    %9197 = vmatprep.subr.mxu0 %v6905
    %9198 = vmatpush1.msra.mxu0 %v6904
    %9199 = vmatprep.subr.mxu0 %v6908
    %9200 = vmatpush1.msra.mxu0 %v6907
    %9201 = vmatprep.subr.mxu0 %v6911
    %9202 = vmatpush1.msra.mxu0 %v6910
    %9203 = vmatprep.subr.mxu0 %v6914
    %9204 = vmatpush1.msra.mxu0 %v6913
    %9205 = vmatprep.subr.mxu0 %v6917
    %9206 = vmatpush1.msra.mxu0 %v6916
    %9207 = vmatprep.subr.mxu0 %v6920
    %9208 = vmatpush1.msra.mxu0 %v6919
    %9209 = vmatprep.subr.mxu0 %v6923
    %9210 = vmatpush1.msra.mxu0 %v6922
    %9211 = vmatprep.subr.mxu0 %v6926
    %9212 = vmatpush1.msra.mxu0 %v6925
    %9213 = vmatprep.subr.mxu0 %v6929
    %9214 = vmatpush1.msra.mxu0 %v6928
    %9215 = vmatprep.subr.mxu0 %v6932
    %9216 = vmatpush1.msra.mxu0 %v6931
    %9217 = vmatprep.subr.mxu0 %v6935
    %9218 = vmatpush1.msra.mxu0 %v6934
    %9219 = vmatprep.subr.mxu0 %v6938
    %9220 = vmatpush1.msra.mxu0 %v6937
    %9221 = vmatprep.subr.mxu0 %v6941
    %9222 = vmatpush1.msra.mxu0 %v6940
    %9223 = vmatprep.subr.mxu0 %v6944
    %9224 = vmatpush1.msra.mxu0 %v6943
    %9225 = vmatprep.subr.mxu0 0.0
    %9226 = vmatpush1.msra.mxu0 0.0
    %9227 = vmatprep.subr.mxu0 0.0
    %9228 = vmatpush1.msra.mxu0 0.0
    %9229 = vmatprep.subr.mxu0 0.0
    %9230 = vmatpush1.msra.mxu0 0.0
    %9231 = vmatprep.subr.mxu0 0.0
    %9232 = vmatpush1.msra.mxu0 0.0
    %9233 = vmatprep.subr.mxu0 0.0
    %9234 = vmatpush1.msra.mxu0 0.0
    %9235 = vmatprep.subr.mxu0 0.0
    %9236 = vmatpush1.msra.mxu0 0.0
    %9237 = vmatprep.subr.mxu0 0.0
    %9238 = vmatpush1.msra.mxu0 0.0
    %9239 = vmatprep.subr.mxu0 0.0
    %9240 = vmatpush1.msra.mxu0 0.0
    %9241 = vmatprep.subr.mxu0 0.0
    %9242 = vmatpush1.msra.mxu0 0.0
    %9243 = vmatprep.subr.mxu0 0.0
    %9244 = vmatpush1.msra.mxu0 0.0
    %9245 = vmatprep.subr.mxu0 0.0
    %9246 = vmatpush1.msra.mxu0 0.0
    %9247 = vmatprep.subr.mxu0 0.0
    %9248 = vmatpush1.msra.mxu0 0.0
    %9249 = vmatprep.subr.mxu0 0.0
    %9250 = vmatpush1.msra.mxu0 0.0
    %9251 = vmatprep.subr.mxu0 0.0
    %9252 = vmatpush1.msra.mxu0 0.0
    %9253 = vmatprep.subr.mxu0 0.0
    %9254 = vmatpush1.msra.mxu0 0.0
    %9255 = vmatprep.subr.mxu0 0.0
    %9256 = vmatpush1.msra.mxu0 0.0
    %9257 = vmatprep.mubr.f32.mxu0 0.0
    %9258 = vmatmul.mubr.f32.gmra.mrb[0].mxu0 %v8943
    %v9259 = vpop.f32.mrb[0].mxu0
    %v9260 = vadd.f32 %v6951, %v9259
    %v9261 = vpop.f32.mrb[0].mxu0
    %v9262 = vadd.f32 %v6955, %v9261
    %9263 = vdwg.mxu0
    %9264 = vmatprep.subr.mxu0 0.0
    %9265 = vmatpush1.msra.mxu0 %v6900
    %9266 = vmatprep.subr.mxu0 0.0
    %9267 = vmatpush1.msra.mxu0 %v6903
    %9268 = vmatprep.subr.mxu0 0.0
    %9269 = vmatpush1.msra.mxu0 %v6906
    %9270 = vmatprep.subr.mxu0 0.0
    %9271 = vmatpush1.msra.mxu0 %v6909
    %9272 = vmatprep.subr.mxu0 0.0
    %9273 = vmatpush1.msra.mxu0 %v6912
    %9274 = vmatprep.subr.mxu0 0.0
    %9275 = vmatpush1.msra.mxu0 %v6915
    %9276 = vmatprep.subr.mxu0 0.0
    %9277 = vmatpush1.msra.mxu0 %v6918
    %9278 = vmatprep.subr.mxu0 0.0
    %9279 = vmatpush1.msra.mxu0 %v6921
    %9280 = vmatprep.subr.mxu0 0.0
    %9281 = vmatpush1.msra.mxu0 %v6924
    %9282 = vmatprep.subr.mxu0 0.0
    %9283 = vmatpush1.msra.mxu0 %v6927
    %9284 = vmatprep.subr.mxu0 0.0
    %9285 = vmatpush1.msra.mxu0 %v6930
    %9286 = vmatprep.subr.mxu0 0.0
    %9287 = vmatpush1.msra.mxu0 %v6933
    %9288 = vmatprep.subr.mxu0 0.0
    %9289 = vmatpush1.msra.mxu0 %v6936
    %9290 = vmatprep.subr.mxu0 0.0
    %9291 = vmatpush1.msra.mxu0 %v6939
    %9292 = vmatprep.subr.mxu0 0.0
    %9293 = vmatpush1.msra.mxu0 %v6942
    %9294 = vmatprep.subr.mxu0 0.0
    %9295 = vmatpush1.msra.mxu0 %v6945
    %9296 = vmatprep.subr.mxu0 0.0
    %9297 = vmatpush1.msra.mxu0 0.0
    %9298 = vmatprep.subr.mxu0 0.0
    %9299 = vmatpush1.msra.mxu0 0.0
    %9300 = vmatprep.subr.mxu0 0.0
    %9301 = vmatpush1.msra.mxu0 0.0
    %9302 = vmatprep.subr.mxu0 0.0
    %9303 = vmatpush1.msra.mxu0 0.0
    %9304 = vmatprep.subr.mxu0 0.0
    %9305 = vmatpush1.msra.mxu0 0.0
    %9306 = vmatprep.subr.mxu0 0.0
    %9307 = vmatpush1.msra.mxu0 0.0
    %9308 = vmatprep.subr.mxu0 0.0
    %9309 = vmatpush1.msra.mxu0 0.0
    %9310 = vmatprep.subr.mxu0 0.0
    %9311 = vmatpush1.msra.mxu0 0.0
    %9312 = vmatprep.subr.mxu0 0.0
    %9313 = vmatpush1.msra.mxu0 0.0
    %9314 = vmatprep.subr.mxu0 0.0
    %9315 = vmatpush1.msra.mxu0 0.0
    %9316 = vmatprep.subr.mxu0 0.0
    %9317 = vmatpush1.msra.mxu0 0.0
    %9318 = vmatprep.subr.mxu0 0.0
    %9319 = vmatpush1.msra.mxu0 0.0
    %9320 = vmatprep.subr.mxu0 0.0
    %9321 = vmatpush1.msra.mxu0 0.0
    %9322 = vmatprep.subr.mxu0 0.0
    %9323 = vmatpush1.msra.mxu0 0.0
    %9324 = vmatprep.subr.mxu0 0.0
    %9325 = vmatpush1.msra.mxu0 0.0
    %9326 = vmatprep.subr.mxu0 0.0
    %9327 = vmatpush1.msra.mxu0 0.0
    %9328 = vmatprep.mubr.f32.mxu0 0.0
    %9329 = vmatmul.mubr.f32.gmra.mrb[0].mxu0 %v8943
    %v9330 = vpop.f32.mrb[0].mxu0
    %v9331 = vadd.f32 %v6959, %v9330
    %v9332 = vpop.f32.mrb[0].mxu0
    %9333 = vdwg.mxu0
    %v9334 = vadd.f32 %v9119, %v9260
    %v9335 = vxor.u32 %v9334, 2147483648
    %v9336 = vmul.f32 %v9335, 1.442695
    %v9337 = vpow.pop %v9336
    %v9338 = vadd.f32 %v9337, 1.0
    %v9339 = vrcp.pop %v9338
    %v9340 = vmul.f32 1.0, %v9339
    %v9341 = vadd.f32 %v9121, %v9262
    %v9342 = vxor.u32 %v9341, 2147483648
    %v9343 = vmul.f32 %v9342, 1.442695
    %v9344 = vpow.pop %v9343
    %v9345 = vadd.f32 %v9344, 1.0
    %v9346 = vrcp.pop %v9345
    %v9347 = vmul.f32 1.0, %v9346
    %v9348 = vmul.f32 %v9340, %v9331
    %v9349 = vadd.f32 %v9190, %v9348
    %v9350 = vtanh.pop %v9349
    %v9351 = vsub.f32 1.0, %v9347
    %v9352 = vmul.f32 %v9351, %v9350
    %v9353 = vmul.f32 %v9347, %v8943
    %v9354 = vadd.f32 %v9352, %v9353
    %9355 = vmatprep.subr.mxu0 0.0
    %9356 = vmatpush1.msra.mxu0 %v7290
    %9357 = vmatprep.subr.mxu0 0.0
    %9358 = vmatpush1.msra.mxu0 %v7291
    %9359 = vmatprep.subr.mxu0 0.0
    %9360 = vmatpush1.msra.mxu0 %v7292
    %9361 = vmatprep.subr.mxu0 0.0
    %9362 = vmatpush1.msra.mxu0 %v7293
    %9363 = vmatprep.subr.mxu0 0.0
    %9364 = vmatpush1.msra.mxu0 %v7294
    %9365 = vmatprep.subr.mxu0 0.0
    %9366 = vmatpush1.msra.mxu0 %v7295
    %9367 = vmatprep.subr.mxu0 0.0
    %9368 = vmatpush1.msra.mxu0 %v7296
    %9369 = vmatprep.subr.mxu0 0.0
    %9370 = vmatpush1.msra.mxu0 %v7297
    %9371 = vmatprep.subr.mxu0 0.0
    %9372 = vmatpush1.msra.mxu0 %v7298
    %9373 = vmatprep.subr.mxu0 0.0
    %9374 = vmatpush1.msra.mxu0 %v7299
    %9375 = vmatprep.subr.mxu0 0.0
    %9376 = vmatpush1.msra.mxu0 %v7300
    %9377 = vmatprep.subr.mxu0 0.0
    %9378 = vmatpush1.msra.mxu0 %v7301
    %9379 = vmatprep.subr.mxu0 0.0
    %9380 = vmatpush1.msra.mxu0 %v7302
    %9381 = vmatprep.subr.mxu0 0.0
    %9382 = vmatpush1.msra.mxu0 %v7303
    %9383 = vmatprep.subr.mxu0 0.0
    %9384 = vmatpush1.msra.mxu0 %v7304
    %9385 = vmatprep.subr.mxu0 0.0
    %9386 = vmatpush1.msra.mxu0 %v7305
    %9387 = vmatprep.subr.mxu0 0.0
    %9388 = vmatpush1.msra.mxu0 0.0
    %9389 = vmatprep.subr.mxu0 0.0
    %9390 = vmatpush1.msra.mxu0 0.0
    %9391 = vmatprep.subr.mxu0 0.0
    %9392 = vmatpush1.msra.mxu0 0.0
    %9393 = vmatprep.subr.mxu0 0.0
    %9394 = vmatpush1.msra.mxu0 0.0
    %9395 = vmatprep.subr.mxu0 0.0
    %9396 = vmatpush1.msra.mxu0 0.0
    %9397 = vmatprep.subr.mxu0 0.0
    %9398 = vmatpush1.msra.mxu0 0.0
    %9399 = vmatprep.subr.mxu0 0.0
    %9400 = vmatpush1.msra.mxu0 0.0
    %9401 = vmatprep.subr.mxu0 0.0
    %9402 = vmatpush1.msra.mxu0 0.0
    %9403 = vmatprep.subr.mxu0 0.0
    %9404 = vmatpush1.msra.mxu0 0.0
    %9405 = vmatprep.subr.mxu0 0.0
    %9406 = vmatpush1.msra.mxu0 0.0
    %9407 = vmatprep.subr.mxu0 0.0
    %9408 = vmatpush1.msra.mxu0 0.0
    %9409 = vmatprep.subr.mxu0 0.0
    %9410 = vmatpush1.msra.mxu0 0.0
    %9411 = vmatprep.subr.mxu0 0.0
    %9412 = vmatpush1.msra.mxu0 0.0
    %9413 = vmatprep.subr.mxu0 0.0
    %9414 = vmatpush1.msra.mxu0 0.0
    %9415 = vmatprep.subr.mxu0 0.0
    %9416 = vmatpush1.msra.mxu0 0.0
    %9417 = vmatprep.subr.mxu0 0.0
    %9418 = vmatpush1.msra.mxu0 0.0
    %9419 = vmatprep.mubr.f32.mxu0 0.0
    %9420 = vmatmul.mubr.f32.gmra.mrb[0].mxu0 %v9354
    %v9421 = vpop.f32.mrb[0].mxu0
    %v9422 = vadd.f32 %v7311, %v9421
    %v9423 = vpop.f32.mrb[0].mxu0
    %9424 = vdwg.mxu0
    %v9427 = vunpack.c.l.s4 1966171168
    %v9428 = vunpack.c.0.s8 %v9427
    %v9429 = vlaneseq
    %v9430 = vshrl.u32 %v9429, 7
    %v9431 = vsub.s32 %v9428, %v9430
    %v9432 = vrot.slane %v9422, %v9431
    %v9433 = vcombine.high %v9432, %v9432
    %v9435 = vunpack.c.l.s4 1966171168
    %v9436 = vunpack.c.0.s8 %v9435
    %v9437 = vlaneseq
    %v9438 = vshrl.u32 %v9437, 7
    %v9439 = vsub.s32 %v9436, %v9438
    %v9440 = vrot.slane %v9432, %v9439
    %v9442 = vunpack.c.l.s4 1966171168
    %v9443 = vunpack.c.0.s8 %v9442
    %v9444 = vlaneseq
    %v9445 = vshrl.u32 %v9444, 7
    %v9446 = vsub.s32 %v9443, %v9445
    %v9447 = vrot.slane %v9433, %v9446
    %v9448 = vcombine.high %v9440, %v9440
    %v9449 = vcombine.high %v9447, %v9447
    %9454 = vst [vmem:[%s73 + $0x4] sm:$0x1] %v9440
    %9455 = vst [vmem:[%s73 + $0xc] sm:$0x1] %v9447
    %9456 = vst [vmem:[%s73 + $0x14] sm:$0x1] %v9448
    %9457 = vst [vmem:[%s73 + $0x1c] sm:$0x1] %v9449
    // Predicated region
    $region142: #{program_vae_forward.1} parent=1 // pred_check
      _
    $region143: #{program_vae_forward.1} parent=1 // pred_check_branch
      %9459 = sbr.rel (0) target = $region145
    $region144: #{program_vae_forward.1} parent=1 // pred_region
      _
    $region145: #{program_vae_forward.1} parent=1 // pred_fallthru
      _
    // Predicated region
    $region146: #{program_vae_forward.1} parent=1 // pred_check
      _
    $region147: #{program_vae_forward.1} parent=1 // pred_check_branch
      %9461 = sbr.rel (0) target = $region149
    $region148: #{program_vae_forward.1} parent=1 // pred_region
      _
    $region149: #{program_vae_forward.1} parent=1 // pred_fallthru
      _
    // Predicated region
    $region150: #{program_vae_forward.1} parent=1 // pred_check
      _
    $region151: #{program_vae_forward.1} parent=1 // pred_check_branch
      %9463 = sbr.rel (0) target = $region153
    $region152: #{program_vae_forward.1} parent=1 // pred_region
      %s9465 = ssub.s32 32, 32
      %9466 = vsyncadd [#allocation3], %s9465
      %s9468 = sshll.u32 [#allocation2], 4
      %s9469 = int_to_ptr.vmem [resolvable:$true] %s9468
      %9471 = dma.vmem_to_hbm [thread:$0]  %s9469, 32, %s75, [#allocation3]
    $region153: #{program_vae_forward.1} parent=1 // pred_fallthru
      _
    // Predicated region
    $region154: #{program_vae_forward.1} parent=1 // pred_check
      _
    $region155: #{program_vae_forward.1} parent=1 // pred_check_branch
      %9473 = sbr.rel (0) target = $region157
    $region156: #{program_vae_forward.1} parent=1 // pred_region
      _
    $region157: #{program_vae_forward.1} parent=1 // pred_fallthru
      _
    // Predicated region
    $region158: #{program_vae_forward.1} parent=1 // pred_check
      _
    $region159: #{program_vae_forward.1} parent=1 // pred_check_branch
      %9475 = sbr.rel (0) target = $region161
    $region160: #{program_vae_forward.1} parent=1 // pred_region
      _
    $region161: #{program_vae_forward.1} parent=1 // pred_fallthru
      _
    // Predicated region
    $region162: #{program_vae_forward.1} parent=1 // pred_check
      _
    $region163: #{program_vae_forward.1} parent=1 // pred_check_branch
      %9477 = sbr.rel (0) target = $region165
    $region164: #{program_vae_forward.1} parent=1 // pred_region
      %9478 = dma.done [#allocation3], 32
    $region165: #{program_vae_forward.1} parent=1 // pred_fallthru
      _
    %9479 = vsyncpa [#allocation3], 1

</llo_original>
